<compile_context>
chip_gen: v6e
topology: v6e:2x2x1
jax: 0.10.0
libtpu: 0.0.40
codegen_flags: <defaults>
</compile_context>

<pallas_src>
import functools

import numpy as np
import jax
import jax.numpy as jnp
from jax.experimental import pallas as pl
from jax.experimental.pallas import tpu as pltpu


_VMEM = pl.BlockSpec(memory_space=pltpu.MemorySpace.VMEM)
_SMEM = pl.BlockSpec(memory_space=pltpu.MemorySpace.SMEM)


# ----------------------------------------------------------------------------
# host-side helpers (numpy, run once per shape)
# ----------------------------------------------------------------------------
def _gaussian_kernel_1d(ksize: int) -> np.ndarray:
    """Replicates cv2.getGaussianKernel(ksize, sigma=0)."""
    fixed = {
        1: [1.0],
        3: [0.25, 0.5, 0.25],
        5: [0.0625, 0.25, 0.375, 0.25, 0.0625],
        7: [0.03125, 0.109375, 0.21875, 0.28125, 0.21875, 0.109375, 0.03125],
    }
    if ksize in fixed:
        return np.asarray(fixed[ksize], dtype=np.float32)
    sigma = 0.3 * ((ksize - 1) * 0.5 - 1.0) + 0.8
    x = np.arange(ksize, dtype=np.float64) - (ksize - 1) / 2.0
    g = np.exp(-(x ** 2) / (2.0 * sigma ** 2))
    return (g / g.sum()).astype(np.float32)


def _gaussian_band_matrix(n: int, ksize: int) -> np.ndarray:
    """Banded matrix B (n, n) with B[src, dst] = Gaussian weight of input
    column `src` in output column `dst`, border = BORDER_REFLECT_101 (cv2
    default).  Horizontal blur: Y = X @ B.  Vertical blur: Y = B.T @ X."""
    g = _gaussian_kernel_1d(ksize).astype(np.float64)
    r = ksize // 2
    dst = np.arange(n)[None, :]                       # (1, n)
    tap = np.arange(ksize)[:, None]                   # (k, 1)
    src = dst + tap - r                               # (k, n)
    if n > 1:
        period = 2 * (n - 1)
        src = np.mod(src, period)
        src = np.where(src >= n, period - src, src)
    else:
        src = np.zeros_like(src)
    B = np.zeros((n, n), np.float64)
    np.add.at(B, (src, np.broadcast_to(dst, src.shape)),
              np.broadcast_to(g[:, None], src.shape))
    return B.astype(np.float32)


def _band_blocks_vertical(n: int, ksize: int, th: int, nb_side: int) -> np.ndarray:
    """Block-banded slices of the vertical-blur matrix Bv = band(n,k).T so
    that out_tile[i] = sum_d Bblocks[i, d] @ X_tile[clip(i+d-nb_side)].
    Out-of-range neighbor blocks are zero, so clamped duplicate fetches at the
    image border contribute nothing."""
    Bv = _gaussian_band_matrix(n, ksize).T.astype(np.float32)   # [out, in]
    nh = n // th
    nb = 2 * nb_side + 1
    blocks = np.zeros((nh, nb, th, th), np.float32)
    for i in range(nh):
        for d in range(nb):
            j = i + d - nb_side
            if 0 <= j < nh:
                blocks[i, d] = Bv[i * th:(i + 1) * th, j * th:(j + 1) * th]
    return blocks


def _max_row_tile() -> int:
    # v5e's MXU is 4x128^2: a 256-row tile only costs VMEM there; v6e/v7x
    # have 2x256^2 MXUs and benefit from M=256.
    try:
        kind = jax.devices()[0].device_kind.lower()
    except Exception:
        kind = ""
    return 128 if "v5" in kind else 256


def _pick_tile(n: int, max_tile: int = 128) -> int:
    """Largest row-tile <= max_tile that divides n (multiple of 8), else n."""
    for t in (256, 128, 64, 32, 16, 8):
        if t <= max_tile and n % t == 0:
            return t
    return n


def _device_vmem_bytes() -> int:
    try:
        return int(pltpu.get_tpu_info().vmem_capacity_bytes)
    except Exception:
        return 64 * 1024 * 1024      # v7x lower bound


def _compiler_params(dimension_semantics=None, est_vmem_bytes=0):
    kwargs = {}
    if dimension_semantics is not None:
        kwargs["dimension_semantics"] = tuple(dimension_semantics)
    if est_vmem_bytes > 12 * 1024 * 1024:
        cap = _device_vmem_bytes() - 8 * 1024 * 1024
        kwargs["vmem_limit_bytes"] = int(max(min(est_vmem_bytes, cap),
                                             16 * 1024 * 1024))
    if not kwargs:
        return None
    return pltpu.CompilerParams(**kwargs)


# ----------------------------------------------------------------------------
# Kernel 1 (fused mask pipeline): sigmoid + rect dilation + Gaussian blur
# (bf16 banded matmuls on the MXU) + fused global min/max (SMEM scalars).
#   - dilation borders: out-of-range pixels contribute 0, which never wins the
#     max over sigmoid values (> 0) => matches cv2.dilate's default border.
#   - blur border: REFLECT_101 folded into the band matrices.
# ----------------------------------------------------------------------------
def _dilate_axis(m, r, axis):
    """Running max over window [-r, r] along `axis` using pltpu.roll (XLU)
    with an iota border mask (O(log r) maxima, no pad, no lane relayouts)."""
    if r <= 0:
        return m
    size = m.shape[axis]
    r = min(r, size - 1)
    w = r + 1
    p = 1 << (w.bit_length() - 1)                    # largest power of 2 <= w
    idx = jax.lax.broadcasted_iota(jnp.int32, m.shape, axis)

    def shl(x, s):                                   # y[j] = x[j + s], OOB -> 0
        if s == 0:
            return x
        return jnp.where(idx < size - s, pltpu.roll(x, size - s, axis=axis), 0.0)

    def shr(x, s):                                   # y[j] = x[j - s], OOB -> 0
        if s == 0:
            return x
        return jnp.where(idx >= s, pltpu.roll(x, s, axis=axis), 0.0)

    fwd, bwd, step = m, m, 1
    while step < p:
        fwd = jnp.maximum(fwd, shl(fwd, step))
        bwd = jnp.maximum(bwd, shr(bwd, step))
        step *= 2
    fwd = jnp.maximum(fwd, shl(fwd, w - p))          # max over [j, j + r]
    bwd = jnp.maximum(bwd, shr(bwd, w - p))          # max over [j - r, j]
    return jnp.maximum(fwd, bwd)


def _mask_pipeline_kernel(x_ref, bh_ref, bv_ref, out_ref, mm_ref, *, r):
    m = jax.nn.sigmoid(x_ref[...])                   # (H, W), values in (0, 1)
    d = _dilate_axis(m, r, axis=1)                   # width dilation
    d = _dilate_axis(d, r, axis=0)                   # height dilation
    # Gaussian blur of the dilated mask: two bf16 MXU matmuls, f32 accumulate.
    tmp = jnp.dot(d.astype(jnp.bfloat16), bh_ref[...],
                  preferred_element_type=jnp.float32)
    blurred = jnp.dot(bv_ref[...], tmp.astype(jnp.bfloat16),
                      preferred_element_type=jnp.float32)
    out_ref[...] = blurred
    mm_ref[0] = jnp.min(blurred)                     # fused global min/max
    mm_ref[1] = jnp.max(blurred)


def mask_pipeline(logits_hw, ksize):
    H, W = logits_hw.shape
    r = ksize // 2
    bh = jnp.asarray(_gaussian_band_matrix(W, ksize), dtype=jnp.bfloat16)
    bv = jnp.asarray(_gaussian_band_matrix(H, ksize).T, dtype=jnp.bfloat16)

    # ~8 f32 plane-sized live values + bf16 band matrices.
    est = 8 * H * W * 4 + 2 * (W * W + H * H)
    # TODO(synk): for >=1K images, row-tile this kernel with overlapping halo
    #             blocks (and band-block matrices) so per-step VMEM stays
    #             bounded and both v7x TensorCores are used.
    kern = functools.partial(_mask_pipeline_kernel, r=r)
    return pl.pallas_call(
        kern,
        out_shape=(jax.ShapeDtypeStruct((H, W), jnp.float32),
                   jax.ShapeDtypeStruct((2,), jnp.float32)),
        in_specs=[_VMEM, _VMEM, _VMEM],
        out_specs=(_VMEM, _SMEM),
        compiler_params=_compiler_params(None, est),
    )(logits_hw, bh, bv)


# ----------------------------------------------------------------------------
# Kernel 2: fused image Gaussian blur, gridded over (channel, row-tile).
#   vertical blur:  V = sum_d Bblk[i, d] @ X[c, clip(i+d)]   (bf16, MXU)
#   horizontal:     out[c, i] = V @ Bh                        (bf16, MXU)
# Per-step VMEM is bounded by the tile (no whole-plane intermediates), and
# there is no HBM round-trip for the horizontal-blur intermediate.
# ----------------------------------------------------------------------------
def _fused_blur_kernel(*refs, nb):
    x_refs = refs[:nb]                      # nb blocks, each (1, th, W) f32
    bblk_ref = refs[nb]                     # (1, nb, th, th) bf16
    bh_ref = refs[nb + 1]                   # (W, W) bf16
    o_ref = refs[nb + 2]                    # (1, th, W) f32
    v = None
    for d in range(nb):
        xv = x_refs[d][0].astype(jnp.bfloat16)
        part = jnp.dot(bblk_ref[0, d], xv, preferred_element_type=jnp.float32)
        v = part if v is None else v + part
    o_ref[0] = jnp.dot(v.astype(jnp.bfloat16), bh_ref[...],
                       preferred_element_type=jnp.float32)


def _clamped_neighbor_map(d, nh):
    def index_map(c, i):
        return (c, jnp.clip(i + d, 0, nh - 1), 0)
    return index_map


def gaussian_blur_chw(x_chw, ksize):
    C, H, W = x_chw.shape
    r = ksize // 2
    th = _pick_tile(H, _max_row_tile())
    nh = H // th
    nb_side = min(int(np.ceil(r / th)), nh - 1) if (r > 0 and nh > 1) else 0
    nb = 2 * nb_side + 1

    bblocks = jnp.asarray(_band_blocks_vertical(H, ksize, th, nb_side),
                          dtype=jnp.bfloat16)
    bh = jnp.asarray(_gaussian_band_matrix(W, ksize), dtype=jnp.bfloat16)

    x_specs = [pl.BlockSpec((1, th, W), _clamped_neighbor_map(d, nh))
               for d in range(-nb_side, nb_side + 1)]

    # TODO(synk): at very large W, band-slab tile the horizontal matmul too
    #             (Bh is still dense W x W), and replace the neighbor row
    #             blocks with an exact (th + 2r)-row halo via manual DMA.
    est = (2 * nb * th * W * 4 + 2 * nb * th * th * 2 + 2 * W * W * 2
           + 3 * th * W * 4)
    return pl.pallas_call(
        functools.partial(_fused_blur_kernel, nb=nb),
        out_shape=jax.ShapeDtypeStruct((C, H, W), jnp.float32),
        grid=(C, nh),
        in_specs=x_specs + [
            pl.BlockSpec((1, nb, th, th), lambda c, i: (i, 0, 0, 0)),
            pl.BlockSpec((W, W), lambda c, i: (0, 0)),
        ],
        out_specs=pl.BlockSpec((1, th, W), lambda c, i: (c, i, 0)),
        compiler_params=_compiler_params(("parallel", "parallel"), est),
    )(*([x_chw] * nb + [bblocks, bh]))


# ----------------------------------------------------------------------------
# Kernel 3: compositing (elementwise), gridded over (row-tile, channel).
#   soft      = a * mask + b          (a, b = fused-min/max normalization)
#   blur_img  = soft * ori + (1 - soft) * blurred_ori
#   hl_img    = ori * (soft + ratio) + fill[c] * (1 - ratio - soft)
#   alpha     = soft * 255            (rgb planes of rgba assembled in wrapper)
# soft/alpha blocks ignore the channel axis (resident, written once at c==0).
# ----------------------------------------------------------------------------
def _composite_kernel(p_ref, mask_ref, ori_ref, blur_ref,
                      soft_ref, blur_img_ref, hl_img_ref, alpha_ref,
                      *, min_reserved_ratio):
    c = pl.program_id(1)
    a = p_ref[0]
    b = p_ref[1]
    fc = p_ref[2 + c]                        # per-channel fill color (SMEM)
    soft = mask_ref[...] * a + b

    @pl.when(c == 0)
    def _():
        soft_ref[...] = soft
        # NOTE: like the original numpy code, alpha saturates at 255*(1-ratio).
        alpha_ref[...] = soft * 255.0

    ori_c = ori_ref[0]
    blur_img_ref[0] = soft * ori_c + (1.0 - soft) * blur_ref[0]
    hl_img_ref[0] = (ori_c * (soft + min_reserved_ratio)
                     + fc * ((1.0 - min_reserved_ratio) - soft))


def composite(pvec, mask_hw, ori_chw, blur_chw, *, min_reserved_ratio):
    H, W = mask_hw.shape
    C = ori_chw.shape[0]
    th = _pick_tile(H, _max_row_tile())
    nh = H // th
    kern = functools.partial(_composite_kernel,
                             min_reserved_ratio=float(min_reserved_ratio))
    out_shapes = (
        jax.ShapeDtypeStruct((H, W), jnp.float32),       # soft
        jax.ShapeDtypeStruct((C, H, W), jnp.float32),    # blur image
        jax.ShapeDtypeStruct((C, H, W), jnp.float32),    # highlight image
        jax.ShapeDtypeStruct((H, W), jnp.float32),       # alpha plane
    )
    # TODO(synk): emit blur/highlight planes in uint8/bf16 if the consumer
    #             tolerates it; composite is HBM-store-bound.
    est = 2 * 7 * th * W * 4
    return pl.pallas_call(
        kern,
        out_shape=out_shapes,
        grid=(nh, C),
        in_specs=[
            _SMEM,                                            # [a, b, fill rgb]
            pl.BlockSpec((th, W), lambda i, c: (i, 0)),
            pl.BlockSpec((1, th, W), lambda i, c: (c, i, 0)),
            pl.BlockSpec((1, th, W), lambda i, c: (c, i, 0)),
        ],
        out_specs=(
            pl.BlockSpec((th, W), lambda i, c: (i, 0)),
            pl.BlockSpec((1, th, W), lambda i, c: (c, i, 0)),
            pl.BlockSpec((1, th, W), lambda i, c: (c, i, 0)),
            pl.BlockSpec((th, W), lambda i, c: (i, 0)),
        ),
        compiler_params=_compiler_params(("parallel", "arbitrary"), est),
    )(pvec, mask_hw, ori_chw, blur_chw)


# ----------------------------------------------------------------------------
# Full forward, mirroring DeployModel_IVM.forward
# ----------------------------------------------------------------------------
def ivm_forward(image_hwc, params, *, blur_kernel_size=31, boxes_threshold=0.5,
                range_threshold=0.5, dilate_kernel_rate=0.05,
                min_reserved_ratio=0.1, fill_color=(255.0, 255.0, 255.0),
                model_input_size=16):
    H, W, _ = image_hwc.shape                     # ori_size == (W, H) in PIL
    ori_hwc = image_hwc.astype(jnp.float32)
    ori_chw = jnp.transpose(ori_hwc, (2, 0, 1))   # planar inside Pallas

    # --- stand-in for self.model.generate(image.resize((1024,1024)), instr) ---
    # TODO(synk): the real IVM/SAM image encoder + prompt encoder + mask
    #             decoder (checkpoint load, ViT, cross-attn) are not
    #             reproduced; a tiny per-pixel linear head stands in (jnp:
    #             3x16x16 is far smaller than one pallas_call's overhead).
    model_img = jax.image.resize(
        ori_chw, (3, model_input_size, model_input_size), method="bilinear")
    w = params["mask_head_w"]
    logits_lo = (model_img[0] * w[0] + model_img[1] * w[1]
                 + model_img[2] * w[2] + w[3])

    # F.interpolate(mask, (H, W), mode='bilinear', align_corners=False)
    logits = jax.image.resize(logits_lo, (H, W), method="bilinear")

    # sigmoid + dilate + Gaussian blur of the mask + fused min/max (Pallas)
    dilate_k = int(W * dilate_kernel_rate) * 2 + 1
    mask, mm = mask_pipeline(logits, dilate_k)

    # Gaussian blur of the original image (Pallas, fused banded MXU matmuls)
    blurred_ori = gaussian_blur_chw(ori_chw, blur_kernel_size)

    # --- normalization affine from the fused min/max (SMEM scalars) ---
    mn, mx = mm[0], mm[1]
    rng = mx - mn
    keep = 1.0 - min_reserved_ratio
    safe = jnp.maximum(rng, 1e-12)
    cond = rng > range_threshold
    a = jnp.where(cond, keep / safe, 0.0)
    b = jnp.where(cond, -mn * keep / safe, keep)
    pvec = jnp.concatenate(
        [jnp.stack([a, b]),
         jnp.asarray(fill_color, jnp.float32)]).astype(jnp.float32)

    soft, blur_img, hl_img, alpha = composite(                       # Pallas
        pvec, mask, ori_chw, blurred_ori,
        min_reserved_ratio=min_reserved_ratio)

    # bbox from np.where(soft > boxes_threshold)
    cond_px = soft > boxes_threshold
    col_hit = jnp.any(cond_px, axis=0)
    row_hit = jnp.any(cond_px, axis=1)
    any_hit = jnp.any(col_hit)
    xs = jnp.arange(W)
    ys = jnp.arange(H)
    x_min = jnp.where(any_hit, jnp.min(jnp.where(col_hit, xs, W)), 0)
    x_max = jnp.where(any_hit, jnp.max(jnp.where(col_hit, xs, -1)), W - 1)
    y_min = jnp.where(any_hit, jnp.min(jnp.where(row_hit, ys, H)), 0)
    y_max = jnp.where(any_hit, jnp.max(jnp.where(row_hit, ys, -1)), H - 1)

    # TODO(synk): cropped_blur_img / cropped_highlight_img need dynamic output
    #             shapes (data-dependent crop); we return the bbox instead.

    to_hwc = lambda x: jnp.transpose(x, (1, 2, 0))
    rgba = jnp.concatenate([ori_hwc, alpha[:, :, None]], axis=-1)

    return {
        "soft": soft[:, :, None],
        "bbox": (x_min, y_min, x_max, y_max),
        "blur_image": to_hwc(blur_img),
        "highlight_image": to_hwc(hl_img),
        "rgba_image": rgba,
    }


if __name__ == "__main__":
    key = jax.random.PRNGKey(0)
    k_img, k_w = jax.random.split(key)

    H, W = 256, 256                    # W multiple of 128 -> lane-dense tiles
    BLUR_K = 31                        # small blur kernel for the small test
    image = jax.random.uniform(k_img, (H, W, 3), jnp.float32, 0.0, 255.0)
    # deterministic synthetic "mask head" parameters: [w_r, w_g, w_b, bias]
    params = {
        "mask_head_w": jax.random.normal(k_w, (4,), jnp.float32)
        * jnp.array([0.02, 0.02, 0.02, 1.0], jnp.float32)
    }

    out = ivm_forward(image, params, blur_kernel_size=BLUR_K)
    jax.tree_util.tree_map(jax.block_until_ready, out)

    # ---- sanity checks ----
    assert out["soft"].shape == (H, W, 1)
    assert out["blur_image"].shape == (H, W, 3)
    assert out["highlight_image"].shape == (H, W, 3)
    assert out["rgba_image"].shape == (H, W, 4)
    for k_ in ("soft", "blur_image", "highlight_image", "rgba_image"):
        assert bool(jnp.all(jnp.isfinite(out[k_]))), k_

    ori_np = np.asarray(image, np.float32)
    soft_np = np.asarray(out["soft"])[..., 0]

    # rgba alpha plane == soft * 255
    assert np.allclose(np.asarray(out["rgba_image"])[..., 3],
                       soft_np * 255.0, atol=1e-2)

    # highlight compositing (elementwise) matches the reference formula
    hl_ref = ori_np * (soft_np[..., None] + 0.1) + 255.0 * (0.9 - soft_np[..., None])
    assert np.allclose(np.asarray(out["highlight_image"]), hl_ref, atol=1e-2)

    # blur compositing vs. an f32 numpy banded-matmul reference of the same
    # blur (kernel uses bf16 MXU operands -> slightly looser tolerance).
    bh_np = _gaussian_band_matrix(W, BLUR_K)
    bv_np = _gaussian_band_matrix(H, BLUR_K).T
    ref_t = np.einsum("ijc,jk->ikc", ori_np, bh_np)
    ref_blur = np.einsum("im,mkc->ikc", bv_np, ref_t)
    ref_blur_img = soft_np[..., None] * ori_np + (1.0 - soft_np[..., None]) * ref_blur
    assert np.allclose(np.asarray(out["blur_image"]), ref_blur_img,
                       atol=4.0, rtol=2e-2)

    print("KERNEL_OK")
</pallas_src>

<mosaic_0001>
module attributes {stable_mosaic.version = 11 : i64} {
  func.func @_mask_pipeline_kernel(%arg0: memref<256x256xf32, #tpu.memory_space<vmem>>, %arg1: memref<256x256xbf16, #tpu.memory_space<vmem>>, %arg2: memref<256x256xbf16, #tpu.memory_space<vmem>>, %arg3: memref<256x256xf32, #tpu.memory_space<vmem>>, %arg4: memref<2xf32, #tpu.memory_space<smem>>) attributes {dimension_semantics = [], scalar_prefetch = 0 : i64, scratch_operands = 0 : i64, tpu.core_type = #tpu.core_type<tc>} {
    %c0 = arith.constant 0 : index
    %c0_0 = arith.constant 0 : index
    %0 = vector.load %arg0[%c0, %c0_0] : memref<256x256xf32, #tpu.memory_space<vmem>>, vector<256x256xf32>
    %1 = arith.negf %0 : vector<256x256xf32>
    %2 = math.exp %1 : vector<256x256xf32>
    %cst = arith.constant 1.000000e+00 : f32
    %3 = vector.broadcast %cst : f32 to vector<256x256xf32>
    %4 = arith.addf %3, %2 : vector<256x256xf32>
    %5 = arith.divf %3, %4 : vector<256x256xf32>
    %6 = tpu.iota {dimensions = array<i32: 1>} : vector<256x256xi32>
    %c255_i32 = arith.constant 255 : i32
    %7 = vector.broadcast %c255_i32 : i32 to vector<256x256xi32>
    %8 = arith.cmpi slt, %6, %7 : vector<256x256xi32>
    %c255_i32_1 = arith.constant 255 : i32
    %9 = tpu.dynamic_rotate %5 by %c255_i32_1 dim 1 : vector<256x256xf32>, i32 -> vector<256x256xf32>
    %cst_2 = arith.constant 0.000000e+00 : f32
    %10 = vector.broadcast %cst_2 : f32 to vector<256x256xf32>
    %11 = arith.select %8, %9, %10 : vector<256x256xi1>, vector<256x256xf32>
    %12 = arith.maximumf %5, %11 : vector<256x256xf32>
    %c1_i32 = arith.constant 1 : i32
    %13 = vector.broadcast %c1_i32 : i32 to vector<256x256xi32>
    %14 = arith.cmpi sge, %6, %13 : vector<256x256xi32>
    %c1_i32_3 = arith.constant 1 : i32
    %15 = tpu.dynamic_rotate %5 by %c1_i32_3 dim 1 : vector<256x256xf32>, i32 -> vector<256x256xf32>
    %cst_4 = arith.constant 0.000000e+00 : f32
    %16 = vector.broadcast %cst_4 : f32 to vector<256x256xf32>
    %17 = arith.select %14, %15, %16 : vector<256x256xi1>, vector<256x256xf32>
    %18 = arith.maximumf %5, %17 : vector<256x256xf32>
    %c254_i32 = arith.constant 254 : i32
    %19 = vector.broadcast %c254_i32 : i32 to vector<256x256xi32>
    %20 = arith.cmpi slt, %6, %19 : vector<256x256xi32>
    %c254_i32_5 = arith.constant 254 : i32
    %21 = tpu.dynamic_rotate %12 by %c254_i32_5 dim 1 : vector<256x256xf32>, i32 -> vector<256x256xf32>
    %cst_6 = arith.constant 0.000000e+00 : f32
    %22 = vector.broadcast %cst_6 : f32 to vector<256x256xf32>
    %23 = arith.select %20, %21, %22 : vector<256x256xi1>, vector<256x256xf32>
    %24 = arith.maximumf %12, %23 : vector<256x256xf32>
    %c2_i32 = arith.constant 2 : i32
    %25 = vector.broadcast %c2_i32 : i32 to vector<256x256xi32>
    %26 = arith.cmpi sge, %6, %25 : vector<256x256xi32>
    %c2_i32_7 = arith.constant 2 : i32
    %27 = tpu.dynamic_rotate %18 by %c2_i32_7 dim 1 : vector<256x256xf32>, i32 -> vector<256x256xf32>
    %cst_8 = arith.constant 0.000000e+00 : f32
    %28 = vector.broadcast %cst_8 : f32 to vector<256x256xf32>
    %29 = arith.select %26, %27, %28 : vector<256x256xi1>, vector<256x256xf32>
    %30 = arith.maximumf %18, %29 : vector<256x256xf32>
    %c252_i32 = arith.constant 252 : i32
    %31 = vector.broadcast %c252_i32 : i32 to vector<256x256xi32>
    %32 = arith.cmpi slt, %6, %31 : vector<256x256xi32>
    %c252_i32_9 = arith.constant 252 : i32
    %33 = tpu.dynamic_rotate %24 by %c252_i32_9 dim 1 : vector<256x256xf32>, i32 -> vector<256x256xf32>
    %cst_10 = arith.constant 0.000000e+00 : f32
    %34 = vector.broadcast %cst_10 : f32 to vector<256x256xf32>
    %35 = arith.select %32, %33, %34 : vector<256x256xi1>, vector<256x256xf32>
    %36 = arith.maximumf %24, %35 : vector<256x256xf32>
    %c4_i32 = arith.constant 4 : i32
    %37 = vector.broadcast %c4_i32 : i32 to vector<256x256xi32>
    %38 = arith.cmpi sge, %6, %37 : vector<256x256xi32>
    %c4_i32_11 = arith.constant 4 : i32
    %39 = tpu.dynamic_rotate %30 by %c4_i32_11 dim 1 : vector<256x256xf32>, i32 -> vector<256x256xf32>
    %cst_12 = arith.constant 0.000000e+00 : f32
    %40 = vector.broadcast %cst_12 : f32 to vector<256x256xf32>
    %41 = arith.select %38, %39, %40 : vector<256x256xi1>, vector<256x256xf32>
    %42 = arith.maximumf %30, %41 : vector<256x256xf32>
    %c251_i32 = arith.constant 251 : i32
    %43 = vector.broadcast %c251_i32 : i32 to vector<256x256xi32>
    %44 = arith.cmpi slt, %6, %43 : vector<256x256xi32>
    %c251_i32_13 = arith.constant 251 : i32
    %45 = tpu.dynamic_rotate %36 by %c251_i32_13 dim 1 : vector<256x256xf32>, i32 -> vector<256x256xf32>
    %cst_14 = arith.constant 0.000000e+00 : f32
    %46 = vector.broadcast %cst_14 : f32 to vector<256x256xf32>
    %47 = arith.select %44, %45, %46 : vector<256x256xi1>, vector<256x256xf32>
    %48 = arith.maximumf %36, %47 : vector<256x256xf32>
    %c5_i32 = arith.constant 5 : i32
    %49 = vector.broadcast %c5_i32 : i32 to vector<256x256xi32>
    %50 = arith.cmpi sge, %6, %49 : vector<256x256xi32>
    %c5_i32_15 = arith.constant 5 : i32
    %51 = tpu.dynamic_rotate %42 by %c5_i32_15 dim 1 : vector<256x256xf32>, i32 -> vector<256x256xf32>
    %cst_16 = arith.constant 0.000000e+00 : f32
    %52 = vector.broadcast %cst_16 : f32 to vector<256x256xf32>
    %53 = arith.select %50, %51, %52 : vector<256x256xi1>, vector<256x256xf32>
    %54 = arith.maximumf %42, %53 : vector<256x256xf32>
    %55 = arith.maximumf %48, %54 : vector<256x256xf32>
    %56 = tpu.iota {dimensions = array<i32: 0>} : vector<256x256xi32>
    %c255_i32_17 = arith.constant 255 : i32
    %57 = vector.broadcast %c255_i32_17 : i32 to vector<256x256xi32>
    %58 = arith.cmpi slt, %56, %57 : vector<256x256xi32>
    %c255_i32_18 = arith.constant 255 : i32
    %59 = tpu.dynamic_rotate %55 by %c255_i32_18 dim 0 : vector<256x256xf32>, i32 -> vector<256x256xf32>
    %cst_19 = arith.constant 0.000000e+00 : f32
    %60 = vector.broadcast %cst_19 : f32 to vector<256x256xf32>
    %61 = arith.select %58, %59, %60 : vector<256x256xi1>, vector<256x256xf32>
    %62 = arith.maximumf %55, %61 : vector<256x256xf32>
    %c1_i32_20 = arith.constant 1 : i32
    %63 = vector.broadcast %c1_i32_20 : i32 to vector<256x256xi32>
    %64 = arith.cmpi sge, %56, %63 : vector<256x256xi32>
    %c1_i32_21 = arith.constant 1 : i32
    %65 = tpu.dynamic_rotate %55 by %c1_i32_21 dim 0 : vector<256x256xf32>, i32 -> vector<256x256xf32>
    %cst_22 = arith.constant 0.000000e+00 : f32
    %66 = vector.broadcast %cst_22 : f32 to vector<256x256xf32>
    %67 = arith.select %64, %65, %66 : vector<256x256xi1>, vector<256x256xf32>
    %68 = arith.maximumf %55, %67 : vector<256x256xf32>
    %c254_i32_23 = arith.constant 254 : i32
    %69 = vector.broadcast %c254_i32_23 : i32 to vector<256x256xi32>
    %70 = arith.cmpi slt, %56, %69 : vector<256x256xi32>
    %c254_i32_24 = arith.constant 254 : i32
    %71 = tpu.dynamic_rotate %62 by %c254_i32_24 dim 0 : vector<256x256xf32>, i32 -> vector<256x256xf32>
    %cst_25 = arith.constant 0.000000e+00 : f32
    %72 = vector.broadcast %cst_25 : f32 to vector<256x256xf32>
    %73 = arith.select %70, %71, %72 : vector<256x256xi1>, vector<256x256xf32>
    %74 = arith.maximumf %62, %73 : vector<256x256xf32>
    %c2_i32_26 = arith.constant 2 : i32
    %75 = vector.broadcast %c2_i32_26 : i32 to vector<256x256xi32>
    %76 = arith.cmpi sge, %56, %75 : vector<256x256xi32>
    %c2_i32_27 = arith.constant 2 : i32
    %77 = tpu.dynamic_rotate %68 by %c2_i32_27 dim 0 : vector<256x256xf32>, i32 -> vector<256x256xf32>
    %cst_28 = arith.constant 0.000000e+00 : f32
    %78 = vector.broadcast %cst_28 : f32 to vector<256x256xf32>
    %79 = arith.select %76, %77, %78 : vector<256x256xi1>, vector<256x256xf32>
    %80 = arith.maximumf %68, %79 : vector<256x256xf32>
    %c252_i32_29 = arith.constant 252 : i32
    %81 = vector.broadcast %c252_i32_29 : i32 to vector<256x256xi32>
    %82 = arith.cmpi slt, %56, %81 : vector<256x256xi32>
    %c252_i32_30 = arith.constant 252 : i32
    %83 = tpu.dynamic_rotate %74 by %c252_i32_30 dim 0 : vector<256x256xf32>, i32 -> vector<256x256xf32>
    %cst_31 = arith.constant 0.000000e+00 : f32
    %84 = vector.broadcast %cst_31 : f32 to vector<256x256xf32>
    %85 = arith.select %82, %83, %84 : vector<256x256xi1>, vector<256x256xf32>
    %86 = arith.maximumf %74, %85 : vector<256x256xf32>
    %c4_i32_32 = arith.constant 4 : i32
    %87 = vector.broadcast %c4_i32_32 : i32 to vector<256x256xi32>
    %88 = arith.cmpi sge, %56, %87 : vector<256x256xi32>
    %c4_i32_33 = arith.constant 4 : i32
    %89 = tpu.dynamic_rotate %80 by %c4_i32_33 dim 0 : vector<256x256xf32>, i32 -> vector<256x256xf32>
    %cst_34 = arith.constant 0.000000e+00 : f32
    %90 = vector.broadcast %cst_34 : f32 to vector<256x256xf32>
    %91 = arith.select %88, %89, %90 : vector<256x256xi1>, vector<256x256xf32>
    %92 = arith.maximumf %80, %91 : vector<256x256xf32>
    %c251_i32_35 = arith.constant 251 : i32
    %93 = vector.broadcast %c251_i32_35 : i32 to vector<256x256xi32>
    %94 = arith.cmpi slt, %56, %93 : vector<256x256xi32>
    %c251_i32_36 = arith.constant 251 : i32
    %95 = tpu.dynamic_rotate %86 by %c251_i32_36 dim 0 : vector<256x256xf32>, i32 -> vector<256x256xf32>
    %cst_37 = arith.constant 0.000000e+00 : f32
    %96 = vector.broadcast %cst_37 : f32 to vector<256x256xf32>
    %97 = arith.select %94, %95, %96 : vector<256x256xi1>, vector<256x256xf32>
    %98 = arith.maximumf %86, %97 : vector<256x256xf32>
    %c5_i32_38 = arith.constant 5 : i32
    %99 = vector.broadcast %c5_i32_38 : i32 to vector<256x256xi32>
    %100 = arith.cmpi sge, %56, %99 : vector<256x256xi32>
    %c5_i32_39 = arith.constant 5 : i32
    %101 = tpu.dynamic_rotate %92 by %c5_i32_39 dim 0 : vector<256x256xf32>, i32 -> vector<256x256xf32>
    %cst_40 = arith.constant 0.000000e+00 : f32
    %102 = vector.broadcast %cst_40 : f32 to vector<256x256xf32>
    %103 = arith.select %100, %101, %102 : vector<256x256xi1>, vector<256x256xf32>
    %104 = arith.maximumf %92, %103 : vector<256x256xf32>
    %105 = arith.maximumf %98, %104 : vector<256x256xf32>
    %106 = arith.truncf %105 : vector<256x256xf32> to vector<256x256xbf16>
    %c0_41 = arith.constant 0 : index
    %c0_42 = arith.constant 0 : index
    %107 = vector.load %arg1[%c0_41, %c0_42] : memref<256x256xbf16, #tpu.memory_space<vmem>>, vector<256x256xbf16>
    %cst_43 = arith.constant dense<0.000000e+00> : vector<256x256xf32>
    %108 = tpu.matmul %106, %107, %cst_43 {dimension_numbers = #tpu.dot_dimension_numbers<[1], [0], [0], [1], [0, 0, 1, 1], [], []>} : vector<256x256xbf16>, vector<256x256xbf16>, vector<256x256xf32> -> vector<256x256xf32>
    %c0_44 = arith.constant 0 : index
    %c0_45 = arith.constant 0 : index
    %109 = vector.load %arg2[%c0_44, %c0_45] : memref<256x256xbf16, #tpu.memory_space<vmem>>, vector<256x256xbf16>
    %110 = arith.truncf %108 : vector<256x256xf32> to vector<256x256xbf16>
    %cst_46 = arith.constant dense<0.000000e+00> : vector<256x256xf32>
    %111 = tpu.matmul %109, %110, %cst_46 {dimension_numbers = #tpu.dot_dimension_numbers<[1], [0], [0], [1], [0, 0, 1, 1], [], []>} : vector<256x256xbf16>, vector<256x256xbf16>, vector<256x256xf32> -> vector<256x256xf32>
    %c0_47 = arith.constant 0 : index
    %c0_48 = arith.constant 0 : index
    %112 = vector.load %arg3[%c0_47, %c0_48] : memref<256x256xf32, #tpu.memory_space<vmem>>, vector<256x256xf32>
    tpu.vector_store %arg3[%c0_47, %c0_48], %111 {strides = array<i32>} : memref<256x256xf32, #tpu.memory_space<vmem>>, vector<256x256xf32>,
    %113 = vector.shape_cast %111 : vector<256x256xf32> to vector<1x256x256xf32>
    %cst_49 = arith.constant dense<0x7F800000> : vector<1xf32>
    %114 = vector.multi_reduction <minimumf>, %113, %cst_49 [1, 2] : vector<1x256x256xf32> to vector<1xf32>
    %115 = vector.shape_cast %114 : vector<1xf32> to vector<1x1x1xf32>
    %116 = vector.extract %115[0, 0, 0] : f32 from vector<1x1x1xf32>
    %c0_50 = arith.constant 0 : index
    %117 = memref.load %arg4[%c0_50] : memref<2xf32, #tpu.memory_space<smem>>
    memref.store %116, %arg4[%c0_50] : memref<2xf32, #tpu.memory_space<smem>>
    %118 = vector.shape_cast %111 : vector<256x256xf32> to vector<1x256x256xf32>
    %cst_51 = arith.constant dense<0xFF800000> : vector<1xf32>
    %119 = vector.multi_reduction <maximumf>, %118, %cst_51 [1, 2] : vector<1x256x256xf32> to vector<1xf32>
    %120 = vector.shape_cast %119 : vector<1xf32> to vector<1x1x1xf32>
    %121 = vector.extract %120[0, 0, 0] : f32 from vector<1x1x1xf32>
    %c1 = arith.constant 1 : index
    %122 = memref.load %arg4[%c1] : memref<2xf32, #tpu.memory_space<smem>>
    memref.store %121, %arg4[%c1] : memref<2xf32, #tpu.memory_space<smem>>
    return
  }
}

</mosaic_0001>

<llo_original>
// kernel: tpu_custom_call.1
$region0: #{tpu_custom_call.1}
  #allocation0 [shape = 'u32[]', space=smem, size = 0x4, offset = 0x4, fixed_abs, tag = 'smem constant byte address 0x4 - core index']
  #allocation1 [shape = 'u32[144,128]{1,0:T(1,128)}', space=vmem, size = 0x12000, scoped, tag = 'internal scratch']
  %s0 = inlined_call_operand.hbm [shape: f32[256,256], index: 0, kind: input, shape index: {}]
  %s1 = inlined_call_operand.hbm [shape: bf16[256,256], index: 1, kind: input, shape index: {}]
  %s2 = inlined_call_operand.hbm [shape: bf16[256,256], index: 2, kind: input, shape index: {}]
  %s3 = inlined_call_operand.hbm [shape: f32[256,256], index: 3, kind: output, shape index: {0}]
  %s4 = inlined_call_operand.hbm [shape: f32[2], index: 4, kind: output, shape index: {1}]
  %5 = xla_tuple %s3, %s4
  %s6 = sld [smem:[#allocation0]]
  $region42: #{tpu_custom_call.1} parent=0
    _
  %s8 = ssub.s32 1, %s6
  %s9 = scalar_select 0, %s8, %s6
  $region1: #{tpu_custom_call.1} parent=0
    #allocation2 [shape = 'u8[262144]{0}', space=vmem, size = 0x40000, scoped, tag = 'input window, operand 0, single buffered']
    #allocation3 [shape = 's32[1]{0}', space=sflag, size = 0x4, scoped, tag = 'scoped memory for tpu_custom_call.1']
    #allocation4 [shape = 's32[1]{0}', space=sflag, size = 0x4, scoped, tag = 'scoped memory for tpu_custom_call.1']
    #allocation5 [shape = 's32[1]{0}', space=sflag, size = 0x4, scoped, tag = 'scoped memory for tpu_custom_call.1']
    #allocation6 [shape = 'u8[131072]{0}', space=vmem, size = 0x20000, scoped, tag = 'input window, operand 1, single buffered']
    #allocation7 [shape = 's32[1]{0}', space=sflag, size = 0x4, scoped, tag = 'scoped memory for tpu_custom_call.1']
    #allocation8 [shape = 'u8[131072]{0}', space=vmem, size = 0x20000, scoped, tag = 'input window, operand 2, single buffered']
    #allocation9 [shape = 'u8[262144]{0}', space=vmem, size = 0x40000, scoped, tag = 'output window, operand 0, single buffered']
    #allocation10 [shape = 'u8[512]{0}', space=smem, size = 0x200, scoped, tag = 'output window, operand 1, single buffered']
    %10 = vsyncpa [#allocation3], 0
    %11 = vsyncpa [#allocation7], 0
    %12 = vsyncpa [#allocation4], 0
    %13 = vsyncpa [#allocation5], 0
    // Predicated region
    $region2: #{tpu_custom_call.1} parent=1 // pred_check
      _
    $region3: #{tpu_custom_call.1} parent=1 // pred_check_branch
      %15 = sbr.rel (0) target = $region5
    $region4: #{tpu_custom_call.1} parent=1 // pred_region
      %s17 = ssub.s32 8192, 8192
      %18 = vsyncadd [#allocation3], %s17
      %s19 = sshll.u32 [#allocation2], 4
      %s20 = int_to_ptr.vmem [resolvable:$true] %s19
      %25 = dma.hbm_to_vmem [thread:$0]  %s0, 8192, %s20, [#allocation3], 256, 256, 16
    $region5: #{tpu_custom_call.1} parent=1 // pred_fallthru
      _
    // Predicated region
    $region6: #{tpu_custom_call.1} parent=1 // pred_check
      _
    $region7: #{tpu_custom_call.1} parent=1 // pred_check_branch
      %27 = sbr.rel (0) target = $region9
    $region8: #{tpu_custom_call.1} parent=1 // pred_region
      %s29 = ssub.s32 4096, 4096
      %30 = vsyncadd [#allocation7], %s29
      %s31 = sshll.u32 [#allocation6], 4
      %s32 = int_to_ptr.vmem [resolvable:$true] %s31
      %37 = dma.hbm_to_vmem [thread:$0]  %s1, 4096, %s32, [#allocation7], 128, 128, 8
    $region9: #{tpu_custom_call.1} parent=1 // pred_fallthru
      _
    // Predicated region
    $region10: #{tpu_custom_call.1} parent=1 // pred_check
      _
    $region11: #{tpu_custom_call.1} parent=1 // pred_check_branch
      %39 = sbr.rel (0) target = $region13
    $region12: #{tpu_custom_call.1} parent=1 // pred_region
      %s41 = ssub.s32 4096, 4096
      %42 = vsyncadd [#allocation7], %s41
      %s43 = sshll.u32 [#allocation8], 4
      %s44 = int_to_ptr.vmem [resolvable:$true] %s43
      %49 = dma.hbm_to_vmem [thread:$0]  %s2, 4096, %s44, [#allocation7], 128, 128, 8
    $region13: #{tpu_custom_call.1} parent=1 // pred_fallthru
      _
    // Predicated region
    $region14: #{tpu_custom_call.1} parent=1 // pred_check
      _
    $region15: #{tpu_custom_call.1} parent=1 // pred_check_branch
      %51 = sbr.rel (0) target = $region17
    $region16: #{tpu_custom_call.1} parent=1 // pred_region
      %52 = dma.done [#allocation3], 8192
    $region17: #{tpu_custom_call.1} parent=1 // pred_fallthru
      _
    // Predicated region
    $region18: #{tpu_custom_call.1} parent=1 // pred_check
      _
    $region19: #{tpu_custom_call.1} parent=1 // pred_check_branch
      %54 = sbr.rel (0) target = $region21
    $region20: #{tpu_custom_call.1} parent=1 // pred_region
      %55 = dma.done [#allocation7], 4096
    $region21: #{tpu_custom_call.1} parent=1 // pred_fallthru
      _
    // Predicated region
    $region22: #{tpu_custom_call.1} parent=1 // pred_check
      _
    $region23: #{tpu_custom_call.1} parent=1 // pred_check_branch
      %57 = sbr.rel (0) target = $region25
    $region24: #{tpu_custom_call.1} parent=1 // pred_region
      %58 = dma.done [#allocation7], 4096
    $region25: #{tpu_custom_call.1} parent=1 // pred_fallthru
      _
    %v59 = vld [vmem:[#allocation2] sm:$0xff]
    %v60 = vld [vmem:[#allocation2 + $0x8] sm:$0xff]
    %v61 = vld [vmem:[#allocation2 + $0x10] sm:$0xff]
    %v62 = vld [vmem:[#allocation2 + $0x18] sm:$0xff]
    %v63 = vld [vmem:[#allocation2 + $0x20] sm:$0xff]
    %v64 = vld [vmem:[#allocation2 + $0x28] sm:$0xff]
    %v65 = vld [vmem:[#allocation2 + $0x30] sm:$0xff]
    %v66 = vld [vmem:[#allocation2 + $0x38] sm:$0xff]
    %v67 = vld [vmem:[#allocation2 + $0x40] sm:$0xff]
    %v68 = vld [vmem:[#allocation2 + $0x48] sm:$0xff]
    %v69 = vld [vmem:[#allocation2 + $0x50] sm:$0xff]
    %v70 = vld [vmem:[#allocation2 + $0x58] sm:$0xff]
    %v71 = vld [vmem:[#allocation2 + $0x60] sm:$0xff]
    %v72 = vld [vmem:[#allocation2 + $0x68] sm:$0xff]
    %v73 = vld [vmem:[#allocation2 + $0x70] sm:$0xff]
    %v74 = vld [vmem:[#allocation2 + $0x78] sm:$0xff]
    %v75 = vld [vmem:[#allocation2 + $0x80] sm:$0xff]
    %v76 = vld [vmem:[#allocation2 + $0x88] sm:$0xff]
    %v77 = vld [vmem:[#allocation2 + $0x90] sm:$0xff]
    %v78 = vld [vmem:[#allocation2 + $0x98] sm:$0xff]
    %v79 = vld [vmem:[#allocation2 + $0xa0] sm:$0xff]
    %v80 = vld [vmem:[#allocation2 + $0xa8] sm:$0xff]
    %v81 = vld [vmem:[#allocation2 + $0xb0] sm:$0xff]
    %v82 = vld [vmem:[#allocation2 + $0xb8] sm:$0xff]
    %v83 = vld [vmem:[#allocation2 + $0xc0] sm:$0xff]
    %v84 = vld [vmem:[#allocation2 + $0xc8] sm:$0xff]
    %v85 = vld [vmem:[#allocation2 + $0xd0] sm:$0xff]
    %v86 = vld [vmem:[#allocation2 + $0xd8] sm:$0xff]
    %v87 = vld [vmem:[#allocation2 + $0xe0] sm:$0xff]
    %v88 = vld [vmem:[#allocation2 + $0xe8] sm:$0xff]
    %v89 = vld [vmem:[#allocation2 + $0xf0] sm:$0xff]
    %v90 = vld [vmem:[#allocation2 + $0xf8] sm:$0xff]
    %v91 = vld [vmem:[#allocation2 + $0x100] sm:$0xff]
    %v92 = vld [vmem:[#allocation2 + $0x108] sm:$0xff]
    %v93 = vld [vmem:[#allocation2 + $0x110] sm:$0xff]
    %v94 = vld [vmem:[#allocation2 + $0x118] sm:$0xff]
    %v95 = vld [vmem:[#allocation2 + $0x120] sm:$0xff]
    %v96 = vld [vmem:[#allocation2 + $0x128] sm:$0xff]
    %v97 = vld [vmem:[#allocation2 + $0x130] sm:$0xff]
    %v98 = vld [vmem:[#allocation2 + $0x138] sm:$0xff]
    %v99 = vld [vmem:[#allocation2 + $0x140] sm:$0xff]
    %v100 = vld [vmem:[#allocation2 + $0x148] sm:$0xff]
    %v101 = vld [vmem:[#allocation2 + $0x150] sm:$0xff]
    %v102 = vld [vmem:[#allocation2 + $0x158] sm:$0xff]
    %v103 = vld [vmem:[#allocation2 + $0x160] sm:$0xff]
    %v104 = vld [vmem:[#allocation2 + $0x168] sm:$0xff]
    %v105 = vld [vmem:[#allocation2 + $0x170] sm:$0xff]
    %v106 = vld [vmem:[#allocation2 + $0x178] sm:$0xff]
    %v107 = vld [vmem:[#allocation2 + $0x180] sm:$0xff]
    %v108 = vld [vmem:[#allocation2 + $0x188] sm:$0xff]
    %v109 = vld [vmem:[#allocation2 + $0x190] sm:$0xff]
    %v110 = vld [vmem:[#allocation2 + $0x198] sm:$0xff]
    %v111 = vld [vmem:[#allocation2 + $0x1a0] sm:$0xff]
    %v112 = vld [vmem:[#allocation2 + $0x1a8] sm:$0xff]
    %v113 = vld [vmem:[#allocation2 + $0x1b0] sm:$0xff]
    %v114 = vld [vmem:[#allocation2 + $0x1b8] sm:$0xff]
    %v115 = vld [vmem:[#allocation2 + $0x1c0] sm:$0xff]
    %v116 = vld [vmem:[#allocation2 + $0x1c8] sm:$0xff]
    %v117 = vld [vmem:[#allocation2 + $0x1d0] sm:$0xff]
    %v118 = vld [vmem:[#allocation2 + $0x1d8] sm:$0xff]
    %v119 = vld [vmem:[#allocation2 + $0x1e0] sm:$0xff]
    %v120 = vld [vmem:[#allocation2 + $0x1e8] sm:$0xff]
    %v121 = vld [vmem:[#allocation2 + $0x1f0] sm:$0xff]
    %v122 = vld [vmem:[#allocation2 + $0x1f8] sm:$0xff]
    %v123 = vxor.u32 %v59, 2147483648
    %v124 = vxor.u32 %v60, 2147483648
    %v125 = vxor.u32 %v61, 2147483648
    %v126 = vxor.u32 %v62, 2147483648
    %v127 = vxor.u32 %v63, 2147483648
    %v128 = vxor.u32 %v64, 2147483648
    %v129 = vxor.u32 %v65, 2147483648
    %v130 = vxor.u32 %v66, 2147483648
    %v131 = vxor.u32 %v67, 2147483648
    %v132 = vxor.u32 %v68, 2147483648
    %v133 = vxor.u32 %v69, 2147483648
    %v134 = vxor.u32 %v70, 2147483648
    %v135 = vxor.u32 %v71, 2147483648
    %v136 = vxor.u32 %v72, 2147483648
    %v137 = vxor.u32 %v73, 2147483648
    %v138 = vxor.u32 %v74, 2147483648
    %v139 = vxor.u32 %v75, 2147483648
    %v140 = vxor.u32 %v76, 2147483648
    %v141 = vxor.u32 %v77, 2147483648
    %v142 = vxor.u32 %v78, 2147483648
    %v143 = vxor.u32 %v79, 2147483648
    %v144 = vxor.u32 %v80, 2147483648
    %v145 = vxor.u32 %v81, 2147483648
    %v146 = vxor.u32 %v82, 2147483648
    %v147 = vxor.u32 %v83, 2147483648
    %v148 = vxor.u32 %v84, 2147483648
    %v149 = vxor.u32 %v85, 2147483648
    %v150 = vxor.u32 %v86, 2147483648
    %v151 = vxor.u32 %v87, 2147483648
    %v152 = vxor.u32 %v88, 2147483648
    %v153 = vxor.u32 %v89, 2147483648
    %v154 = vxor.u32 %v90, 2147483648
    %v155 = vxor.u32 %v91, 2147483648
    %v156 = vxor.u32 %v92, 2147483648
    %v157 = vxor.u32 %v93, 2147483648
    %v158 = vxor.u32 %v94, 2147483648
    %v159 = vxor.u32 %v95, 2147483648
    %v160 = vxor.u32 %v96, 2147483648
    %v161 = vxor.u32 %v97, 2147483648
    %v162 = vxor.u32 %v98, 2147483648
    %v163 = vxor.u32 %v99, 2147483648
    %v164 = vxor.u32 %v100, 2147483648
    %v165 = vxor.u32 %v101, 2147483648
    %v166 = vxor.u32 %v102, 2147483648
    %v167 = vxor.u32 %v103, 2147483648
    %v168 = vxor.u32 %v104, 2147483648
    %v169 = vxor.u32 %v105, 2147483648
    %v170 = vxor.u32 %v106, 2147483648
    %v171 = vxor.u32 %v107, 2147483648
    %v172 = vxor.u32 %v108, 2147483648
    %v173 = vxor.u32 %v109, 2147483648
    %v174 = vxor.u32 %v110, 2147483648
    %v175 = vxor.u32 %v111, 2147483648
    %v176 = vxor.u32 %v112, 2147483648
    %v177 = vxor.u32 %v113, 2147483648
    %v178 = vxor.u32 %v114, 2147483648
    %v179 = vxor.u32 %v115, 2147483648
    %v180 = vxor.u32 %v116, 2147483648
    %v181 = vxor.u32 %v117, 2147483648
    %v182 = vxor.u32 %v118, 2147483648
    %v183 = vxor.u32 %v119, 2147483648
    %v184 = vxor.u32 %v120, 2147483648
    %v185 = vxor.u32 %v121, 2147483648
    %v186 = vxor.u32 %v122, 2147483648
    %v187 = vmul.f32 %v123, 1.442695
    %v188 = vpow.pop %v187
    %v189 = vmul.f32 %v124, 1.442695
    %v190 = vpow.pop %v189
    %v191 = vmul.f32 %v125, 1.442695
    %v192 = vpow.pop %v191
    %v193 = vmul.f32 %v126, 1.442695
    %v194 = vpow.pop %v193
    %v195 = vmul.f32 %v127, 1.442695
    %v196 = vpow.pop %v195
    %v197 = vmul.f32 %v128, 1.442695
    %v198 = vpow.pop %v197
    %v199 = vmul.f32 %v129, 1.442695
    %v200 = vpow.pop %v199
    %v201 = vmul.f32 %v130, 1.442695
    %v202 = vpow.pop %v201
    %v203 = vmul.f32 %v131, 1.442695
    %v204 = vpow.pop %v203
    %v205 = vmul.f32 %v132, 1.442695
    %v206 = vpow.pop %v205
    %v207 = vmul.f32 %v133, 1.442695
    %v208 = vpow.pop %v207
    %v209 = vmul.f32 %v134, 1.442695
    %v210 = vpow.pop %v209
    %v211 = vmul.f32 %v135, 1.442695
    %v212 = vpow.pop %v211
    %v213 = vmul.f32 %v136, 1.442695
    %v214 = vpow.pop %v213
    %v215 = vmul.f32 %v137, 1.442695
    %v216 = vpow.pop %v215
    %v217 = vmul.f32 %v138, 1.442695
    %v218 = vpow.pop %v217
    %v219 = vmul.f32 %v139, 1.442695
    %v220 = vpow.pop %v219
    %v221 = vmul.f32 %v140, 1.442695
    %v222 = vpow.pop %v221
    %v223 = vmul.f32 %v141, 1.442695
    %v224 = vpow.pop %v223
    %v225 = vmul.f32 %v142, 1.442695
    %v226 = vpow.pop %v225
    %v227 = vmul.f32 %v143, 1.442695
    %v228 = vpow.pop %v227
    %v229 = vmul.f32 %v144, 1.442695
    %v230 = vpow.pop %v229
    %v231 = vmul.f32 %v145, 1.442695
    %v232 = vpow.pop %v231
    %v233 = vmul.f32 %v146, 1.442695
    %v234 = vpow.pop %v233
    %v235 = vmul.f32 %v147, 1.442695
    %v236 = vpow.pop %v235
    %v237 = vmul.f32 %v148, 1.442695
    %v238 = vpow.pop %v237
    %v239 = vmul.f32 %v149, 1.442695
    %v240 = vpow.pop %v239
    %v241 = vmul.f32 %v150, 1.442695
    %v242 = vpow.pop %v241
    %v243 = vmul.f32 %v151, 1.442695
    %v244 = vpow.pop %v243
    %v245 = vmul.f32 %v152, 1.442695
    %v246 = vpow.pop %v245
    %v247 = vmul.f32 %v153, 1.442695
    %v248 = vpow.pop %v247
    %v249 = vmul.f32 %v154, 1.442695
    %v250 = vpow.pop %v249
    %v251 = vmul.f32 %v155, 1.442695
    %v252 = vpow.pop %v251
    %v253 = vmul.f32 %v156, 1.442695
    %v254 = vpow.pop %v253
    %v255 = vmul.f32 %v157, 1.442695
    %v256 = vpow.pop %v255
    %v257 = vmul.f32 %v158, 1.442695
    %v258 = vpow.pop %v257
    %v259 = vmul.f32 %v159, 1.442695
    %v260 = vpow.pop %v259
    %v261 = vmul.f32 %v160, 1.442695
    %v262 = vpow.pop %v261
    %v263 = vmul.f32 %v161, 1.442695
    %v264 = vpow.pop %v263
    %v265 = vmul.f32 %v162, 1.442695
    %v266 = vpow.pop %v265
    %v267 = vmul.f32 %v163, 1.442695
    %v268 = vpow.pop %v267
    %v269 = vmul.f32 %v164, 1.442695
    %v270 = vpow.pop %v269
    %v271 = vmul.f32 %v165, 1.442695
    %v272 = vpow.pop %v271
    %v273 = vmul.f32 %v166, 1.442695
    %v274 = vpow.pop %v273
    %v275 = vmul.f32 %v167, 1.442695
    %v276 = vpow.pop %v275
    %v277 = vmul.f32 %v168, 1.442695
    %v278 = vpow.pop %v277
    %v279 = vmul.f32 %v169, 1.442695
    %v280 = vpow.pop %v279
    %v281 = vmul.f32 %v170, 1.442695
    %v282 = vpow.pop %v281
    %v283 = vmul.f32 %v171, 1.442695
    %v284 = vpow.pop %v283
    %v285 = vmul.f32 %v172, 1.442695
    %v286 = vpow.pop %v285
    %v287 = vmul.f32 %v173, 1.442695
    %v288 = vpow.pop %v287
    %v289 = vmul.f32 %v174, 1.442695
    %v290 = vpow.pop %v289
    %v291 = vmul.f32 %v175, 1.442695
    %v292 = vpow.pop %v291
    %v293 = vmul.f32 %v176, 1.442695
    %v294 = vpow.pop %v293
    %v295 = vmul.f32 %v177, 1.442695
    %v296 = vpow.pop %v295
    %v297 = vmul.f32 %v178, 1.442695
    %v298 = vpow.pop %v297
    %v299 = vmul.f32 %v179, 1.442695
    %v300 = vpow.pop %v299
    %v301 = vmul.f32 %v180, 1.442695
    %v302 = vpow.pop %v301
    %v303 = vmul.f32 %v181, 1.442695
    %v304 = vpow.pop %v303
    %v305 = vmul.f32 %v182, 1.442695
    %v306 = vpow.pop %v305
    %v307 = vmul.f32 %v183, 1.442695
    %v308 = vpow.pop %v307
    %v309 = vmul.f32 %v184, 1.442695
    %v310 = vpow.pop %v309
    %v311 = vmul.f32 %v185, 1.442695
    %v312 = vpow.pop %v311
    %v313 = vmul.f32 %v186, 1.442695
    %v314 = vpow.pop %v313
    %v315 = vadd.f32 %v188, 1.0
    %v316 = vadd.f32 %v190, 1.0
    %v317 = vadd.f32 %v192, 1.0
    %v318 = vadd.f32 %v194, 1.0
    %v319 = vadd.f32 %v196, 1.0
    %v320 = vadd.f32 %v198, 1.0
    %v321 = vadd.f32 %v200, 1.0
    %v322 = vadd.f32 %v202, 1.0
    %v323 = vadd.f32 %v204, 1.0
    %v324 = vadd.f32 %v206, 1.0
    %v325 = vadd.f32 %v208, 1.0
    %v326 = vadd.f32 %v210, 1.0
    %v327 = vadd.f32 %v212, 1.0
    %v328 = vadd.f32 %v214, 1.0
    %v329 = vadd.f32 %v216, 1.0
    %v330 = vadd.f32 %v218, 1.0
    %v331 = vadd.f32 %v220, 1.0
    %v332 = vadd.f32 %v222, 1.0
    %v333 = vadd.f32 %v224, 1.0
    %v334 = vadd.f32 %v226, 1.0
    %v335 = vadd.f32 %v228, 1.0
    %v336 = vadd.f32 %v230, 1.0
    %v337 = vadd.f32 %v232, 1.0
    %v338 = vadd.f32 %v234, 1.0
    %v339 = vadd.f32 %v236, 1.0
    %v340 = vadd.f32 %v238, 1.0
    %v341 = vadd.f32 %v240, 1.0
    %v342 = vadd.f32 %v242, 1.0
    %v343 = vadd.f32 %v244, 1.0
    %v344 = vadd.f32 %v246, 1.0
    %v345 = vadd.f32 %v248, 1.0
    %v346 = vadd.f32 %v250, 1.0
    %v347 = vadd.f32 %v252, 1.0
    %v348 = vadd.f32 %v254, 1.0
    %v349 = vadd.f32 %v256, 1.0
    %v350 = vadd.f32 %v258, 1.0
    %v351 = vadd.f32 %v260, 1.0
    %v352 = vadd.f32 %v262, 1.0
    %v353 = vadd.f32 %v264, 1.0
    %v354 = vadd.f32 %v266, 1.0
    %v355 = vadd.f32 %v268, 1.0
    %v356 = vadd.f32 %v270, 1.0
    %v357 = vadd.f32 %v272, 1.0
    %v358 = vadd.f32 %v274, 1.0
    %v359 = vadd.f32 %v276, 1.0
    %v360 = vadd.f32 %v278, 1.0
    %v361 = vadd.f32 %v280, 1.0
    %v362 = vadd.f32 %v282, 1.0
    %v363 = vadd.f32 %v284, 1.0
    %v364 = vadd.f32 %v286, 1.0
    %v365 = vadd.f32 %v288, 1.0
    %v366 = vadd.f32 %v290, 1.0
    %v367 = vadd.f32 %v292, 1.0
    %v368 = vadd.f32 %v294, 1.0
    %v369 = vadd.f32 %v296, 1.0
    %v370 = vadd.f32 %v298, 1.0
    %v371 = vadd.f32 %v300, 1.0
    %v372 = vadd.f32 %v302, 1.0
    %v373 = vadd.f32 %v304, 1.0
    %v374 = vadd.f32 %v306, 1.0
    %v375 = vadd.f32 %v308, 1.0
    %v376 = vadd.f32 %v310, 1.0
    %v377 = vadd.f32 %v312, 1.0
    %v378 = vadd.f32 %v314, 1.0
    %v379 = vrcp.pop %v315
    %v380 = vmul.f32 1.0, %v379
    %v381 = vrcp.pop %v316
    %v382 = vmul.f32 1.0, %v381
    %v383 = vrcp.pop %v317
    %v384 = vmul.f32 1.0, %v383
    %v385 = vrcp.pop %v318
    %v386 = vmul.f32 1.0, %v385
    %v387 = vrcp.pop %v319
    %v388 = vmul.f32 1.0, %v387
    %v389 = vrcp.pop %v320
    %v390 = vmul.f32 1.0, %v389
    %v391 = vrcp.pop %v321
    %v392 = vmul.f32 1.0, %v391
    %v393 = vrcp.pop %v322
    %v394 = vmul.f32 1.0, %v393
    %v395 = vrcp.pop %v323
    %v396 = vmul.f32 1.0, %v395
    %v397 = vrcp.pop %v324
    %v398 = vmul.f32 1.0, %v397
    %v399 = vrcp.pop %v325
    %v400 = vmul.f32 1.0, %v399
    %v401 = vrcp.pop %v326
    %v402 = vmul.f32 1.0, %v401
    %v403 = vrcp.pop %v327
    %v404 = vmul.f32 1.0, %v403
    %v405 = vrcp.pop %v328
    %v406 = vmul.f32 1.0, %v405
    %v407 = vrcp.pop %v329
    %v408 = vmul.f32 1.0, %v407
    %v409 = vrcp.pop %v330
    %v410 = vmul.f32 1.0, %v409
    %v411 = vrcp.pop %v331
    %v412 = vmul.f32 1.0, %v411
    %v413 = vrcp.pop %v332
    %v414 = vmul.f32 1.0, %v413
    %v415 = vrcp.pop %v333
    %v416 = vmul.f32 1.0, %v415
    %v417 = vrcp.pop %v334
    %v418 = vmul.f32 1.0, %v417
    %v419 = vrcp.pop %v335
    %v420 = vmul.f32 1.0, %v419
    %v421 = vrcp.pop %v336
    %v422 = vmul.f32 1.0, %v421
    %v423 = vrcp.pop %v337
    %v424 = vmul.f32 1.0, %v423
    %v425 = vrcp.pop %v338
    %v426 = vmul.f32 1.0, %v425
    %v427 = vrcp.pop %v339
    %v428 = vmul.f32 1.0, %v427
    %v429 = vrcp.pop %v340
    %v430 = vmul.f32 1.0, %v429
    %v431 = vrcp.pop %v341
    %v432 = vmul.f32 1.0, %v431
    %v433 = vrcp.pop %v342
    %v434 = vmul.f32 1.0, %v433
    %v435 = vrcp.pop %v343
    %v436 = vmul.f32 1.0, %v435
    %v437 = vrcp.pop %v344
    %v438 = vmul.f32 1.0, %v437
    %v439 = vrcp.pop %v345
    %v440 = vmul.f32 1.0, %v439
    %v441 = vrcp.pop %v346
    %v442 = vmul.f32 1.0, %v441
    %v443 = vrcp.pop %v347
    %v444 = vmul.f32 1.0, %v443
    %v445 = vrcp.pop %v348
    %v446 = vmul.f32 1.0, %v445
    %v447 = vrcp.pop %v349
    %v448 = vmul.f32 1.0, %v447
    %v449 = vrcp.pop %v350
    %v450 = vmul.f32 1.0, %v449
    %v451 = vrcp.pop %v351
    %v452 = vmul.f32 1.0, %v451
    %v453 = vrcp.pop %v352
    %v454 = vmul.f32 1.0, %v453
    %v455 = vrcp.pop %v353
    %v456 = vmul.f32 1.0, %v455
    %v457 = vrcp.pop %v354
    %v458 = vmul.f32 1.0, %v457
    %v459 = vrcp.pop %v355
    %v460 = vmul.f32 1.0, %v459
    %v461 = vrcp.pop %v356
    %v462 = vmul.f32 1.0, %v461
    %v463 = vrcp.pop %v357
    %v464 = vmul.f32 1.0, %v463
    %v465 = vrcp.pop %v358
    %v466 = vmul.f32 1.0, %v465
    %v467 = vrcp.pop %v359
    %v468 = vmul.f32 1.0, %v467
    %v469 = vrcp.pop %v360
    %v470 = vmul.f32 1.0, %v469
    %v471 = vrcp.pop %v361
    %v472 = vmul.f32 1.0, %v471
    %v473 = vrcp.pop %v362
    %v474 = vmul.f32 1.0, %v473
    %v475 = vrcp.pop %v363
    %v476 = vmul.f32 1.0, %v475
    %v477 = vrcp.pop %v364
    %v478 = vmul.f32 1.0, %v477
    %v479 = vrcp.pop %v365
    %v480 = vmul.f32 1.0, %v479
    %v481 = vrcp.pop %v366
    %v482 = vmul.f32 1.0, %v481
    %v483 = vrcp.pop %v367
    %v484 = vmul.f32 1.0, %v483
    %v485 = vrcp.pop %v368
    %v486 = vmul.f32 1.0, %v485
    %v487 = vrcp.pop %v369
    %v488 = vmul.f32 1.0, %v487
    %v489 = vrcp.pop %v370
    %v490 = vmul.f32 1.0, %v489
    %v491 = vrcp.pop %v371
    %v492 = vmul.f32 1.0, %v491
    %v493 = vrcp.pop %v372
    %v494 = vmul.f32 1.0, %v493
    %v495 = vrcp.pop %v373
    %v496 = vmul.f32 1.0, %v495
    %v497 = vrcp.pop %v374
    %v498 = vmul.f32 1.0, %v497
    %v499 = vrcp.pop %v375
    %v500 = vmul.f32 1.0, %v499
    %v501 = vrcp.pop %v376
    %v502 = vmul.f32 1.0, %v501
    %v503 = vrcp.pop %v377
    %v504 = vmul.f32 1.0, %v503
    %v505 = vrcp.pop %v378
    %v506 = vmul.f32 1.0, %v505
    %v507 = vlaneseq
    %v508 = vand.u32 %v507, 127
    %v509 = vadd.s32 %v508, 128
    %vm510 = vcmp.lt.s32.totalorder %v508, 255
    %vm511 = vcmp.lt.s32.totalorder %v509, 255
    %512 = vrot.lane.b32.xlu0 %v380, 127
    %v513 = vpop.permute.xlu0 %512
    %514 = vrot.lane.b32.xlu0 %v384, 127
    %v515 = vpop.permute.xlu0 %514
    %516 = vrot.lane.b32.xlu0 %v388, 127
    %v517 = vpop.permute.xlu0 %516
    %518 = vrot.lane.b32.xlu0 %v392, 127
    %v519 = vpop.permute.xlu0 %518
    %520 = vrot.lane.b32.xlu0 %v396, 127
    %v521 = vpop.permute.xlu0 %520
    %522 = vrot.lane.b32.xlu0 %v400, 127
    %v523 = vpop.permute.xlu0 %522
    %524 = vrot.lane.b32.xlu0 %v404, 127
    %v525 = vpop.permute.xlu0 %524
    %526 = vrot.lane.b32.xlu0 %v408, 127
    %v527 = vpop.permute.xlu0 %526
    %528 = vrot.lane.b32.xlu0 %v412, 127
    %v529 = vpop.permute.xlu0 %528
    %530 = vrot.lane.b32.xlu0 %v416, 127
    %v531 = vpop.permute.xlu0 %530
    %532 = vrot.lane.b32.xlu0 %v420, 127
    %v533 = vpop.permute.xlu0 %532
    %534 = vrot.lane.b32.xlu0 %v424, 127
    %v535 = vpop.permute.xlu0 %534
    %536 = vrot.lane.b32.xlu0 %v428, 127
    %v537 = vpop.permute.xlu0 %536
    %538 = vrot.lane.b32.xlu0 %v432, 127
    %v539 = vpop.permute.xlu0 %538
    %540 = vrot.lane.b32.xlu0 %v436, 127
    %v541 = vpop.permute.xlu0 %540
    %542 = vrot.lane.b32.xlu0 %v440, 127
    %v543 = vpop.permute.xlu0 %542
    %544 = vrot.lane.b32.xlu0 %v444, 127
    %v545 = vpop.permute.xlu0 %544
    %546 = vrot.lane.b32.xlu0 %v448, 127
    %v547 = vpop.permute.xlu0 %546
    %548 = vrot.lane.b32.xlu0 %v452, 127
    %v549 = vpop.permute.xlu0 %548
    %550 = vrot.lane.b32.xlu0 %v456, 127
    %v551 = vpop.permute.xlu0 %550
    %552 = vrot.lane.b32.xlu0 %v460, 127
    %v553 = vpop.permute.xlu0 %552
    %554 = vrot.lane.b32.xlu0 %v464, 127
    %v555 = vpop.permute.xlu0 %554
    %556 = vrot.lane.b32.xlu0 %v468, 127
    %v557 = vpop.permute.xlu0 %556
    %558 = vrot.lane.b32.xlu0 %v472, 127
    %v559 = vpop.permute.xlu0 %558
    %560 = vrot.lane.b32.xlu0 %v476, 127
    %v561 = vpop.permute.xlu0 %560
    %562 = vrot.lane.b32.xlu0 %v480, 127
    %v563 = vpop.permute.xlu0 %562
    %564 = vrot.lane.b32.xlu0 %v484, 127
    %v565 = vpop.permute.xlu0 %564
    %566 = vrot.lane.b32.xlu0 %v488, 127
    %v567 = vpop.permute.xlu0 %566
    %568 = vrot.lane.b32.xlu0 %v492, 127
    %v569 = vpop.permute.xlu0 %568
    %570 = vrot.lane.b32.xlu0 %v496, 127
    %v571 = vpop.permute.xlu0 %570
    %572 = vrot.lane.b32.xlu0 %v500, 127
    %v573 = vpop.permute.xlu0 %572
    %574 = vrot.lane.b32.xlu0 %v504, 127
    %v575 = vpop.permute.xlu0 %574
    %576 = vrot.lane.b32.xlu0 %v382, 127
    %v577 = vpop.permute.xlu0 %576
    %578 = vrot.lane.b32.xlu0 %v386, 127
    %v579 = vpop.permute.xlu0 %578
    %580 = vrot.lane.b32.xlu0 %v390, 127
    %v581 = vpop.permute.xlu0 %580
    %582 = vrot.lane.b32.xlu0 %v394, 127
    %v583 = vpop.permute.xlu0 %582
    %584 = vrot.lane.b32.xlu0 %v398, 127
    %v585 = vpop.permute.xlu0 %584
    %586 = vrot.lane.b32.xlu0 %v402, 127
    %v587 = vpop.permute.xlu0 %586
    %588 = vrot.lane.b32.xlu0 %v406, 127
    %v589 = vpop.permute.xlu0 %588
    %590 = vrot.lane.b32.xlu0 %v410, 127
    %v591 = vpop.permute.xlu0 %590
    %592 = vrot.lane.b32.xlu0 %v414, 127
    %v593 = vpop.permute.xlu0 %592
    %594 = vrot.lane.b32.xlu0 %v418, 127
    %v595 = vpop.permute.xlu0 %594
    %596 = vrot.lane.b32.xlu0 %v422, 127
    %v597 = vpop.permute.xlu0 %596
    %598 = vrot.lane.b32.xlu0 %v426, 127
    %v599 = vpop.permute.xlu0 %598
    %600 = vrot.lane.b32.xlu0 %v430, 127
    %v601 = vpop.permute.xlu0 %600
    %602 = vrot.lane.b32.xlu0 %v434, 127
    %v603 = vpop.permute.xlu0 %602
    %604 = vrot.lane.b32.xlu0 %v438, 127
    %v605 = vpop.permute.xlu0 %604
    %606 = vrot.lane.b32.xlu0 %v442, 127
    %v607 = vpop.permute.xlu0 %606
    %608 = vrot.lane.b32.xlu0 %v446, 127
    %v609 = vpop.permute.xlu0 %608
    %610 = vrot.lane.b32.xlu0 %v450, 127
    %v611 = vpop.permute.xlu0 %610
    %612 = vrot.lane.b32.xlu0 %v454, 127
    %v613 = vpop.permute.xlu0 %612
    %614 = vrot.lane.b32.xlu0 %v458, 127
    %v615 = vpop.permute.xlu0 %614
    %616 = vrot.lane.b32.xlu0 %v462, 127
    %v617 = vpop.permute.xlu0 %616
    %618 = vrot.lane.b32.xlu0 %v466, 127
    %v619 = vpop.permute.xlu0 %618
    %620 = vrot.lane.b32.xlu0 %v470, 127
    %v621 = vpop.permute.xlu0 %620
    %622 = vrot.lane.b32.xlu0 %v474, 127
    %v623 = vpop.permute.xlu0 %622
    %624 = vrot.lane.b32.xlu0 %v478, 127
    %v625 = vpop.permute.xlu0 %624
    %626 = vrot.lane.b32.xlu0 %v482, 127
    %v627 = vpop.permute.xlu0 %626
    %628 = vrot.lane.b32.xlu0 %v486, 127
    %v629 = vpop.permute.xlu0 %628
    %630 = vrot.lane.b32.xlu0 %v490, 127
    %v631 = vpop.permute.xlu0 %630
    %632 = vrot.lane.b32.xlu0 %v494, 127
    %v633 = vpop.permute.xlu0 %632
    %634 = vrot.lane.b32.xlu0 %v498, 127
    %v635 = vpop.permute.xlu0 %634
    %636 = vrot.lane.b32.xlu0 %v502, 127
    %v637 = vpop.permute.xlu0 %636
    %638 = vrot.lane.b32.xlu0 %v506, 127
    %v639 = vpop.permute.xlu0 %638
    %vm640 = vcmp.lt.s32.totalorder %v508, 127
    %v641 = vsel %vm640, %v513, %v577
    %v642 = vsel %vm640, %v515, %v579
    %v643 = vsel %vm640, %v517, %v581
    %v644 = vsel %vm640, %v519, %v583
    %v645 = vsel %vm640, %v521, %v585
    %v646 = vsel %vm640, %v523, %v587
    %v647 = vsel %vm640, %v525, %v589
    %v648 = vsel %vm640, %v527, %v591
    %v649 = vsel %vm640, %v529, %v593
    %v650 = vsel %vm640, %v531, %v595
    %v651 = vsel %vm640, %v533, %v597
    %v652 = vsel %vm640, %v535, %v599
    %v653 = vsel %vm640, %v537, %v601
    %v654 = vsel %vm640, %v539, %v603
    %v655 = vsel %vm640, %v541, %v605
    %v656 = vsel %vm640, %v543, %v607
    %v657 = vsel %vm640, %v545, %v609
    %v658 = vsel %vm640, %v547, %v611
    %v659 = vsel %vm640, %v549, %v613
    %v660 = vsel %vm640, %v551, %v615
    %v661 = vsel %vm640, %v553, %v617
    %v662 = vsel %vm640, %v555, %v619
    %v663 = vsel %vm640, %v557, %v621
    %v664 = vsel %vm640, %v559, %v623
    %v665 = vsel %vm640, %v561, %v625
    %v666 = vsel %vm640, %v563, %v627
    %v667 = vsel %vm640, %v565, %v629
    %v668 = vsel %vm640, %v567, %v631
    %v669 = vsel %vm640, %v569, %v633
    %v670 = vsel %vm640, %v571, %v635
    %v671 = vsel %vm640, %v573, %v637
    %v672 = vsel %vm640, %v575, %v639
    %v673 = vsel %vm640, %v577, %v513
    %v674 = vsel %vm640, %v579, %v515
    %v675 = vsel %vm640, %v581, %v517
    %v676 = vsel %vm640, %v583, %v519
    %v677 = vsel %vm640, %v585, %v521
    %v678 = vsel %vm640, %v587, %v523
    %v679 = vsel %vm640, %v589, %v525
    %v680 = vsel %vm640, %v591, %v527
    %v681 = vsel %vm640, %v593, %v529
    %v682 = vsel %vm640, %v595, %v531
    %v683 = vsel %vm640, %v597, %v533
    %v684 = vsel %vm640, %v599, %v535
    %v685 = vsel %vm640, %v601, %v537
    %v686 = vsel %vm640, %v603, %v539
    %v687 = vsel %vm640, %v605, %v541
    %v688 = vsel %vm640, %v607, %v543
    %v689 = vsel %vm640, %v609, %v545
    %v690 = vsel %vm640, %v611, %v547
    %v691 = vsel %vm640, %v613, %v549
    %v692 = vsel %vm640, %v615, %v551
    %v693 = vsel %vm640, %v617, %v553
    %v694 = vsel %vm640, %v619, %v555
    %v695 = vsel %vm640, %v621, %v557
    %v696 = vsel %vm640, %v623, %v559
    %v697 = vsel %vm640, %v625, %v561
    %v698 = vsel %vm640, %v627, %v563
    %v699 = vsel %vm640, %v629, %v565
    %v700 = vsel %vm640, %v631, %v567
    %v701 = vsel %vm640, %v633, %v569
    %v702 = vsel %vm640, %v635, %v571
    %v703 = vsel %vm640, %v637, %v573
    %v704 = vsel %vm640, %v639, %v575
    %v705 = vsel %vm510, %v641, 0.0
    %v706 = vsel %vm511, %v673, 0.0
    %v707 = vsel %vm510, %v642, 0.0
    %v708 = vsel %vm511, %v674, 0.0
    %v709 = vsel %vm510, %v643, 0.0
    %v710 = vsel %vm511, %v675, 0.0
    %v711 = vsel %vm510, %v644, 0.0
    %v712 = vsel %vm511, %v676, 0.0
    %v713 = vsel %vm510, %v645, 0.0
    %v714 = vsel %vm511, %v677, 0.0
    %v715 = vsel %vm510, %v646, 0.0
    %v716 = vsel %vm511, %v678, 0.0
    %v717 = vsel %vm510, %v647, 0.0
    %v718 = vsel %vm511, %v679, 0.0
    %v719 = vsel %vm510, %v648, 0.0
    %v720 = vsel %vm511, %v680, 0.0
    %v721 = vsel %vm510, %v649, 0.0
    %v722 = vsel %vm511, %v681, 0.0
    %v723 = vsel %vm510, %v650, 0.0
    %v724 = vsel %vm511, %v682, 0.0
    %v725 = vsel %vm510, %v651, 0.0
    %v726 = vsel %vm511, %v683, 0.0
    %v727 = vsel %vm510, %v652, 0.0
    %v728 = vsel %vm511, %v684, 0.0
    %v729 = vsel %vm510, %v653, 0.0
    %v730 = vsel %vm511, %v685, 0.0
    %v731 = vsel %vm510, %v654, 0.0
    %v732 = vsel %vm511, %v686, 0.0
    %v733 = vsel %vm510, %v655, 0.0
    %v734 = vsel %vm511, %v687, 0.0
    %v735 = vsel %vm510, %v656, 0.0
    %v736 = vsel %vm511, %v688, 0.0
    %v737 = vsel %vm510, %v657, 0.0
    %v738 = vsel %vm511, %v689, 0.0
    %v739 = vsel %vm510, %v658, 0.0
    %v740 = vsel %vm511, %v690, 0.0
    %v741 = vsel %vm510, %v659, 0.0
    %v742 = vsel %vm511, %v691, 0.0
    %v743 = vsel %vm510, %v660, 0.0
    %v744 = vsel %vm511, %v692, 0.0
    %v745 = vsel %vm510, %v661, 0.0
    %v746 = vsel %vm511, %v693, 0.0
    %v747 = vsel %vm510, %v662, 0.0
    %v748 = vsel %vm511, %v694, 0.0
    %v749 = vsel %vm510, %v663, 0.0
    %v750 = vsel %vm511, %v695, 0.0
    %v751 = vsel %vm510, %v664, 0.0
    %v752 = vsel %vm511, %v696, 0.0
    %v753 = vsel %vm510, %v665, 0.0
    %v754 = vsel %vm511, %v697, 0.0
    %v755 = vsel %vm510, %v666, 0.0
    %v756 = vsel %vm511, %v698, 0.0
    %v757 = vsel %vm510, %v667, 0.0
    %v758 = vsel %vm511, %v699, 0.0
    %v759 = vsel %vm510, %v668, 0.0
    %v760 = vsel %vm511, %v700, 0.0
    %v761 = vsel %vm510, %v669, 0.0
    %v762 = vsel %vm511, %v701, 0.0
    %v763 = vsel %vm510, %v670, 0.0
    %v764 = vsel %vm511, %v702, 0.0
    %v765 = vsel %vm510, %v671, 0.0
    %v766 = vsel %vm511, %v703, 0.0
    %v767 = vsel %vm510, %v672, 0.0
    %v768 = vsel %vm511, %v704, 0.0
    %v769 = vmax.f32 %v380, %v705
    %v770 = vmax.f32 %v382, %v706
    %v771 = vmax.f32 %v384, %v707
    %v772 = vmax.f32 %v386, %v708
    %v773 = vmax.f32 %v388, %v709
    %v774 = vmax.f32 %v390, %v710
    %v775 = vmax.f32 %v392, %v711
    %v776 = vmax.f32 %v394, %v712
    %v777 = vmax.f32 %v396, %v713
    %v778 = vmax.f32 %v398, %v714
    %v779 = vmax.f32 %v400, %v715
    %v780 = vmax.f32 %v402, %v716
    %v781 = vmax.f32 %v404, %v717
    %v782 = vmax.f32 %v406, %v718
    %v783 = vmax.f32 %v408, %v719
    %v784 = vmax.f32 %v410, %v720
    %v785 = vmax.f32 %v412, %v721
    %v786 = vmax.f32 %v414, %v722
    %v787 = vmax.f32 %v416, %v723
    %v788 = vmax.f32 %v418, %v724
    %v789 = vmax.f32 %v420, %v725
    %v790 = vmax.f32 %v422, %v726
    %v791 = vmax.f32 %v424, %v727
    %v792 = vmax.f32 %v426, %v728
    %v793 = vmax.f32 %v428, %v729
    %v794 = vmax.f32 %v430, %v730
    %v795 = vmax.f32 %v432, %v731
    %v796 = vmax.f32 %v434, %v732
    %v797 = vmax.f32 %v436, %v733
    %v798 = vmax.f32 %v438, %v734
    %v799 = vmax.f32 %v440, %v735
    %v800 = vmax.f32 %v442, %v736
    %v801 = vmax.f32 %v444, %v737
    %v802 = vmax.f32 %v446, %v738
    %v803 = vmax.f32 %v448, %v739
    %v804 = vmax.f32 %v450, %v740
    %v805 = vmax.f32 %v452, %v741
    %v806 = vmax.f32 %v454, %v742
    %v807 = vmax.f32 %v456, %v743
    %v808 = vmax.f32 %v458, %v744
    %v809 = vmax.f32 %v460, %v745
    %v810 = vmax.f32 %v462, %v746
    %v811 = vmax.f32 %v464, %v747
    %v812 = vmax.f32 %v466, %v748
    %v813 = vmax.f32 %v468, %v749
    %v814 = vmax.f32 %v470, %v750
    %v815 = vmax.f32 %v472, %v751
    %v816 = vmax.f32 %v474, %v752
    %v817 = vmax.f32 %v476, %v753
    %v818 = vmax.f32 %v478, %v754
    %v819 = vmax.f32 %v480, %v755
    %v820 = vmax.f32 %v482, %v756
    %v821 = vmax.f32 %v484, %v757
    %v822 = vmax.f32 %v486, %v758
    %v823 = vmax.f32 %v488, %v759
    %v824 = vmax.f32 %v490, %v760
    %v825 = vmax.f32 %v492, %v761
    %v826 = vmax.f32 %v494, %v762
    %v827 = vmax.f32 %v496, %v763
    %v828 = vmax.f32 %v498, %v764
    %v829 = vmax.f32 %v500, %v765
    %v830 = vmax.f32 %v502, %v766
    %v831 = vmax.f32 %v504, %v767
    %v832 = vmax.f32 %v506, %v768
    %vm833 = vcmp.ge.s32.totalorder %v508, 1
    %vm834 = vcmp.ge.s32.totalorder %v509, 1
    %835 = vrot.lane.b32.xlu0 %v380, 1
    %v836 = vpop.permute.xlu0 %835
    %837 = vrot.lane.b32.xlu0 %v384, 1
    %v838 = vpop.permute.xlu0 %837
    %839 = vrot.lane.b32.xlu0 %v388, 1
    %v840 = vpop.permute.xlu0 %839
    %841 = vrot.lane.b32.xlu0 %v392, 1
    %v842 = vpop.permute.xlu0 %841
    %843 = vrot.lane.b32.xlu0 %v396, 1
    %v844 = vpop.permute.xlu0 %843
    %845 = vrot.lane.b32.xlu0 %v400, 1
    %v846 = vpop.permute.xlu0 %845
    %847 = vrot.lane.b32.xlu0 %v404, 1
    %v848 = vpop.permute.xlu0 %847
    %849 = vrot.lane.b32.xlu0 %v408, 1
    %v850 = vpop.permute.xlu0 %849
    %851 = vrot.lane.b32.xlu0 %v412, 1
    %v852 = vpop.permute.xlu0 %851
    %853 = vrot.lane.b32.xlu0 %v416, 1
    %v854 = vpop.permute.xlu0 %853
    %855 = vrot.lane.b32.xlu0 %v420, 1
    %v856 = vpop.permute.xlu0 %855
    %857 = vrot.lane.b32.xlu0 %v424, 1
    %v858 = vpop.permute.xlu0 %857
    %859 = vrot.lane.b32.xlu0 %v428, 1
    %v860 = vpop.permute.xlu0 %859
    %861 = vrot.lane.b32.xlu0 %v432, 1
    %v862 = vpop.permute.xlu0 %861
    %863 = vrot.lane.b32.xlu0 %v436, 1
    %v864 = vpop.permute.xlu0 %863
    %865 = vrot.lane.b32.xlu0 %v440, 1
    %v866 = vpop.permute.xlu0 %865
    %867 = vrot.lane.b32.xlu0 %v444, 1
    %v868 = vpop.permute.xlu0 %867
    %869 = vrot.lane.b32.xlu0 %v448, 1
    %v870 = vpop.permute.xlu0 %869
    %871 = vrot.lane.b32.xlu0 %v452, 1
    %v872 = vpop.permute.xlu0 %871
    %873 = vrot.lane.b32.xlu0 %v456, 1
    %v874 = vpop.permute.xlu0 %873
    %875 = vrot.lane.b32.xlu0 %v460, 1
    %v876 = vpop.permute.xlu0 %875
    %877 = vrot.lane.b32.xlu0 %v464, 1
    %v878 = vpop.permute.xlu0 %877
    %879 = vrot.lane.b32.xlu0 %v468, 1
    %v880 = vpop.permute.xlu0 %879
    %881 = vrot.lane.b32.xlu0 %v472, 1
    %v882 = vpop.permute.xlu0 %881
    %883 = vrot.lane.b32.xlu0 %v476, 1
    %v884 = vpop.permute.xlu0 %883
    %885 = vrot.lane.b32.xlu0 %v480, 1
    %v886 = vpop.permute.xlu0 %885
    %887 = vrot.lane.b32.xlu0 %v484, 1
    %v888 = vpop.permute.xlu0 %887
    %889 = vrot.lane.b32.xlu0 %v488, 1
    %v890 = vpop.permute.xlu0 %889
    %891 = vrot.lane.b32.xlu0 %v492, 1
    %v892 = vpop.permute.xlu0 %891
    %893 = vrot.lane.b32.xlu0 %v496, 1
    %v894 = vpop.permute.xlu0 %893
    %895 = vrot.lane.b32.xlu0 %v500, 1
    %v896 = vpop.permute.xlu0 %895
    %897 = vrot.lane.b32.xlu0 %v504, 1
    %v898 = vpop.permute.xlu0 %897
    %899 = vrot.lane.b32.xlu0 %v382, 1
    %v900 = vpop.permute.xlu0 %899
    %901 = vrot.lane.b32.xlu0 %v386, 1
    %v902 = vpop.permute.xlu0 %901
    %903 = vrot.lane.b32.xlu0 %v390, 1
    %v904 = vpop.permute.xlu0 %903
    %905 = vrot.lane.b32.xlu0 %v394, 1
    %v906 = vpop.permute.xlu0 %905
    %907 = vrot.lane.b32.xlu0 %v398, 1
    %v908 = vpop.permute.xlu0 %907
    %909 = vrot.lane.b32.xlu0 %v402, 1
    %v910 = vpop.permute.xlu0 %909
    %911 = vrot.lane.b32.xlu0 %v406, 1
    %v912 = vpop.permute.xlu0 %911
    %913 = vrot.lane.b32.xlu0 %v410, 1
    %v914 = vpop.permute.xlu0 %913
    %915 = vrot.lane.b32.xlu0 %v414, 1
    %v916 = vpop.permute.xlu0 %915
    %917 = vrot.lane.b32.xlu0 %v418, 1
    %v918 = vpop.permute.xlu0 %917
    %919 = vrot.lane.b32.xlu0 %v422, 1
    %v920 = vpop.permute.xlu0 %919
    %921 = vrot.lane.b32.xlu0 %v426, 1
    %v922 = vpop.permute.xlu0 %921
    %923 = vrot.lane.b32.xlu0 %v430, 1
    %v924 = vpop.permute.xlu0 %923
    %925 = vrot.lane.b32.xlu0 %v434, 1
    %v926 = vpop.permute.xlu0 %925
    %927 = vrot.lane.b32.xlu0 %v438, 1
    %v928 = vpop.permute.xlu0 %927
    %929 = vrot.lane.b32.xlu0 %v442, 1
    %v930 = vpop.permute.xlu0 %929
    %931 = vrot.lane.b32.xlu0 %v446, 1
    %v932 = vpop.permute.xlu0 %931
    %933 = vrot.lane.b32.xlu0 %v450, 1
    %v934 = vpop.permute.xlu0 %933
    %935 = vrot.lane.b32.xlu0 %v454, 1
    %v936 = vpop.permute.xlu0 %935
    %937 = vrot.lane.b32.xlu0 %v458, 1
    %v938 = vpop.permute.xlu0 %937
    %939 = vrot.lane.b32.xlu0 %v462, 1
    %v940 = vpop.permute.xlu0 %939
    %941 = vrot.lane.b32.xlu0 %v466, 1
    %v942 = vpop.permute.xlu0 %941
    %943 = vrot.lane.b32.xlu0 %v470, 1
    %v944 = vpop.permute.xlu0 %943
    %945 = vrot.lane.b32.xlu0 %v474, 1
    %v946 = vpop.permute.xlu0 %945
    %947 = vrot.lane.b32.xlu0 %v478, 1
    %v948 = vpop.permute.xlu0 %947
    %949 = vrot.lane.b32.xlu0 %v482, 1
    %v950 = vpop.permute.xlu0 %949
    %951 = vrot.lane.b32.xlu0 %v486, 1
    %v952 = vpop.permute.xlu0 %951
    %953 = vrot.lane.b32.xlu0 %v490, 1
    %v954 = vpop.permute.xlu0 %953
    %955 = vrot.lane.b32.xlu0 %v494, 1
    %v956 = vpop.permute.xlu0 %955
    %957 = vrot.lane.b32.xlu0 %v498, 1
    %v958 = vpop.permute.xlu0 %957
    %959 = vrot.lane.b32.xlu0 %v502, 1
    %v960 = vpop.permute.xlu0 %959
    %961 = vrot.lane.b32.xlu0 %v506, 1
    %v962 = vpop.permute.xlu0 %961
    %vm963 = vcmp.lt.s32.totalorder %v508, 1
    %v964 = vsel %vm963, %v836, %v900
    %v965 = vsel %vm963, %v838, %v902
    %v966 = vsel %vm963, %v840, %v904
    %v967 = vsel %vm963, %v842, %v906
    %v968 = vsel %vm963, %v844, %v908
    %v969 = vsel %vm963, %v846, %v910
    %v970 = vsel %vm963, %v848, %v912
    %v971 = vsel %vm963, %v850, %v914
    %v972 = vsel %vm963, %v852, %v916
    %v973 = vsel %vm963, %v854, %v918
    %v974 = vsel %vm963, %v856, %v920
    %v975 = vsel %vm963, %v858, %v922
    %v976 = vsel %vm963, %v860, %v924
    %v977 = vsel %vm963, %v862, %v926
    %v978 = vsel %vm963, %v864, %v928
    %v979 = vsel %vm963, %v866, %v930
    %v980 = vsel %vm963, %v868, %v932
    %v981 = vsel %vm963, %v870, %v934
    %v982 = vsel %vm963, %v872, %v936
    %v983 = vsel %vm963, %v874, %v938
    %v984 = vsel %vm963, %v876, %v940
    %v985 = vsel %vm963, %v878, %v942
    %v986 = vsel %vm963, %v880, %v944
    %v987 = vsel %vm963, %v882, %v946
    %v988 = vsel %vm963, %v884, %v948
    %v989 = vsel %vm963, %v886, %v950
    %v990 = vsel %vm963, %v888, %v952
    %v991 = vsel %vm963, %v890, %v954
    %v992 = vsel %vm963, %v892, %v956
    %v993 = vsel %vm963, %v894, %v958
    %v994 = vsel %vm963, %v896, %v960
    %v995 = vsel %vm963, %v898, %v962
    %v996 = vsel %vm963, %v900, %v836
    %v997 = vsel %vm963, %v902, %v838
    %v998 = vsel %vm963, %v904, %v840
    %v999 = vsel %vm963, %v906, %v842
    %v1000 = vsel %vm963, %v908, %v844
    %v1001 = vsel %vm963, %v910, %v846
    %v1002 = vsel %vm963, %v912, %v848
    %v1003 = vsel %vm963, %v914, %v850
    %v1004 = vsel %vm963, %v916, %v852
    %v1005 = vsel %vm963, %v918, %v854
    %v1006 = vsel %vm963, %v920, %v856
    %v1007 = vsel %vm963, %v922, %v858
    %v1008 = vsel %vm963, %v924, %v860
    %v1009 = vsel %vm963, %v926, %v862
    %v1010 = vsel %vm963, %v928, %v864
    %v1011 = vsel %vm963, %v930, %v866
    %v1012 = vsel %vm963, %v932, %v868
    %v1013 = vsel %vm963, %v934, %v870
    %v1014 = vsel %vm963, %v936, %v872
    %v1015 = vsel %vm963, %v938, %v874
    %v1016 = vsel %vm963, %v940, %v876
    %v1017 = vsel %vm963, %v942, %v878
    %v1018 = vsel %vm963, %v944, %v880
    %v1019 = vsel %vm963, %v946, %v882
    %v1020 = vsel %vm963, %v948, %v884
    %v1021 = vsel %vm963, %v950, %v886
    %v1022 = vsel %vm963, %v952, %v888
    %v1023 = vsel %vm963, %v954, %v890
    %v1024 = vsel %vm963, %v956, %v892
    %v1025 = vsel %vm963, %v958, %v894
    %v1026 = vsel %vm963, %v960, %v896
    %v1027 = vsel %vm963, %v962, %v898
    %v1028 = vsel %vm833, %v996, 0.0
    %v1029 = vsel %vm834, %v964, 0.0
    %v1030 = vsel %vm833, %v997, 0.0
    %v1031 = vsel %vm834, %v965, 0.0
    %v1032 = vsel %vm833, %v998, 0.0
    %v1033 = vsel %vm834, %v966, 0.0
    %v1034 = vsel %vm833, %v999, 0.0
    %v1035 = vsel %vm834, %v967, 0.0
    %v1036 = vsel %vm833, %v1000, 0.0
    %v1037 = vsel %vm834, %v968, 0.0
    %v1038 = vsel %vm833, %v1001, 0.0
    %v1039 = vsel %vm834, %v969, 0.0
    %v1040 = vsel %vm833, %v1002, 0.0
    %v1041 = vsel %vm834, %v970, 0.0
    %v1042 = vsel %vm833, %v1003, 0.0
    %v1043 = vsel %vm834, %v971, 0.0
    %v1044 = vsel %vm833, %v1004, 0.0
    %v1045 = vsel %vm834, %v972, 0.0
    %v1046 = vsel %vm833, %v1005, 0.0
    %v1047 = vsel %vm834, %v973, 0.0
    %v1048 = vsel %vm833, %v1006, 0.0
    %v1049 = vsel %vm834, %v974, 0.0
    %v1050 = vsel %vm833, %v1007, 0.0
    %v1051 = vsel %vm834, %v975, 0.0
    %v1052 = vsel %vm833, %v1008, 0.0
    %v1053 = vsel %vm834, %v976, 0.0
    %v1054 = vsel %vm833, %v1009, 0.0
    %v1055 = vsel %vm834, %v977, 0.0
    %v1056 = vsel %vm833, %v1010, 0.0
    %v1057 = vsel %vm834, %v978, 0.0
    %v1058 = vsel %vm833, %v1011, 0.0
    %v1059 = vsel %vm834, %v979, 0.0
    %v1060 = vsel %vm833, %v1012, 0.0
    %v1061 = vsel %vm834, %v980, 0.0
    %v1062 = vsel %vm833, %v1013, 0.0
    %v1063 = vsel %vm834, %v981, 0.0
    %v1064 = vsel %vm833, %v1014, 0.0
    %v1065 = vsel %vm834, %v982, 0.0
    %v1066 = vsel %vm833, %v1015, 0.0
    %v1067 = vsel %vm834, %v983, 0.0
    %v1068 = vsel %vm833, %v1016, 0.0
    %v1069 = vsel %vm834, %v984, 0.0
    %v1070 = vsel %vm833, %v1017, 0.0
    %v1071 = vsel %vm834, %v985, 0.0
    %v1072 = vsel %vm833, %v1018, 0.0
    %v1073 = vsel %vm834, %v986, 0.0
    %v1074 = vsel %vm833, %v1019, 0.0
    %v1075 = vsel %vm834, %v987, 0.0
    %v1076 = vsel %vm833, %v1020, 0.0
    %v1077 = vsel %vm834, %v988, 0.0
    %v1078 = vsel %vm833, %v1021, 0.0
    %v1079 = vsel %vm834, %v989, 0.0
    %v1080 = vsel %vm833, %v1022, 0.0
    %v1081 = vsel %vm834, %v990, 0.0
    %v1082 = vsel %vm833, %v1023, 0.0
    %v1083 = vsel %vm834, %v991, 0.0
    %v1084 = vsel %vm833, %v1024, 0.0
    %v1085 = vsel %vm834, %v992, 0.0
    %v1086 = vsel %vm833, %v1025, 0.0
    %v1087 = vsel %vm834, %v993, 0.0
    %v1088 = vsel %vm833, %v1026, 0.0
    %v1089 = vsel %vm834, %v994, 0.0
    %v1090 = vsel %vm833, %v1027, 0.0
    %v1091 = vsel %vm834, %v995, 0.0
    %v1092 = vmax.f32 %v380, %v1028
    %v1093 = vmax.f32 %v382, %v1029
    %v1094 = vmax.f32 %v384, %v1030
    %v1095 = vmax.f32 %v386, %v1031
    %v1096 = vmax.f32 %v388, %v1032
    %v1097 = vmax.f32 %v390, %v1033
    %v1098 = vmax.f32 %v392, %v1034
    %v1099 = vmax.f32 %v394, %v1035
    %v1100 = vmax.f32 %v396, %v1036
    %v1101 = vmax.f32 %v398, %v1037
    %v1102 = vmax.f32 %v400, %v1038
    %v1103 = vmax.f32 %v402, %v1039
    %v1104 = vmax.f32 %v404, %v1040
    %v1105 = vmax.f32 %v406, %v1041
    %v1106 = vmax.f32 %v408, %v1042
    %v1107 = vmax.f32 %v410, %v1043
    %v1108 = vmax.f32 %v412, %v1044
    %v1109 = vmax.f32 %v414, %v1045
    %v1110 = vmax.f32 %v416, %v1046
    %v1111 = vmax.f32 %v418, %v1047
    %v1112 = vmax.f32 %v420, %v1048
    %v1113 = vmax.f32 %v422, %v1049
    %v1114 = vmax.f32 %v424, %v1050
    %v1115 = vmax.f32 %v426, %v1051
    %v1116 = vmax.f32 %v428, %v1052
    %v1117 = vmax.f32 %v430, %v1053
    %v1118 = vmax.f32 %v432, %v1054
    %v1119 = vmax.f32 %v434, %v1055
    %v1120 = vmax.f32 %v436, %v1056
    %v1121 = vmax.f32 %v438, %v1057
    %v1122 = vmax.f32 %v440, %v1058
    %v1123 = vmax.f32 %v442, %v1059
    %v1124 = vmax.f32 %v444, %v1060
    %v1125 = vmax.f32 %v446, %v1061
    %v1126 = vmax.f32 %v448, %v1062
    %v1127 = vmax.f32 %v450, %v1063
    %v1128 = vmax.f32 %v452, %v1064
    %v1129 = vmax.f32 %v454, %v1065
    %v1130 = vmax.f32 %v456, %v1066
    %v1131 = vmax.f32 %v458, %v1067
    %v1132 = vmax.f32 %v460, %v1068
    %v1133 = vmax.f32 %v462, %v1069
    %v1134 = vmax.f32 %v464, %v1070
    %v1135 = vmax.f32 %v466, %v1071
    %v1136 = vmax.f32 %v468, %v1072
    %v1137 = vmax.f32 %v470, %v1073
    %v1138 = vmax.f32 %v472, %v1074
    %v1139 = vmax.f32 %v474, %v1075
    %v1140 = vmax.f32 %v476, %v1076
    %v1141 = vmax.f32 %v478, %v1077
    %v1142 = vmax.f32 %v480, %v1078
    %v1143 = vmax.f32 %v482, %v1079
    %v1144 = vmax.f32 %v484, %v1080
    %v1145 = vmax.f32 %v486, %v1081
    %v1146 = vmax.f32 %v488, %v1082
    %v1147 = vmax.f32 %v490, %v1083
    %v1148 = vmax.f32 %v492, %v1084
    %v1149 = vmax.f32 %v494, %v1085
    %v1150 = vmax.f32 %v496, %v1086
    %v1151 = vmax.f32 %v498, %v1087
    %v1152 = vmax.f32 %v500, %v1088
    %v1153 = vmax.f32 %v502, %v1089
    %v1154 = vmax.f32 %v504, %v1090
    %v1155 = vmax.f32 %v506, %v1091
    %vm1156 = vcmp.lt.s32.totalorder %v508, 254
    %vm1157 = vcmp.lt.s32.totalorder %v509, 254
    %1158 = vrot.lane.b32.xlu0 %v769, 126
    %v1159 = vpop.permute.xlu0 %1158
    %1160 = vrot.lane.b32.xlu0 %v771, 126
    %v1161 = vpop.permute.xlu0 %1160
    %1162 = vrot.lane.b32.xlu0 %v773, 126
    %v1163 = vpop.permute.xlu0 %1162
    %1164 = vrot.lane.b32.xlu0 %v775, 126
    %v1165 = vpop.permute.xlu0 %1164
    %1166 = vrot.lane.b32.xlu0 %v777, 126
    %v1167 = vpop.permute.xlu0 %1166
    %1168 = vrot.lane.b32.xlu0 %v779, 126
    %v1169 = vpop.permute.xlu0 %1168
    %1170 = vrot.lane.b32.xlu0 %v781, 126
    %v1171 = vpop.permute.xlu0 %1170
    %1172 = vrot.lane.b32.xlu0 %v783, 126
    %v1173 = vpop.permute.xlu0 %1172
    %1174 = vrot.lane.b32.xlu0 %v785, 126
    %v1175 = vpop.permute.xlu0 %1174
    %1176 = vrot.lane.b32.xlu0 %v787, 126
    %v1177 = vpop.permute.xlu0 %1176
    %1178 = vrot.lane.b32.xlu0 %v789, 126
    %v1179 = vpop.permute.xlu0 %1178
    %1180 = vrot.lane.b32.xlu0 %v791, 126
    %v1181 = vpop.permute.xlu0 %1180
    %1182 = vrot.lane.b32.xlu0 %v793, 126
    %v1183 = vpop.permute.xlu0 %1182
    %1184 = vrot.lane.b32.xlu0 %v795, 126
    %v1185 = vpop.permute.xlu0 %1184
    %1186 = vrot.lane.b32.xlu0 %v797, 126
    %v1187 = vpop.permute.xlu0 %1186
    %1188 = vrot.lane.b32.xlu0 %v799, 126
    %v1189 = vpop.permute.xlu0 %1188
    %1190 = vrot.lane.b32.xlu0 %v801, 126
    %v1191 = vpop.permute.xlu0 %1190
    %1192 = vrot.lane.b32.xlu0 %v803, 126
    %v1193 = vpop.permute.xlu0 %1192
    %1194 = vrot.lane.b32.xlu0 %v805, 126
    %v1195 = vpop.permute.xlu0 %1194
    %1196 = vrot.lane.b32.xlu0 %v807, 126
    %v1197 = vpop.permute.xlu0 %1196
    %1198 = vrot.lane.b32.xlu0 %v809, 126
    %v1199 = vpop.permute.xlu0 %1198
    %1200 = vrot.lane.b32.xlu0 %v811, 126
    %v1201 = vpop.permute.xlu0 %1200
    %1202 = vrot.lane.b32.xlu0 %v813, 126
    %v1203 = vpop.permute.xlu0 %1202
    %1204 = vrot.lane.b32.xlu0 %v815, 126
    %v1205 = vpop.permute.xlu0 %1204
    %1206 = vrot.lane.b32.xlu0 %v817, 126
    %v1207 = vpop.permute.xlu0 %1206
    %1208 = vrot.lane.b32.xlu0 %v819, 126
    %v1209 = vpop.permute.xlu0 %1208
    %1210 = vrot.lane.b32.xlu0 %v821, 126
    %v1211 = vpop.permute.xlu0 %1210
    %1212 = vrot.lane.b32.xlu0 %v823, 126
    %v1213 = vpop.permute.xlu0 %1212
    %1214 = vrot.lane.b32.xlu0 %v825, 126
    %v1215 = vpop.permute.xlu0 %1214
    %1216 = vrot.lane.b32.xlu0 %v827, 126
    %v1217 = vpop.permute.xlu0 %1216
    %1218 = vrot.lane.b32.xlu0 %v829, 126
    %v1219 = vpop.permute.xlu0 %1218
    %1220 = vrot.lane.b32.xlu0 %v831, 126
    %v1221 = vpop.permute.xlu0 %1220
    %1222 = vrot.lane.b32.xlu0 %v770, 126
    %v1223 = vpop.permute.xlu0 %1222
    %1224 = vrot.lane.b32.xlu0 %v772, 126
    %v1225 = vpop.permute.xlu0 %1224
    %1226 = vrot.lane.b32.xlu0 %v774, 126
    %v1227 = vpop.permute.xlu0 %1226
    %1228 = vrot.lane.b32.xlu0 %v776, 126
    %v1229 = vpop.permute.xlu0 %1228
    %1230 = vrot.lane.b32.xlu0 %v778, 126
    %v1231 = vpop.permute.xlu0 %1230
    %1232 = vrot.lane.b32.xlu0 %v780, 126
    %v1233 = vpop.permute.xlu0 %1232
    %1234 = vrot.lane.b32.xlu0 %v782, 126
    %v1235 = vpop.permute.xlu0 %1234
    %1236 = vrot.lane.b32.xlu0 %v784, 126
    %v1237 = vpop.permute.xlu0 %1236
    %1238 = vrot.lane.b32.xlu0 %v786, 126
    %v1239 = vpop.permute.xlu0 %1238
    %1240 = vrot.lane.b32.xlu0 %v788, 126
    %v1241 = vpop.permute.xlu0 %1240
    %1242 = vrot.lane.b32.xlu0 %v790, 126
    %v1243 = vpop.permute.xlu0 %1242
    %1244 = vrot.lane.b32.xlu0 %v792, 126
    %v1245 = vpop.permute.xlu0 %1244
    %1246 = vrot.lane.b32.xlu0 %v794, 126
    %v1247 = vpop.permute.xlu0 %1246
    %1248 = vrot.lane.b32.xlu0 %v796, 126
    %v1249 = vpop.permute.xlu0 %1248
    %1250 = vrot.lane.b32.xlu0 %v798, 126
    %v1251 = vpop.permute.xlu0 %1250
    %1252 = vrot.lane.b32.xlu0 %v800, 126
    %v1253 = vpop.permute.xlu0 %1252
    %1254 = vrot.lane.b32.xlu0 %v802, 126
    %v1255 = vpop.permute.xlu0 %1254
    %1256 = vrot.lane.b32.xlu0 %v804, 126
    %v1257 = vpop.permute.xlu0 %1256
    %1258 = vrot.lane.b32.xlu0 %v806, 126
    %v1259 = vpop.permute.xlu0 %1258
    %1260 = vrot.lane.b32.xlu0 %v808, 126
    %v1261 = vpop.permute.xlu0 %1260
    %1262 = vrot.lane.b32.xlu0 %v810, 126
    %v1263 = vpop.permute.xlu0 %1262
    %1264 = vrot.lane.b32.xlu0 %v812, 126
    %v1265 = vpop.permute.xlu0 %1264
    %1266 = vrot.lane.b32.xlu0 %v814, 126
    %v1267 = vpop.permute.xlu0 %1266
    %1268 = vrot.lane.b32.xlu0 %v816, 126
    %v1269 = vpop.permute.xlu0 %1268
    %1270 = vrot.lane.b32.xlu0 %v818, 126
    %v1271 = vpop.permute.xlu0 %1270
    %1272 = vrot.lane.b32.xlu0 %v820, 126
    %v1273 = vpop.permute.xlu0 %1272
    %1274 = vrot.lane.b32.xlu0 %v822, 126
    %v1275 = vpop.permute.xlu0 %1274
    %1276 = vrot.lane.b32.xlu0 %v824, 126
    %v1277 = vpop.permute.xlu0 %1276
    %1278 = vrot.lane.b32.xlu0 %v826, 126
    %v1279 = vpop.permute.xlu0 %1278
    %1280 = vrot.lane.b32.xlu0 %v828, 126
    %v1281 = vpop.permute.xlu0 %1280
    %1282 = vrot.lane.b32.xlu0 %v830, 126
    %v1283 = vpop.permute.xlu0 %1282
    %1284 = vrot.lane.b32.xlu0 %v832, 126
    %v1285 = vpop.permute.xlu0 %1284
    %vm1286 = vcmp.lt.s32.totalorder %v508, 126
    %v1287 = vsel %vm1286, %v1159, %v1223
    %v1288 = vsel %vm1286, %v1161, %v1225
    %v1289 = vsel %vm1286, %v1163, %v1227
    %v1290 = vsel %vm1286, %v1165, %v1229
    %v1291 = vsel %vm1286, %v1167, %v1231
    %v1292 = vsel %vm1286, %v1169, %v1233
    %v1293 = vsel %vm1286, %v1171, %v1235
    %v1294 = vsel %vm1286, %v1173, %v1237
    %v1295 = vsel %vm1286, %v1175, %v1239
    %v1296 = vsel %vm1286, %v1177, %v1241
    %v1297 = vsel %vm1286, %v1179, %v1243
    %v1298 = vsel %vm1286, %v1181, %v1245
    %v1299 = vsel %vm1286, %v1183, %v1247
    %v1300 = vsel %vm1286, %v1185, %v1249
    %v1301 = vsel %vm1286, %v1187, %v1251
    %v1302 = vsel %vm1286, %v1189, %v1253
    %v1303 = vsel %vm1286, %v1191, %v1255
    %v1304 = vsel %vm1286, %v1193, %v1257
    %v1305 = vsel %vm1286, %v1195, %v1259
    %v1306 = vsel %vm1286, %v1197, %v1261
    %v1307 = vsel %vm1286, %v1199, %v1263
    %v1308 = vsel %vm1286, %v1201, %v1265
    %v1309 = vsel %vm1286, %v1203, %v1267
    %v1310 = vsel %vm1286, %v1205, %v1269
    %v1311 = vsel %vm1286, %v1207, %v1271
    %v1312 = vsel %vm1286, %v1209, %v1273
    %v1313 = vsel %vm1286, %v1211, %v1275
    %v1314 = vsel %vm1286, %v1213, %v1277
    %v1315 = vsel %vm1286, %v1215, %v1279
    %v1316 = vsel %vm1286, %v1217, %v1281
    %v1317 = vsel %vm1286, %v1219, %v1283
    %v1318 = vsel %vm1286, %v1221, %v1285
    %v1319 = vsel %vm1286, %v1223, %v1159
    %v1320 = vsel %vm1286, %v1225, %v1161
    %v1321 = vsel %vm1286, %v1227, %v1163
    %v1322 = vsel %vm1286, %v1229, %v1165
    %v1323 = vsel %vm1286, %v1231, %v1167
    %v1324 = vsel %vm1286, %v1233, %v1169
    %v1325 = vsel %vm1286, %v1235, %v1171
    %v1326 = vsel %vm1286, %v1237, %v1173
    %v1327 = vsel %vm1286, %v1239, %v1175
    %v1328 = vsel %vm1286, %v1241, %v1177
    %v1329 = vsel %vm1286, %v1243, %v1179
    %v1330 = vsel %vm1286, %v1245, %v1181
    %v1331 = vsel %vm1286, %v1247, %v1183
    %v1332 = vsel %vm1286, %v1249, %v1185
    %v1333 = vsel %vm1286, %v1251, %v1187
    %v1334 = vsel %vm1286, %v1253, %v1189
    %v1335 = vsel %vm1286, %v1255, %v1191
    %v1336 = vsel %vm1286, %v1257, %v1193
    %v1337 = vsel %vm1286, %v1259, %v1195
    %v1338 = vsel %vm1286, %v1261, %v1197
    %v1339 = vsel %vm1286, %v1263, %v1199
    %v1340 = vsel %vm1286, %v1265, %v1201
    %v1341 = vsel %vm1286, %v1267, %v1203
    %v1342 = vsel %vm1286, %v1269, %v1205
    %v1343 = vsel %vm1286, %v1271, %v1207
    %v1344 = vsel %vm1286, %v1273, %v1209
    %v1345 = vsel %vm1286, %v1275, %v1211
    %v1346 = vsel %vm1286, %v1277, %v1213
    %v1347 = vsel %vm1286, %v1279, %v1215
    %v1348 = vsel %vm1286, %v1281, %v1217
    %v1349 = vsel %vm1286, %v1283, %v1219
    %v1350 = vsel %vm1286, %v1285, %v1221
    %v1351 = vsel %vm1156, %v1287, 0.0
    %v1352 = vsel %vm1157, %v1319, 0.0
    %v1353 = vsel %vm1156, %v1288, 0.0
    %v1354 = vsel %vm1157, %v1320, 0.0
    %v1355 = vsel %vm1156, %v1289, 0.0
    %v1356 = vsel %vm1157, %v1321, 0.0
    %v1357 = vsel %vm1156, %v1290, 0.0
    %v1358 = vsel %vm1157, %v1322, 0.0
    %v1359 = vsel %vm1156, %v1291, 0.0
    %v1360 = vsel %vm1157, %v1323, 0.0
    %v1361 = vsel %vm1156, %v1292, 0.0
    %v1362 = vsel %vm1157, %v1324, 0.0
    %v1363 = vsel %vm1156, %v1293, 0.0
    %v1364 = vsel %vm1157, %v1325, 0.0
    %v1365 = vsel %vm1156, %v1294, 0.0
    %v1366 = vsel %vm1157, %v1326, 0.0
    %v1367 = vsel %vm1156, %v1295, 0.0
    %v1368 = vsel %vm1157, %v1327, 0.0
    %v1369 = vsel %vm1156, %v1296, 0.0
    %v1370 = vsel %vm1157, %v1328, 0.0
    %v1371 = vsel %vm1156, %v1297, 0.0
    %v1372 = vsel %vm1157, %v1329, 0.0
    %v1373 = vsel %vm1156, %v1298, 0.0
    %v1374 = vsel %vm1157, %v1330, 0.0
    %v1375 = vsel %vm1156, %v1299, 0.0
    %v1376 = vsel %vm1157, %v1331, 0.0
    %v1377 = vsel %vm1156, %v1300, 0.0
    %v1378 = vsel %vm1157, %v1332, 0.0
    %v1379 = vsel %vm1156, %v1301, 0.0
    %v1380 = vsel %vm1157, %v1333, 0.0
    %v1381 = vsel %vm1156, %v1302, 0.0
    %v1382 = vsel %vm1157, %v1334, 0.0
    %v1383 = vsel %vm1156, %v1303, 0.0
    %v1384 = vsel %vm1157, %v1335, 0.0
    %v1385 = vsel %vm1156, %v1304, 0.0
    %v1386 = vsel %vm1157, %v1336, 0.0
    %v1387 = vsel %vm1156, %v1305, 0.0
    %v1388 = vsel %vm1157, %v1337, 0.0
    %v1389 = vsel %vm1156, %v1306, 0.0
    %v1390 = vsel %vm1157, %v1338, 0.0
    %v1391 = vsel %vm1156, %v1307, 0.0
    %v1392 = vsel %vm1157, %v1339, 0.0
    %v1393 = vsel %vm1156, %v1308, 0.0
    %v1394 = vsel %vm1157, %v1340, 0.0
    %v1395 = vsel %vm1156, %v1309, 0.0
    %v1396 = vsel %vm1157, %v1341, 0.0
    %v1397 = vsel %vm1156, %v1310, 0.0
    %v1398 = vsel %vm1157, %v1342, 0.0
    %v1399 = vsel %vm1156, %v1311, 0.0
    %v1400 = vsel %vm1157, %v1343, 0.0
    %v1401 = vsel %vm1156, %v1312, 0.0
    %v1402 = vsel %vm1157, %v1344, 0.0
    %v1403 = vsel %vm1156, %v1313, 0.0
    %v1404 = vsel %vm1157, %v1345, 0.0
    %v1405 = vsel %vm1156, %v1314, 0.0
    %v1406 = vsel %vm1157, %v1346, 0.0
    %v1407 = vsel %vm1156, %v1315, 0.0
    %v1408 = vsel %vm1157, %v1347, 0.0
    %v1409 = vsel %vm1156, %v1316, 0.0
    %v1410 = vsel %vm1157, %v1348, 0.0
    %v1411 = vsel %vm1156, %v1317, 0.0
    %v1412 = vsel %vm1157, %v1349, 0.0
    %v1413 = vsel %vm1156, %v1318, 0.0
    %v1414 = vsel %vm1157, %v1350, 0.0
    %v1415 = vmax.f32 %v769, %v1351
    %v1416 = vmax.f32 %v770, %v1352
    %v1417 = vmax.f32 %v771, %v1353
    %v1418 = vmax.f32 %v772, %v1354
    %v1419 = vmax.f32 %v773, %v1355
    %v1420 = vmax.f32 %v774, %v1356
    %v1421 = vmax.f32 %v775, %v1357
    %v1422 = vmax.f32 %v776, %v1358
    %v1423 = vmax.f32 %v777, %v1359
    %v1424 = vmax.f32 %v778, %v1360
    %v1425 = vmax.f32 %v779, %v1361
    %v1426 = vmax.f32 %v780, %v1362
    %v1427 = vmax.f32 %v781, %v1363
    %v1428 = vmax.f32 %v782, %v1364
    %v1429 = vmax.f32 %v783, %v1365
    %v1430 = vmax.f32 %v784, %v1366
    %v1431 = vmax.f32 %v785, %v1367
    %v1432 = vmax.f32 %v786, %v1368
    %v1433 = vmax.f32 %v787, %v1369
    %v1434 = vmax.f32 %v788, %v1370
    %v1435 = vmax.f32 %v789, %v1371
    %v1436 = vmax.f32 %v790, %v1372
    %v1437 = vmax.f32 %v791, %v1373
    %v1438 = vmax.f32 %v792, %v1374
    %v1439 = vmax.f32 %v793, %v1375
    %v1440 = vmax.f32 %v794, %v1376
    %v1441 = vmax.f32 %v795, %v1377
    %v1442 = vmax.f32 %v796, %v1378
    %v1443 = vmax.f32 %v797, %v1379
    %v1444 = vmax.f32 %v798, %v1380
    %v1445 = vmax.f32 %v799, %v1381
    %v1446 = vmax.f32 %v800, %v1382
    %v1447 = vmax.f32 %v801, %v1383
    %v1448 = vmax.f32 %v802, %v1384
    %v1449 = vmax.f32 %v803, %v1385
    %v1450 = vmax.f32 %v804, %v1386
    %v1451 = vmax.f32 %v805, %v1387
    %v1452 = vmax.f32 %v806, %v1388
    %v1453 = vmax.f32 %v807, %v1389
    %v1454 = vmax.f32 %v808, %v1390
    %v1455 = vmax.f32 %v809, %v1391
    %v1456 = vmax.f32 %v810, %v1392
    %v1457 = vmax.f32 %v811, %v1393
    %v1458 = vmax.f32 %v812, %v1394
    %v1459 = vmax.f32 %v813, %v1395
    %v1460 = vmax.f32 %v814, %v1396
    %v1461 = vmax.f32 %v815, %v1397
    %v1462 = vmax.f32 %v816, %v1398
    %v1463 = vmax.f32 %v817, %v1399
    %v1464 = vmax.f32 %v818, %v1400
    %v1465 = vmax.f32 %v819, %v1401
    %v1466 = vmax.f32 %v820, %v1402
    %v1467 = vmax.f32 %v821, %v1403
    %v1468 = vmax.f32 %v822, %v1404
    %v1469 = vmax.f32 %v823, %v1405
    %v1470 = vmax.f32 %v824, %v1406
    %v1471 = vmax.f32 %v825, %v1407
    %v1472 = vmax.f32 %v826, %v1408
    %v1473 = vmax.f32 %v827, %v1409
    %v1474 = vmax.f32 %v828, %v1410
    %v1475 = vmax.f32 %v829, %v1411
    %v1476 = vmax.f32 %v830, %v1412
    %v1477 = vmax.f32 %v831, %v1413
    %v1478 = vmax.f32 %v832, %v1414
    %vm1479 = vcmp.ge.s32.totalorder %v508, 2
    %vm1480 = vcmp.ge.s32.totalorder %v509, 2
    %1481 = vrot.lane.b32.xlu0 %v1092, 2
    %v1482 = vpop.permute.xlu0 %1481
    %1483 = vrot.lane.b32.xlu0 %v1094, 2
    %v1484 = vpop.permute.xlu0 %1483
    %1485 = vrot.lane.b32.xlu0 %v1096, 2
    %v1486 = vpop.permute.xlu0 %1485
    %1487 = vrot.lane.b32.xlu0 %v1098, 2
    %v1488 = vpop.permute.xlu0 %1487
    %1489 = vrot.lane.b32.xlu0 %v1100, 2
    %v1490 = vpop.permute.xlu0 %1489
    %1491 = vrot.lane.b32.xlu0 %v1102, 2
    %v1492 = vpop.permute.xlu0 %1491
    %1493 = vrot.lane.b32.xlu0 %v1104, 2
    %v1494 = vpop.permute.xlu0 %1493
    %1495 = vrot.lane.b32.xlu0 %v1106, 2
    %v1496 = vpop.permute.xlu0 %1495
    %1497 = vrot.lane.b32.xlu0 %v1108, 2
    %v1498 = vpop.permute.xlu0 %1497
    %1499 = vrot.lane.b32.xlu0 %v1110, 2
    %v1500 = vpop.permute.xlu0 %1499
    %1501 = vrot.lane.b32.xlu0 %v1112, 2
    %v1502 = vpop.permute.xlu0 %1501
    %1503 = vrot.lane.b32.xlu0 %v1114, 2
    %v1504 = vpop.permute.xlu0 %1503
    %1505 = vrot.lane.b32.xlu0 %v1116, 2
    %v1506 = vpop.permute.xlu0 %1505
    %1507 = vrot.lane.b32.xlu0 %v1118, 2
    %v1508 = vpop.permute.xlu0 %1507
    %1509 = vrot.lane.b32.xlu0 %v1120, 2
    %v1510 = vpop.permute.xlu0 %1509
    %1511 = vrot.lane.b32.xlu0 %v1122, 2
    %v1512 = vpop.permute.xlu0 %1511
    %1513 = vrot.lane.b32.xlu0 %v1124, 2
    %v1514 = vpop.permute.xlu0 %1513
    %1515 = vrot.lane.b32.xlu0 %v1126, 2
    %v1516 = vpop.permute.xlu0 %1515
    %1517 = vrot.lane.b32.xlu0 %v1128, 2
    %v1518 = vpop.permute.xlu0 %1517
    %1519 = vrot.lane.b32.xlu0 %v1130, 2
    %v1520 = vpop.permute.xlu0 %1519
    %1521 = vrot.lane.b32.xlu0 %v1132, 2
    %v1522 = vpop.permute.xlu0 %1521
    %1523 = vrot.lane.b32.xlu0 %v1134, 2
    %v1524 = vpop.permute.xlu0 %1523
    %1525 = vrot.lane.b32.xlu0 %v1136, 2
    %v1526 = vpop.permute.xlu0 %1525
    %1527 = vrot.lane.b32.xlu0 %v1138, 2
    %v1528 = vpop.permute.xlu0 %1527
    %1529 = vrot.lane.b32.xlu0 %v1140, 2
    %v1530 = vpop.permute.xlu0 %1529
    %1531 = vrot.lane.b32.xlu0 %v1142, 2
    %v1532 = vpop.permute.xlu0 %1531
    %1533 = vrot.lane.b32.xlu0 %v1144, 2
    %v1534 = vpop.permute.xlu0 %1533
    %1535 = vrot.lane.b32.xlu0 %v1146, 2
    %v1536 = vpop.permute.xlu0 %1535
    %1537 = vrot.lane.b32.xlu0 %v1148, 2
    %v1538 = vpop.permute.xlu0 %1537
    %1539 = vrot.lane.b32.xlu0 %v1150, 2
    %v1540 = vpop.permute.xlu0 %1539
    %1541 = vrot.lane.b32.xlu0 %v1152, 2
    %v1542 = vpop.permute.xlu0 %1541
    %1543 = vrot.lane.b32.xlu0 %v1154, 2
    %v1544 = vpop.permute.xlu0 %1543
    %1545 = vrot.lane.b32.xlu0 %v1093, 2
    %v1546 = vpop.permute.xlu0 %1545
    %1547 = vrot.lane.b32.xlu0 %v1095, 2
    %v1548 = vpop.permute.xlu0 %1547
    %1549 = vrot.lane.b32.xlu0 %v1097, 2
    %v1550 = vpop.permute.xlu0 %1549
    %1551 = vrot.lane.b32.xlu0 %v1099, 2
    %v1552 = vpop.permute.xlu0 %1551
    %1553 = vrot.lane.b32.xlu0 %v1101, 2
    %v1554 = vpop.permute.xlu0 %1553
    %1555 = vrot.lane.b32.xlu0 %v1103, 2
    %v1556 = vpop.permute.xlu0 %1555
    %1557 = vrot.lane.b32.xlu0 %v1105, 2
    %v1558 = vpop.permute.xlu0 %1557
    %1559 = vrot.lane.b32.xlu0 %v1107, 2
    %v1560 = vpop.permute.xlu0 %1559
    %1561 = vrot.lane.b32.xlu0 %v1109, 2
    %v1562 = vpop.permute.xlu0 %1561
    %1563 = vrot.lane.b32.xlu0 %v1111, 2
    %v1564 = vpop.permute.xlu0 %1563
    %1565 = vrot.lane.b32.xlu0 %v1113, 2
    %v1566 = vpop.permute.xlu0 %1565
    %1567 = vrot.lane.b32.xlu0 %v1115, 2
    %v1568 = vpop.permute.xlu0 %1567
    %1569 = vrot.lane.b32.xlu0 %v1117, 2
    %v1570 = vpop.permute.xlu0 %1569
    %1571 = vrot.lane.b32.xlu0 %v1119, 2
    %v1572 = vpop.permute.xlu0 %1571
    %1573 = vrot.lane.b32.xlu0 %v1121, 2
    %v1574 = vpop.permute.xlu0 %1573
    %1575 = vrot.lane.b32.xlu0 %v1123, 2
    %v1576 = vpop.permute.xlu0 %1575
    %1577 = vrot.lane.b32.xlu0 %v1125, 2
    %v1578 = vpop.permute.xlu0 %1577
    %1579 = vrot.lane.b32.xlu0 %v1127, 2
    %v1580 = vpop.permute.xlu0 %1579
    %1581 = vrot.lane.b32.xlu0 %v1129, 2
    %v1582 = vpop.permute.xlu0 %1581
    %1583 = vrot.lane.b32.xlu0 %v1131, 2
    %v1584 = vpop.permute.xlu0 %1583
    %1585 = vrot.lane.b32.xlu0 %v1133, 2
    %v1586 = vpop.permute.xlu0 %1585
    %1587 = vrot.lane.b32.xlu0 %v1135, 2
    %v1588 = vpop.permute.xlu0 %1587
    %1589 = vrot.lane.b32.xlu0 %v1137, 2
    %v1590 = vpop.permute.xlu0 %1589
    %1591 = vrot.lane.b32.xlu0 %v1139, 2
    %v1592 = vpop.permute.xlu0 %1591
    %1593 = vrot.lane.b32.xlu0 %v1141, 2
    %v1594 = vpop.permute.xlu0 %1593
    %1595 = vrot.lane.b32.xlu0 %v1143, 2
    %v1596 = vpop.permute.xlu0 %1595
    %1597 = vrot.lane.b32.xlu0 %v1145, 2
    %v1598 = vpop.permute.xlu0 %1597
    %1599 = vrot.lane.b32.xlu0 %v1147, 2
    %v1600 = vpop.permute.xlu0 %1599
    %1601 = vrot.lane.b32.xlu0 %v1149, 2
    %v1602 = vpop.permute.xlu0 %1601
    %1603 = vrot.lane.b32.xlu0 %v1151, 2
    %v1604 = vpop.permute.xlu0 %1603
    %1605 = vrot.lane.b32.xlu0 %v1153, 2
    %v1606 = vpop.permute.xlu0 %1605
    %1607 = vrot.lane.b32.xlu0 %v1155, 2
    %v1608 = vpop.permute.xlu0 %1607
    %vm1609 = vcmp.lt.s32.totalorder %v508, 2
    %v1610 = vsel %vm1609, %v1482, %v1546
    %v1611 = vsel %vm1609, %v1484, %v1548
    %v1612 = vsel %vm1609, %v1486, %v1550
    %v1613 = vsel %vm1609, %v1488, %v1552
    %v1614 = vsel %vm1609, %v1490, %v1554
    %v1615 = vsel %vm1609, %v1492, %v1556
    %v1616 = vsel %vm1609, %v1494, %v1558
    %v1617 = vsel %vm1609, %v1496, %v1560
    %v1618 = vsel %vm1609, %v1498, %v1562
    %v1619 = vsel %vm1609, %v1500, %v1564
    %v1620 = vsel %vm1609, %v1502, %v1566
    %v1621 = vsel %vm1609, %v1504, %v1568
    %v1622 = vsel %vm1609, %v1506, %v1570
    %v1623 = vsel %vm1609, %v1508, %v1572
    %v1624 = vsel %vm1609, %v1510, %v1574
    %v1625 = vsel %vm1609, %v1512, %v1576
    %v1626 = vsel %vm1609, %v1514, %v1578
    %v1627 = vsel %vm1609, %v1516, %v1580
    %v1628 = vsel %vm1609, %v1518, %v1582
    %v1629 = vsel %vm1609, %v1520, %v1584
    %v1630 = vsel %vm1609, %v1522, %v1586
    %v1631 = vsel %vm1609, %v1524, %v1588
    %v1632 = vsel %vm1609, %v1526, %v1590
    %v1633 = vsel %vm1609, %v1528, %v1592
    %v1634 = vsel %vm1609, %v1530, %v1594
    %v1635 = vsel %vm1609, %v1532, %v1596
    %v1636 = vsel %vm1609, %v1534, %v1598
    %v1637 = vsel %vm1609, %v1536, %v1600
    %v1638 = vsel %vm1609, %v1538, %v1602
    %v1639 = vsel %vm1609, %v1540, %v1604
    %v1640 = vsel %vm1609, %v1542, %v1606
    %v1641 = vsel %vm1609, %v1544, %v1608
    %v1642 = vsel %vm1609, %v1546, %v1482
    %v1643 = vsel %vm1609, %v1548, %v1484
    %v1644 = vsel %vm1609, %v1550, %v1486
    %v1645 = vsel %vm1609, %v1552, %v1488
    %v1646 = vsel %vm1609, %v1554, %v1490
    %v1647 = vsel %vm1609, %v1556, %v1492
    %v1648 = vsel %vm1609, %v1558, %v1494
    %v1649 = vsel %vm1609, %v1560, %v1496
    %v1650 = vsel %vm1609, %v1562, %v1498
    %v1651 = vsel %vm1609, %v1564, %v1500
    %v1652 = vsel %vm1609, %v1566, %v1502
    %v1653 = vsel %vm1609, %v1568, %v1504
    %v1654 = vsel %vm1609, %v1570, %v1506
    %v1655 = vsel %vm1609, %v1572, %v1508
    %v1656 = vsel %vm1609, %v1574, %v1510
    %v1657 = vsel %vm1609, %v1576, %v1512
    %v1658 = vsel %vm1609, %v1578, %v1514
    %v1659 = vsel %vm1609, %v1580, %v1516
    %v1660 = vsel %vm1609, %v1582, %v1518
    %v1661 = vsel %vm1609, %v1584, %v1520
    %v1662 = vsel %vm1609, %v1586, %v1522
    %v1663 = vsel %vm1609, %v1588, %v1524
    %v1664 = vsel %vm1609, %v1590, %v1526
    %v1665 = vsel %vm1609, %v1592, %v1528
    %v1666 = vsel %vm1609, %v1594, %v1530
    %v1667 = vsel %vm1609, %v1596, %v1532
    %v1668 = vsel %vm1609, %v1598, %v1534
    %v1669 = vsel %vm1609, %v1600, %v1536
    %v1670 = vsel %vm1609, %v1602, %v1538
    %v1671 = vsel %vm1609, %v1604, %v1540
    %v1672 = vsel %vm1609, %v1606, %v1542
    %v1673 = vsel %vm1609, %v1608, %v1544
    %v1674 = vsel %vm1479, %v1642, 0.0
    %v1675 = vsel %vm1480, %v1610, 0.0
    %v1676 = vsel %vm1479, %v1643, 0.0
    %v1677 = vsel %vm1480, %v1611, 0.0
    %v1678 = vsel %vm1479, %v1644, 0.0
    %v1679 = vsel %vm1480, %v1612, 0.0
    %v1680 = vsel %vm1479, %v1645, 0.0
    %v1681 = vsel %vm1480, %v1613, 0.0
    %v1682 = vsel %vm1479, %v1646, 0.0
    %v1683 = vsel %vm1480, %v1614, 0.0
    %v1684 = vsel %vm1479, %v1647, 0.0
    %v1685 = vsel %vm1480, %v1615, 0.0
    %v1686 = vsel %vm1479, %v1648, 0.0
    %v1687 = vsel %vm1480, %v1616, 0.0
    %v1688 = vsel %vm1479, %v1649, 0.0
    %v1689 = vsel %vm1480, %v1617, 0.0
    %v1690 = vsel %vm1479, %v1650, 0.0
    %v1691 = vsel %vm1480, %v1618, 0.0
    %v1692 = vsel %vm1479, %v1651, 0.0
    %v1693 = vsel %vm1480, %v1619, 0.0
    %v1694 = vsel %vm1479, %v1652, 0.0
    %v1695 = vsel %vm1480, %v1620, 0.0
    %v1696 = vsel %vm1479, %v1653, 0.0
    %v1697 = vsel %vm1480, %v1621, 0.0
    %v1698 = vsel %vm1479, %v1654, 0.0
    %v1699 = vsel %vm1480, %v1622, 0.0
    %v1700 = vsel %vm1479, %v1655, 0.0
    %v1701 = vsel %vm1480, %v1623, 0.0
    %v1702 = vsel %vm1479, %v1656, 0.0
    %v1703 = vsel %vm1480, %v1624, 0.0
    %v1704 = vsel %vm1479, %v1657, 0.0
    %v1705 = vsel %vm1480, %v1625, 0.0
    %v1706 = vsel %vm1479, %v1658, 0.0
    %v1707 = vsel %vm1480, %v1626, 0.0
    %v1708 = vsel %vm1479, %v1659, 0.0
    %v1709 = vsel %vm1480, %v1627, 0.0
    %v1710 = vsel %vm1479, %v1660, 0.0
    %v1711 = vsel %vm1480, %v1628, 0.0
    %v1712 = vsel %vm1479, %v1661, 0.0
    %v1713 = vsel %vm1480, %v1629, 0.0
    %v1714 = vsel %vm1479, %v1662, 0.0
    %v1715 = vsel %vm1480, %v1630, 0.0
    %v1716 = vsel %vm1479, %v1663, 0.0
    %v1717 = vsel %vm1480, %v1631, 0.0
    %v1718 = vsel %vm1479, %v1664, 0.0
    %v1719 = vsel %vm1480, %v1632, 0.0
    %v1720 = vsel %vm1479, %v1665, 0.0
    %v1721 = vsel %vm1480, %v1633, 0.0
    %v1722 = vsel %vm1479, %v1666, 0.0
    %v1723 = vsel %vm1480, %v1634, 0.0
    %v1724 = vsel %vm1479, %v1667, 0.0
    %v1725 = vsel %vm1480, %v1635, 0.0
    %v1726 = vsel %vm1479, %v1668, 0.0
    %v1727 = vsel %vm1480, %v1636, 0.0
    %v1728 = vsel %vm1479, %v1669, 0.0
    %v1729 = vsel %vm1480, %v1637, 0.0
    %v1730 = vsel %vm1479, %v1670, 0.0
    %v1731 = vsel %vm1480, %v1638, 0.0
    %v1732 = vsel %vm1479, %v1671, 0.0
    %v1733 = vsel %vm1480, %v1639, 0.0
    %v1734 = vsel %vm1479, %v1672, 0.0
    %v1735 = vsel %vm1480, %v1640, 0.0
    %v1736 = vsel %vm1479, %v1673, 0.0
    %v1737 = vsel %vm1480, %v1641, 0.0
    %v1738 = vmax.f32 %v1092, %v1674
    %v1739 = vmax.f32 %v1093, %v1675
    %v1740 = vmax.f32 %v1094, %v1676
    %v1741 = vmax.f32 %v1095, %v1677
    %v1742 = vmax.f32 %v1096, %v1678
    %v1743 = vmax.f32 %v1097, %v1679
    %v1744 = vmax.f32 %v1098, %v1680
    %v1745 = vmax.f32 %v1099, %v1681
    %v1746 = vmax.f32 %v1100, %v1682
    %v1747 = vmax.f32 %v1101, %v1683
    %v1748 = vmax.f32 %v1102, %v1684
    %v1749 = vmax.f32 %v1103, %v1685
    %v1750 = vmax.f32 %v1104, %v1686
    %v1751 = vmax.f32 %v1105, %v1687
    %v1752 = vmax.f32 %v1106, %v1688
    %v1753 = vmax.f32 %v1107, %v1689
    %v1754 = vmax.f32 %v1108, %v1690
    %v1755 = vmax.f32 %v1109, %v1691
    %v1756 = vmax.f32 %v1110, %v1692
    %v1757 = vmax.f32 %v1111, %v1693
    %v1758 = vmax.f32 %v1112, %v1694
    %v1759 = vmax.f32 %v1113, %v1695
    %v1760 = vmax.f32 %v1114, %v1696
    %v1761 = vmax.f32 %v1115, %v1697
    %v1762 = vmax.f32 %v1116, %v1698
    %v1763 = vmax.f32 %v1117, %v1699
    %v1764 = vmax.f32 %v1118, %v1700
    %v1765 = vmax.f32 %v1119, %v1701
    %v1766 = vmax.f32 %v1120, %v1702
    %v1767 = vmax.f32 %v1121, %v1703
    %v1768 = vmax.f32 %v1122, %v1704
    %v1769 = vmax.f32 %v1123, %v1705
    %v1770 = vmax.f32 %v1124, %v1706
    %v1771 = vmax.f32 %v1125, %v1707
    %v1772 = vmax.f32 %v1126, %v1708
    %v1773 = vmax.f32 %v1127, %v1709
    %v1774 = vmax.f32 %v1128, %v1710
    %v1775 = vmax.f32 %v1129, %v1711
    %v1776 = vmax.f32 %v1130, %v1712
    %v1777 = vmax.f32 %v1131, %v1713
    %v1778 = vmax.f32 %v1132, %v1714
    %v1779 = vmax.f32 %v1133, %v1715
    %v1780 = vmax.f32 %v1134, %v1716
    %v1781 = vmax.f32 %v1135, %v1717
    %v1782 = vmax.f32 %v1136, %v1718
    %v1783 = vmax.f32 %v1137, %v1719
    %v1784 = vmax.f32 %v1138, %v1720
    %v1785 = vmax.f32 %v1139, %v1721
    %v1786 = vmax.f32 %v1140, %v1722
    %v1787 = vmax.f32 %v1141, %v1723
    %v1788 = vmax.f32 %v1142, %v1724
    %v1789 = vmax.f32 %v1143, %v1725
    %v1790 = vmax.f32 %v1144, %v1726
    %v1791 = vmax.f32 %v1145, %v1727
    %v1792 = vmax.f32 %v1146, %v1728
    %v1793 = vmax.f32 %v1147, %v1729
    %v1794 = vmax.f32 %v1148, %v1730
    %v1795 = vmax.f32 %v1149, %v1731
    %v1796 = vmax.f32 %v1150, %v1732
    %v1797 = vmax.f32 %v1151, %v1733
    %v1798 = vmax.f32 %v1152, %v1734
    %v1799 = vmax.f32 %v1153, %v1735
    %v1800 = vmax.f32 %v1154, %v1736
    %v1801 = vmax.f32 %v1155, %v1737
    %vm1802 = vcmp.lt.s32.totalorder %v508, 252
    %vm1803 = vcmp.lt.s32.totalorder %v509, 252
    %1804 = vrot.lane.b32.xlu0 %v1415, 124
    %v1805 = vpop.permute.xlu0 %1804
    %1806 = vrot.lane.b32.xlu0 %v1417, 124
    %v1807 = vpop.permute.xlu0 %1806
    %1808 = vrot.lane.b32.xlu0 %v1419, 124
    %v1809 = vpop.permute.xlu0 %1808
    %1810 = vrot.lane.b32.xlu0 %v1421, 124
    %v1811 = vpop.permute.xlu0 %1810
    %1812 = vrot.lane.b32.xlu0 %v1423, 124
    %v1813 = vpop.permute.xlu0 %1812
    %1814 = vrot.lane.b32.xlu0 %v1425, 124
    %v1815 = vpop.permute.xlu0 %1814
    %1816 = vrot.lane.b32.xlu0 %v1427, 124
    %v1817 = vpop.permute.xlu0 %1816
    %1818 = vrot.lane.b32.xlu0 %v1429, 124
    %v1819 = vpop.permute.xlu0 %1818
    %1820 = vrot.lane.b32.xlu0 %v1431, 124
    %v1821 = vpop.permute.xlu0 %1820
    %1822 = vrot.lane.b32.xlu0 %v1433, 124
    %v1823 = vpop.permute.xlu0 %1822
    %1824 = vrot.lane.b32.xlu0 %v1435, 124
    %v1825 = vpop.permute.xlu0 %1824
    %1826 = vrot.lane.b32.xlu0 %v1437, 124
    %v1827 = vpop.permute.xlu0 %1826
    %1828 = vrot.lane.b32.xlu0 %v1439, 124
    %v1829 = vpop.permute.xlu0 %1828
    %1830 = vrot.lane.b32.xlu0 %v1441, 124
    %v1831 = vpop.permute.xlu0 %1830
    %1832 = vrot.lane.b32.xlu0 %v1443, 124
    %v1833 = vpop.permute.xlu0 %1832
    %1834 = vrot.lane.b32.xlu0 %v1445, 124
    %v1835 = vpop.permute.xlu0 %1834
    %1836 = vrot.lane.b32.xlu0 %v1447, 124
    %v1837 = vpop.permute.xlu0 %1836
    %1838 = vrot.lane.b32.xlu0 %v1449, 124
    %v1839 = vpop.permute.xlu0 %1838
    %1840 = vrot.lane.b32.xlu0 %v1451, 124
    %v1841 = vpop.permute.xlu0 %1840
    %1842 = vrot.lane.b32.xlu0 %v1453, 124
    %v1843 = vpop.permute.xlu0 %1842
    %1844 = vrot.lane.b32.xlu0 %v1455, 124
    %v1845 = vpop.permute.xlu0 %1844
    %1846 = vrot.lane.b32.xlu0 %v1457, 124
    %v1847 = vpop.permute.xlu0 %1846
    %1848 = vrot.lane.b32.xlu0 %v1459, 124
    %v1849 = vpop.permute.xlu0 %1848
    %1850 = vrot.lane.b32.xlu0 %v1461, 124
    %v1851 = vpop.permute.xlu0 %1850
    %1852 = vrot.lane.b32.xlu0 %v1463, 124
    %v1853 = vpop.permute.xlu0 %1852
    %1854 = vrot.lane.b32.xlu0 %v1465, 124
    %v1855 = vpop.permute.xlu0 %1854
    %1856 = vrot.lane.b32.xlu0 %v1467, 124
    %v1857 = vpop.permute.xlu0 %1856
    %1858 = vrot.lane.b32.xlu0 %v1469, 124
    %v1859 = vpop.permute.xlu0 %1858
    %1860 = vrot.lane.b32.xlu0 %v1471, 124
    %v1861 = vpop.permute.xlu0 %1860
    %1862 = vrot.lane.b32.xlu0 %v1473, 124
    %v1863 = vpop.permute.xlu0 %1862
    %1864 = vrot.lane.b32.xlu0 %v1475, 124
    %v1865 = vpop.permute.xlu0 %1864
    %1866 = vrot.lane.b32.xlu0 %v1477, 124
    %v1867 = vpop.permute.xlu0 %1866
    %1868 = vrot.lane.b32.xlu0 %v1416, 124
    %v1869 = vpop.permute.xlu0 %1868
    %1870 = vrot.lane.b32.xlu0 %v1418, 124
    %v1871 = vpop.permute.xlu0 %1870
    %1872 = vrot.lane.b32.xlu0 %v1420, 124
    %v1873 = vpop.permute.xlu0 %1872
    %1874 = vrot.lane.b32.xlu0 %v1422, 124
    %v1875 = vpop.permute.xlu0 %1874
    %1876 = vrot.lane.b32.xlu0 %v1424, 124
    %v1877 = vpop.permute.xlu0 %1876
    %1878 = vrot.lane.b32.xlu0 %v1426, 124
    %v1879 = vpop.permute.xlu0 %1878
    %1880 = vrot.lane.b32.xlu0 %v1428, 124
    %v1881 = vpop.permute.xlu0 %1880
    %1882 = vrot.lane.b32.xlu0 %v1430, 124
    %v1883 = vpop.permute.xlu0 %1882
    %1884 = vrot.lane.b32.xlu0 %v1432, 124
    %v1885 = vpop.permute.xlu0 %1884
    %1886 = vrot.lane.b32.xlu0 %v1434, 124
    %v1887 = vpop.permute.xlu0 %1886
    %1888 = vrot.lane.b32.xlu0 %v1436, 124
    %v1889 = vpop.permute.xlu0 %1888
    %1890 = vrot.lane.b32.xlu0 %v1438, 124
    %v1891 = vpop.permute.xlu0 %1890
    %1892 = vrot.lane.b32.xlu0 %v1440, 124
    %v1893 = vpop.permute.xlu0 %1892
    %1894 = vrot.lane.b32.xlu0 %v1442, 124
    %v1895 = vpop.permute.xlu0 %1894
    %1896 = vrot.lane.b32.xlu0 %v1444, 124
    %v1897 = vpop.permute.xlu0 %1896
    %1898 = vrot.lane.b32.xlu0 %v1446, 124
    %v1899 = vpop.permute.xlu0 %1898
    %1900 = vrot.lane.b32.xlu0 %v1448, 124
    %v1901 = vpop.permute.xlu0 %1900
    %1902 = vrot.lane.b32.xlu0 %v1450, 124
    %v1903 = vpop.permute.xlu0 %1902
    %1904 = vrot.lane.b32.xlu0 %v1452, 124
    %v1905 = vpop.permute.xlu0 %1904
    %1906 = vrot.lane.b32.xlu0 %v1454, 124
    %v1907 = vpop.permute.xlu0 %1906
    %1908 = vrot.lane.b32.xlu0 %v1456, 124
    %v1909 = vpop.permute.xlu0 %1908
    %1910 = vrot.lane.b32.xlu0 %v1458, 124
    %v1911 = vpop.permute.xlu0 %1910
    %1912 = vrot.lane.b32.xlu0 %v1460, 124
    %v1913 = vpop.permute.xlu0 %1912
    %1914 = vrot.lane.b32.xlu0 %v1462, 124
    %v1915 = vpop.permute.xlu0 %1914
    %1916 = vrot.lane.b32.xlu0 %v1464, 124
    %v1917 = vpop.permute.xlu0 %1916
    %1918 = vrot.lane.b32.xlu0 %v1466, 124
    %v1919 = vpop.permute.xlu0 %1918
    %1920 = vrot.lane.b32.xlu0 %v1468, 124
    %v1921 = vpop.permute.xlu0 %1920
    %1922 = vrot.lane.b32.xlu0 %v1470, 124
    %v1923 = vpop.permute.xlu0 %1922
    %1924 = vrot.lane.b32.xlu0 %v1472, 124
    %v1925 = vpop.permute.xlu0 %1924
    %1926 = vrot.lane.b32.xlu0 %v1474, 124
    %v1927 = vpop.permute.xlu0 %1926
    %1928 = vrot.lane.b32.xlu0 %v1476, 124
    %v1929 = vpop.permute.xlu0 %1928
    %1930 = vrot.lane.b32.xlu0 %v1478, 124
    %v1931 = vpop.permute.xlu0 %1930
    %vm1932 = vcmp.lt.s32.totalorder %v508, 124
    %v1933 = vsel %vm1932, %v1805, %v1869
    %v1934 = vsel %vm1932, %v1807, %v1871
    %v1935 = vsel %vm1932, %v1809, %v1873
    %v1936 = vsel %vm1932, %v1811, %v1875
    %v1937 = vsel %vm1932, %v1813, %v1877
    %v1938 = vsel %vm1932, %v1815, %v1879
    %v1939 = vsel %vm1932, %v1817, %v1881
    %v1940 = vsel %vm1932, %v1819, %v1883
    %v1941 = vsel %vm1932, %v1821, %v1885
    %v1942 = vsel %vm1932, %v1823, %v1887
    %v1943 = vsel %vm1932, %v1825, %v1889
    %v1944 = vsel %vm1932, %v1827, %v1891
    %v1945 = vsel %vm1932, %v1829, %v1893
    %v1946 = vsel %vm1932, %v1831, %v1895
    %v1947 = vsel %vm1932, %v1833, %v1897
    %v1948 = vsel %vm1932, %v1835, %v1899
    %v1949 = vsel %vm1932, %v1837, %v1901
    %v1950 = vsel %vm1932, %v1839, %v1903
    %v1951 = vsel %vm1932, %v1841, %v1905
    %v1952 = vsel %vm1932, %v1843, %v1907
    %v1953 = vsel %vm1932, %v1845, %v1909
    %v1954 = vsel %vm1932, %v1847, %v1911
    %v1955 = vsel %vm1932, %v1849, %v1913
    %v1956 = vsel %vm1932, %v1851, %v1915
    %v1957 = vsel %vm1932, %v1853, %v1917
    %v1958 = vsel %vm1932, %v1855, %v1919
    %v1959 = vsel %vm1932, %v1857, %v1921
    %v1960 = vsel %vm1932, %v1859, %v1923
    %v1961 = vsel %vm1932, %v1861, %v1925
    %v1962 = vsel %vm1932, %v1863, %v1927
    %v1963 = vsel %vm1932, %v1865, %v1929
    %v1964 = vsel %vm1932, %v1867, %v1931
    %v1965 = vsel %vm1932, %v1869, %v1805
    %v1966 = vsel %vm1932, %v1871, %v1807
    %v1967 = vsel %vm1932, %v1873, %v1809
    %v1968 = vsel %vm1932, %v1875, %v1811
    %v1969 = vsel %vm1932, %v1877, %v1813
    %v1970 = vsel %vm1932, %v1879, %v1815
    %v1971 = vsel %vm1932, %v1881, %v1817
    %v1972 = vsel %vm1932, %v1883, %v1819
    %v1973 = vsel %vm1932, %v1885, %v1821
    %v1974 = vsel %vm1932, %v1887, %v1823
    %v1975 = vsel %vm1932, %v1889, %v1825
    %v1976 = vsel %vm1932, %v1891, %v1827
    %v1977 = vsel %vm1932, %v1893, %v1829
    %v1978 = vsel %vm1932, %v1895, %v1831
    %v1979 = vsel %vm1932, %v1897, %v1833
    %v1980 = vsel %vm1932, %v1899, %v1835
    %v1981 = vsel %vm1932, %v1901, %v1837
    %v1982 = vsel %vm1932, %v1903, %v1839
    %v1983 = vsel %vm1932, %v1905, %v1841
    %v1984 = vsel %vm1932, %v1907, %v1843
    %v1985 = vsel %vm1932, %v1909, %v1845
    %v1986 = vsel %vm1932, %v1911, %v1847
    %v1987 = vsel %vm1932, %v1913, %v1849
    %v1988 = vsel %vm1932, %v1915, %v1851
    %v1989 = vsel %vm1932, %v1917, %v1853
    %v1990 = vsel %vm1932, %v1919, %v1855
    %v1991 = vsel %vm1932, %v1921, %v1857
    %v1992 = vsel %vm1932, %v1923, %v1859
    %v1993 = vsel %vm1932, %v1925, %v1861
    %v1994 = vsel %vm1932, %v1927, %v1863
    %v1995 = vsel %vm1932, %v1929, %v1865
    %v1996 = vsel %vm1932, %v1931, %v1867
    %v1997 = vsel %vm1802, %v1933, 0.0
    %v1998 = vsel %vm1803, %v1965, 0.0
    %v1999 = vsel %vm1802, %v1934, 0.0
    %v2000 = vsel %vm1803, %v1966, 0.0
    %v2001 = vsel %vm1802, %v1935, 0.0
    %v2002 = vsel %vm1803, %v1967, 0.0
    %v2003 = vsel %vm1802, %v1936, 0.0
    %v2004 = vsel %vm1803, %v1968, 0.0
    %v2005 = vsel %vm1802, %v1937, 0.0
    %v2006 = vsel %vm1803, %v1969, 0.0
    %v2007 = vsel %vm1802, %v1938, 0.0
    %v2008 = vsel %vm1803, %v1970, 0.0
    %v2009 = vsel %vm1802, %v1939, 0.0
    %v2010 = vsel %vm1803, %v1971, 0.0
    %v2011 = vsel %vm1802, %v1940, 0.0
    %v2012 = vsel %vm1803, %v1972, 0.0
    %v2013 = vsel %vm1802, %v1941, 0.0
    %v2014 = vsel %vm1803, %v1973, 0.0
    %v2015 = vsel %vm1802, %v1942, 0.0
    %v2016 = vsel %vm1803, %v1974, 0.0
    %v2017 = vsel %vm1802, %v1943, 0.0
    %v2018 = vsel %vm1803, %v1975, 0.0
    %v2019 = vsel %vm1802, %v1944, 0.0
    %v2020 = vsel %vm1803, %v1976, 0.0
    %v2021 = vsel %vm1802, %v1945, 0.0
    %v2022 = vsel %vm1803, %v1977, 0.0
    %v2023 = vsel %vm1802, %v1946, 0.0
    %v2024 = vsel %vm1803, %v1978, 0.0
    %v2025 = vsel %vm1802, %v1947, 0.0
    %v2026 = vsel %vm1803, %v1979, 0.0
    %v2027 = vsel %vm1802, %v1948, 0.0
    %v2028 = vsel %vm1803, %v1980, 0.0
    %v2029 = vsel %vm1802, %v1949, 0.0
    %v2030 = vsel %vm1803, %v1981, 0.0
    %v2031 = vsel %vm1802, %v1950, 0.0
    %v2032 = vsel %vm1803, %v1982, 0.0
    %v2033 = vsel %vm1802, %v1951, 0.0
    %v2034 = vsel %vm1803, %v1983, 0.0
    %v2035 = vsel %vm1802, %v1952, 0.0
    %v2036 = vsel %vm1803, %v1984, 0.0
    %v2037 = vsel %vm1802, %v1953, 0.0
    %v2038 = vsel %vm1803, %v1985, 0.0
    %v2039 = vsel %vm1802, %v1954, 0.0
    %v2040 = vsel %vm1803, %v1986, 0.0
    %v2041 = vsel %vm1802, %v1955, 0.0
    %v2042 = vsel %vm1803, %v1987, 0.0
    %v2043 = vsel %vm1802, %v1956, 0.0
    %v2044 = vsel %vm1803, %v1988, 0.0
    %v2045 = vsel %vm1802, %v1957, 0.0
    %v2046 = vsel %vm1803, %v1989, 0.0
    %v2047 = vsel %vm1802, %v1958, 0.0
    %v2048 = vsel %vm1803, %v1990, 0.0
    %v2049 = vsel %vm1802, %v1959, 0.0
    %v2050 = vsel %vm1803, %v1991, 0.0
    %v2051 = vsel %vm1802, %v1960, 0.0
    %v2052 = vsel %vm1803, %v1992, 0.0
    %v2053 = vsel %vm1802, %v1961, 0.0
    %v2054 = vsel %vm1803, %v1993, 0.0
    %v2055 = vsel %vm1802, %v1962, 0.0
    %v2056 = vsel %vm1803, %v1994, 0.0
    %v2057 = vsel %vm1802, %v1963, 0.0
    %v2058 = vsel %vm1803, %v1995, 0.0
    %v2059 = vsel %vm1802, %v1964, 0.0
    %v2060 = vsel %vm1803, %v1996, 0.0
    %v2061 = vmax.f32 %v1415, %v1997
    %v2062 = vmax.f32 %v1416, %v1998
    %v2063 = vmax.f32 %v1417, %v1999
    %v2064 = vmax.f32 %v1418, %v2000
    %v2065 = vmax.f32 %v1419, %v2001
    %v2066 = vmax.f32 %v1420, %v2002
    %v2067 = vmax.f32 %v1421, %v2003
    %v2068 = vmax.f32 %v1422, %v2004
    %v2069 = vmax.f32 %v1423, %v2005
    %v2070 = vmax.f32 %v1424, %v2006
    %v2071 = vmax.f32 %v1425, %v2007
    %v2072 = vmax.f32 %v1426, %v2008
    %v2073 = vmax.f32 %v1427, %v2009
    %v2074 = vmax.f32 %v1428, %v2010
    %v2075 = vmax.f32 %v1429, %v2011
    %v2076 = vmax.f32 %v1430, %v2012
    %v2077 = vmax.f32 %v1431, %v2013
    %v2078 = vmax.f32 %v1432, %v2014
    %v2079 = vmax.f32 %v1433, %v2015
    %v2080 = vmax.f32 %v1434, %v2016
    %v2081 = vmax.f32 %v1435, %v2017
    %v2082 = vmax.f32 %v1436, %v2018
    %v2083 = vmax.f32 %v1437, %v2019
    %v2084 = vmax.f32 %v1438, %v2020
    %v2085 = vmax.f32 %v1439, %v2021
    %v2086 = vmax.f32 %v1440, %v2022
    %v2087 = vmax.f32 %v1441, %v2023
    %v2088 = vmax.f32 %v1442, %v2024
    %v2089 = vmax.f32 %v1443, %v2025
    %v2090 = vmax.f32 %v1444, %v2026
    %v2091 = vmax.f32 %v1445, %v2027
    %v2092 = vmax.f32 %v1446, %v2028
    %v2093 = vmax.f32 %v1447, %v2029
    %v2094 = vmax.f32 %v1448, %v2030
    %v2095 = vmax.f32 %v1449, %v2031
    %v2096 = vmax.f32 %v1450, %v2032
    %v2097 = vmax.f32 %v1451, %v2033
    %v2098 = vmax.f32 %v1452, %v2034
    %v2099 = vmax.f32 %v1453, %v2035
    %v2100 = vmax.f32 %v1454, %v2036
    %v2101 = vmax.f32 %v1455, %v2037
    %v2102 = vmax.f32 %v1456, %v2038
    %v2103 = vmax.f32 %v1457, %v2039
    %v2104 = vmax.f32 %v1458, %v2040
    %v2105 = vmax.f32 %v1459, %v2041
    %v2106 = vmax.f32 %v1460, %v2042
    %v2107 = vmax.f32 %v1461, %v2043
    %v2108 = vmax.f32 %v1462, %v2044
    %v2109 = vmax.f32 %v1463, %v2045
    %v2110 = vmax.f32 %v1464, %v2046
    %v2111 = vmax.f32 %v1465, %v2047
    %v2112 = vmax.f32 %v1466, %v2048
    %v2113 = vmax.f32 %v1467, %v2049
    %v2114 = vmax.f32 %v1468, %v2050
    %v2115 = vmax.f32 %v1469, %v2051
    %v2116 = vmax.f32 %v1470, %v2052
    %v2117 = vmax.f32 %v1471, %v2053
    %v2118 = vmax.f32 %v1472, %v2054
    %v2119 = vmax.f32 %v1473, %v2055
    %v2120 = vmax.f32 %v1474, %v2056
    %v2121 = vmax.f32 %v1475, %v2057
    %v2122 = vmax.f32 %v1476, %v2058
    %v2123 = vmax.f32 %v1477, %v2059
    %v2124 = vmax.f32 %v1478, %v2060
    %vm2125 = vcmp.ge.s32.totalorder %v508, 4
    %vm2126 = vcmp.ge.s32.totalorder %v509, 4
    %2127 = vrot.lane.b32.xlu0 %v1738, 4
    %v2128 = vpop.permute.xlu0 %2127
    %2129 = vrot.lane.b32.xlu0 %v1740, 4
    %v2130 = vpop.permute.xlu0 %2129
    %2131 = vrot.lane.b32.xlu0 %v1742, 4
    %v2132 = vpop.permute.xlu0 %2131
    %2133 = vrot.lane.b32.xlu0 %v1744, 4
    %v2134 = vpop.permute.xlu0 %2133
    %2135 = vrot.lane.b32.xlu0 %v1746, 4
    %v2136 = vpop.permute.xlu0 %2135
    %2137 = vrot.lane.b32.xlu0 %v1748, 4
    %v2138 = vpop.permute.xlu0 %2137
    %2139 = vrot.lane.b32.xlu0 %v1750, 4
    %v2140 = vpop.permute.xlu0 %2139
    %2141 = vrot.lane.b32.xlu0 %v1752, 4
    %v2142 = vpop.permute.xlu0 %2141
    %2143 = vrot.lane.b32.xlu0 %v1754, 4
    %v2144 = vpop.permute.xlu0 %2143
    %2145 = vrot.lane.b32.xlu0 %v1756, 4
    %v2146 = vpop.permute.xlu0 %2145
    %2147 = vrot.lane.b32.xlu0 %v1758, 4
    %v2148 = vpop.permute.xlu0 %2147
    %2149 = vrot.lane.b32.xlu0 %v1760, 4
    %v2150 = vpop.permute.xlu0 %2149
    %2151 = vrot.lane.b32.xlu0 %v1762, 4
    %v2152 = vpop.permute.xlu0 %2151
    %2153 = vrot.lane.b32.xlu0 %v1764, 4
    %v2154 = vpop.permute.xlu0 %2153
    %2155 = vrot.lane.b32.xlu0 %v1766, 4
    %v2156 = vpop.permute.xlu0 %2155
    %2157 = vrot.lane.b32.xlu0 %v1768, 4
    %v2158 = vpop.permute.xlu0 %2157
    %2159 = vrot.lane.b32.xlu0 %v1770, 4
    %v2160 = vpop.permute.xlu0 %2159
    %2161 = vrot.lane.b32.xlu0 %v1772, 4
    %v2162 = vpop.permute.xlu0 %2161
    %2163 = vrot.lane.b32.xlu0 %v1774, 4
    %v2164 = vpop.permute.xlu0 %2163
    %2165 = vrot.lane.b32.xlu0 %v1776, 4
    %v2166 = vpop.permute.xlu0 %2165
    %2167 = vrot.lane.b32.xlu0 %v1778, 4
    %v2168 = vpop.permute.xlu0 %2167
    %2169 = vrot.lane.b32.xlu0 %v1780, 4
    %v2170 = vpop.permute.xlu0 %2169
    %2171 = vrot.lane.b32.xlu0 %v1782, 4
    %v2172 = vpop.permute.xlu0 %2171
    %2173 = vrot.lane.b32.xlu0 %v1784, 4
    %v2174 = vpop.permute.xlu0 %2173
    %2175 = vrot.lane.b32.xlu0 %v1786, 4
    %v2176 = vpop.permute.xlu0 %2175
    %2177 = vrot.lane.b32.xlu0 %v1788, 4
    %v2178 = vpop.permute.xlu0 %2177
    %2179 = vrot.lane.b32.xlu0 %v1790, 4
    %v2180 = vpop.permute.xlu0 %2179
    %2181 = vrot.lane.b32.xlu0 %v1792, 4
    %v2182 = vpop.permute.xlu0 %2181
    %2183 = vrot.lane.b32.xlu0 %v1794, 4
    %v2184 = vpop.permute.xlu0 %2183
    %2185 = vrot.lane.b32.xlu0 %v1796, 4
    %v2186 = vpop.permute.xlu0 %2185
    %2187 = vrot.lane.b32.xlu0 %v1798, 4
    %v2188 = vpop.permute.xlu0 %2187
    %2189 = vrot.lane.b32.xlu0 %v1800, 4
    %v2190 = vpop.permute.xlu0 %2189
    %2191 = vrot.lane.b32.xlu0 %v1739, 4
    %v2192 = vpop.permute.xlu0 %2191
    %2193 = vrot.lane.b32.xlu0 %v1741, 4
    %v2194 = vpop.permute.xlu0 %2193
    %2195 = vrot.lane.b32.xlu0 %v1743, 4
    %v2196 = vpop.permute.xlu0 %2195
    %2197 = vrot.lane.b32.xlu0 %v1745, 4
    %v2198 = vpop.permute.xlu0 %2197
    %2199 = vrot.lane.b32.xlu0 %v1747, 4
    %v2200 = vpop.permute.xlu0 %2199
    %2201 = vrot.lane.b32.xlu0 %v1749, 4
    %v2202 = vpop.permute.xlu0 %2201
    %2203 = vrot.lane.b32.xlu0 %v1751, 4
    %v2204 = vpop.permute.xlu0 %2203
    %2205 = vrot.lane.b32.xlu0 %v1753, 4
    %v2206 = vpop.permute.xlu0 %2205
    %2207 = vrot.lane.b32.xlu0 %v1755, 4
    %v2208 = vpop.permute.xlu0 %2207
    %2209 = vrot.lane.b32.xlu0 %v1757, 4
    %v2210 = vpop.permute.xlu0 %2209
    %2211 = vrot.lane.b32.xlu0 %v1759, 4
    %v2212 = vpop.permute.xlu0 %2211
    %2213 = vrot.lane.b32.xlu0 %v1761, 4
    %v2214 = vpop.permute.xlu0 %2213
    %2215 = vrot.lane.b32.xlu0 %v1763, 4
    %v2216 = vpop.permute.xlu0 %2215
    %2217 = vrot.lane.b32.xlu0 %v1765, 4
    %v2218 = vpop.permute.xlu0 %2217
    %2219 = vrot.lane.b32.xlu0 %v1767, 4
    %v2220 = vpop.permute.xlu0 %2219
    %2221 = vrot.lane.b32.xlu0 %v1769, 4
    %v2222 = vpop.permute.xlu0 %2221
    %2223 = vrot.lane.b32.xlu0 %v1771, 4
    %v2224 = vpop.permute.xlu0 %2223
    %2225 = vrot.lane.b32.xlu0 %v1773, 4
    %v2226 = vpop.permute.xlu0 %2225
    %2227 = vrot.lane.b32.xlu0 %v1775, 4
    %v2228 = vpop.permute.xlu0 %2227
    %2229 = vrot.lane.b32.xlu0 %v1777, 4
    %v2230 = vpop.permute.xlu0 %2229
    %2231 = vrot.lane.b32.xlu0 %v1779, 4
    %v2232 = vpop.permute.xlu0 %2231
    %2233 = vrot.lane.b32.xlu0 %v1781, 4
    %v2234 = vpop.permute.xlu0 %2233
    %2235 = vrot.lane.b32.xlu0 %v1783, 4
    %v2236 = vpop.permute.xlu0 %2235
    %2237 = vrot.lane.b32.xlu0 %v1785, 4
    %v2238 = vpop.permute.xlu0 %2237
    %2239 = vrot.lane.b32.xlu0 %v1787, 4
    %v2240 = vpop.permute.xlu0 %2239
    %2241 = vrot.lane.b32.xlu0 %v1789, 4
    %v2242 = vpop.permute.xlu0 %2241
    %2243 = vrot.lane.b32.xlu0 %v1791, 4
    %v2244 = vpop.permute.xlu0 %2243
    %2245 = vrot.lane.b32.xlu0 %v1793, 4
    %v2246 = vpop.permute.xlu0 %2245
    %2247 = vrot.lane.b32.xlu0 %v1795, 4
    %v2248 = vpop.permute.xlu0 %2247
    %2249 = vrot.lane.b32.xlu0 %v1797, 4
    %v2250 = vpop.permute.xlu0 %2249
    %2251 = vrot.lane.b32.xlu0 %v1799, 4
    %v2252 = vpop.permute.xlu0 %2251
    %2253 = vrot.lane.b32.xlu0 %v1801, 4
    %v2254 = vpop.permute.xlu0 %2253
    %vm2255 = vcmp.lt.s32.totalorder %v508, 4
    %v2256 = vsel %vm2255, %v2128, %v2192
    %v2257 = vsel %vm2255, %v2130, %v2194
    %v2258 = vsel %vm2255, %v2132, %v2196
    %v2259 = vsel %vm2255, %v2134, %v2198
    %v2260 = vsel %vm2255, %v2136, %v2200
    %v2261 = vsel %vm2255, %v2138, %v2202
    %v2262 = vsel %vm2255, %v2140, %v2204
    %v2263 = vsel %vm2255, %v2142, %v2206
    %v2264 = vsel %vm2255, %v2144, %v2208
    %v2265 = vsel %vm2255, %v2146, %v2210
    %v2266 = vsel %vm2255, %v2148, %v2212
    %v2267 = vsel %vm2255, %v2150, %v2214
    %v2268 = vsel %vm2255, %v2152, %v2216
    %v2269 = vsel %vm2255, %v2154, %v2218
    %v2270 = vsel %vm2255, %v2156, %v2220
    %v2271 = vsel %vm2255, %v2158, %v2222
    %v2272 = vsel %vm2255, %v2160, %v2224
    %v2273 = vsel %vm2255, %v2162, %v2226
    %v2274 = vsel %vm2255, %v2164, %v2228
    %v2275 = vsel %vm2255, %v2166, %v2230
    %v2276 = vsel %vm2255, %v2168, %v2232
    %v2277 = vsel %vm2255, %v2170, %v2234
    %v2278 = vsel %vm2255, %v2172, %v2236
    %v2279 = vsel %vm2255, %v2174, %v2238
    %v2280 = vsel %vm2255, %v2176, %v2240
    %v2281 = vsel %vm2255, %v2178, %v2242
    %v2282 = vsel %vm2255, %v2180, %v2244
    %v2283 = vsel %vm2255, %v2182, %v2246
    %v2284 = vsel %vm2255, %v2184, %v2248
    %v2285 = vsel %vm2255, %v2186, %v2250
    %v2286 = vsel %vm2255, %v2188, %v2252
    %v2287 = vsel %vm2255, %v2190, %v2254
    %v2288 = vsel %vm2255, %v2192, %v2128
    %v2289 = vsel %vm2255, %v2194, %v2130
    %v2290 = vsel %vm2255, %v2196, %v2132
    %v2291 = vsel %vm2255, %v2198, %v2134
    %v2292 = vsel %vm2255, %v2200, %v2136
    %v2293 = vsel %vm2255, %v2202, %v2138
    %v2294 = vsel %vm2255, %v2204, %v2140
    %v2295 = vsel %vm2255, %v2206, %v2142
    %v2296 = vsel %vm2255, %v2208, %v2144
    %v2297 = vsel %vm2255, %v2210, %v2146
    %v2298 = vsel %vm2255, %v2212, %v2148
    %v2299 = vsel %vm2255, %v2214, %v2150
    %v2300 = vsel %vm2255, %v2216, %v2152
    %v2301 = vsel %vm2255, %v2218, %v2154
    %v2302 = vsel %vm2255, %v2220, %v2156
    %v2303 = vsel %vm2255, %v2222, %v2158
    %v2304 = vsel %vm2255, %v2224, %v2160
    %v2305 = vsel %vm2255, %v2226, %v2162
    %v2306 = vsel %vm2255, %v2228, %v2164
    %v2307 = vsel %vm2255, %v2230, %v2166
    %v2308 = vsel %vm2255, %v2232, %v2168
    %v2309 = vsel %vm2255, %v2234, %v2170
    %v2310 = vsel %vm2255, %v2236, %v2172
    %v2311 = vsel %vm2255, %v2238, %v2174
    %v2312 = vsel %vm2255, %v2240, %v2176
    %v2313 = vsel %vm2255, %v2242, %v2178
    %v2314 = vsel %vm2255, %v2244, %v2180
    %v2315 = vsel %vm2255, %v2246, %v2182
    %v2316 = vsel %vm2255, %v2248, %v2184
    %v2317 = vsel %vm2255, %v2250, %v2186
    %v2318 = vsel %vm2255, %v2252, %v2188
    %v2319 = vsel %vm2255, %v2254, %v2190
    %v2320 = vsel %vm2125, %v2288, 0.0
    %v2321 = vsel %vm2126, %v2256, 0.0
    %v2322 = vsel %vm2125, %v2289, 0.0
    %v2323 = vsel %vm2126, %v2257, 0.0
    %v2324 = vsel %vm2125, %v2290, 0.0
    %v2325 = vsel %vm2126, %v2258, 0.0
    %v2326 = vsel %vm2125, %v2291, 0.0
    %v2327 = vsel %vm2126, %v2259, 0.0
    %v2328 = vsel %vm2125, %v2292, 0.0
    %v2329 = vsel %vm2126, %v2260, 0.0
    %v2330 = vsel %vm2125, %v2293, 0.0
    %v2331 = vsel %vm2126, %v2261, 0.0
    %v2332 = vsel %vm2125, %v2294, 0.0
    %v2333 = vsel %vm2126, %v2262, 0.0
    %v2334 = vsel %vm2125, %v2295, 0.0
    %v2335 = vsel %vm2126, %v2263, 0.0
    %v2336 = vsel %vm2125, %v2296, 0.0
    %v2337 = vsel %vm2126, %v2264, 0.0
    %v2338 = vsel %vm2125, %v2297, 0.0
    %v2339 = vsel %vm2126, %v2265, 0.0
    %v2340 = vsel %vm2125, %v2298, 0.0
    %v2341 = vsel %vm2126, %v2266, 0.0
    %v2342 = vsel %vm2125, %v2299, 0.0
    %v2343 = vsel %vm2126, %v2267, 0.0
    %v2344 = vsel %vm2125, %v2300, 0.0
    %v2345 = vsel %vm2126, %v2268, 0.0
    %v2346 = vsel %vm2125, %v2301, 0.0
    %v2347 = vsel %vm2126, %v2269, 0.0
    %v2348 = vsel %vm2125, %v2302, 0.0
    %v2349 = vsel %vm2126, %v2270, 0.0
    %v2350 = vsel %vm2125, %v2303, 0.0
    %v2351 = vsel %vm2126, %v2271, 0.0
    %v2352 = vsel %vm2125, %v2304, 0.0
    %v2353 = vsel %vm2126, %v2272, 0.0
    %v2354 = vsel %vm2125, %v2305, 0.0
    %v2355 = vsel %vm2126, %v2273, 0.0
    %v2356 = vsel %vm2125, %v2306, 0.0
    %v2357 = vsel %vm2126, %v2274, 0.0
    %v2358 = vsel %vm2125, %v2307, 0.0
    %v2359 = vsel %vm2126, %v2275, 0.0
    %v2360 = vsel %vm2125, %v2308, 0.0
    %v2361 = vsel %vm2126, %v2276, 0.0
    %v2362 = vsel %vm2125, %v2309, 0.0
    %v2363 = vsel %vm2126, %v2277, 0.0
    %v2364 = vsel %vm2125, %v2310, 0.0
    %v2365 = vsel %vm2126, %v2278, 0.0
    %v2366 = vsel %vm2125, %v2311, 0.0
    %v2367 = vsel %vm2126, %v2279, 0.0
    %v2368 = vsel %vm2125, %v2312, 0.0
    %v2369 = vsel %vm2126, %v2280, 0.0
    %v2370 = vsel %vm2125, %v2313, 0.0
    %v2371 = vsel %vm2126, %v2281, 0.0
    %v2372 = vsel %vm2125, %v2314, 0.0
    %v2373 = vsel %vm2126, %v2282, 0.0
    %v2374 = vsel %vm2125, %v2315, 0.0
    %v2375 = vsel %vm2126, %v2283, 0.0
    %v2376 = vsel %vm2125, %v2316, 0.0
    %v2377 = vsel %vm2126, %v2284, 0.0
    %v2378 = vsel %vm2125, %v2317, 0.0
    %v2379 = vsel %vm2126, %v2285, 0.0
    %v2380 = vsel %vm2125, %v2318, 0.0
    %v2381 = vsel %vm2126, %v2286, 0.0
    %v2382 = vsel %vm2125, %v2319, 0.0
    %v2383 = vsel %vm2126, %v2287, 0.0
    %v2384 = vmax.f32 %v1738, %v2320
    %v2385 = vmax.f32 %v1739, %v2321
    %v2386 = vmax.f32 %v1740, %v2322
    %v2387 = vmax.f32 %v1741, %v2323
    %v2388 = vmax.f32 %v1742, %v2324
    %v2389 = vmax.f32 %v1743, %v2325
    %v2390 = vmax.f32 %v1744, %v2326
    %v2391 = vmax.f32 %v1745, %v2327
    %v2392 = vmax.f32 %v1746, %v2328
    %v2393 = vmax.f32 %v1747, %v2329
    %v2394 = vmax.f32 %v1748, %v2330
    %v2395 = vmax.f32 %v1749, %v2331
    %v2396 = vmax.f32 %v1750, %v2332
    %v2397 = vmax.f32 %v1751, %v2333
    %v2398 = vmax.f32 %v1752, %v2334
    %v2399 = vmax.f32 %v1753, %v2335
    %v2400 = vmax.f32 %v1754, %v2336
    %v2401 = vmax.f32 %v1755, %v2337
    %v2402 = vmax.f32 %v1756, %v2338
    %v2403 = vmax.f32 %v1757, %v2339
    %v2404 = vmax.f32 %v1758, %v2340
    %v2405 = vmax.f32 %v1759, %v2341
    %v2406 = vmax.f32 %v1760, %v2342
    %v2407 = vmax.f32 %v1761, %v2343
    %v2408 = vmax.f32 %v1762, %v2344
    %v2409 = vmax.f32 %v1763, %v2345
    %v2410 = vmax.f32 %v1764, %v2346
    %v2411 = vmax.f32 %v1765, %v2347
    %v2412 = vmax.f32 %v1766, %v2348
    %v2413 = vmax.f32 %v1767, %v2349
    %v2414 = vmax.f32 %v1768, %v2350
    %v2415 = vmax.f32 %v1769, %v2351
    %v2416 = vmax.f32 %v1770, %v2352
    %v2417 = vmax.f32 %v1771, %v2353
    %v2418 = vmax.f32 %v1772, %v2354
    %v2419 = vmax.f32 %v1773, %v2355
    %v2420 = vmax.f32 %v1774, %v2356
    %v2421 = vmax.f32 %v1775, %v2357
    %v2422 = vmax.f32 %v1776, %v2358
    %v2423 = vmax.f32 %v1777, %v2359
    %v2424 = vmax.f32 %v1778, %v2360
    %v2425 = vmax.f32 %v1779, %v2361
    %v2426 = vmax.f32 %v1780, %v2362
    %v2427 = vmax.f32 %v1781, %v2363
    %v2428 = vmax.f32 %v1782, %v2364
    %v2429 = vmax.f32 %v1783, %v2365
    %v2430 = vmax.f32 %v1784, %v2366
    %v2431 = vmax.f32 %v1785, %v2367
    %v2432 = vmax.f32 %v1786, %v2368
    %v2433 = vmax.f32 %v1787, %v2369
    %v2434 = vmax.f32 %v1788, %v2370
    %v2435 = vmax.f32 %v1789, %v2371
    %v2436 = vmax.f32 %v1790, %v2372
    %v2437 = vmax.f32 %v1791, %v2373
    %v2438 = vmax.f32 %v1792, %v2374
    %v2439 = vmax.f32 %v1793, %v2375
    %v2440 = vmax.f32 %v1794, %v2376
    %v2441 = vmax.f32 %v1795, %v2377
    %v2442 = vmax.f32 %v1796, %v2378
    %v2443 = vmax.f32 %v1797, %v2379
    %v2444 = vmax.f32 %v1798, %v2380
    %v2445 = vmax.f32 %v1799, %v2381
    %v2446 = vmax.f32 %v1800, %v2382
    %v2447 = vmax.f32 %v1801, %v2383
    %vm2448 = vcmp.lt.s32.totalorder %v508, 251
    %vm2449 = vcmp.lt.s32.totalorder %v509, 251
    %2450 = vrot.lane.b32.xlu0 %v2061, 123
    %v2451 = vpop.permute.xlu0 %2450
    %2452 = vrot.lane.b32.xlu0 %v2063, 123
    %v2453 = vpop.permute.xlu0 %2452
    %2454 = vrot.lane.b32.xlu0 %v2065, 123
    %v2455 = vpop.permute.xlu0 %2454
    %2456 = vrot.lane.b32.xlu0 %v2067, 123
    %v2457 = vpop.permute.xlu0 %2456
    %2458 = vrot.lane.b32.xlu0 %v2069, 123
    %v2459 = vpop.permute.xlu0 %2458
    %2460 = vrot.lane.b32.xlu0 %v2071, 123
    %v2461 = vpop.permute.xlu0 %2460
    %2462 = vrot.lane.b32.xlu0 %v2073, 123
    %v2463 = vpop.permute.xlu0 %2462
    %2464 = vrot.lane.b32.xlu0 %v2075, 123
    %v2465 = vpop.permute.xlu0 %2464
    %2466 = vrot.lane.b32.xlu0 %v2077, 123
    %v2467 = vpop.permute.xlu0 %2466
    %2468 = vrot.lane.b32.xlu0 %v2079, 123
    %v2469 = vpop.permute.xlu0 %2468
    %2470 = vrot.lane.b32.xlu0 %v2081, 123
    %v2471 = vpop.permute.xlu0 %2470
    %2472 = vrot.lane.b32.xlu0 %v2083, 123
    %v2473 = vpop.permute.xlu0 %2472
    %2474 = vrot.lane.b32.xlu0 %v2085, 123
    %v2475 = vpop.permute.xlu0 %2474
    %2476 = vrot.lane.b32.xlu0 %v2087, 123
    %v2477 = vpop.permute.xlu0 %2476
    %2478 = vrot.lane.b32.xlu0 %v2089, 123
    %v2479 = vpop.permute.xlu0 %2478
    %2480 = vrot.lane.b32.xlu0 %v2091, 123
    %v2481 = vpop.permute.xlu0 %2480
    %2482 = vrot.lane.b32.xlu0 %v2093, 123
    %v2483 = vpop.permute.xlu0 %2482
    %2484 = vrot.lane.b32.xlu0 %v2095, 123
    %v2485 = vpop.permute.xlu0 %2484
    %2486 = vrot.lane.b32.xlu0 %v2097, 123
    %v2487 = vpop.permute.xlu0 %2486
    %2488 = vrot.lane.b32.xlu0 %v2099, 123
    %v2489 = vpop.permute.xlu0 %2488
    %2490 = vrot.lane.b32.xlu0 %v2101, 123
    %v2491 = vpop.permute.xlu0 %2490
    %2492 = vrot.lane.b32.xlu0 %v2103, 123
    %v2493 = vpop.permute.xlu0 %2492
    %2494 = vrot.lane.b32.xlu0 %v2105, 123
    %v2495 = vpop.permute.xlu0 %2494
    %2496 = vrot.lane.b32.xlu0 %v2107, 123
    %v2497 = vpop.permute.xlu0 %2496
    %2498 = vrot.lane.b32.xlu0 %v2109, 123
    %v2499 = vpop.permute.xlu0 %2498
    %2500 = vrot.lane.b32.xlu0 %v2111, 123
    %v2501 = vpop.permute.xlu0 %2500
    %2502 = vrot.lane.b32.xlu0 %v2113, 123
    %v2503 = vpop.permute.xlu0 %2502
    %2504 = vrot.lane.b32.xlu0 %v2115, 123
    %v2505 = vpop.permute.xlu0 %2504
    %2506 = vrot.lane.b32.xlu0 %v2117, 123
    %v2507 = vpop.permute.xlu0 %2506
    %2508 = vrot.lane.b32.xlu0 %v2119, 123
    %v2509 = vpop.permute.xlu0 %2508
    %2510 = vrot.lane.b32.xlu0 %v2121, 123
    %v2511 = vpop.permute.xlu0 %2510
    %2512 = vrot.lane.b32.xlu0 %v2123, 123
    %v2513 = vpop.permute.xlu0 %2512
    %2514 = vrot.lane.b32.xlu0 %v2062, 123
    %v2515 = vpop.permute.xlu0 %2514
    %2516 = vrot.lane.b32.xlu0 %v2064, 123
    %v2517 = vpop.permute.xlu0 %2516
    %2518 = vrot.lane.b32.xlu0 %v2066, 123
    %v2519 = vpop.permute.xlu0 %2518
    %2520 = vrot.lane.b32.xlu0 %v2068, 123
    %v2521 = vpop.permute.xlu0 %2520
    %2522 = vrot.lane.b32.xlu0 %v2070, 123
    %v2523 = vpop.permute.xlu0 %2522
    %2524 = vrot.lane.b32.xlu0 %v2072, 123
    %v2525 = vpop.permute.xlu0 %2524
    %2526 = vrot.lane.b32.xlu0 %v2074, 123
    %v2527 = vpop.permute.xlu0 %2526
    %2528 = vrot.lane.b32.xlu0 %v2076, 123
    %v2529 = vpop.permute.xlu0 %2528
    %2530 = vrot.lane.b32.xlu0 %v2078, 123
    %v2531 = vpop.permute.xlu0 %2530
    %2532 = vrot.lane.b32.xlu0 %v2080, 123
    %v2533 = vpop.permute.xlu0 %2532
    %2534 = vrot.lane.b32.xlu0 %v2082, 123
    %v2535 = vpop.permute.xlu0 %2534
    %2536 = vrot.lane.b32.xlu0 %v2084, 123
    %v2537 = vpop.permute.xlu0 %2536
    %2538 = vrot.lane.b32.xlu0 %v2086, 123
    %v2539 = vpop.permute.xlu0 %2538
    %2540 = vrot.lane.b32.xlu0 %v2088, 123
    %v2541 = vpop.permute.xlu0 %2540
    %2542 = vrot.lane.b32.xlu0 %v2090, 123
    %v2543 = vpop.permute.xlu0 %2542
    %2544 = vrot.lane.b32.xlu0 %v2092, 123
    %v2545 = vpop.permute.xlu0 %2544
    %2546 = vrot.lane.b32.xlu0 %v2094, 123
    %v2547 = vpop.permute.xlu0 %2546
    %2548 = vrot.lane.b32.xlu0 %v2096, 123
    %v2549 = vpop.permute.xlu0 %2548
    %2550 = vrot.lane.b32.xlu0 %v2098, 123
    %v2551 = vpop.permute.xlu0 %2550
    %2552 = vrot.lane.b32.xlu0 %v2100, 123
    %v2553 = vpop.permute.xlu0 %2552
    %2554 = vrot.lane.b32.xlu0 %v2102, 123
    %v2555 = vpop.permute.xlu0 %2554
    %2556 = vrot.lane.b32.xlu0 %v2104, 123
    %v2557 = vpop.permute.xlu0 %2556
    %2558 = vrot.lane.b32.xlu0 %v2106, 123
    %v2559 = vpop.permute.xlu0 %2558
    %2560 = vrot.lane.b32.xlu0 %v2108, 123
    %v2561 = vpop.permute.xlu0 %2560
    %2562 = vrot.lane.b32.xlu0 %v2110, 123
    %v2563 = vpop.permute.xlu0 %2562
    %2564 = vrot.lane.b32.xlu0 %v2112, 123
    %v2565 = vpop.permute.xlu0 %2564
    %2566 = vrot.lane.b32.xlu0 %v2114, 123
    %v2567 = vpop.permute.xlu0 %2566
    %2568 = vrot.lane.b32.xlu0 %v2116, 123
    %v2569 = vpop.permute.xlu0 %2568
    %2570 = vrot.lane.b32.xlu0 %v2118, 123
    %v2571 = vpop.permute.xlu0 %2570
    %2572 = vrot.lane.b32.xlu0 %v2120, 123
    %v2573 = vpop.permute.xlu0 %2572
    %2574 = vrot.lane.b32.xlu0 %v2122, 123
    %v2575 = vpop.permute.xlu0 %2574
    %2576 = vrot.lane.b32.xlu0 %v2124, 123
    %v2577 = vpop.permute.xlu0 %2576
    %vm2578 = vcmp.lt.s32.totalorder %v508, 123
    %v2579 = vsel %vm2578, %v2451, %v2515
    %v2580 = vsel %vm2578, %v2453, %v2517
    %v2581 = vsel %vm2578, %v2455, %v2519
    %v2582 = vsel %vm2578, %v2457, %v2521
    %v2583 = vsel %vm2578, %v2459, %v2523
    %v2584 = vsel %vm2578, %v2461, %v2525
    %v2585 = vsel %vm2578, %v2463, %v2527
    %v2586 = vsel %vm2578, %v2465, %v2529
    %v2587 = vsel %vm2578, %v2467, %v2531
    %v2588 = vsel %vm2578, %v2469, %v2533
    %v2589 = vsel %vm2578, %v2471, %v2535
    %v2590 = vsel %vm2578, %v2473, %v2537
    %v2591 = vsel %vm2578, %v2475, %v2539
    %v2592 = vsel %vm2578, %v2477, %v2541
    %v2593 = vsel %vm2578, %v2479, %v2543
    %v2594 = vsel %vm2578, %v2481, %v2545
    %v2595 = vsel %vm2578, %v2483, %v2547
    %v2596 = vsel %vm2578, %v2485, %v2549
    %v2597 = vsel %vm2578, %v2487, %v2551
    %v2598 = vsel %vm2578, %v2489, %v2553
    %v2599 = vsel %vm2578, %v2491, %v2555
    %v2600 = vsel %vm2578, %v2493, %v2557
    %v2601 = vsel %vm2578, %v2495, %v2559
    %v2602 = vsel %vm2578, %v2497, %v2561
    %v2603 = vsel %vm2578, %v2499, %v2563
    %v2604 = vsel %vm2578, %v2501, %v2565
    %v2605 = vsel %vm2578, %v2503, %v2567
    %v2606 = vsel %vm2578, %v2505, %v2569
    %v2607 = vsel %vm2578, %v2507, %v2571
    %v2608 = vsel %vm2578, %v2509, %v2573
    %v2609 = vsel %vm2578, %v2511, %v2575
    %v2610 = vsel %vm2578, %v2513, %v2577
    %v2611 = vsel %vm2578, %v2515, %v2451
    %v2612 = vsel %vm2578, %v2517, %v2453
    %v2613 = vsel %vm2578, %v2519, %v2455
    %v2614 = vsel %vm2578, %v2521, %v2457
    %v2615 = vsel %vm2578, %v2523, %v2459
    %v2616 = vsel %vm2578, %v2525, %v2461
    %v2617 = vsel %vm2578, %v2527, %v2463
    %v2618 = vsel %vm2578, %v2529, %v2465
    %v2619 = vsel %vm2578, %v2531, %v2467
    %v2620 = vsel %vm2578, %v2533, %v2469
    %v2621 = vsel %vm2578, %v2535, %v2471
    %v2622 = vsel %vm2578, %v2537, %v2473
    %v2623 = vsel %vm2578, %v2539, %v2475
    %v2624 = vsel %vm2578, %v2541, %v2477
    %v2625 = vsel %vm2578, %v2543, %v2479
    %v2626 = vsel %vm2578, %v2545, %v2481
    %v2627 = vsel %vm2578, %v2547, %v2483
    %v2628 = vsel %vm2578, %v2549, %v2485
    %v2629 = vsel %vm2578, %v2551, %v2487
    %v2630 = vsel %vm2578, %v2553, %v2489
    %v2631 = vsel %vm2578, %v2555, %v2491
    %v2632 = vsel %vm2578, %v2557, %v2493
    %v2633 = vsel %vm2578, %v2559, %v2495
    %v2634 = vsel %vm2578, %v2561, %v2497
    %v2635 = vsel %vm2578, %v2563, %v2499
    %v2636 = vsel %vm2578, %v2565, %v2501
    %v2637 = vsel %vm2578, %v2567, %v2503
    %v2638 = vsel %vm2578, %v2569, %v2505
    %v2639 = vsel %vm2578, %v2571, %v2507
    %v2640 = vsel %vm2578, %v2573, %v2509
    %v2641 = vsel %vm2578, %v2575, %v2511
    %v2642 = vsel %vm2578, %v2577, %v2513
    %v2643 = vsel %vm2448, %v2579, 0.0
    %v2644 = vsel %vm2449, %v2611, 0.0
    %v2645 = vsel %vm2448, %v2580, 0.0
    %v2646 = vsel %vm2449, %v2612, 0.0
    %v2647 = vsel %vm2448, %v2581, 0.0
    %v2648 = vsel %vm2449, %v2613, 0.0
    %v2649 = vsel %vm2448, %v2582, 0.0
    %v2650 = vsel %vm2449, %v2614, 0.0
    %v2651 = vsel %vm2448, %v2583, 0.0
    %v2652 = vsel %vm2449, %v2615, 0.0
    %v2653 = vsel %vm2448, %v2584, 0.0
    %v2654 = vsel %vm2449, %v2616, 0.0
    %v2655 = vsel %vm2448, %v2585, 0.0
    %v2656 = vsel %vm2449, %v2617, 0.0
    %v2657 = vsel %vm2448, %v2586, 0.0
    %v2658 = vsel %vm2449, %v2618, 0.0
    %v2659 = vsel %vm2448, %v2587, 0.0
    %v2660 = vsel %vm2449, %v2619, 0.0
    %v2661 = vsel %vm2448, %v2588, 0.0
    %v2662 = vsel %vm2449, %v2620, 0.0
    %v2663 = vsel %vm2448, %v2589, 0.0
    %v2664 = vsel %vm2449, %v2621, 0.0
    %v2665 = vsel %vm2448, %v2590, 0.0
    %v2666 = vsel %vm2449, %v2622, 0.0
    %v2667 = vsel %vm2448, %v2591, 0.0
    %v2668 = vsel %vm2449, %v2623, 0.0
    %v2669 = vsel %vm2448, %v2592, 0.0
    %v2670 = vsel %vm2449, %v2624, 0.0
    %v2671 = vsel %vm2448, %v2593, 0.0
    %v2672 = vsel %vm2449, %v2625, 0.0
    %v2673 = vsel %vm2448, %v2594, 0.0
    %v2674 = vsel %vm2449, %v2626, 0.0
    %v2675 = vsel %vm2448, %v2595, 0.0
    %v2676 = vsel %vm2449, %v2627, 0.0
    %v2677 = vsel %vm2448, %v2596, 0.0
    %v2678 = vsel %vm2449, %v2628, 0.0
    %v2679 = vsel %vm2448, %v2597, 0.0
    %v2680 = vsel %vm2449, %v2629, 0.0
    %v2681 = vsel %vm2448, %v2598, 0.0
    %v2682 = vsel %vm2449, %v2630, 0.0
    %v2683 = vsel %vm2448, %v2599, 0.0
    %v2684 = vsel %vm2449, %v2631, 0.0
    %v2685 = vsel %vm2448, %v2600, 0.0
    %v2686 = vsel %vm2449, %v2632, 0.0
    %v2687 = vsel %vm2448, %v2601, 0.0
    %v2688 = vsel %vm2449, %v2633, 0.0
    %v2689 = vsel %vm2448, %v2602, 0.0
    %v2690 = vsel %vm2449, %v2634, 0.0
    %v2691 = vsel %vm2448, %v2603, 0.0
    %v2692 = vsel %vm2449, %v2635, 0.0
    %v2693 = vsel %vm2448, %v2604, 0.0
    %v2694 = vsel %vm2449, %v2636, 0.0
    %v2695 = vsel %vm2448, %v2605, 0.0
    %v2696 = vsel %vm2449, %v2637, 0.0
    %v2697 = vsel %vm2448, %v2606, 0.0
    %v2698 = vsel %vm2449, %v2638, 0.0
    %v2699 = vsel %vm2448, %v2607, 0.0
    %v2700 = vsel %vm2449, %v2639, 0.0
    %v2701 = vsel %vm2448, %v2608, 0.0
    %v2702 = vsel %vm2449, %v2640, 0.0
    %v2703 = vsel %vm2448, %v2609, 0.0
    %v2704 = vsel %vm2449, %v2641, 0.0
    %v2705 = vsel %vm2448, %v2610, 0.0
    %v2706 = vsel %vm2449, %v2642, 0.0
    %v2707 = vmax.f32 %v2061, %v2643
    %v2708 = vmax.f32 %v2062, %v2644
    %v2709 = vmax.f32 %v2063, %v2645
    %v2710 = vmax.f32 %v2064, %v2646
    %v2711 = vmax.f32 %v2065, %v2647
    %v2712 = vmax.f32 %v2066, %v2648
    %v2713 = vmax.f32 %v2067, %v2649
    %v2714 = vmax.f32 %v2068, %v2650
    %v2715 = vmax.f32 %v2069, %v2651
    %v2716 = vmax.f32 %v2070, %v2652
    %v2717 = vmax.f32 %v2071, %v2653
    %v2718 = vmax.f32 %v2072, %v2654
    %v2719 = vmax.f32 %v2073, %v2655
    %v2720 = vmax.f32 %v2074, %v2656
    %v2721 = vmax.f32 %v2075, %v2657
    %v2722 = vmax.f32 %v2076, %v2658
    %v2723 = vmax.f32 %v2077, %v2659
    %v2724 = vmax.f32 %v2078, %v2660
    %v2725 = vmax.f32 %v2079, %v2661
    %v2726 = vmax.f32 %v2080, %v2662
    %v2727 = vmax.f32 %v2081, %v2663
    %v2728 = vmax.f32 %v2082, %v2664
    %v2729 = vmax.f32 %v2083, %v2665
    %v2730 = vmax.f32 %v2084, %v2666
    %v2731 = vmax.f32 %v2085, %v2667
    %v2732 = vmax.f32 %v2086, %v2668
    %v2733 = vmax.f32 %v2087, %v2669
    %v2734 = vmax.f32 %v2088, %v2670
    %v2735 = vmax.f32 %v2089, %v2671
    %v2736 = vmax.f32 %v2090, %v2672
    %v2737 = vmax.f32 %v2091, %v2673
    %v2738 = vmax.f32 %v2092, %v2674
    %v2739 = vmax.f32 %v2093, %v2675
    %v2740 = vmax.f32 %v2094, %v2676
    %v2741 = vmax.f32 %v2095, %v2677
    %v2742 = vmax.f32 %v2096, %v2678
    %v2743 = vmax.f32 %v2097, %v2679
    %v2744 = vmax.f32 %v2098, %v2680
    %v2745 = vmax.f32 %v2099, %v2681
    %v2746 = vmax.f32 %v2100, %v2682
    %v2747 = vmax.f32 %v2101, %v2683
    %v2748 = vmax.f32 %v2102, %v2684
    %v2749 = vmax.f32 %v2103, %v2685
    %v2750 = vmax.f32 %v2104, %v2686
    %v2751 = vmax.f32 %v2105, %v2687
    %v2752 = vmax.f32 %v2106, %v2688
    %v2753 = vmax.f32 %v2107, %v2689
    %v2754 = vmax.f32 %v2108, %v2690
    %v2755 = vmax.f32 %v2109, %v2691
    %v2756 = vmax.f32 %v2110, %v2692
    %v2757 = vmax.f32 %v2111, %v2693
    %v2758 = vmax.f32 %v2112, %v2694
    %v2759 = vmax.f32 %v2113, %v2695
    %v2760 = vmax.f32 %v2114, %v2696
    %v2761 = vmax.f32 %v2115, %v2697
    %v2762 = vmax.f32 %v2116, %v2698
    %v2763 = vmax.f32 %v2117, %v2699
    %v2764 = vmax.f32 %v2118, %v2700
    %v2765 = vmax.f32 %v2119, %v2701
    %v2766 = vmax.f32 %v2120, %v2702
    %v2767 = vmax.f32 %v2121, %v2703
    %v2768 = vmax.f32 %v2122, %v2704
    %v2769 = vmax.f32 %v2123, %v2705
    %v2770 = vmax.f32 %v2124, %v2706
    %vm2771 = vcmp.ge.s32.totalorder %v508, 5
    %vm2772 = vcmp.ge.s32.totalorder %v509, 5
    %2773 = vrot.lane.b32.xlu0 %v2384, 5
    %v2774 = vpop.permute.xlu0 %2773
    %2775 = vrot.lane.b32.xlu0 %v2386, 5
    %v2776 = vpop.permute.xlu0 %2775
    %2777 = vrot.lane.b32.xlu0 %v2388, 5
    %v2778 = vpop.permute.xlu0 %2777
    %2779 = vrot.lane.b32.xlu0 %v2390, 5
    %v2780 = vpop.permute.xlu0 %2779
    %2781 = vrot.lane.b32.xlu0 %v2392, 5
    %v2782 = vpop.permute.xlu0 %2781
    %2783 = vrot.lane.b32.xlu0 %v2394, 5
    %v2784 = vpop.permute.xlu0 %2783
    %2785 = vrot.lane.b32.xlu0 %v2396, 5
    %v2786 = vpop.permute.xlu0 %2785
    %2787 = vrot.lane.b32.xlu0 %v2398, 5
    %v2788 = vpop.permute.xlu0 %2787
    %2789 = vrot.lane.b32.xlu0 %v2400, 5
    %v2790 = vpop.permute.xlu0 %2789
    %2791 = vrot.lane.b32.xlu0 %v2402, 5
    %v2792 = vpop.permute.xlu0 %2791
    %2793 = vrot.lane.b32.xlu0 %v2404, 5
    %v2794 = vpop.permute.xlu0 %2793
    %2795 = vrot.lane.b32.xlu0 %v2406, 5
    %v2796 = vpop.permute.xlu0 %2795
    %2797 = vrot.lane.b32.xlu0 %v2408, 5
    %v2798 = vpop.permute.xlu0 %2797
    %2799 = vrot.lane.b32.xlu0 %v2410, 5
    %v2800 = vpop.permute.xlu0 %2799
    %2801 = vrot.lane.b32.xlu0 %v2412, 5
    %v2802 = vpop.permute.xlu0 %2801
    %2803 = vrot.lane.b32.xlu0 %v2414, 5
    %v2804 = vpop.permute.xlu0 %2803
    %2805 = vrot.lane.b32.xlu0 %v2416, 5
    %v2806 = vpop.permute.xlu0 %2805
    %2807 = vrot.lane.b32.xlu0 %v2418, 5
    %v2808 = vpop.permute.xlu0 %2807
    %2809 = vrot.lane.b32.xlu0 %v2420, 5
    %v2810 = vpop.permute.xlu0 %2809
    %2811 = vrot.lane.b32.xlu0 %v2422, 5
    %v2812 = vpop.permute.xlu0 %2811
    %2813 = vrot.lane.b32.xlu0 %v2424, 5
    %v2814 = vpop.permute.xlu0 %2813
    %2815 = vrot.lane.b32.xlu0 %v2426, 5
    %v2816 = vpop.permute.xlu0 %2815
    %2817 = vrot.lane.b32.xlu0 %v2428, 5
    %v2818 = vpop.permute.xlu0 %2817
    %2819 = vrot.lane.b32.xlu0 %v2430, 5
    %v2820 = vpop.permute.xlu0 %2819
    %2821 = vrot.lane.b32.xlu0 %v2432, 5
    %v2822 = vpop.permute.xlu0 %2821
    %2823 = vrot.lane.b32.xlu0 %v2434, 5
    %v2824 = vpop.permute.xlu0 %2823
    %2825 = vrot.lane.b32.xlu0 %v2436, 5
    %v2826 = vpop.permute.xlu0 %2825
    %2827 = vrot.lane.b32.xlu0 %v2438, 5
    %v2828 = vpop.permute.xlu0 %2827
    %2829 = vrot.lane.b32.xlu0 %v2440, 5
    %v2830 = vpop.permute.xlu0 %2829
    %2831 = vrot.lane.b32.xlu0 %v2442, 5
    %v2832 = vpop.permute.xlu0 %2831
    %2833 = vrot.lane.b32.xlu0 %v2444, 5
    %v2834 = vpop.permute.xlu0 %2833
    %2835 = vrot.lane.b32.xlu0 %v2446, 5
    %v2836 = vpop.permute.xlu0 %2835
    %2837 = vrot.lane.b32.xlu0 %v2385, 5
    %v2838 = vpop.permute.xlu0 %2837
    %2839 = vrot.lane.b32.xlu0 %v2387, 5
    %v2840 = vpop.permute.xlu0 %2839
    %2841 = vrot.lane.b32.xlu0 %v2389, 5
    %v2842 = vpop.permute.xlu0 %2841
    %2843 = vrot.lane.b32.xlu0 %v2391, 5
    %v2844 = vpop.permute.xlu0 %2843
    %2845 = vrot.lane.b32.xlu0 %v2393, 5
    %v2846 = vpop.permute.xlu0 %2845
    %2847 = vrot.lane.b32.xlu0 %v2395, 5
    %v2848 = vpop.permute.xlu0 %2847
    %2849 = vrot.lane.b32.xlu0 %v2397, 5
    %v2850 = vpop.permute.xlu0 %2849
    %2851 = vrot.lane.b32.xlu0 %v2399, 5
    %v2852 = vpop.permute.xlu0 %2851
    %2853 = vrot.lane.b32.xlu0 %v2401, 5
    %v2854 = vpop.permute.xlu0 %2853
    %2855 = vrot.lane.b32.xlu0 %v2403, 5
    %v2856 = vpop.permute.xlu0 %2855
    %2857 = vrot.lane.b32.xlu0 %v2405, 5
    %v2858 = vpop.permute.xlu0 %2857
    %2859 = vrot.lane.b32.xlu0 %v2407, 5
    %v2860 = vpop.permute.xlu0 %2859
    %2861 = vrot.lane.b32.xlu0 %v2409, 5
    %v2862 = vpop.permute.xlu0 %2861
    %2863 = vrot.lane.b32.xlu0 %v2411, 5
    %v2864 = vpop.permute.xlu0 %2863
    %2865 = vrot.lane.b32.xlu0 %v2413, 5
    %v2866 = vpop.permute.xlu0 %2865
    %2867 = vrot.lane.b32.xlu0 %v2415, 5
    %v2868 = vpop.permute.xlu0 %2867
    %2869 = vrot.lane.b32.xlu0 %v2417, 5
    %v2870 = vpop.permute.xlu0 %2869
    %2871 = vrot.lane.b32.xlu0 %v2419, 5
    %v2872 = vpop.permute.xlu0 %2871
    %2873 = vrot.lane.b32.xlu0 %v2421, 5
    %v2874 = vpop.permute.xlu0 %2873
    %2875 = vrot.lane.b32.xlu0 %v2423, 5
    %v2876 = vpop.permute.xlu0 %2875
    %2877 = vrot.lane.b32.xlu0 %v2425, 5
    %v2878 = vpop.permute.xlu0 %2877
    %2879 = vrot.lane.b32.xlu0 %v2427, 5
    %v2880 = vpop.permute.xlu0 %2879
    %2881 = vrot.lane.b32.xlu0 %v2429, 5
    %v2882 = vpop.permute.xlu0 %2881
    %2883 = vrot.lane.b32.xlu0 %v2431, 5
    %v2884 = vpop.permute.xlu0 %2883
    %2885 = vrot.lane.b32.xlu0 %v2433, 5
    %v2886 = vpop.permute.xlu0 %2885
    %2887 = vrot.lane.b32.xlu0 %v2435, 5
    %v2888 = vpop.permute.xlu0 %2887
    %2889 = vrot.lane.b32.xlu0 %v2437, 5
    %v2890 = vpop.permute.xlu0 %2889
    %2891 = vrot.lane.b32.xlu0 %v2439, 5
    %v2892 = vpop.permute.xlu0 %2891
    %2893 = vrot.lane.b32.xlu0 %v2441, 5
    %v2894 = vpop.permute.xlu0 %2893
    %2895 = vrot.lane.b32.xlu0 %v2443, 5
    %v2896 = vpop.permute.xlu0 %2895
    %2897 = vrot.lane.b32.xlu0 %v2445, 5
    %v2898 = vpop.permute.xlu0 %2897
    %2899 = vrot.lane.b32.xlu0 %v2447, 5
    %v2900 = vpop.permute.xlu0 %2899
    %vm2901 = vcmp.lt.s32.totalorder %v508, 5
    %v2902 = vsel %vm2901, %v2774, %v2838
    %v2903 = vsel %vm2901, %v2776, %v2840
    %v2904 = vsel %vm2901, %v2778, %v2842
    %v2905 = vsel %vm2901, %v2780, %v2844
    %v2906 = vsel %vm2901, %v2782, %v2846
    %v2907 = vsel %vm2901, %v2784, %v2848
    %v2908 = vsel %vm2901, %v2786, %v2850
    %v2909 = vsel %vm2901, %v2788, %v2852
    %v2910 = vsel %vm2901, %v2790, %v2854
    %v2911 = vsel %vm2901, %v2792, %v2856
    %v2912 = vsel %vm2901, %v2794, %v2858
    %v2913 = vsel %vm2901, %v2796, %v2860
    %v2914 = vsel %vm2901, %v2798, %v2862
    %v2915 = vsel %vm2901, %v2800, %v2864
    %v2916 = vsel %vm2901, %v2802, %v2866
    %v2917 = vsel %vm2901, %v2804, %v2868
    %v2918 = vsel %vm2901, %v2806, %v2870
    %v2919 = vsel %vm2901, %v2808, %v2872
    %v2920 = vsel %vm2901, %v2810, %v2874
    %v2921 = vsel %vm2901, %v2812, %v2876
    %v2922 = vsel %vm2901, %v2814, %v2878
    %v2923 = vsel %vm2901, %v2816, %v2880
    %v2924 = vsel %vm2901, %v2818, %v2882
    %v2925 = vsel %vm2901, %v2820, %v2884
    %v2926 = vsel %vm2901, %v2822, %v2886
    %v2927 = vsel %vm2901, %v2824, %v2888
    %v2928 = vsel %vm2901, %v2826, %v2890
    %v2929 = vsel %vm2901, %v2828, %v2892
    %v2930 = vsel %vm2901, %v2830, %v2894
    %v2931 = vsel %vm2901, %v2832, %v2896
    %v2932 = vsel %vm2901, %v2834, %v2898
    %v2933 = vsel %vm2901, %v2836, %v2900
    %v2934 = vsel %vm2901, %v2838, %v2774
    %v2935 = vsel %vm2901, %v2840, %v2776
    %v2936 = vsel %vm2901, %v2842, %v2778
    %v2937 = vsel %vm2901, %v2844, %v2780
    %v2938 = vsel %vm2901, %v2846, %v2782
    %v2939 = vsel %vm2901, %v2848, %v2784
    %v2940 = vsel %vm2901, %v2850, %v2786
    %v2941 = vsel %vm2901, %v2852, %v2788
    %v2942 = vsel %vm2901, %v2854, %v2790
    %v2943 = vsel %vm2901, %v2856, %v2792
    %v2944 = vsel %vm2901, %v2858, %v2794
    %v2945 = vsel %vm2901, %v2860, %v2796
    %v2946 = vsel %vm2901, %v2862, %v2798
    %v2947 = vsel %vm2901, %v2864, %v2800
    %v2948 = vsel %vm2901, %v2866, %v2802
    %v2949 = vsel %vm2901, %v2868, %v2804
    %v2950 = vsel %vm2901, %v2870, %v2806
    %v2951 = vsel %vm2901, %v2872, %v2808
    %v2952 = vsel %vm2901, %v2874, %v2810
    %v2953 = vsel %vm2901, %v2876, %v2812
    %v2954 = vsel %vm2901, %v2878, %v2814
    %v2955 = vsel %vm2901, %v2880, %v2816
    %v2956 = vsel %vm2901, %v2882, %v2818
    %v2957 = vsel %vm2901, %v2884, %v2820
    %v2958 = vsel %vm2901, %v2886, %v2822
    %v2959 = vsel %vm2901, %v2888, %v2824
    %v2960 = vsel %vm2901, %v2890, %v2826
    %v2961 = vsel %vm2901, %v2892, %v2828
    %v2962 = vsel %vm2901, %v2894, %v2830
    %v2963 = vsel %vm2901, %v2896, %v2832
    %v2964 = vsel %vm2901, %v2898, %v2834
    %v2965 = vsel %vm2901, %v2900, %v2836
    %v2966 = vsel %vm2771, %v2934, 0.0
    %v2967 = vsel %vm2772, %v2902, 0.0
    %v2968 = vsel %vm2771, %v2935, 0.0
    %v2969 = vsel %vm2772, %v2903, 0.0
    %v2970 = vsel %vm2771, %v2936, 0.0
    %v2971 = vsel %vm2772, %v2904, 0.0
    %v2972 = vsel %vm2771, %v2937, 0.0
    %v2973 = vsel %vm2772, %v2905, 0.0
    %v2974 = vsel %vm2771, %v2938, 0.0
    %v2975 = vsel %vm2772, %v2906, 0.0
    %v2976 = vsel %vm2771, %v2939, 0.0
    %v2977 = vsel %vm2772, %v2907, 0.0
    %v2978 = vsel %vm2771, %v2940, 0.0
    %v2979 = vsel %vm2772, %v2908, 0.0
    %v2980 = vsel %vm2771, %v2941, 0.0
    %v2981 = vsel %vm2772, %v2909, 0.0
    %v2982 = vsel %vm2771, %v2942, 0.0
    %v2983 = vsel %vm2772, %v2910, 0.0
    %v2984 = vsel %vm2771, %v2943, 0.0
    %v2985 = vsel %vm2772, %v2911, 0.0
    %v2986 = vsel %vm2771, %v2944, 0.0
    %v2987 = vsel %vm2772, %v2912, 0.0
    %v2988 = vsel %vm2771, %v2945, 0.0
    %v2989 = vsel %vm2772, %v2913, 0.0
    %v2990 = vsel %vm2771, %v2946, 0.0
    %v2991 = vsel %vm2772, %v2914, 0.0
    %v2992 = vsel %vm2771, %v2947, 0.0
    %v2993 = vsel %vm2772, %v2915, 0.0
    %v2994 = vsel %vm2771, %v2948, 0.0
    %v2995 = vsel %vm2772, %v2916, 0.0
    %v2996 = vsel %vm2771, %v2949, 0.0
    %v2997 = vsel %vm2772, %v2917, 0.0
    %v2998 = vsel %vm2771, %v2950, 0.0
    %v2999 = vsel %vm2772, %v2918, 0.0
    %v3000 = vsel %vm2771, %v2951, 0.0
    %v3001 = vsel %vm2772, %v2919, 0.0
    %v3002 = vsel %vm2771, %v2952, 0.0
    %v3003 = vsel %vm2772, %v2920, 0.0
    %v3004 = vsel %vm2771, %v2953, 0.0
    %v3005 = vsel %vm2772, %v2921, 0.0
    %v3006 = vsel %vm2771, %v2954, 0.0
    %v3007 = vsel %vm2772, %v2922, 0.0
    %v3008 = vsel %vm2771, %v2955, 0.0
    %v3009 = vsel %vm2772, %v2923, 0.0
    %v3010 = vsel %vm2771, %v2956, 0.0
    %v3011 = vsel %vm2772, %v2924, 0.0
    %v3012 = vsel %vm2771, %v2957, 0.0
    %v3013 = vsel %vm2772, %v2925, 0.0
    %v3014 = vsel %vm2771, %v2958, 0.0
    %v3015 = vsel %vm2772, %v2926, 0.0
    %v3016 = vsel %vm2771, %v2959, 0.0
    %v3017 = vsel %vm2772, %v2927, 0.0
    %v3018 = vsel %vm2771, %v2960, 0.0
    %v3019 = vsel %vm2772, %v2928, 0.0
    %v3020 = vsel %vm2771, %v2961, 0.0
    %v3021 = vsel %vm2772, %v2929, 0.0
    %v3022 = vsel %vm2771, %v2962, 0.0
    %v3023 = vsel %vm2772, %v2930, 0.0
    %v3024 = vsel %vm2771, %v2963, 0.0
    %v3025 = vsel %vm2772, %v2931, 0.0
    %v3026 = vsel %vm2771, %v2964, 0.0
    %v3027 = vsel %vm2772, %v2932, 0.0
    %v3028 = vsel %vm2771, %v2965, 0.0
    %v3029 = vsel %vm2772, %v2933, 0.0
    %v3030 = vmax.f32 %v2384, %v2966
    %v3031 = vmax.f32 %v2385, %v2967
    %v3032 = vmax.f32 %v2386, %v2968
    %v3033 = vmax.f32 %v2387, %v2969
    %v3034 = vmax.f32 %v2388, %v2970
    %v3035 = vmax.f32 %v2389, %v2971
    %v3036 = vmax.f32 %v2390, %v2972
    %v3037 = vmax.f32 %v2391, %v2973
    %v3038 = vmax.f32 %v2392, %v2974
    %v3039 = vmax.f32 %v2393, %v2975
    %v3040 = vmax.f32 %v2394, %v2976
    %v3041 = vmax.f32 %v2395, %v2977
    %v3042 = vmax.f32 %v2396, %v2978
    %v3043 = vmax.f32 %v2397, %v2979
    %v3044 = vmax.f32 %v2398, %v2980
    %v3045 = vmax.f32 %v2399, %v2981
    %v3046 = vmax.f32 %v2400, %v2982
    %v3047 = vmax.f32 %v2401, %v2983
    %v3048 = vmax.f32 %v2402, %v2984
    %v3049 = vmax.f32 %v2403, %v2985
    %v3050 = vmax.f32 %v2404, %v2986
    %v3051 = vmax.f32 %v2405, %v2987
    %v3052 = vmax.f32 %v2406, %v2988
    %v3053 = vmax.f32 %v2407, %v2989
    %v3054 = vmax.f32 %v2408, %v2990
    %v3055 = vmax.f32 %v2409, %v2991
    %v3056 = vmax.f32 %v2410, %v2992
    %v3057 = vmax.f32 %v2411, %v2993
    %v3058 = vmax.f32 %v2412, %v2994
    %v3059 = vmax.f32 %v2413, %v2995
    %v3060 = vmax.f32 %v2414, %v2996
    %v3061 = vmax.f32 %v2415, %v2997
    %v3062 = vmax.f32 %v2416, %v2998
    %v3063 = vmax.f32 %v2417, %v2999
    %v3064 = vmax.f32 %v2418, %v3000
    %v3065 = vmax.f32 %v2419, %v3001
    %v3066 = vmax.f32 %v2420, %v3002
    %v3067 = vmax.f32 %v2421, %v3003
    %v3068 = vmax.f32 %v2422, %v3004
    %v3069 = vmax.f32 %v2423, %v3005
    %v3070 = vmax.f32 %v2424, %v3006
    %v3071 = vmax.f32 %v2425, %v3007
    %v3072 = vmax.f32 %v2426, %v3008
    %v3073 = vmax.f32 %v2427, %v3009
    %v3074 = vmax.f32 %v2428, %v3010
    %v3075 = vmax.f32 %v2429, %v3011
    %v3076 = vmax.f32 %v2430, %v3012
    %v3077 = vmax.f32 %v2431, %v3013
    %v3078 = vmax.f32 %v2432, %v3014
    %v3079 = vmax.f32 %v2433, %v3015
    %v3080 = vmax.f32 %v2434, %v3016
    %v3081 = vmax.f32 %v2435, %v3017
    %v3082 = vmax.f32 %v2436, %v3018
    %v3083 = vmax.f32 %v2437, %v3019
    %v3084 = vmax.f32 %v2438, %v3020
    %v3085 = vmax.f32 %v2439, %v3021
    %v3086 = vmax.f32 %v2440, %v3022
    %v3087 = vmax.f32 %v2441, %v3023
    %v3088 = vmax.f32 %v2442, %v3024
    %v3089 = vmax.f32 %v2443, %v3025
    %v3090 = vmax.f32 %v2444, %v3026
    %v3091 = vmax.f32 %v2445, %v3027
    %v3092 = vmax.f32 %v2446, %v3028
    %v3093 = vmax.f32 %v2447, %v3029
    %v3094 = vmax.f32 %v2707, %v3030
    %v3095 = vmax.f32 %v2708, %v3031
    %v3096 = vmax.f32 %v2709, %v3032
    %v3097 = vmax.f32 %v2710, %v3033
    %v3098 = vmax.f32 %v2711, %v3034
    %v3099 = vmax.f32 %v2712, %v3035
    %v3100 = vmax.f32 %v2713, %v3036
    %v3101 = vmax.f32 %v2714, %v3037
    %v3102 = vmax.f32 %v2715, %v3038
    %v3103 = vmax.f32 %v2716, %v3039
    %v3104 = vmax.f32 %v2717, %v3040
    %v3105 = vmax.f32 %v2718, %v3041
    %v3106 = vmax.f32 %v2719, %v3042
    %v3107 = vmax.f32 %v2720, %v3043
    %v3108 = vmax.f32 %v2721, %v3044
    %v3109 = vmax.f32 %v2722, %v3045
    %v3110 = vmax.f32 %v2723, %v3046
    %v3111 = vmax.f32 %v2724, %v3047
    %v3112 = vmax.f32 %v2725, %v3048
    %v3113 = vmax.f32 %v2726, %v3049
    %v3114 = vmax.f32 %v2727, %v3050
    %v3115 = vmax.f32 %v2728, %v3051
    %v3116 = vmax.f32 %v2729, %v3052
    %v3117 = vmax.f32 %v2730, %v3053
    %v3118 = vmax.f32 %v2731, %v3054
    %v3119 = vmax.f32 %v2732, %v3055
    %v3120 = vmax.f32 %v2733, %v3056
    %v3121 = vmax.f32 %v2734, %v3057
    %v3122 = vmax.f32 %v2735, %v3058
    %v3123 = vmax.f32 %v2736, %v3059
    %v3124 = vmax.f32 %v2737, %v3060
    %v3125 = vmax.f32 %v2738, %v3061
    %v3126 = vmax.f32 %v2739, %v3062
    %v3127 = vmax.f32 %v2740, %v3063
    %v3128 = vmax.f32 %v2741, %v3064
    %v3129 = vmax.f32 %v2742, %v3065
    %v3130 = vmax.f32 %v2743, %v3066
    %v3131 = vmax.f32 %v2744, %v3067
    %v3132 = vmax.f32 %v2745, %v3068
    %v3133 = vmax.f32 %v2746, %v3069
    %v3134 = vmax.f32 %v2747, %v3070
    %v3135 = vmax.f32 %v2748, %v3071
    %v3136 = vmax.f32 %v2749, %v3072
    %v3137 = vmax.f32 %v2750, %v3073
    %v3138 = vmax.f32 %v2751, %v3074
    %v3139 = vmax.f32 %v2752, %v3075
    %v3140 = vmax.f32 %v2753, %v3076
    %v3141 = vmax.f32 %v2754, %v3077
    %v3142 = vmax.f32 %v2755, %v3078
    %v3143 = vmax.f32 %v2756, %v3079
    %v3144 = vmax.f32 %v2757, %v3080
    %v3145 = vmax.f32 %v2758, %v3081
    %v3146 = vmax.f32 %v2759, %v3082
    %v3147 = vmax.f32 %v2760, %v3083
    %v3148 = vmax.f32 %v2761, %v3084
    %v3149 = vmax.f32 %v2762, %v3085
    %v3150 = vmax.f32 %v2763, %v3086
    %v3151 = vmax.f32 %v2764, %v3087
    %v3152 = vmax.f32 %v2765, %v3088
    %v3153 = vmax.f32 %v2766, %v3089
    %v3154 = vmax.f32 %v2767, %v3090
    %v3155 = vmax.f32 %v2768, %v3091
    %v3156 = vmax.f32 %v2769, %v3092
    %v3157 = vmax.f32 %v2770, %v3093
    %v3158 = vlaneseq
    %v3159 = vshrl.u32 %v3158, 7
    %v3160 = vadd.s32 %v3159, 8
    %v3161 = vadd.s32 %v3159, 16
    %v3162 = vadd.s32 %v3159, 24
    %v3163 = vadd.s32 %v3159, 32
    %v3164 = vadd.s32 %v3159, 40
    %v3165 = vadd.s32 %v3159, 48
    %v3166 = vadd.s32 %v3159, 56
    %v3167 = vadd.s32 %v3159, 64
    %v3168 = vadd.s32 %v3159, 72
    %v3169 = vadd.s32 %v3159, 80
    %v3170 = vadd.s32 %v3159, 88
    %v3171 = vadd.s32 %v3159, 96
    %v3172 = vadd.s32 %v3159, 104
    %v3173 = vadd.s32 %v3159, 112
    %v3174 = vadd.s32 %v3159, 120
    %v3175 = vadd.s32 %v3159, 128
    %v3176 = vadd.s32 %v3159, 136
    %v3177 = vadd.s32 %v3159, 144
    %v3178 = vadd.s32 %v3159, 152
    %v3179 = vadd.s32 %v3159, 160
    %v3180 = vadd.s32 %v3159, 168
    %v3181 = vadd.s32 %v3159, 176
    %v3182 = vadd.s32 %v3159, 184
    %v3183 = vadd.s32 %v3159, 192
    %v3184 = vadd.s32 %v3159, 200
    %v3185 = vadd.s32 %v3159, 208
    %v3186 = vadd.s32 %v3159, 216
    %v3187 = vadd.s32 %v3159, 224
    %v3188 = vadd.s32 %v3159, 232
    %v3189 = vadd.s32 %v3159, 240
    %v3190 = vadd.s32 %v3159, 248
    %vm3191 = vcmp.lt.s32.totalorder %v3159, 255
    %vm3192 = vcmp.lt.s32.totalorder %v3160, 255
    %vm3193 = vcmp.lt.s32.totalorder %v3161, 255
    %vm3194 = vcmp.lt.s32.totalorder %v3162, 255
    %vm3195 = vcmp.lt.s32.totalorder %v3163, 255
    %vm3196 = vcmp.lt.s32.totalorder %v3164, 255
    %vm3197 = vcmp.lt.s32.totalorder %v3165, 255
    %vm3198 = vcmp.lt.s32.totalorder %v3166, 255
    %vm3199 = vcmp.lt.s32.totalorder %v3167, 255
    %vm3200 = vcmp.lt.s32.totalorder %v3168, 255
    %vm3201 = vcmp.lt.s32.totalorder %v3169, 255
    %vm3202 = vcmp.lt.s32.totalorder %v3170, 255
    %vm3203 = vcmp.lt.s32.totalorder %v3171, 255
    %vm3204 = vcmp.lt.s32.totalorder %v3172, 255
    %vm3205 = vcmp.lt.s32.totalorder %v3173, 255
    %vm3206 = vcmp.lt.s32.totalorder %v3174, 255
    %vm3207 = vcmp.lt.s32.totalorder %v3175, 255
    %vm3208 = vcmp.lt.s32.totalorder %v3176, 255
    %vm3209 = vcmp.lt.s32.totalorder %v3177, 255
    %vm3210 = vcmp.lt.s32.totalorder %v3178, 255
    %vm3211 = vcmp.lt.s32.totalorder %v3179, 255
    %vm3212 = vcmp.lt.s32.totalorder %v3180, 255
    %vm3213 = vcmp.lt.s32.totalorder %v3181, 255
    %vm3214 = vcmp.lt.s32.totalorder %v3182, 255
    %vm3215 = vcmp.lt.s32.totalorder %v3183, 255
    %vm3216 = vcmp.lt.s32.totalorder %v3184, 255
    %vm3217 = vcmp.lt.s32.totalorder %v3185, 255
    %vm3218 = vcmp.lt.s32.totalorder %v3186, 255
    %vm3219 = vcmp.lt.s32.totalorder %v3187, 255
    %vm3220 = vcmp.lt.s32.totalorder %v3188, 255
    %vm3221 = vcmp.lt.s32.totalorder %v3189, 255
    %vm3222 = vcmp.lt.s32.totalorder %v3190, 255
    %v3223 = vrot.slane %v3094, 1
    %v3224 = vrot.slane %v3095, 1
    %v3225 = vrot.slane %v3096, 1
    %v3226 = vrot.slane %v3097, 1
    %v3227 = vrot.slane %v3098, 1
    %v3228 = vrot.slane %v3099, 1
    %v3229 = vrot.slane %v3100, 1
    %v3230 = vrot.slane %v3101, 1
    %v3231 = vrot.slane %v3102, 1
    %v3232 = vrot.slane %v3103, 1
    %v3233 = vrot.slane %v3104, 1
    %v3234 = vrot.slane %v3105, 1
    %v3235 = vrot.slane %v3106, 1
    %v3236 = vrot.slane %v3107, 1
    %v3237 = vrot.slane %v3108, 1
    %v3238 = vrot.slane %v3109, 1
    %v3239 = vrot.slane %v3110, 1
    %v3240 = vrot.slane %v3111, 1
    %v3241 = vrot.slane %v3112, 1
    %v3242 = vrot.slane %v3113, 1
    %v3243 = vrot.slane %v3114, 1
    %v3244 = vrot.slane %v3115, 1
    %v3245 = vrot.slane %v3116, 1
    %v3246 = vrot.slane %v3117, 1
    %v3247 = vrot.slane %v3118, 1
    %v3248 = vrot.slane %v3119, 1
    %v3249 = vrot.slane %v3120, 1
    %v3250 = vrot.slane %v3121, 1
    %v3251 = vrot.slane %v3122, 1
    %v3252 = vrot.slane %v3123, 1
    %v3253 = vrot.slane %v3124, 1
    %v3254 = vrot.slane %v3125, 1
    %v3255 = vrot.slane %v3126, 1
    %v3256 = vrot.slane %v3127, 1
    %v3257 = vrot.slane %v3128, 1
    %v3258 = vrot.slane %v3129, 1
    %v3259 = vrot.slane %v3130, 1
    %v3260 = vrot.slane %v3131, 1
    %v3261 = vrot.slane %v3132, 1
    %v3262 = vrot.slane %v3133, 1
    %v3263 = vrot.slane %v3134, 1
    %v3264 = vrot.slane %v3135, 1
    %v3265 = vrot.slane %v3136, 1
    %v3266 = vrot.slane %v3137, 1
    %v3267 = vrot.slane %v3138, 1
    %v3268 = vrot.slane %v3139, 1
    %v3269 = vrot.slane %v3140, 1
    %v3270 = vrot.slane %v3141, 1
    %v3271 = vrot.slane %v3142, 1
    %v3272 = vrot.slane %v3143, 1
    %v3273 = vrot.slane %v3144, 1
    %v3274 = vrot.slane %v3145, 1
    %v3275 = vrot.slane %v3146, 1
    %v3276 = vrot.slane %v3147, 1
    %v3277 = vrot.slane %v3148, 1
    %v3278 = vrot.slane %v3149, 1
    %v3279 = vrot.slane %v3150, 1
    %v3280 = vrot.slane %v3151, 1
    %v3281 = vrot.slane %v3152, 1
    %v3282 = vrot.slane %v3153, 1
    %v3283 = vrot.slane %v3154, 1
    %v3284 = vrot.slane %v3155, 1
    %v3285 = vrot.slane %v3156, 1
    %v3286 = vrot.slane %v3157, 1
    %vm3287 = vcmp.lt.s32.totalorder %v3159, 7
    %v3288 = vsel %vm3287, %v3283, %v3285
    %v3289 = vsel %vm3287, %v3284, %v3286
    %v3290 = vsel %vm3287, %v3281, %v3283
    %v3291 = vsel %vm3287, %v3282, %v3284
    %v3292 = vsel %vm3287, %v3279, %v3281
    %v3293 = vsel %vm3287, %v3280, %v3282
    %v3294 = vsel %vm3287, %v3277, %v3279
    %v3295 = vsel %vm3287, %v3278, %v3280
    %v3296 = vsel %vm3287, %v3275, %v3277
    %v3297 = vsel %vm3287, %v3276, %v3278
    %v3298 = vsel %vm3287, %v3273, %v3275
    %v3299 = vsel %vm3287, %v3274, %v3276
    %v3300 = vsel %vm3287, %v3271, %v3273
    %v3301 = vsel %vm3287, %v3272, %v3274
    %v3302 = vsel %vm3287, %v3269, %v3271
    %v3303 = vsel %vm3287, %v3270, %v3272
    %v3304 = vsel %vm3287, %v3267, %v3269
    %v3305 = vsel %vm3287, %v3268, %v3270
    %v3306 = vsel %vm3287, %v3265, %v3267
    %v3307 = vsel %vm3287, %v3266, %v3268
    %v3308 = vsel %vm3287, %v3263, %v3265
    %v3309 = vsel %vm3287, %v3264, %v3266
    %v3310 = vsel %vm3287, %v3261, %v3263
    %v3311 = vsel %vm3287, %v3262, %v3264
    %v3312 = vsel %vm3287, %v3259, %v3261
    %v3313 = vsel %vm3287, %v3260, %v3262
    %v3314 = vsel %vm3287, %v3257, %v3259
    %v3315 = vsel %vm3287, %v3258, %v3260
    %v3316 = vsel %vm3287, %v3255, %v3257
    %v3317 = vsel %vm3287, %v3256, %v3258
    %v3318 = vsel %vm3287, %v3253, %v3255
    %v3319 = vsel %vm3287, %v3254, %v3256
    %v3320 = vsel %vm3287, %v3251, %v3253
    %v3321 = vsel %vm3287, %v3252, %v3254
    %v3322 = vsel %vm3287, %v3249, %v3251
    %v3323 = vsel %vm3287, %v3250, %v3252
    %v3324 = vsel %vm3287, %v3247, %v3249
    %v3325 = vsel %vm3287, %v3248, %v3250
    %v3326 = vsel %vm3287, %v3245, %v3247
    %v3327 = vsel %vm3287, %v3246, %v3248
    %v3328 = vsel %vm3287, %v3243, %v3245
    %v3329 = vsel %vm3287, %v3244, %v3246
    %v3330 = vsel %vm3287, %v3241, %v3243
    %v3331 = vsel %vm3287, %v3242, %v3244
    %v3332 = vsel %vm3287, %v3239, %v3241
    %v3333 = vsel %vm3287, %v3240, %v3242
    %v3334 = vsel %vm3287, %v3237, %v3239
    %v3335 = vsel %vm3287, %v3238, %v3240
    %v3336 = vsel %vm3287, %v3235, %v3237
    %v3337 = vsel %vm3287, %v3236, %v3238
    %v3338 = vsel %vm3287, %v3233, %v3235
    %v3339 = vsel %vm3287, %v3234, %v3236
    %v3340 = vsel %vm3287, %v3231, %v3233
    %v3341 = vsel %vm3287, %v3232, %v3234
    %v3342 = vsel %vm3287, %v3229, %v3231
    %v3343 = vsel %vm3287, %v3230, %v3232
    %v3344 = vsel %vm3287, %v3227, %v3229
    %v3345 = vsel %vm3287, %v3228, %v3230
    %v3346 = vsel %vm3287, %v3225, %v3227
    %v3347 = vsel %vm3287, %v3226, %v3228
    %v3348 = vsel %vm3287, %v3223, %v3225
    %v3349 = vsel %vm3287, %v3224, %v3226
    %v3350 = vsel %vm3287, %v3285, %v3223
    %v3351 = vsel %vm3287, %v3286, %v3224
    %v3352 = vsel %vm3191, %v3348, 0.0
    %v3353 = vsel %vm3191, %v3349, 0.0
    %v3354 = vsel %vm3192, %v3346, 0.0
    %v3355 = vsel %vm3192, %v3347, 0.0
    %v3356 = vsel %vm3193, %v3344, 0.0
    %v3357 = vsel %vm3193, %v3345, 0.0
    %v3358 = vsel %vm3194, %v3342, 0.0
    %v3359 = vsel %vm3194, %v3343, 0.0
    %v3360 = vsel %vm3195, %v3340, 0.0
    %v3361 = vsel %vm3195, %v3341, 0.0
    %v3362 = vsel %vm3196, %v3338, 0.0
    %v3363 = vsel %vm3196, %v3339, 0.0
    %v3364 = vsel %vm3197, %v3336, 0.0
    %v3365 = vsel %vm3197, %v3337, 0.0
    %v3366 = vsel %vm3198, %v3334, 0.0
    %v3367 = vsel %vm3198, %v3335, 0.0
    %v3368 = vsel %vm3199, %v3332, 0.0
    %v3369 = vsel %vm3199, %v3333, 0.0
    %v3370 = vsel %vm3200, %v3330, 0.0
    %v3371 = vsel %vm3200, %v3331, 0.0
    %v3372 = vsel %vm3201, %v3328, 0.0
    %v3373 = vsel %vm3201, %v3329, 0.0
    %v3374 = vsel %vm3202, %v3326, 0.0
    %v3375 = vsel %vm3202, %v3327, 0.0
    %v3376 = vsel %vm3203, %v3324, 0.0
    %v3377 = vsel %vm3203, %v3325, 0.0
    %v3378 = vsel %vm3204, %v3322, 0.0
    %v3379 = vsel %vm3204, %v3323, 0.0
    %v3380 = vsel %vm3205, %v3320, 0.0
    %v3381 = vsel %vm3205, %v3321, 0.0
    %v3382 = vsel %vm3206, %v3318, 0.0
    %v3383 = vsel %vm3206, %v3319, 0.0
    %v3384 = vsel %vm3207, %v3316, 0.0
    %v3385 = vsel %vm3207, %v3317, 0.0
    %v3386 = vsel %vm3208, %v3314, 0.0
    %v3387 = vsel %vm3208, %v3315, 0.0
    %v3388 = vsel %vm3209, %v3312, 0.0
    %v3389 = vsel %vm3209, %v3313, 0.0
    %v3390 = vsel %vm3210, %v3310, 0.0
    %v3391 = vsel %vm3210, %v3311, 0.0
    %v3392 = vsel %vm3211, %v3308, 0.0
    %v3393 = vsel %vm3211, %v3309, 0.0
    %v3394 = vsel %vm3212, %v3306, 0.0
    %v3395 = vsel %vm3212, %v3307, 0.0
    %v3396 = vsel %vm3213, %v3304, 0.0
    %v3397 = vsel %vm3213, %v3305, 0.0
    %v3398 = vsel %vm3214, %v3302, 0.0
    %v3399 = vsel %vm3214, %v3303, 0.0
    %v3400 = vsel %vm3215, %v3300, 0.0
    %v3401 = vsel %vm3215, %v3301, 0.0
    %v3402 = vsel %vm3216, %v3298, 0.0
    %v3403 = vsel %vm3216, %v3299, 0.0
    %v3404 = vsel %vm3217, %v3296, 0.0
    %v3405 = vsel %vm3217, %v3297, 0.0
    %v3406 = vsel %vm3218, %v3294, 0.0
    %v3407 = vsel %vm3218, %v3295, 0.0
    %v3408 = vsel %vm3219, %v3292, 0.0
    %v3409 = vsel %vm3219, %v3293, 0.0
    %v3410 = vsel %vm3220, %v3290, 0.0
    %v3411 = vsel %vm3220, %v3291, 0.0
    %v3412 = vsel %vm3221, %v3288, 0.0
    %v3413 = vsel %vm3221, %v3289, 0.0
    %v3414 = vsel %vm3222, %v3350, 0.0
    %v3415 = vsel %vm3222, %v3351, 0.0
    %v3416 = vmax.f32 %v3094, %v3352
    %v3417 = vmax.f32 %v3095, %v3353
    %v3418 = vmax.f32 %v3096, %v3354
    %v3419 = vmax.f32 %v3097, %v3355
    %v3420 = vmax.f32 %v3098, %v3356
    %v3421 = vmax.f32 %v3099, %v3357
    %v3422 = vmax.f32 %v3100, %v3358
    %v3423 = vmax.f32 %v3101, %v3359
    %v3424 = vmax.f32 %v3102, %v3360
    %v3425 = vmax.f32 %v3103, %v3361
    %v3426 = vmax.f32 %v3104, %v3362
    %v3427 = vmax.f32 %v3105, %v3363
    %v3428 = vmax.f32 %v3106, %v3364
    %v3429 = vmax.f32 %v3107, %v3365
    %v3430 = vmax.f32 %v3108, %v3366
    %v3431 = vmax.f32 %v3109, %v3367
    %v3432 = vmax.f32 %v3110, %v3368
    %v3433 = vmax.f32 %v3111, %v3369
    %v3434 = vmax.f32 %v3112, %v3370
    %v3435 = vmax.f32 %v3113, %v3371
    %v3436 = vmax.f32 %v3114, %v3372
    %v3437 = vmax.f32 %v3115, %v3373
    %v3438 = vmax.f32 %v3116, %v3374
    %v3439 = vmax.f32 %v3117, %v3375
    %v3440 = vmax.f32 %v3118, %v3376
    %v3441 = vmax.f32 %v3119, %v3377
    %v3442 = vmax.f32 %v3120, %v3378
    %v3443 = vmax.f32 %v3121, %v3379
    %v3444 = vmax.f32 %v3122, %v3380
    %v3445 = vmax.f32 %v3123, %v3381
    %v3446 = vmax.f32 %v3124, %v3382
    %v3447 = vmax.f32 %v3125, %v3383
    %v3448 = vmax.f32 %v3126, %v3384
    %v3449 = vmax.f32 %v3127, %v3385
    %v3450 = vmax.f32 %v3128, %v3386
    %v3451 = vmax.f32 %v3129, %v3387
    %v3452 = vmax.f32 %v3130, %v3388
    %v3453 = vmax.f32 %v3131, %v3389
    %v3454 = vmax.f32 %v3132, %v3390
    %v3455 = vmax.f32 %v3133, %v3391
    %v3456 = vmax.f32 %v3134, %v3392
    %v3457 = vmax.f32 %v3135, %v3393
    %v3458 = vmax.f32 %v3136, %v3394
    %v3459 = vmax.f32 %v3137, %v3395
    %v3460 = vmax.f32 %v3138, %v3396
    %v3461 = vmax.f32 %v3139, %v3397
    %v3462 = vmax.f32 %v3140, %v3398
    %v3463 = vmax.f32 %v3141, %v3399
    %v3464 = vmax.f32 %v3142, %v3400
    %v3465 = vmax.f32 %v3143, %v3401
    %v3466 = vmax.f32 %v3144, %v3402
    %v3467 = vmax.f32 %v3145, %v3403
    %v3468 = vmax.f32 %v3146, %v3404
    %v3469 = vmax.f32 %v3147, %v3405
    %v3470 = vmax.f32 %v3148, %v3406
    %v3471 = vmax.f32 %v3149, %v3407
    %v3472 = vmax.f32 %v3150, %v3408
    %v3473 = vmax.f32 %v3151, %v3409
    %v3474 = vmax.f32 %v3152, %v3410
    %v3475 = vmax.f32 %v3153, %v3411
    %v3476 = vmax.f32 %v3154, %v3412
    %v3477 = vmax.f32 %v3155, %v3413
    %v3478 = vmax.f32 %v3156, %v3414
    %v3479 = vmax.f32 %v3157, %v3415
    %vm3480 = vcmp.ge.s32.totalorder %v3159, 1
    %vm3481 = vcmp.ge.s32.totalorder %v3160, 1
    %vm3482 = vcmp.ge.s32.totalorder %v3161, 1
    %vm3483 = vcmp.ge.s32.totalorder %v3162, 1
    %vm3484 = vcmp.ge.s32.totalorder %v3163, 1
    %vm3485 = vcmp.ge.s32.totalorder %v3164, 1
    %vm3486 = vcmp.ge.s32.totalorder %v3165, 1
    %vm3487 = vcmp.ge.s32.totalorder %v3166, 1
    %vm3488 = vcmp.ge.s32.totalorder %v3167, 1
    %vm3489 = vcmp.ge.s32.totalorder %v3168, 1
    %vm3490 = vcmp.ge.s32.totalorder %v3169, 1
    %vm3491 = vcmp.ge.s32.totalorder %v3170, 1
    %vm3492 = vcmp.ge.s32.totalorder %v3171, 1
    %vm3493 = vcmp.ge.s32.totalorder %v3172, 1
    %vm3494 = vcmp.ge.s32.totalorder %v3173, 1
    %vm3495 = vcmp.ge.s32.totalorder %v3174, 1
    %vm3496 = vcmp.ge.s32.totalorder %v3175, 1
    %vm3497 = vcmp.ge.s32.totalorder %v3176, 1
    %vm3498 = vcmp.ge.s32.totalorder %v3177, 1
    %vm3499 = vcmp.ge.s32.totalorder %v3178, 1
    %vm3500 = vcmp.ge.s32.totalorder %v3179, 1
    %vm3501 = vcmp.ge.s32.totalorder %v3180, 1
    %vm3502 = vcmp.ge.s32.totalorder %v3181, 1
    %vm3503 = vcmp.ge.s32.totalorder %v3182, 1
    %vm3504 = vcmp.ge.s32.totalorder %v3183, 1
    %vm3505 = vcmp.ge.s32.totalorder %v3184, 1
    %vm3506 = vcmp.ge.s32.totalorder %v3185, 1
    %vm3507 = vcmp.ge.s32.totalorder %v3186, 1
    %vm3508 = vcmp.ge.s32.totalorder %v3187, 1
    %vm3509 = vcmp.ge.s32.totalorder %v3188, 1
    %vm3510 = vcmp.ge.s32.totalorder %v3189, 1
    %vm3511 = vcmp.ge.s32.totalorder %v3190, 1
    %v3512 = vrot.slane %v3094, 7
    %v3513 = vrot.slane %v3095, 7
    %v3514 = vrot.slane %v3096, 7
    %v3515 = vrot.slane %v3097, 7
    %v3516 = vrot.slane %v3098, 7
    %v3517 = vrot.slane %v3099, 7
    %v3518 = vrot.slane %v3100, 7
    %v3519 = vrot.slane %v3101, 7
    %v3520 = vrot.slane %v3102, 7
    %v3521 = vrot.slane %v3103, 7
    %v3522 = vrot.slane %v3104, 7
    %v3523 = vrot.slane %v3105, 7
    %v3524 = vrot.slane %v3106, 7
    %v3525 = vrot.slane %v3107, 7
    %v3526 = vrot.slane %v3108, 7
    %v3527 = vrot.slane %v3109, 7
    %v3528 = vrot.slane %v3110, 7
    %v3529 = vrot.slane %v3111, 7
    %v3530 = vrot.slane %v3112, 7
    %v3531 = vrot.slane %v3113, 7
    %v3532 = vrot.slane %v3114, 7
    %v3533 = vrot.slane %v3115, 7
    %v3534 = vrot.slane %v3116, 7
    %v3535 = vrot.slane %v3117, 7
    %v3536 = vrot.slane %v3118, 7
    %v3537 = vrot.slane %v3119, 7
    %v3538 = vrot.slane %v3120, 7
    %v3539 = vrot.slane %v3121, 7
    %v3540 = vrot.slane %v3122, 7
    %v3541 = vrot.slane %v3123, 7
    %v3542 = vrot.slane %v3124, 7
    %v3543 = vrot.slane %v3125, 7
    %v3544 = vrot.slane %v3126, 7
    %v3545 = vrot.slane %v3127, 7
    %v3546 = vrot.slane %v3128, 7
    %v3547 = vrot.slane %v3129, 7
    %v3548 = vrot.slane %v3130, 7
    %v3549 = vrot.slane %v3131, 7
    %v3550 = vrot.slane %v3132, 7
    %v3551 = vrot.slane %v3133, 7
    %v3552 = vrot.slane %v3134, 7
    %v3553 = vrot.slane %v3135, 7
    %v3554 = vrot.slane %v3136, 7
    %v3555 = vrot.slane %v3137, 7
    %v3556 = vrot.slane %v3138, 7
    %v3557 = vrot.slane %v3139, 7
    %v3558 = vrot.slane %v3140, 7
    %v3559 = vrot.slane %v3141, 7
    %v3560 = vrot.slane %v3142, 7
    %v3561 = vrot.slane %v3143, 7
    %v3562 = vrot.slane %v3144, 7
    %v3563 = vrot.slane %v3145, 7
    %v3564 = vrot.slane %v3146, 7
    %v3565 = vrot.slane %v3147, 7
    %v3566 = vrot.slane %v3148, 7
    %v3567 = vrot.slane %v3149, 7
    %v3568 = vrot.slane %v3150, 7
    %v3569 = vrot.slane %v3151, 7
    %v3570 = vrot.slane %v3152, 7
    %v3571 = vrot.slane %v3153, 7
    %v3572 = vrot.slane %v3154, 7
    %v3573 = vrot.slane %v3155, 7
    %v3574 = vrot.slane %v3156, 7
    %v3575 = vrot.slane %v3157, 7
    %vm3576 = vcmp.lt.s32.totalorder %v3159, 1
    %v3577 = vsel %vm3576, %v3572, %v3574
    %v3578 = vsel %vm3576, %v3573, %v3575
    %v3579 = vsel %vm3576, %v3570, %v3572
    %v3580 = vsel %vm3576, %v3571, %v3573
    %v3581 = vsel %vm3576, %v3568, %v3570
    %v3582 = vsel %vm3576, %v3569, %v3571
    %v3583 = vsel %vm3576, %v3566, %v3568
    %v3584 = vsel %vm3576, %v3567, %v3569
    %v3585 = vsel %vm3576, %v3564, %v3566
    %v3586 = vsel %vm3576, %v3565, %v3567
    %v3587 = vsel %vm3576, %v3562, %v3564
    %v3588 = vsel %vm3576, %v3563, %v3565
    %v3589 = vsel %vm3576, %v3560, %v3562
    %v3590 = vsel %vm3576, %v3561, %v3563
    %v3591 = vsel %vm3576, %v3558, %v3560
    %v3592 = vsel %vm3576, %v3559, %v3561
    %v3593 = vsel %vm3576, %v3556, %v3558
    %v3594 = vsel %vm3576, %v3557, %v3559
    %v3595 = vsel %vm3576, %v3554, %v3556
    %v3596 = vsel %vm3576, %v3555, %v3557
    %v3597 = vsel %vm3576, %v3552, %v3554
    %v3598 = vsel %vm3576, %v3553, %v3555
    %v3599 = vsel %vm3576, %v3550, %v3552
    %v3600 = vsel %vm3576, %v3551, %v3553
    %v3601 = vsel %vm3576, %v3548, %v3550
    %v3602 = vsel %vm3576, %v3549, %v3551
    %v3603 = vsel %vm3576, %v3546, %v3548
    %v3604 = vsel %vm3576, %v3547, %v3549
    %v3605 = vsel %vm3576, %v3544, %v3546
    %v3606 = vsel %vm3576, %v3545, %v3547
    %v3607 = vsel %vm3576, %v3542, %v3544
    %v3608 = vsel %vm3576, %v3543, %v3545
    %v3609 = vsel %vm3576, %v3540, %v3542
    %v3610 = vsel %vm3576, %v3541, %v3543
    %v3611 = vsel %vm3576, %v3538, %v3540
    %v3612 = vsel %vm3576, %v3539, %v3541
    %v3613 = vsel %vm3576, %v3536, %v3538
    %v3614 = vsel %vm3576, %v3537, %v3539
    %v3615 = vsel %vm3576, %v3534, %v3536
    %v3616 = vsel %vm3576, %v3535, %v3537
    %v3617 = vsel %vm3576, %v3532, %v3534
    %v3618 = vsel %vm3576, %v3533, %v3535
    %v3619 = vsel %vm3576, %v3530, %v3532
    %v3620 = vsel %vm3576, %v3531, %v3533
    %v3621 = vsel %vm3576, %v3528, %v3530
    %v3622 = vsel %vm3576, %v3529, %v3531
    %v3623 = vsel %vm3576, %v3526, %v3528
    %v3624 = vsel %vm3576, %v3527, %v3529
    %v3625 = vsel %vm3576, %v3524, %v3526
    %v3626 = vsel %vm3576, %v3525, %v3527
    %v3627 = vsel %vm3576, %v3522, %v3524
    %v3628 = vsel %vm3576, %v3523, %v3525
    %v3629 = vsel %vm3576, %v3520, %v3522
    %v3630 = vsel %vm3576, %v3521, %v3523
    %v3631 = vsel %vm3576, %v3518, %v3520
    %v3632 = vsel %vm3576, %v3519, %v3521
    %v3633 = vsel %vm3576, %v3516, %v3518
    %v3634 = vsel %vm3576, %v3517, %v3519
    %v3635 = vsel %vm3576, %v3514, %v3516
    %v3636 = vsel %vm3576, %v3515, %v3517
    %v3637 = vsel %vm3576, %v3512, %v3514
    %v3638 = vsel %vm3576, %v3513, %v3515
    %v3639 = vsel %vm3576, %v3574, %v3512
    %v3640 = vsel %vm3576, %v3575, %v3513
    %v3641 = vsel %vm3480, %v3639, 0.0
    %v3642 = vsel %vm3480, %v3640, 0.0
    %v3643 = vsel %vm3481, %v3637, 0.0
    %v3644 = vsel %vm3481, %v3638, 0.0
    %v3645 = vsel %vm3482, %v3635, 0.0
    %v3646 = vsel %vm3482, %v3636, 0.0
    %v3647 = vsel %vm3483, %v3633, 0.0
    %v3648 = vsel %vm3483, %v3634, 0.0
    %v3649 = vsel %vm3484, %v3631, 0.0
    %v3650 = vsel %vm3484, %v3632, 0.0
    %v3651 = vsel %vm3485, %v3629, 0.0
    %v3652 = vsel %vm3485, %v3630, 0.0
    %v3653 = vsel %vm3486, %v3627, 0.0
    %v3654 = vsel %vm3486, %v3628, 0.0
    %v3655 = vsel %vm3487, %v3625, 0.0
    %v3656 = vsel %vm3487, %v3626, 0.0
    %v3657 = vsel %vm3488, %v3623, 0.0
    %v3658 = vsel %vm3488, %v3624, 0.0
    %v3659 = vsel %vm3489, %v3621, 0.0
    %v3660 = vsel %vm3489, %v3622, 0.0
    %v3661 = vsel %vm3490, %v3619, 0.0
    %v3662 = vsel %vm3490, %v3620, 0.0
    %v3663 = vsel %vm3491, %v3617, 0.0
    %v3664 = vsel %vm3491, %v3618, 0.0
    %v3665 = vsel %vm3492, %v3615, 0.0
    %v3666 = vsel %vm3492, %v3616, 0.0
    %v3667 = vsel %vm3493, %v3613, 0.0
    %v3668 = vsel %vm3493, %v3614, 0.0
    %v3669 = vsel %vm3494, %v3611, 0.0
    %v3670 = vsel %vm3494, %v3612, 0.0
    %v3671 = vsel %vm3495, %v3609, 0.0
    %v3672 = vsel %vm3495, %v3610, 0.0
    %v3673 = vsel %vm3496, %v3607, 0.0
    %v3674 = vsel %vm3496, %v3608, 0.0
    %v3675 = vsel %vm3497, %v3605, 0.0
    %v3676 = vsel %vm3497, %v3606, 0.0
    %v3677 = vsel %vm3498, %v3603, 0.0
    %v3678 = vsel %vm3498, %v3604, 0.0
    %v3679 = vsel %vm3499, %v3601, 0.0
    %v3680 = vsel %vm3499, %v3602, 0.0
    %v3681 = vsel %vm3500, %v3599, 0.0
    %v3682 = vsel %vm3500, %v3600, 0.0
    %v3683 = vsel %vm3501, %v3597, 0.0
    %v3684 = vsel %vm3501, %v3598, 0.0
    %v3685 = vsel %vm3502, %v3595, 0.0
    %v3686 = vsel %vm3502, %v3596, 0.0
    %v3687 = vsel %vm3503, %v3593, 0.0
    %v3688 = vsel %vm3503, %v3594, 0.0
    %v3689 = vsel %vm3504, %v3591, 0.0
    %v3690 = vsel %vm3504, %v3592, 0.0
    %v3691 = vsel %vm3505, %v3589, 0.0
    %v3692 = vsel %vm3505, %v3590, 0.0
    %v3693 = vsel %vm3506, %v3587, 0.0
    %v3694 = vsel %vm3506, %v3588, 0.0
    %v3695 = vsel %vm3507, %v3585, 0.0
    %v3696 = vsel %vm3507, %v3586, 0.0
    %v3697 = vsel %vm3508, %v3583, 0.0
    %v3698 = vsel %vm3508, %v3584, 0.0
    %v3699 = vsel %vm3509, %v3581, 0.0
    %v3700 = vsel %vm3509, %v3582, 0.0
    %v3701 = vsel %vm3510, %v3579, 0.0
    %v3702 = vsel %vm3510, %v3580, 0.0
    %v3703 = vsel %vm3511, %v3577, 0.0
    %v3704 = vsel %vm3511, %v3578, 0.0
    %v3705 = vmax.f32 %v3094, %v3641
    %v3706 = vmax.f32 %v3095, %v3642
    %v3707 = vmax.f32 %v3096, %v3643
    %v3708 = vmax.f32 %v3097, %v3644
    %v3709 = vmax.f32 %v3098, %v3645
    %v3710 = vmax.f32 %v3099, %v3646
    %v3711 = vmax.f32 %v3100, %v3647
    %v3712 = vmax.f32 %v3101, %v3648
    %v3713 = vmax.f32 %v3102, %v3649
    %v3714 = vmax.f32 %v3103, %v3650
    %v3715 = vmax.f32 %v3104, %v3651
    %v3716 = vmax.f32 %v3105, %v3652
    %v3717 = vmax.f32 %v3106, %v3653
    %v3718 = vmax.f32 %v3107, %v3654
    %v3719 = vmax.f32 %v3108, %v3655
    %v3720 = vmax.f32 %v3109, %v3656
    %v3721 = vmax.f32 %v3110, %v3657
    %v3722 = vmax.f32 %v3111, %v3658
    %v3723 = vmax.f32 %v3112, %v3659
    %v3724 = vmax.f32 %v3113, %v3660
    %v3725 = vmax.f32 %v3114, %v3661
    %v3726 = vmax.f32 %v3115, %v3662
    %v3727 = vmax.f32 %v3116, %v3663
    %v3728 = vmax.f32 %v3117, %v3664
    %v3729 = vmax.f32 %v3118, %v3665
    %v3730 = vmax.f32 %v3119, %v3666
    %v3731 = vmax.f32 %v3120, %v3667
    %v3732 = vmax.f32 %v3121, %v3668
    %v3733 = vmax.f32 %v3122, %v3669
    %v3734 = vmax.f32 %v3123, %v3670
    %v3735 = vmax.f32 %v3124, %v3671
    %v3736 = vmax.f32 %v3125, %v3672
    %v3737 = vmax.f32 %v3126, %v3673
    %v3738 = vmax.f32 %v3127, %v3674
    %v3739 = vmax.f32 %v3128, %v3675
    %v3740 = vmax.f32 %v3129, %v3676
    %v3741 = vmax.f32 %v3130, %v3677
    %v3742 = vmax.f32 %v3131, %v3678
    %v3743 = vmax.f32 %v3132, %v3679
    %v3744 = vmax.f32 %v3133, %v3680
    %v3745 = vmax.f32 %v3134, %v3681
    %v3746 = vmax.f32 %v3135, %v3682
    %v3747 = vmax.f32 %v3136, %v3683
    %v3748 = vmax.f32 %v3137, %v3684
    %v3749 = vmax.f32 %v3138, %v3685
    %v3750 = vmax.f32 %v3139, %v3686
    %v3751 = vmax.f32 %v3140, %v3687
    %v3752 = vmax.f32 %v3141, %v3688
    %v3753 = vmax.f32 %v3142, %v3689
    %v3754 = vmax.f32 %v3143, %v3690
    %v3755 = vmax.f32 %v3144, %v3691
    %v3756 = vmax.f32 %v3145, %v3692
    %v3757 = vmax.f32 %v3146, %v3693
    %v3758 = vmax.f32 %v3147, %v3694
    %v3759 = vmax.f32 %v3148, %v3695
    %v3760 = vmax.f32 %v3149, %v3696
    %v3761 = vmax.f32 %v3150, %v3697
    %v3762 = vmax.f32 %v3151, %v3698
    %v3763 = vmax.f32 %v3152, %v3699
    %v3764 = vmax.f32 %v3153, %v3700
    %v3765 = vmax.f32 %v3154, %v3701
    %v3766 = vmax.f32 %v3155, %v3702
    %v3767 = vmax.f32 %v3156, %v3703
    %v3768 = vmax.f32 %v3157, %v3704
    %vm3769 = vcmp.lt.s32.totalorder %v3159, 254
    %vm3770 = vcmp.lt.s32.totalorder %v3160, 254
    %vm3771 = vcmp.lt.s32.totalorder %v3161, 254
    %vm3772 = vcmp.lt.s32.totalorder %v3162, 254
    %vm3773 = vcmp.lt.s32.totalorder %v3163, 254
    %vm3774 = vcmp.lt.s32.totalorder %v3164, 254
    %vm3775 = vcmp.lt.s32.totalorder %v3165, 254
    %vm3776 = vcmp.lt.s32.totalorder %v3166, 254
    %vm3777 = vcmp.lt.s32.totalorder %v3167, 254
    %vm3778 = vcmp.lt.s32.totalorder %v3168, 254
    %vm3779 = vcmp.lt.s32.totalorder %v3169, 254
    %vm3780 = vcmp.lt.s32.totalorder %v3170, 254
    %vm3781 = vcmp.lt.s32.totalorder %v3171, 254
    %vm3782 = vcmp.lt.s32.totalorder %v3172, 254
    %vm3783 = vcmp.lt.s32.totalorder %v3173, 254
    %vm3784 = vcmp.lt.s32.totalorder %v3174, 254
    %vm3785 = vcmp.lt.s32.totalorder %v3175, 254
    %vm3786 = vcmp.lt.s32.totalorder %v3176, 254
    %vm3787 = vcmp.lt.s32.totalorder %v3177, 254
    %vm3788 = vcmp.lt.s32.totalorder %v3178, 254
    %vm3789 = vcmp.lt.s32.totalorder %v3179, 254
    %vm3790 = vcmp.lt.s32.totalorder %v3180, 254
    %vm3791 = vcmp.lt.s32.totalorder %v3181, 254
    %vm3792 = vcmp.lt.s32.totalorder %v3182, 254
    %vm3793 = vcmp.lt.s32.totalorder %v3183, 254
    %vm3794 = vcmp.lt.s32.totalorder %v3184, 254
    %vm3795 = vcmp.lt.s32.totalorder %v3185, 254
    %vm3796 = vcmp.lt.s32.totalorder %v3186, 254
    %vm3797 = vcmp.lt.s32.totalorder %v3187, 254
    %vm3798 = vcmp.lt.s32.totalorder %v3188, 254
    %vm3799 = vcmp.lt.s32.totalorder %v3189, 254
    %vm3800 = vcmp.lt.s32.totalorder %v3190, 254
    %v3801 = vrot.slane %v3416, 2
    %v3802 = vrot.slane %v3417, 2
    %v3803 = vrot.slane %v3418, 2
    %v3804 = vrot.slane %v3419, 2
    %v3805 = vrot.slane %v3420, 2
    %v3806 = vrot.slane %v3421, 2
    %v3807 = vrot.slane %v3422, 2
    %v3808 = vrot.slane %v3423, 2
    %v3809 = vrot.slane %v3424, 2
    %v3810 = vrot.slane %v3425, 2
    %v3811 = vrot.slane %v3426, 2
    %v3812 = vrot.slane %v3427, 2
    %v3813 = vrot.slane %v3428, 2
    %v3814 = vrot.slane %v3429, 2
    %v3815 = vrot.slane %v3430, 2
    %v3816 = vrot.slane %v3431, 2
    %v3817 = vrot.slane %v3432, 2
    %v3818 = vrot.slane %v3433, 2
    %v3819 = vrot.slane %v3434, 2
    %v3820 = vrot.slane %v3435, 2
    %v3821 = vrot.slane %v3436, 2
    %v3822 = vrot.slane %v3437, 2
    %v3823 = vrot.slane %v3438, 2
    %v3824 = vrot.slane %v3439, 2
    %v3825 = vrot.slane %v3440, 2
    %v3826 = vrot.slane %v3441, 2
    %v3827 = vrot.slane %v3442, 2
    %v3828 = vrot.slane %v3443, 2
    %v3829 = vrot.slane %v3444, 2
    %v3830 = vrot.slane %v3445, 2
    %v3831 = vrot.slane %v3446, 2
    %v3832 = vrot.slane %v3447, 2
    %v3833 = vrot.slane %v3448, 2
    %v3834 = vrot.slane %v3449, 2
    %v3835 = vrot.slane %v3450, 2
    %v3836 = vrot.slane %v3451, 2
    %v3837 = vrot.slane %v3452, 2
    %v3838 = vrot.slane %v3453, 2
    %v3839 = vrot.slane %v3454, 2
    %v3840 = vrot.slane %v3455, 2
    %v3841 = vrot.slane %v3456, 2
    %v3842 = vrot.slane %v3457, 2
    %v3843 = vrot.slane %v3458, 2
    %v3844 = vrot.slane %v3459, 2
    %v3845 = vrot.slane %v3460, 2
    %v3846 = vrot.slane %v3461, 2
    %v3847 = vrot.slane %v3462, 2
    %v3848 = vrot.slane %v3463, 2
    %v3849 = vrot.slane %v3464, 2
    %v3850 = vrot.slane %v3465, 2
    %v3851 = vrot.slane %v3466, 2
    %v3852 = vrot.slane %v3467, 2
    %v3853 = vrot.slane %v3468, 2
    %v3854 = vrot.slane %v3469, 2
    %v3855 = vrot.slane %v3470, 2
    %v3856 = vrot.slane %v3471, 2
    %v3857 = vrot.slane %v3472, 2
    %v3858 = vrot.slane %v3473, 2
    %v3859 = vrot.slane %v3474, 2
    %v3860 = vrot.slane %v3475, 2
    %v3861 = vrot.slane %v3476, 2
    %v3862 = vrot.slane %v3477, 2
    %v3863 = vrot.slane %v3478, 2
    %v3864 = vrot.slane %v3479, 2
    %vm3865 = vcmp.lt.s32.totalorder %v3159, 6
    %v3866 = vsel %vm3865, %v3861, %v3863
    %v3867 = vsel %vm3865, %v3862, %v3864
    %v3868 = vsel %vm3865, %v3859, %v3861
    %v3869 = vsel %vm3865, %v3860, %v3862
    %v3870 = vsel %vm3865, %v3857, %v3859
    %v3871 = vsel %vm3865, %v3858, %v3860
    %v3872 = vsel %vm3865, %v3855, %v3857
    %v3873 = vsel %vm3865, %v3856, %v3858
    %v3874 = vsel %vm3865, %v3853, %v3855
    %v3875 = vsel %vm3865, %v3854, %v3856
    %v3876 = vsel %vm3865, %v3851, %v3853
    %v3877 = vsel %vm3865, %v3852, %v3854
    %v3878 = vsel %vm3865, %v3849, %v3851
    %v3879 = vsel %vm3865, %v3850, %v3852
    %v3880 = vsel %vm3865, %v3847, %v3849
    %v3881 = vsel %vm3865, %v3848, %v3850
    %v3882 = vsel %vm3865, %v3845, %v3847
    %v3883 = vsel %vm3865, %v3846, %v3848
    %v3884 = vsel %vm3865, %v3843, %v3845
    %v3885 = vsel %vm3865, %v3844, %v3846
    %v3886 = vsel %vm3865, %v3841, %v3843
    %v3887 = vsel %vm3865, %v3842, %v3844
    %v3888 = vsel %vm3865, %v3839, %v3841
    %v3889 = vsel %vm3865, %v3840, %v3842
    %v3890 = vsel %vm3865, %v3837, %v3839
    %v3891 = vsel %vm3865, %v3838, %v3840
    %v3892 = vsel %vm3865, %v3835, %v3837
    %v3893 = vsel %vm3865, %v3836, %v3838
    %v3894 = vsel %vm3865, %v3833, %v3835
    %v3895 = vsel %vm3865, %v3834, %v3836
    %v3896 = vsel %vm3865, %v3831, %v3833
    %v3897 = vsel %vm3865, %v3832, %v3834
    %v3898 = vsel %vm3865, %v3829, %v3831
    %v3899 = vsel %vm3865, %v3830, %v3832
    %v3900 = vsel %vm3865, %v3827, %v3829
    %v3901 = vsel %vm3865, %v3828, %v3830
    %v3902 = vsel %vm3865, %v3825, %v3827
    %v3903 = vsel %vm3865, %v3826, %v3828
    %v3904 = vsel %vm3865, %v3823, %v3825
    %v3905 = vsel %vm3865, %v3824, %v3826
    %v3906 = vsel %vm3865, %v3821, %v3823
    %v3907 = vsel %vm3865, %v3822, %v3824
    %v3908 = vsel %vm3865, %v3819, %v3821
    %v3909 = vsel %vm3865, %v3820, %v3822
    %v3910 = vsel %vm3865, %v3817, %v3819
    %v3911 = vsel %vm3865, %v3818, %v3820
    %v3912 = vsel %vm3865, %v3815, %v3817
    %v3913 = vsel %vm3865, %v3816, %v3818
    %v3914 = vsel %vm3865, %v3813, %v3815
    %v3915 = vsel %vm3865, %v3814, %v3816
    %v3916 = vsel %vm3865, %v3811, %v3813
    %v3917 = vsel %vm3865, %v3812, %v3814
    %v3918 = vsel %vm3865, %v3809, %v3811
    %v3919 = vsel %vm3865, %v3810, %v3812
    %v3920 = vsel %vm3865, %v3807, %v3809
    %v3921 = vsel %vm3865, %v3808, %v3810
    %v3922 = vsel %vm3865, %v3805, %v3807
    %v3923 = vsel %vm3865, %v3806, %v3808
    %v3924 = vsel %vm3865, %v3803, %v3805
    %v3925 = vsel %vm3865, %v3804, %v3806
    %v3926 = vsel %vm3865, %v3801, %v3803
    %v3927 = vsel %vm3865, %v3802, %v3804
    %v3928 = vsel %vm3865, %v3863, %v3801
    %v3929 = vsel %vm3865, %v3864, %v3802
    %v3930 = vsel %vm3769, %v3926, 0.0
    %v3931 = vsel %vm3769, %v3927, 0.0
    %v3932 = vsel %vm3770, %v3924, 0.0
    %v3933 = vsel %vm3770, %v3925, 0.0
    %v3934 = vsel %vm3771, %v3922, 0.0
    %v3935 = vsel %vm3771, %v3923, 0.0
    %v3936 = vsel %vm3772, %v3920, 0.0
    %v3937 = vsel %vm3772, %v3921, 0.0
    %v3938 = vsel %vm3773, %v3918, 0.0
    %v3939 = vsel %vm3773, %v3919, 0.0
    %v3940 = vsel %vm3774, %v3916, 0.0
    %v3941 = vsel %vm3774, %v3917, 0.0
    %v3942 = vsel %vm3775, %v3914, 0.0
    %v3943 = vsel %vm3775, %v3915, 0.0
    %v3944 = vsel %vm3776, %v3912, 0.0
    %v3945 = vsel %vm3776, %v3913, 0.0
    %v3946 = vsel %vm3777, %v3910, 0.0
    %v3947 = vsel %vm3777, %v3911, 0.0
    %v3948 = vsel %vm3778, %v3908, 0.0
    %v3949 = vsel %vm3778, %v3909, 0.0
    %v3950 = vsel %vm3779, %v3906, 0.0
    %v3951 = vsel %vm3779, %v3907, 0.0
    %v3952 = vsel %vm3780, %v3904, 0.0
    %v3953 = vsel %vm3780, %v3905, 0.0
    %v3954 = vsel %vm3781, %v3902, 0.0
    %v3955 = vsel %vm3781, %v3903, 0.0
    %v3956 = vsel %vm3782, %v3900, 0.0
    %v3957 = vsel %vm3782, %v3901, 0.0
    %v3958 = vsel %vm3783, %v3898, 0.0
    %v3959 = vsel %vm3783, %v3899, 0.0
    %v3960 = vsel %vm3784, %v3896, 0.0
    %v3961 = vsel %vm3784, %v3897, 0.0
    %v3962 = vsel %vm3785, %v3894, 0.0
    %v3963 = vsel %vm3785, %v3895, 0.0
    %v3964 = vsel %vm3786, %v3892, 0.0
    %v3965 = vsel %vm3786, %v3893, 0.0
    %v3966 = vsel %vm3787, %v3890, 0.0
    %v3967 = vsel %vm3787, %v3891, 0.0
    %v3968 = vsel %vm3788, %v3888, 0.0
    %v3969 = vsel %vm3788, %v3889, 0.0
    %v3970 = vsel %vm3789, %v3886, 0.0
    %v3971 = vsel %vm3789, %v3887, 0.0
    %v3972 = vsel %vm3790, %v3884, 0.0
    %v3973 = vsel %vm3790, %v3885, 0.0
    %v3974 = vsel %vm3791, %v3882, 0.0
    %v3975 = vsel %vm3791, %v3883, 0.0
    %v3976 = vsel %vm3792, %v3880, 0.0
    %v3977 = vsel %vm3792, %v3881, 0.0
    %v3978 = vsel %vm3793, %v3878, 0.0
    %v3979 = vsel %vm3793, %v3879, 0.0
    %v3980 = vsel %vm3794, %v3876, 0.0
    %v3981 = vsel %vm3794, %v3877, 0.0
    %v3982 = vsel %vm3795, %v3874, 0.0
    %v3983 = vsel %vm3795, %v3875, 0.0
    %v3984 = vsel %vm3796, %v3872, 0.0
    %v3985 = vsel %vm3796, %v3873, 0.0
    %v3986 = vsel %vm3797, %v3870, 0.0
    %v3987 = vsel %vm3797, %v3871, 0.0
    %v3988 = vsel %vm3798, %v3868, 0.0
    %v3989 = vsel %vm3798, %v3869, 0.0
    %v3990 = vsel %vm3799, %v3866, 0.0
    %v3991 = vsel %vm3799, %v3867, 0.0
    %v3992 = vsel %vm3800, %v3928, 0.0
    %v3993 = vsel %vm3800, %v3929, 0.0
    %v3994 = vmax.f32 %v3416, %v3930
    %v3995 = vmax.f32 %v3417, %v3931
    %v3996 = vmax.f32 %v3418, %v3932
    %v3997 = vmax.f32 %v3419, %v3933
    %v3998 = vmax.f32 %v3420, %v3934
    %v3999 = vmax.f32 %v3421, %v3935
    %v4000 = vmax.f32 %v3422, %v3936
    %v4001 = vmax.f32 %v3423, %v3937
    %v4002 = vmax.f32 %v3424, %v3938
    %v4003 = vmax.f32 %v3425, %v3939
    %v4004 = vmax.f32 %v3426, %v3940
    %v4005 = vmax.f32 %v3427, %v3941
    %v4006 = vmax.f32 %v3428, %v3942
    %v4007 = vmax.f32 %v3429, %v3943
    %v4008 = vmax.f32 %v3430, %v3944
    %v4009 = vmax.f32 %v3431, %v3945
    %v4010 = vmax.f32 %v3432, %v3946
    %v4011 = vmax.f32 %v3433, %v3947
    %v4012 = vmax.f32 %v3434, %v3948
    %v4013 = vmax.f32 %v3435, %v3949
    %v4014 = vmax.f32 %v3436, %v3950
    %v4015 = vmax.f32 %v3437, %v3951
    %v4016 = vmax.f32 %v3438, %v3952
    %v4017 = vmax.f32 %v3439, %v3953
    %v4018 = vmax.f32 %v3440, %v3954
    %v4019 = vmax.f32 %v3441, %v3955
    %v4020 = vmax.f32 %v3442, %v3956
    %v4021 = vmax.f32 %v3443, %v3957
    %v4022 = vmax.f32 %v3444, %v3958
    %v4023 = vmax.f32 %v3445, %v3959
    %v4024 = vmax.f32 %v3446, %v3960
    %v4025 = vmax.f32 %v3447, %v3961
    %v4026 = vmax.f32 %v3448, %v3962
    %v4027 = vmax.f32 %v3449, %v3963
    %v4028 = vmax.f32 %v3450, %v3964
    %v4029 = vmax.f32 %v3451, %v3965
    %v4030 = vmax.f32 %v3452, %v3966
    %v4031 = vmax.f32 %v3453, %v3967
    %v4032 = vmax.f32 %v3454, %v3968
    %v4033 = vmax.f32 %v3455, %v3969
    %v4034 = vmax.f32 %v3456, %v3970
    %v4035 = vmax.f32 %v3457, %v3971
    %v4036 = vmax.f32 %v3458, %v3972
    %v4037 = vmax.f32 %v3459, %v3973
    %v4038 = vmax.f32 %v3460, %v3974
    %v4039 = vmax.f32 %v3461, %v3975
    %v4040 = vmax.f32 %v3462, %v3976
    %v4041 = vmax.f32 %v3463, %v3977
    %v4042 = vmax.f32 %v3464, %v3978
    %v4043 = vmax.f32 %v3465, %v3979
    %v4044 = vmax.f32 %v3466, %v3980
    %v4045 = vmax.f32 %v3467, %v3981
    %v4046 = vmax.f32 %v3468, %v3982
    %v4047 = vmax.f32 %v3469, %v3983
    %v4048 = vmax.f32 %v3470, %v3984
    %v4049 = vmax.f32 %v3471, %v3985
    %v4050 = vmax.f32 %v3472, %v3986
    %v4051 = vmax.f32 %v3473, %v3987
    %v4052 = vmax.f32 %v3474, %v3988
    %v4053 = vmax.f32 %v3475, %v3989
    %v4054 = vmax.f32 %v3476, %v3990
    %v4055 = vmax.f32 %v3477, %v3991
    %v4056 = vmax.f32 %v3478, %v3992
    %v4057 = vmax.f32 %v3479, %v3993
    %vm4058 = vcmp.ge.s32.totalorder %v3159, 2
    %vm4059 = vcmp.ge.s32.totalorder %v3160, 2
    %vm4060 = vcmp.ge.s32.totalorder %v3161, 2
    %vm4061 = vcmp.ge.s32.totalorder %v3162, 2
    %vm4062 = vcmp.ge.s32.totalorder %v3163, 2
    %vm4063 = vcmp.ge.s32.totalorder %v3164, 2
    %vm4064 = vcmp.ge.s32.totalorder %v3165, 2
    %vm4065 = vcmp.ge.s32.totalorder %v3166, 2
    %vm4066 = vcmp.ge.s32.totalorder %v3167, 2
    %vm4067 = vcmp.ge.s32.totalorder %v3168, 2
    %vm4068 = vcmp.ge.s32.totalorder %v3169, 2
    %vm4069 = vcmp.ge.s32.totalorder %v3170, 2
    %vm4070 = vcmp.ge.s32.totalorder %v3171, 2
    %vm4071 = vcmp.ge.s32.totalorder %v3172, 2
    %vm4072 = vcmp.ge.s32.totalorder %v3173, 2
    %vm4073 = vcmp.ge.s32.totalorder %v3174, 2
    %vm4074 = vcmp.ge.s32.totalorder %v3175, 2
    %vm4075 = vcmp.ge.s32.totalorder %v3176, 2
    %vm4076 = vcmp.ge.s32.totalorder %v3177, 2
    %vm4077 = vcmp.ge.s32.totalorder %v3178, 2
    %vm4078 = vcmp.ge.s32.totalorder %v3179, 2
    %vm4079 = vcmp.ge.s32.totalorder %v3180, 2
    %vm4080 = vcmp.ge.s32.totalorder %v3181, 2
    %vm4081 = vcmp.ge.s32.totalorder %v3182, 2
    %vm4082 = vcmp.ge.s32.totalorder %v3183, 2
    %vm4083 = vcmp.ge.s32.totalorder %v3184, 2
    %vm4084 = vcmp.ge.s32.totalorder %v3185, 2
    %vm4085 = vcmp.ge.s32.totalorder %v3186, 2
    %vm4086 = vcmp.ge.s32.totalorder %v3187, 2
    %vm4087 = vcmp.ge.s32.totalorder %v3188, 2
    %vm4088 = vcmp.ge.s32.totalorder %v3189, 2
    %vm4089 = vcmp.ge.s32.totalorder %v3190, 2
    %v4090 = vrot.slane %v3705, 6
    %v4091 = vrot.slane %v3706, 6
    %v4092 = vrot.slane %v3707, 6
    %v4093 = vrot.slane %v3708, 6
    %v4094 = vrot.slane %v3709, 6
    %v4095 = vrot.slane %v3710, 6
    %v4096 = vrot.slane %v3711, 6
    %v4097 = vrot.slane %v3712, 6
    %v4098 = vrot.slane %v3713, 6
    %v4099 = vrot.slane %v3714, 6
    %v4100 = vrot.slane %v3715, 6
    %v4101 = vrot.slane %v3716, 6
    %v4102 = vrot.slane %v3717, 6
    %v4103 = vrot.slane %v3718, 6
    %v4104 = vrot.slane %v3719, 6
    %v4105 = vrot.slane %v3720, 6
    %v4106 = vrot.slane %v3721, 6
    %v4107 = vrot.slane %v3722, 6
    %v4108 = vrot.slane %v3723, 6
    %v4109 = vrot.slane %v3724, 6
    %v4110 = vrot.slane %v3725, 6
    %v4111 = vrot.slane %v3726, 6
    %v4112 = vrot.slane %v3727, 6
    %v4113 = vrot.slane %v3728, 6
    %v4114 = vrot.slane %v3729, 6
    %v4115 = vrot.slane %v3730, 6
    %v4116 = vrot.slane %v3731, 6
    %v4117 = vrot.slane %v3732, 6
    %v4118 = vrot.slane %v3733, 6
    %v4119 = vrot.slane %v3734, 6
    %v4120 = vrot.slane %v3735, 6
    %v4121 = vrot.slane %v3736, 6
    %v4122 = vrot.slane %v3737, 6
    %v4123 = vrot.slane %v3738, 6
    %v4124 = vrot.slane %v3739, 6
    %v4125 = vrot.slane %v3740, 6
    %v4126 = vrot.slane %v3741, 6
    %v4127 = vrot.slane %v3742, 6
    %v4128 = vrot.slane %v3743, 6
    %v4129 = vrot.slane %v3744, 6
    %v4130 = vrot.slane %v3745, 6
    %v4131 = vrot.slane %v3746, 6
    %v4132 = vrot.slane %v3747, 6
    %v4133 = vrot.slane %v3748, 6
    %v4134 = vrot.slane %v3749, 6
    %v4135 = vrot.slane %v3750, 6
    %v4136 = vrot.slane %v3751, 6
    %v4137 = vrot.slane %v3752, 6
    %v4138 = vrot.slane %v3753, 6
    %v4139 = vrot.slane %v3754, 6
    %v4140 = vrot.slane %v3755, 6
    %v4141 = vrot.slane %v3756, 6
    %v4142 = vrot.slane %v3757, 6
    %v4143 = vrot.slane %v3758, 6
    %v4144 = vrot.slane %v3759, 6
    %v4145 = vrot.slane %v3760, 6
    %v4146 = vrot.slane %v3761, 6
    %v4147 = vrot.slane %v3762, 6
    %v4148 = vrot.slane %v3763, 6
    %v4149 = vrot.slane %v3764, 6
    %v4150 = vrot.slane %v3765, 6
    %v4151 = vrot.slane %v3766, 6
    %v4152 = vrot.slane %v3767, 6
    %v4153 = vrot.slane %v3768, 6
    %vm4154 = vcmp.lt.s32.totalorder %v3159, 2
    %v4155 = vsel %vm4154, %v4150, %v4152
    %v4156 = vsel %vm4154, %v4151, %v4153
    %v4157 = vsel %vm4154, %v4148, %v4150
    %v4158 = vsel %vm4154, %v4149, %v4151
    %v4159 = vsel %vm4154, %v4146, %v4148
    %v4160 = vsel %vm4154, %v4147, %v4149
    %v4161 = vsel %vm4154, %v4144, %v4146
    %v4162 = vsel %vm4154, %v4145, %v4147
    %v4163 = vsel %vm4154, %v4142, %v4144
    %v4164 = vsel %vm4154, %v4143, %v4145
    %v4165 = vsel %vm4154, %v4140, %v4142
    %v4166 = vsel %vm4154, %v4141, %v4143
    %v4167 = vsel %vm4154, %v4138, %v4140
    %v4168 = vsel %vm4154, %v4139, %v4141
    %v4169 = vsel %vm4154, %v4136, %v4138
    %v4170 = vsel %vm4154, %v4137, %v4139
    %v4171 = vsel %vm4154, %v4134, %v4136
    %v4172 = vsel %vm4154, %v4135, %v4137
    %v4173 = vsel %vm4154, %v4132, %v4134
    %v4174 = vsel %vm4154, %v4133, %v4135
    %v4175 = vsel %vm4154, %v4130, %v4132
    %v4176 = vsel %vm4154, %v4131, %v4133
    %v4177 = vsel %vm4154, %v4128, %v4130
    %v4178 = vsel %vm4154, %v4129, %v4131
    %v4179 = vsel %vm4154, %v4126, %v4128
    %v4180 = vsel %vm4154, %v4127, %v4129
    %v4181 = vsel %vm4154, %v4124, %v4126
    %v4182 = vsel %vm4154, %v4125, %v4127
    %v4183 = vsel %vm4154, %v4122, %v4124
    %v4184 = vsel %vm4154, %v4123, %v4125
    %v4185 = vsel %vm4154, %v4120, %v4122
    %v4186 = vsel %vm4154, %v4121, %v4123
    %v4187 = vsel %vm4154, %v4118, %v4120
    %v4188 = vsel %vm4154, %v4119, %v4121
    %v4189 = vsel %vm4154, %v4116, %v4118
    %v4190 = vsel %vm4154, %v4117, %v4119
    %v4191 = vsel %vm4154, %v4114, %v4116
    %v4192 = vsel %vm4154, %v4115, %v4117
    %v4193 = vsel %vm4154, %v4112, %v4114
    %v4194 = vsel %vm4154, %v4113, %v4115
    %v4195 = vsel %vm4154, %v4110, %v4112
    %v4196 = vsel %vm4154, %v4111, %v4113
    %v4197 = vsel %vm4154, %v4108, %v4110
    %v4198 = vsel %vm4154, %v4109, %v4111
    %v4199 = vsel %vm4154, %v4106, %v4108
    %v4200 = vsel %vm4154, %v4107, %v4109
    %v4201 = vsel %vm4154, %v4104, %v4106
    %v4202 = vsel %vm4154, %v4105, %v4107
    %v4203 = vsel %vm4154, %v4102, %v4104
    %v4204 = vsel %vm4154, %v4103, %v4105
    %v4205 = vsel %vm4154, %v4100, %v4102
    %v4206 = vsel %vm4154, %v4101, %v4103
    %v4207 = vsel %vm4154, %v4098, %v4100
    %v4208 = vsel %vm4154, %v4099, %v4101
    %v4209 = vsel %vm4154, %v4096, %v4098
    %v4210 = vsel %vm4154, %v4097, %v4099
    %v4211 = vsel %vm4154, %v4094, %v4096
    %v4212 = vsel %vm4154, %v4095, %v4097
    %v4213 = vsel %vm4154, %v4092, %v4094
    %v4214 = vsel %vm4154, %v4093, %v4095
    %v4215 = vsel %vm4154, %v4090, %v4092
    %v4216 = vsel %vm4154, %v4091, %v4093
    %v4217 = vsel %vm4154, %v4152, %v4090
    %v4218 = vsel %vm4154, %v4153, %v4091
    %v4219 = vsel %vm4058, %v4217, 0.0
    %v4220 = vsel %vm4058, %v4218, 0.0
    %v4221 = vsel %vm4059, %v4215, 0.0
    %v4222 = vsel %vm4059, %v4216, 0.0
    %v4223 = vsel %vm4060, %v4213, 0.0
    %v4224 = vsel %vm4060, %v4214, 0.0
    %v4225 = vsel %vm4061, %v4211, 0.0
    %v4226 = vsel %vm4061, %v4212, 0.0
    %v4227 = vsel %vm4062, %v4209, 0.0
    %v4228 = vsel %vm4062, %v4210, 0.0
    %v4229 = vsel %vm4063, %v4207, 0.0
    %v4230 = vsel %vm4063, %v4208, 0.0
    %v4231 = vsel %vm4064, %v4205, 0.0
    %v4232 = vsel %vm4064, %v4206, 0.0
    %v4233 = vsel %vm4065, %v4203, 0.0
    %v4234 = vsel %vm4065, %v4204, 0.0
    %v4235 = vsel %vm4066, %v4201, 0.0
    %v4236 = vsel %vm4066, %v4202, 0.0
    %v4237 = vsel %vm4067, %v4199, 0.0
    %v4238 = vsel %vm4067, %v4200, 0.0
    %v4239 = vsel %vm4068, %v4197, 0.0
    %v4240 = vsel %vm4068, %v4198, 0.0
    %v4241 = vsel %vm4069, %v4195, 0.0
    %v4242 = vsel %vm4069, %v4196, 0.0
    %v4243 = vsel %vm4070, %v4193, 0.0
    %v4244 = vsel %vm4070, %v4194, 0.0
    %v4245 = vsel %vm4071, %v4191, 0.0
    %v4246 = vsel %vm4071, %v4192, 0.0
    %v4247 = vsel %vm4072, %v4189, 0.0
    %v4248 = vsel %vm4072, %v4190, 0.0
    %v4249 = vsel %vm4073, %v4187, 0.0
    %v4250 = vsel %vm4073, %v4188, 0.0
    %v4251 = vsel %vm4074, %v4185, 0.0
    %v4252 = vsel %vm4074, %v4186, 0.0
    %v4253 = vsel %vm4075, %v4183, 0.0
    %v4254 = vsel %vm4075, %v4184, 0.0
    %v4255 = vsel %vm4076, %v4181, 0.0
    %v4256 = vsel %vm4076, %v4182, 0.0
    %v4257 = vsel %vm4077, %v4179, 0.0
    %v4258 = vsel %vm4077, %v4180, 0.0
    %v4259 = vsel %vm4078, %v4177, 0.0
    %v4260 = vsel %vm4078, %v4178, 0.0
    %v4261 = vsel %vm4079, %v4175, 0.0
    %v4262 = vsel %vm4079, %v4176, 0.0
    %v4263 = vsel %vm4080, %v4173, 0.0
    %v4264 = vsel %vm4080, %v4174, 0.0
    %v4265 = vsel %vm4081, %v4171, 0.0
    %v4266 = vsel %vm4081, %v4172, 0.0
    %v4267 = vsel %vm4082, %v4169, 0.0
    %v4268 = vsel %vm4082, %v4170, 0.0
    %v4269 = vsel %vm4083, %v4167, 0.0
    %v4270 = vsel %vm4083, %v4168, 0.0
    %v4271 = vsel %vm4084, %v4165, 0.0
    %v4272 = vsel %vm4084, %v4166, 0.0
    %v4273 = vsel %vm4085, %v4163, 0.0
    %v4274 = vsel %vm4085, %v4164, 0.0
    %v4275 = vsel %vm4086, %v4161, 0.0
    %v4276 = vsel %vm4086, %v4162, 0.0
    %v4277 = vsel %vm4087, %v4159, 0.0
    %v4278 = vsel %vm4087, %v4160, 0.0
    %v4279 = vsel %vm4088, %v4157, 0.0
    %v4280 = vsel %vm4088, %v4158, 0.0
    %v4281 = vsel %vm4089, %v4155, 0.0
    %v4282 = vsel %vm4089, %v4156, 0.0
    %v4283 = vmax.f32 %v3705, %v4219
    %v4284 = vmax.f32 %v3706, %v4220
    %v4285 = vmax.f32 %v3707, %v4221
    %v4286 = vmax.f32 %v3708, %v4222
    %v4287 = vmax.f32 %v3709, %v4223
    %v4288 = vmax.f32 %v3710, %v4224
    %v4289 = vmax.f32 %v3711, %v4225
    %v4290 = vmax.f32 %v3712, %v4226
    %v4291 = vmax.f32 %v3713, %v4227
    %v4292 = vmax.f32 %v3714, %v4228
    %v4293 = vmax.f32 %v3715, %v4229
    %v4294 = vmax.f32 %v3716, %v4230
    %v4295 = vmax.f32 %v3717, %v4231
    %v4296 = vmax.f32 %v3718, %v4232
    %v4297 = vmax.f32 %v3719, %v4233
    %v4298 = vmax.f32 %v3720, %v4234
    %v4299 = vmax.f32 %v3721, %v4235
    %v4300 = vmax.f32 %v3722, %v4236
    %v4301 = vmax.f32 %v3723, %v4237
    %v4302 = vmax.f32 %v3724, %v4238
    %v4303 = vmax.f32 %v3725, %v4239
    %v4304 = vmax.f32 %v3726, %v4240
    %v4305 = vmax.f32 %v3727, %v4241
    %v4306 = vmax.f32 %v3728, %v4242
    %v4307 = vmax.f32 %v3729, %v4243
    %v4308 = vmax.f32 %v3730, %v4244
    %v4309 = vmax.f32 %v3731, %v4245
    %v4310 = vmax.f32 %v3732, %v4246
    %v4311 = vmax.f32 %v3733, %v4247
    %v4312 = vmax.f32 %v3734, %v4248
    %v4313 = vmax.f32 %v3735, %v4249
    %v4314 = vmax.f32 %v3736, %v4250
    %v4315 = vmax.f32 %v3737, %v4251
    %v4316 = vmax.f32 %v3738, %v4252
    %v4317 = vmax.f32 %v3739, %v4253
    %v4318 = vmax.f32 %v3740, %v4254
    %v4319 = vmax.f32 %v3741, %v4255
    %v4320 = vmax.f32 %v3742, %v4256
    %v4321 = vmax.f32 %v3743, %v4257
    %v4322 = vmax.f32 %v3744, %v4258
    %v4323 = vmax.f32 %v3745, %v4259
    %v4324 = vmax.f32 %v3746, %v4260
    %v4325 = vmax.f32 %v3747, %v4261
    %v4326 = vmax.f32 %v3748, %v4262
    %v4327 = vmax.f32 %v3749, %v4263
    %v4328 = vmax.f32 %v3750, %v4264
    %v4329 = vmax.f32 %v3751, %v4265
    %v4330 = vmax.f32 %v3752, %v4266
    %v4331 = vmax.f32 %v3753, %v4267
    %v4332 = vmax.f32 %v3754, %v4268
    %v4333 = vmax.f32 %v3755, %v4269
    %v4334 = vmax.f32 %v3756, %v4270
    %v4335 = vmax.f32 %v3757, %v4271
    %v4336 = vmax.f32 %v3758, %v4272
    %v4337 = vmax.f32 %v3759, %v4273
    %v4338 = vmax.f32 %v3760, %v4274
    %v4339 = vmax.f32 %v3761, %v4275
    %v4340 = vmax.f32 %v3762, %v4276
    %v4341 = vmax.f32 %v3763, %v4277
    %v4342 = vmax.f32 %v3764, %v4278
    %v4343 = vmax.f32 %v3765, %v4279
    %v4344 = vmax.f32 %v3766, %v4280
    %v4345 = vmax.f32 %v3767, %v4281
    %v4346 = vmax.f32 %v3768, %v4282
    %vm4347 = vcmp.lt.s32.totalorder %v3159, 252
    %vm4348 = vcmp.lt.s32.totalorder %v3160, 252
    %vm4349 = vcmp.lt.s32.totalorder %v3161, 252
    %vm4350 = vcmp.lt.s32.totalorder %v3162, 252
    %vm4351 = vcmp.lt.s32.totalorder %v3163, 252
    %vm4352 = vcmp.lt.s32.totalorder %v3164, 252
    %vm4353 = vcmp.lt.s32.totalorder %v3165, 252
    %vm4354 = vcmp.lt.s32.totalorder %v3166, 252
    %vm4355 = vcmp.lt.s32.totalorder %v3167, 252
    %vm4356 = vcmp.lt.s32.totalorder %v3168, 252
    %vm4357 = vcmp.lt.s32.totalorder %v3169, 252
    %vm4358 = vcmp.lt.s32.totalorder %v3170, 252
    %vm4359 = vcmp.lt.s32.totalorder %v3171, 252
    %vm4360 = vcmp.lt.s32.totalorder %v3172, 252
    %vm4361 = vcmp.lt.s32.totalorder %v3173, 252
    %vm4362 = vcmp.lt.s32.totalorder %v3174, 252
    %vm4363 = vcmp.lt.s32.totalorder %v3175, 252
    %vm4364 = vcmp.lt.s32.totalorder %v3176, 252
    %vm4365 = vcmp.lt.s32.totalorder %v3177, 252
    %vm4366 = vcmp.lt.s32.totalorder %v3178, 252
    %vm4367 = vcmp.lt.s32.totalorder %v3179, 252
    %vm4368 = vcmp.lt.s32.totalorder %v3180, 252
    %vm4369 = vcmp.lt.s32.totalorder %v3181, 252
    %vm4370 = vcmp.lt.s32.totalorder %v3182, 252
    %vm4371 = vcmp.lt.s32.totalorder %v3183, 252
    %vm4372 = vcmp.lt.s32.totalorder %v3184, 252
    %vm4373 = vcmp.lt.s32.totalorder %v3185, 252
    %vm4374 = vcmp.lt.s32.totalorder %v3186, 252
    %vm4375 = vcmp.lt.s32.totalorder %v3187, 252
    %vm4376 = vcmp.lt.s32.totalorder %v3188, 252
    %vm4377 = vcmp.lt.s32.totalorder %v3189, 252
    %vm4378 = vcmp.lt.s32.totalorder %v3190, 252
    %v4379 = vrot.slane %v3994, 4
    %v4380 = vrot.slane %v3995, 4
    %v4381 = vrot.slane %v3996, 4
    %v4382 = vrot.slane %v3997, 4
    %v4383 = vrot.slane %v3998, 4
    %v4384 = vrot.slane %v3999, 4
    %v4385 = vrot.slane %v4000, 4
    %v4386 = vrot.slane %v4001, 4
    %v4387 = vrot.slane %v4002, 4
    %v4388 = vrot.slane %v4003, 4
    %v4389 = vrot.slane %v4004, 4
    %v4390 = vrot.slane %v4005, 4
    %v4391 = vrot.slane %v4006, 4
    %v4392 = vrot.slane %v4007, 4
    %v4393 = vrot.slane %v4008, 4
    %v4394 = vrot.slane %v4009, 4
    %v4395 = vrot.slane %v4010, 4
    %v4396 = vrot.slane %v4011, 4
    %v4397 = vrot.slane %v4012, 4
    %v4398 = vrot.slane %v4013, 4
    %v4399 = vrot.slane %v4014, 4
    %v4400 = vrot.slane %v4015, 4
    %v4401 = vrot.slane %v4016, 4
    %v4402 = vrot.slane %v4017, 4
    %v4403 = vrot.slane %v4018, 4
    %v4404 = vrot.slane %v4019, 4
    %v4405 = vrot.slane %v4020, 4
    %v4406 = vrot.slane %v4021, 4
    %v4407 = vrot.slane %v4022, 4
    %v4408 = vrot.slane %v4023, 4
    %v4409 = vrot.slane %v4024, 4
    %v4410 = vrot.slane %v4025, 4
    %v4411 = vrot.slane %v4026, 4
    %v4412 = vrot.slane %v4027, 4
    %v4413 = vrot.slane %v4028, 4
    %v4414 = vrot.slane %v4029, 4
    %v4415 = vrot.slane %v4030, 4
    %v4416 = vrot.slane %v4031, 4
    %v4417 = vrot.slane %v4032, 4
    %v4418 = vrot.slane %v4033, 4
    %v4419 = vrot.slane %v4034, 4
    %v4420 = vrot.slane %v4035, 4
    %v4421 = vrot.slane %v4036, 4
    %v4422 = vrot.slane %v4037, 4
    %v4423 = vrot.slane %v4038, 4
    %v4424 = vrot.slane %v4039, 4
    %v4425 = vrot.slane %v4040, 4
    %v4426 = vrot.slane %v4041, 4
    %v4427 = vrot.slane %v4042, 4
    %v4428 = vrot.slane %v4043, 4
    %v4429 = vrot.slane %v4044, 4
    %v4430 = vrot.slane %v4045, 4
    %v4431 = vrot.slane %v4046, 4
    %v4432 = vrot.slane %v4047, 4
    %v4433 = vrot.slane %v4048, 4
    %v4434 = vrot.slane %v4049, 4
    %v4435 = vrot.slane %v4050, 4
    %v4436 = vrot.slane %v4051, 4
    %v4437 = vrot.slane %v4052, 4
    %v4438 = vrot.slane %v4053, 4
    %v4439 = vrot.slane %v4054, 4
    %v4440 = vrot.slane %v4055, 4
    %v4441 = vrot.slane %v4056, 4
    %v4442 = vrot.slane %v4057, 4
    %vm4443 = vcmp.lt.s32.totalorder %v3159, 4
    %v4444 = vsel %vm4443, %v4439, %v4441
    %v4445 = vsel %vm4443, %v4440, %v4442
    %v4446 = vsel %vm4443, %v4437, %v4439
    %v4447 = vsel %vm4443, %v4438, %v4440
    %v4448 = vsel %vm4443, %v4435, %v4437
    %v4449 = vsel %vm4443, %v4436, %v4438
    %v4450 = vsel %vm4443, %v4433, %v4435
    %v4451 = vsel %vm4443, %v4434, %v4436
    %v4452 = vsel %vm4443, %v4431, %v4433
    %v4453 = vsel %vm4443, %v4432, %v4434
    %v4454 = vsel %vm4443, %v4429, %v4431
    %v4455 = vsel %vm4443, %v4430, %v4432
    %v4456 = vsel %vm4443, %v4427, %v4429
    %v4457 = vsel %vm4443, %v4428, %v4430
    %v4458 = vsel %vm4443, %v4425, %v4427
    %v4459 = vsel %vm4443, %v4426, %v4428
    %v4460 = vsel %vm4443, %v4423, %v4425
    %v4461 = vsel %vm4443, %v4424, %v4426
    %v4462 = vsel %vm4443, %v4421, %v4423
    %v4463 = vsel %vm4443, %v4422, %v4424
    %v4464 = vsel %vm4443, %v4419, %v4421
    %v4465 = vsel %vm4443, %v4420, %v4422
    %v4466 = vsel %vm4443, %v4417, %v4419
    %v4467 = vsel %vm4443, %v4418, %v4420
    %v4468 = vsel %vm4443, %v4415, %v4417
    %v4469 = vsel %vm4443, %v4416, %v4418
    %v4470 = vsel %vm4443, %v4413, %v4415
    %v4471 = vsel %vm4443, %v4414, %v4416
    %v4472 = vsel %vm4443, %v4411, %v4413
    %v4473 = vsel %vm4443, %v4412, %v4414
    %v4474 = vsel %vm4443, %v4409, %v4411
    %v4475 = vsel %vm4443, %v4410, %v4412
    %v4476 = vsel %vm4443, %v4407, %v4409
    %v4477 = vsel %vm4443, %v4408, %v4410
    %v4478 = vsel %vm4443, %v4405, %v4407
    %v4479 = vsel %vm4443, %v4406, %v4408
    %v4480 = vsel %vm4443, %v4403, %v4405
    %v4481 = vsel %vm4443, %v4404, %v4406
    %v4482 = vsel %vm4443, %v4401, %v4403
    %v4483 = vsel %vm4443, %v4402, %v4404
    %v4484 = vsel %vm4443, %v4399, %v4401
    %v4485 = vsel %vm4443, %v4400, %v4402
    %v4486 = vsel %vm4443, %v4397, %v4399
    %v4487 = vsel %vm4443, %v4398, %v4400
    %v4488 = vsel %vm4443, %v4395, %v4397
    %v4489 = vsel %vm4443, %v4396, %v4398
    %v4490 = vsel %vm4443, %v4393, %v4395
    %v4491 = vsel %vm4443, %v4394, %v4396
    %v4492 = vsel %vm4443, %v4391, %v4393
    %v4493 = vsel %vm4443, %v4392, %v4394
    %v4494 = vsel %vm4443, %v4389, %v4391
    %v4495 = vsel %vm4443, %v4390, %v4392
    %v4496 = vsel %vm4443, %v4387, %v4389
    %v4497 = vsel %vm4443, %v4388, %v4390
    %v4498 = vsel %vm4443, %v4385, %v4387
    %v4499 = vsel %vm4443, %v4386, %v4388
    %v4500 = vsel %vm4443, %v4383, %v4385
    %v4501 = vsel %vm4443, %v4384, %v4386
    %v4502 = vsel %vm4443, %v4381, %v4383
    %v4503 = vsel %vm4443, %v4382, %v4384
    %v4504 = vsel %vm4443, %v4379, %v4381
    %v4505 = vsel %vm4443, %v4380, %v4382
    %v4506 = vsel %vm4443, %v4441, %v4379
    %v4507 = vsel %vm4443, %v4442, %v4380
    %v4508 = vsel %vm4347, %v4504, 0.0
    %v4509 = vsel %vm4347, %v4505, 0.0
    %v4510 = vsel %vm4348, %v4502, 0.0
    %v4511 = vsel %vm4348, %v4503, 0.0
    %v4512 = vsel %vm4349, %v4500, 0.0
    %v4513 = vsel %vm4349, %v4501, 0.0
    %v4514 = vsel %vm4350, %v4498, 0.0
    %v4515 = vsel %vm4350, %v4499, 0.0
    %v4516 = vsel %vm4351, %v4496, 0.0
    %v4517 = vsel %vm4351, %v4497, 0.0
    %v4518 = vsel %vm4352, %v4494, 0.0
    %v4519 = vsel %vm4352, %v4495, 0.0
    %v4520 = vsel %vm4353, %v4492, 0.0
    %v4521 = vsel %vm4353, %v4493, 0.0
    %v4522 = vsel %vm4354, %v4490, 0.0
    %v4523 = vsel %vm4354, %v4491, 0.0
    %v4524 = vsel %vm4355, %v4488, 0.0
    %v4525 = vsel %vm4355, %v4489, 0.0
    %v4526 = vsel %vm4356, %v4486, 0.0
    %v4527 = vsel %vm4356, %v4487, 0.0
    %v4528 = vsel %vm4357, %v4484, 0.0
    %v4529 = vsel %vm4357, %v4485, 0.0
    %v4530 = vsel %vm4358, %v4482, 0.0
    %v4531 = vsel %vm4358, %v4483, 0.0
    %v4532 = vsel %vm4359, %v4480, 0.0
    %v4533 = vsel %vm4359, %v4481, 0.0
    %v4534 = vsel %vm4360, %v4478, 0.0
    %v4535 = vsel %vm4360, %v4479, 0.0
    %v4536 = vsel %vm4361, %v4476, 0.0
    %v4537 = vsel %vm4361, %v4477, 0.0
    %v4538 = vsel %vm4362, %v4474, 0.0
    %v4539 = vsel %vm4362, %v4475, 0.0
    %v4540 = vsel %vm4363, %v4472, 0.0
    %v4541 = vsel %vm4363, %v4473, 0.0
    %v4542 = vsel %vm4364, %v4470, 0.0
    %v4543 = vsel %vm4364, %v4471, 0.0
    %v4544 = vsel %vm4365, %v4468, 0.0
    %v4545 = vsel %vm4365, %v4469, 0.0
    %v4546 = vsel %vm4366, %v4466, 0.0
    %v4547 = vsel %vm4366, %v4467, 0.0
    %v4548 = vsel %vm4367, %v4464, 0.0
    %v4549 = vsel %vm4367, %v4465, 0.0
    %v4550 = vsel %vm4368, %v4462, 0.0
    %v4551 = vsel %vm4368, %v4463, 0.0
    %v4552 = vsel %vm4369, %v4460, 0.0
    %v4553 = vsel %vm4369, %v4461, 0.0
    %v4554 = vsel %vm4370, %v4458, 0.0
    %v4555 = vsel %vm4370, %v4459, 0.0
    %v4556 = vsel %vm4371, %v4456, 0.0
    %v4557 = vsel %vm4371, %v4457, 0.0
    %v4558 = vsel %vm4372, %v4454, 0.0
    %v4559 = vsel %vm4372, %v4455, 0.0
    %v4560 = vsel %vm4373, %v4452, 0.0
    %v4561 = vsel %vm4373, %v4453, 0.0
    %v4562 = vsel %vm4374, %v4450, 0.0
    %v4563 = vsel %vm4374, %v4451, 0.0
    %v4564 = vsel %vm4375, %v4448, 0.0
    %v4565 = vsel %vm4375, %v4449, 0.0
    %v4566 = vsel %vm4376, %v4446, 0.0
    %v4567 = vsel %vm4376, %v4447, 0.0
    %v4568 = vsel %vm4377, %v4444, 0.0
    %v4569 = vsel %vm4377, %v4445, 0.0
    %v4570 = vsel %vm4378, %v4506, 0.0
    %v4571 = vsel %vm4378, %v4507, 0.0
    %v4572 = vmax.f32 %v3994, %v4508
    %v4573 = vmax.f32 %v3995, %v4509
    %v4574 = vmax.f32 %v3996, %v4510
    %v4575 = vmax.f32 %v3997, %v4511
    %v4576 = vmax.f32 %v3998, %v4512
    %v4577 = vmax.f32 %v3999, %v4513
    %v4578 = vmax.f32 %v4000, %v4514
    %v4579 = vmax.f32 %v4001, %v4515
    %v4580 = vmax.f32 %v4002, %v4516
    %v4581 = vmax.f32 %v4003, %v4517
    %v4582 = vmax.f32 %v4004, %v4518
    %v4583 = vmax.f32 %v4005, %v4519
    %v4584 = vmax.f32 %v4006, %v4520
    %v4585 = vmax.f32 %v4007, %v4521
    %v4586 = vmax.f32 %v4008, %v4522
    %v4587 = vmax.f32 %v4009, %v4523
    %v4588 = vmax.f32 %v4010, %v4524
    %v4589 = vmax.f32 %v4011, %v4525
    %v4590 = vmax.f32 %v4012, %v4526
    %v4591 = vmax.f32 %v4013, %v4527
    %v4592 = vmax.f32 %v4014, %v4528
    %v4593 = vmax.f32 %v4015, %v4529
    %v4594 = vmax.f32 %v4016, %v4530
    %v4595 = vmax.f32 %v4017, %v4531
    %v4596 = vmax.f32 %v4018, %v4532
    %v4597 = vmax.f32 %v4019, %v4533
    %v4598 = vmax.f32 %v4020, %v4534
    %v4599 = vmax.f32 %v4021, %v4535
    %v4600 = vmax.f32 %v4022, %v4536
    %v4601 = vmax.f32 %v4023, %v4537
    %v4602 = vmax.f32 %v4024, %v4538
    %v4603 = vmax.f32 %v4025, %v4539
    %v4604 = vmax.f32 %v4026, %v4540
    %v4605 = vmax.f32 %v4027, %v4541
    %v4606 = vmax.f32 %v4028, %v4542
    %v4607 = vmax.f32 %v4029, %v4543
    %v4608 = vmax.f32 %v4030, %v4544
    %v4609 = vmax.f32 %v4031, %v4545
    %v4610 = vmax.f32 %v4032, %v4546
    %v4611 = vmax.f32 %v4033, %v4547
    %v4612 = vmax.f32 %v4034, %v4548
    %v4613 = vmax.f32 %v4035, %v4549
    %v4614 = vmax.f32 %v4036, %v4550
    %v4615 = vmax.f32 %v4037, %v4551
    %v4616 = vmax.f32 %v4038, %v4552
    %v4617 = vmax.f32 %v4039, %v4553
    %v4618 = vmax.f32 %v4040, %v4554
    %v4619 = vmax.f32 %v4041, %v4555
    %v4620 = vmax.f32 %v4042, %v4556
    %v4621 = vmax.f32 %v4043, %v4557
    %v4622 = vmax.f32 %v4044, %v4558
    %v4623 = vmax.f32 %v4045, %v4559
    %v4624 = vmax.f32 %v4046, %v4560
    %v4625 = vmax.f32 %v4047, %v4561
    %v4626 = vmax.f32 %v4048, %v4562
    %v4627 = vmax.f32 %v4049, %v4563
    %v4628 = vmax.f32 %v4050, %v4564
    %v4629 = vmax.f32 %v4051, %v4565
    %v4630 = vmax.f32 %v4052, %v4566
    %v4631 = vmax.f32 %v4053, %v4567
    %v4632 = vmax.f32 %v4054, %v4568
    %v4633 = vmax.f32 %v4055, %v4569
    %v4634 = vmax.f32 %v4056, %v4570
    %v4635 = vmax.f32 %v4057, %v4571
    %vm4636 = vcmp.ge.s32.totalorder %v3159, 4
    %vm4637 = vcmp.ge.s32.totalorder %v3160, 4
    %vm4638 = vcmp.ge.s32.totalorder %v3161, 4
    %vm4639 = vcmp.ge.s32.totalorder %v3162, 4
    %vm4640 = vcmp.ge.s32.totalorder %v3163, 4
    %vm4641 = vcmp.ge.s32.totalorder %v3164, 4
    %vm4642 = vcmp.ge.s32.totalorder %v3165, 4
    %vm4643 = vcmp.ge.s32.totalorder %v3166, 4
    %vm4644 = vcmp.ge.s32.totalorder %v3167, 4
    %vm4645 = vcmp.ge.s32.totalorder %v3168, 4
    %vm4646 = vcmp.ge.s32.totalorder %v3169, 4
    %vm4647 = vcmp.ge.s32.totalorder %v3170, 4
    %vm4648 = vcmp.ge.s32.totalorder %v3171, 4
    %vm4649 = vcmp.ge.s32.totalorder %v3172, 4
    %vm4650 = vcmp.ge.s32.totalorder %v3173, 4
    %vm4651 = vcmp.ge.s32.totalorder %v3174, 4
    %vm4652 = vcmp.ge.s32.totalorder %v3175, 4
    %vm4653 = vcmp.ge.s32.totalorder %v3176, 4
    %vm4654 = vcmp.ge.s32.totalorder %v3177, 4
    %vm4655 = vcmp.ge.s32.totalorder %v3178, 4
    %vm4656 = vcmp.ge.s32.totalorder %v3179, 4
    %vm4657 = vcmp.ge.s32.totalorder %v3180, 4
    %vm4658 = vcmp.ge.s32.totalorder %v3181, 4
    %vm4659 = vcmp.ge.s32.totalorder %v3182, 4
    %vm4660 = vcmp.ge.s32.totalorder %v3183, 4
    %vm4661 = vcmp.ge.s32.totalorder %v3184, 4
    %vm4662 = vcmp.ge.s32.totalorder %v3185, 4
    %vm4663 = vcmp.ge.s32.totalorder %v3186, 4
    %vm4664 = vcmp.ge.s32.totalorder %v3187, 4
    %vm4665 = vcmp.ge.s32.totalorder %v3188, 4
    %vm4666 = vcmp.ge.s32.totalorder %v3189, 4
    %vm4667 = vcmp.ge.s32.totalorder %v3190, 4
    %v4668 = vrot.slane %v4283, 4
    %v4669 = vrot.slane %v4284, 4
    %v4670 = vrot.slane %v4285, 4
    %v4671 = vrot.slane %v4286, 4
    %v4672 = vrot.slane %v4287, 4
    %v4673 = vrot.slane %v4288, 4
    %v4674 = vrot.slane %v4289, 4
    %v4675 = vrot.slane %v4290, 4
    %v4676 = vrot.slane %v4291, 4
    %v4677 = vrot.slane %v4292, 4
    %v4678 = vrot.slane %v4293, 4
    %v4679 = vrot.slane %v4294, 4
    %v4680 = vrot.slane %v4295, 4
    %v4681 = vrot.slane %v4296, 4
    %v4682 = vrot.slane %v4297, 4
    %v4683 = vrot.slane %v4298, 4
    %v4684 = vrot.slane %v4299, 4
    %v4685 = vrot.slane %v4300, 4
    %v4686 = vrot.slane %v4301, 4
    %v4687 = vrot.slane %v4302, 4
    %v4688 = vrot.slane %v4303, 4
    %v4689 = vrot.slane %v4304, 4
    %v4690 = vrot.slane %v4305, 4
    %v4691 = vrot.slane %v4306, 4
    %v4692 = vrot.slane %v4307, 4
    %v4693 = vrot.slane %v4308, 4
    %v4694 = vrot.slane %v4309, 4
    %v4695 = vrot.slane %v4310, 4
    %v4696 = vrot.slane %v4311, 4
    %v4697 = vrot.slane %v4312, 4
    %v4698 = vrot.slane %v4313, 4
    %v4699 = vrot.slane %v4314, 4
    %v4700 = vrot.slane %v4315, 4
    %v4701 = vrot.slane %v4316, 4
    %v4702 = vrot.slane %v4317, 4
    %v4703 = vrot.slane %v4318, 4
    %v4704 = vrot.slane %v4319, 4
    %v4705 = vrot.slane %v4320, 4
    %v4706 = vrot.slane %v4321, 4
    %v4707 = vrot.slane %v4322, 4
    %v4708 = vrot.slane %v4323, 4
    %v4709 = vrot.slane %v4324, 4
    %v4710 = vrot.slane %v4325, 4
    %v4711 = vrot.slane %v4326, 4
    %v4712 = vrot.slane %v4327, 4
    %v4713 = vrot.slane %v4328, 4
    %v4714 = vrot.slane %v4329, 4
    %v4715 = vrot.slane %v4330, 4
    %v4716 = vrot.slane %v4331, 4
    %v4717 = vrot.slane %v4332, 4
    %v4718 = vrot.slane %v4333, 4
    %v4719 = vrot.slane %v4334, 4
    %v4720 = vrot.slane %v4335, 4
    %v4721 = vrot.slane %v4336, 4
    %v4722 = vrot.slane %v4337, 4
    %v4723 = vrot.slane %v4338, 4
    %v4724 = vrot.slane %v4339, 4
    %v4725 = vrot.slane %v4340, 4
    %v4726 = vrot.slane %v4341, 4
    %v4727 = vrot.slane %v4342, 4
    %v4728 = vrot.slane %v4343, 4
    %v4729 = vrot.slane %v4344, 4
    %v4730 = vrot.slane %v4345, 4
    %v4731 = vrot.slane %v4346, 4
    %v4732 = vsel %vm4443, %v4728, %v4730
    %v4733 = vsel %vm4443, %v4729, %v4731
    %v4734 = vsel %vm4443, %v4726, %v4728
    %v4735 = vsel %vm4443, %v4727, %v4729
    %v4736 = vsel %vm4443, %v4724, %v4726
    %v4737 = vsel %vm4443, %v4725, %v4727
    %v4738 = vsel %vm4443, %v4722, %v4724
    %v4739 = vsel %vm4443, %v4723, %v4725
    %v4740 = vsel %vm4443, %v4720, %v4722
    %v4741 = vsel %vm4443, %v4721, %v4723
    %v4742 = vsel %vm4443, %v4718, %v4720
    %v4743 = vsel %vm4443, %v4719, %v4721
    %v4744 = vsel %vm4443, %v4716, %v4718
    %v4745 = vsel %vm4443, %v4717, %v4719
    %v4746 = vsel %vm4443, %v4714, %v4716
    %v4747 = vsel %vm4443, %v4715, %v4717
    %v4748 = vsel %vm4443, %v4712, %v4714
    %v4749 = vsel %vm4443, %v4713, %v4715
    %v4750 = vsel %vm4443, %v4710, %v4712
    %v4751 = vsel %vm4443, %v4711, %v4713
    %v4752 = vsel %vm4443, %v4708, %v4710
    %v4753 = vsel %vm4443, %v4709, %v4711
    %v4754 = vsel %vm4443, %v4706, %v4708
    %v4755 = vsel %vm4443, %v4707, %v4709
    %v4756 = vsel %vm4443, %v4704, %v4706
    %v4757 = vsel %vm4443, %v4705, %v4707
    %v4758 = vsel %vm4443, %v4702, %v4704
    %v4759 = vsel %vm4443, %v4703, %v4705
    %v4760 = vsel %vm4443, %v4700, %v4702
    %v4761 = vsel %vm4443, %v4701, %v4703
    %v4762 = vsel %vm4443, %v4698, %v4700
    %v4763 = vsel %vm4443, %v4699, %v4701
    %v4764 = vsel %vm4443, %v4696, %v4698
    %v4765 = vsel %vm4443, %v4697, %v4699
    %v4766 = vsel %vm4443, %v4694, %v4696
    %v4767 = vsel %vm4443, %v4695, %v4697
    %v4768 = vsel %vm4443, %v4692, %v4694
    %v4769 = vsel %vm4443, %v4693, %v4695
    %v4770 = vsel %vm4443, %v4690, %v4692
    %v4771 = vsel %vm4443, %v4691, %v4693
    %v4772 = vsel %vm4443, %v4688, %v4690
    %v4773 = vsel %vm4443, %v4689, %v4691
    %v4774 = vsel %vm4443, %v4686, %v4688
    %v4775 = vsel %vm4443, %v4687, %v4689
    %v4776 = vsel %vm4443, %v4684, %v4686
    %v4777 = vsel %vm4443, %v4685, %v4687
    %v4778 = vsel %vm4443, %v4682, %v4684
    %v4779 = vsel %vm4443, %v4683, %v4685
    %v4780 = vsel %vm4443, %v4680, %v4682
    %v4781 = vsel %vm4443, %v4681, %v4683
    %v4782 = vsel %vm4443, %v4678, %v4680
    %v4783 = vsel %vm4443, %v4679, %v4681
    %v4784 = vsel %vm4443, %v4676, %v4678
    %v4785 = vsel %vm4443, %v4677, %v4679
    %v4786 = vsel %vm4443, %v4674, %v4676
    %v4787 = vsel %vm4443, %v4675, %v4677
    %v4788 = vsel %vm4443, %v4672, %v4674
    %v4789 = vsel %vm4443, %v4673, %v4675
    %v4790 = vsel %vm4443, %v4670, %v4672
    %v4791 = vsel %vm4443, %v4671, %v4673
    %v4792 = vsel %vm4443, %v4668, %v4670
    %v4793 = vsel %vm4443, %v4669, %v4671
    %v4794 = vsel %vm4443, %v4730, %v4668
    %v4795 = vsel %vm4443, %v4731, %v4669
    %v4796 = vsel %vm4636, %v4794, 0.0
    %v4797 = vsel %vm4636, %v4795, 0.0
    %v4798 = vsel %vm4637, %v4792, 0.0
    %v4799 = vsel %vm4637, %v4793, 0.0
    %v4800 = vsel %vm4638, %v4790, 0.0
    %v4801 = vsel %vm4638, %v4791, 0.0
    %v4802 = vsel %vm4639, %v4788, 0.0
    %v4803 = vsel %vm4639, %v4789, 0.0
    %v4804 = vsel %vm4640, %v4786, 0.0
    %v4805 = vsel %vm4640, %v4787, 0.0
    %v4806 = vsel %vm4641, %v4784, 0.0
    %v4807 = vsel %vm4641, %v4785, 0.0
    %v4808 = vsel %vm4642, %v4782, 0.0
    %v4809 = vsel %vm4642, %v4783, 0.0
    %v4810 = vsel %vm4643, %v4780, 0.0
    %v4811 = vsel %vm4643, %v4781, 0.0
    %v4812 = vsel %vm4644, %v4778, 0.0
    %v4813 = vsel %vm4644, %v4779, 0.0
    %v4814 = vsel %vm4645, %v4776, 0.0
    %v4815 = vsel %vm4645, %v4777, 0.0
    %v4816 = vsel %vm4646, %v4774, 0.0
    %v4817 = vsel %vm4646, %v4775, 0.0
    %v4818 = vsel %vm4647, %v4772, 0.0
    %v4819 = vsel %vm4647, %v4773, 0.0
    %v4820 = vsel %vm4648, %v4770, 0.0
    %v4821 = vsel %vm4648, %v4771, 0.0
    %v4822 = vsel %vm4649, %v4768, 0.0
    %v4823 = vsel %vm4649, %v4769, 0.0
    %v4824 = vsel %vm4650, %v4766, 0.0
    %v4825 = vsel %vm4650, %v4767, 0.0
    %v4826 = vsel %vm4651, %v4764, 0.0
    %v4827 = vsel %vm4651, %v4765, 0.0
    %v4828 = vsel %vm4652, %v4762, 0.0
    %v4829 = vsel %vm4652, %v4763, 0.0
    %v4830 = vsel %vm4653, %v4760, 0.0
    %v4831 = vsel %vm4653, %v4761, 0.0
    %v4832 = vsel %vm4654, %v4758, 0.0
    %v4833 = vsel %vm4654, %v4759, 0.0
    %v4834 = vsel %vm4655, %v4756, 0.0
    %v4835 = vsel %vm4655, %v4757, 0.0
    %v4836 = vsel %vm4656, %v4754, 0.0
    %v4837 = vsel %vm4656, %v4755, 0.0
    %v4838 = vsel %vm4657, %v4752, 0.0
    %v4839 = vsel %vm4657, %v4753, 0.0
    %v4840 = vsel %vm4658, %v4750, 0.0
    %v4841 = vsel %vm4658, %v4751, 0.0
    %v4842 = vsel %vm4659, %v4748, 0.0
    %v4843 = vsel %vm4659, %v4749, 0.0
    %v4844 = vsel %vm4660, %v4746, 0.0
    %v4845 = vsel %vm4660, %v4747, 0.0
    %v4846 = vsel %vm4661, %v4744, 0.0
    %v4847 = vsel %vm4661, %v4745, 0.0
    %v4848 = vsel %vm4662, %v4742, 0.0
    %v4849 = vsel %vm4662, %v4743, 0.0
    %v4850 = vsel %vm4663, %v4740, 0.0
    %v4851 = vsel %vm4663, %v4741, 0.0
    %v4852 = vsel %vm4664, %v4738, 0.0
    %v4853 = vsel %vm4664, %v4739, 0.0
    %v4854 = vsel %vm4665, %v4736, 0.0
    %v4855 = vsel %vm4665, %v4737, 0.0
    %v4856 = vsel %vm4666, %v4734, 0.0
    %v4857 = vsel %vm4666, %v4735, 0.0
    %v4858 = vsel %vm4667, %v4732, 0.0
    %v4859 = vsel %vm4667, %v4733, 0.0
    %v4860 = vmax.f32 %v4283, %v4796
    %v4861 = vmax.f32 %v4284, %v4797
    %v4862 = vmax.f32 %v4285, %v4798
    %v4863 = vmax.f32 %v4286, %v4799
    %v4864 = vmax.f32 %v4287, %v4800
    %v4865 = vmax.f32 %v4288, %v4801
    %v4866 = vmax.f32 %v4289, %v4802
    %v4867 = vmax.f32 %v4290, %v4803
    %v4868 = vmax.f32 %v4291, %v4804
    %v4869 = vmax.f32 %v4292, %v4805
    %v4870 = vmax.f32 %v4293, %v4806
    %v4871 = vmax.f32 %v4294, %v4807
    %v4872 = vmax.f32 %v4295, %v4808
    %v4873 = vmax.f32 %v4296, %v4809
    %v4874 = vmax.f32 %v4297, %v4810
    %v4875 = vmax.f32 %v4298, %v4811
    %v4876 = vmax.f32 %v4299, %v4812
    %v4877 = vmax.f32 %v4300, %v4813
    %v4878 = vmax.f32 %v4301, %v4814
    %v4879 = vmax.f32 %v4302, %v4815
    %v4880 = vmax.f32 %v4303, %v4816
    %v4881 = vmax.f32 %v4304, %v4817
    %v4882 = vmax.f32 %v4305, %v4818
    %v4883 = vmax.f32 %v4306, %v4819
    %v4884 = vmax.f32 %v4307, %v4820
    %v4885 = vmax.f32 %v4308, %v4821
    %v4886 = vmax.f32 %v4309, %v4822
    %v4887 = vmax.f32 %v4310, %v4823
    %v4888 = vmax.f32 %v4311, %v4824
    %v4889 = vmax.f32 %v4312, %v4825
    %v4890 = vmax.f32 %v4313, %v4826
    %v4891 = vmax.f32 %v4314, %v4827
    %v4892 = vmax.f32 %v4315, %v4828
    %v4893 = vmax.f32 %v4316, %v4829
    %v4894 = vmax.f32 %v4317, %v4830
    %v4895 = vmax.f32 %v4318, %v4831
    %v4896 = vmax.f32 %v4319, %v4832
    %v4897 = vmax.f32 %v4320, %v4833
    %v4898 = vmax.f32 %v4321, %v4834
    %v4899 = vmax.f32 %v4322, %v4835
    %v4900 = vmax.f32 %v4323, %v4836
    %v4901 = vmax.f32 %v4324, %v4837
    %v4902 = vmax.f32 %v4325, %v4838
    %v4903 = vmax.f32 %v4326, %v4839
    %v4904 = vmax.f32 %v4327, %v4840
    %v4905 = vmax.f32 %v4328, %v4841
    %v4906 = vmax.f32 %v4329, %v4842
    %v4907 = vmax.f32 %v4330, %v4843
    %v4908 = vmax.f32 %v4331, %v4844
    %v4909 = vmax.f32 %v4332, %v4845
    %v4910 = vmax.f32 %v4333, %v4846
    %v4911 = vmax.f32 %v4334, %v4847
    %v4912 = vmax.f32 %v4335, %v4848
    %v4913 = vmax.f32 %v4336, %v4849
    %v4914 = vmax.f32 %v4337, %v4850
    %v4915 = vmax.f32 %v4338, %v4851
    %v4916 = vmax.f32 %v4339, %v4852
    %v4917 = vmax.f32 %v4340, %v4853
    %v4918 = vmax.f32 %v4341, %v4854
    %v4919 = vmax.f32 %v4342, %v4855
    %v4920 = vmax.f32 %v4343, %v4856
    %v4921 = vmax.f32 %v4344, %v4857
    %v4922 = vmax.f32 %v4345, %v4858
    %v4923 = vmax.f32 %v4346, %v4859
    %vm4924 = vcmp.lt.s32.totalorder %v3159, 251
    %vm4925 = vcmp.lt.s32.totalorder %v3160, 251
    %vm4926 = vcmp.lt.s32.totalorder %v3161, 251
    %vm4927 = vcmp.lt.s32.totalorder %v3162, 251
    %vm4928 = vcmp.lt.s32.totalorder %v3163, 251
    %vm4929 = vcmp.lt.s32.totalorder %v3164, 251
    %vm4930 = vcmp.lt.s32.totalorder %v3165, 251
    %vm4931 = vcmp.lt.s32.totalorder %v3166, 251
    %vm4932 = vcmp.lt.s32.totalorder %v3167, 251
    %vm4933 = vcmp.lt.s32.totalorder %v3168, 251
    %vm4934 = vcmp.lt.s32.totalorder %v3169, 251
    %vm4935 = vcmp.lt.s32.totalorder %v3170, 251
    %vm4936 = vcmp.lt.s32.totalorder %v3171, 251
    %vm4937 = vcmp.lt.s32.totalorder %v3172, 251
    %vm4938 = vcmp.lt.s32.totalorder %v3173, 251
    %vm4939 = vcmp.lt.s32.totalorder %v3174, 251
    %vm4940 = vcmp.lt.s32.totalorder %v3175, 251
    %vm4941 = vcmp.lt.s32.totalorder %v3176, 251
    %vm4942 = vcmp.lt.s32.totalorder %v3177, 251
    %vm4943 = vcmp.lt.s32.totalorder %v3178, 251
    %vm4944 = vcmp.lt.s32.totalorder %v3179, 251
    %vm4945 = vcmp.lt.s32.totalorder %v3180, 251
    %vm4946 = vcmp.lt.s32.totalorder %v3181, 251
    %vm4947 = vcmp.lt.s32.totalorder %v3182, 251
    %vm4948 = vcmp.lt.s32.totalorder %v3183, 251
    %vm4949 = vcmp.lt.s32.totalorder %v3184, 251
    %vm4950 = vcmp.lt.s32.totalorder %v3185, 251
    %vm4951 = vcmp.lt.s32.totalorder %v3186, 251
    %vm4952 = vcmp.lt.s32.totalorder %v3187, 251
    %vm4953 = vcmp.lt.s32.totalorder %v3188, 251
    %vm4954 = vcmp.lt.s32.totalorder %v3189, 251
    %vm4955 = vcmp.lt.s32.totalorder %v3190, 251
    %v4956 = vrot.slane %v4572, 5
    %v4957 = vrot.slane %v4573, 5
    %v4958 = vrot.slane %v4574, 5
    %v4959 = vrot.slane %v4575, 5
    %v4960 = vrot.slane %v4576, 5
    %v4961 = vrot.slane %v4577, 5
    %v4962 = vrot.slane %v4578, 5
    %v4963 = vrot.slane %v4579, 5
    %v4964 = vrot.slane %v4580, 5
    %v4965 = vrot.slane %v4581, 5
    %v4966 = vrot.slane %v4582, 5
    %v4967 = vrot.slane %v4583, 5
    %v4968 = vrot.slane %v4584, 5
    %v4969 = vrot.slane %v4585, 5
    %v4970 = vrot.slane %v4586, 5
    %v4971 = vrot.slane %v4587, 5
    %v4972 = vrot.slane %v4588, 5
    %v4973 = vrot.slane %v4589, 5
    %v4974 = vrot.slane %v4590, 5
    %v4975 = vrot.slane %v4591, 5
    %v4976 = vrot.slane %v4592, 5
    %v4977 = vrot.slane %v4593, 5
    %v4978 = vrot.slane %v4594, 5
    %v4979 = vrot.slane %v4595, 5
    %v4980 = vrot.slane %v4596, 5
    %v4981 = vrot.slane %v4597, 5
    %v4982 = vrot.slane %v4598, 5
    %v4983 = vrot.slane %v4599, 5
    %v4984 = vrot.slane %v4600, 5
    %v4985 = vrot.slane %v4601, 5
    %v4986 = vrot.slane %v4602, 5
    %v4987 = vrot.slane %v4603, 5
    %v4988 = vrot.slane %v4604, 5
    %v4989 = vrot.slane %v4605, 5
    %v4990 = vrot.slane %v4606, 5
    %v4991 = vrot.slane %v4607, 5
    %v4992 = vrot.slane %v4608, 5
    %v4993 = vrot.slane %v4609, 5
    %v4994 = vrot.slane %v4610, 5
    %v4995 = vrot.slane %v4611, 5
    %v4996 = vrot.slane %v4612, 5
    %v4997 = vrot.slane %v4613, 5
    %v4998 = vrot.slane %v4614, 5
    %v4999 = vrot.slane %v4615, 5
    %v5000 = vrot.slane %v4616, 5
    %v5001 = vrot.slane %v4617, 5
    %v5002 = vrot.slane %v4618, 5
    %v5003 = vrot.slane %v4619, 5
    %v5004 = vrot.slane %v4620, 5
    %v5005 = vrot.slane %v4621, 5
    %v5006 = vrot.slane %v4622, 5
    %v5007 = vrot.slane %v4623, 5
    %v5008 = vrot.slane %v4624, 5
    %v5009 = vrot.slane %v4625, 5
    %v5010 = vrot.slane %v4626, 5
    %v5011 = vrot.slane %v4627, 5
    %v5012 = vrot.slane %v4628, 5
    %v5013 = vrot.slane %v4629, 5
    %v5014 = vrot.slane %v4630, 5
    %v5015 = vrot.slane %v4631, 5
    %v5016 = vrot.slane %v4632, 5
    %v5017 = vrot.slane %v4633, 5
    %v5018 = vrot.slane %v4634, 5
    %v5019 = vrot.slane %v4635, 5
    %vm5020 = vcmp.lt.s32.totalorder %v3159, 3
    %v5021 = vsel %vm5020, %v5016, %v5018
    %v5022 = vsel %vm5020, %v5017, %v5019
    %v5023 = vsel %vm5020, %v5014, %v5016
    %v5024 = vsel %vm5020, %v5015, %v5017
    %v5025 = vsel %vm5020, %v5012, %v5014
    %v5026 = vsel %vm5020, %v5013, %v5015
    %v5027 = vsel %vm5020, %v5010, %v5012
    %v5028 = vsel %vm5020, %v5011, %v5013
    %v5029 = vsel %vm5020, %v5008, %v5010
    %v5030 = vsel %vm5020, %v5009, %v5011
    %v5031 = vsel %vm5020, %v5006, %v5008
    %v5032 = vsel %vm5020, %v5007, %v5009
    %v5033 = vsel %vm5020, %v5004, %v5006
    %v5034 = vsel %vm5020, %v5005, %v5007
    %v5035 = vsel %vm5020, %v5002, %v5004
    %v5036 = vsel %vm5020, %v5003, %v5005
    %v5037 = vsel %vm5020, %v5000, %v5002
    %v5038 = vsel %vm5020, %v5001, %v5003
    %v5039 = vsel %vm5020, %v4998, %v5000
    %v5040 = vsel %vm5020, %v4999, %v5001
    %v5041 = vsel %vm5020, %v4996, %v4998
    %v5042 = vsel %vm5020, %v4997, %v4999
    %v5043 = vsel %vm5020, %v4994, %v4996
    %v5044 = vsel %vm5020, %v4995, %v4997
    %v5045 = vsel %vm5020, %v4992, %v4994
    %v5046 = vsel %vm5020, %v4993, %v4995
    %v5047 = vsel %vm5020, %v4990, %v4992
    %v5048 = vsel %vm5020, %v4991, %v4993
    %v5049 = vsel %vm5020, %v4988, %v4990
    %v5050 = vsel %vm5020, %v4989, %v4991
    %v5051 = vsel %vm5020, %v4986, %v4988
    %v5052 = vsel %vm5020, %v4987, %v4989
    %v5053 = vsel %vm5020, %v4984, %v4986
    %v5054 = vsel %vm5020, %v4985, %v4987
    %v5055 = vsel %vm5020, %v4982, %v4984
    %v5056 = vsel %vm5020, %v4983, %v4985
    %v5057 = vsel %vm5020, %v4980, %v4982
    %v5058 = vsel %vm5020, %v4981, %v4983
    %v5059 = vsel %vm5020, %v4978, %v4980
    %v5060 = vsel %vm5020, %v4979, %v4981
    %v5061 = vsel %vm5020, %v4976, %v4978
    %v5062 = vsel %vm5020, %v4977, %v4979
    %v5063 = vsel %vm5020, %v4974, %v4976
    %v5064 = vsel %vm5020, %v4975, %v4977
    %v5065 = vsel %vm5020, %v4972, %v4974
    %v5066 = vsel %vm5020, %v4973, %v4975
    %v5067 = vsel %vm5020, %v4970, %v4972
    %v5068 = vsel %vm5020, %v4971, %v4973
    %v5069 = vsel %vm5020, %v4968, %v4970
    %v5070 = vsel %vm5020, %v4969, %v4971
    %v5071 = vsel %vm5020, %v4966, %v4968
    %v5072 = vsel %vm5020, %v4967, %v4969
    %v5073 = vsel %vm5020, %v4964, %v4966
    %v5074 = vsel %vm5020, %v4965, %v4967
    %v5075 = vsel %vm5020, %v4962, %v4964
    %v5076 = vsel %vm5020, %v4963, %v4965
    %v5077 = vsel %vm5020, %v4960, %v4962
    %v5078 = vsel %vm5020, %v4961, %v4963
    %v5079 = vsel %vm5020, %v4958, %v4960
    %v5080 = vsel %vm5020, %v4959, %v4961
    %v5081 = vsel %vm5020, %v4956, %v4958
    %v5082 = vsel %vm5020, %v4957, %v4959
    %v5083 = vsel %vm5020, %v5018, %v4956
    %v5084 = vsel %vm5020, %v5019, %v4957
    %v5085 = vsel %vm4924, %v5081, 0.0
    %v5086 = vsel %vm4924, %v5082, 0.0
    %v5087 = vsel %vm4925, %v5079, 0.0
    %v5088 = vsel %vm4925, %v5080, 0.0
    %v5089 = vsel %vm4926, %v5077, 0.0
    %v5090 = vsel %vm4926, %v5078, 0.0
    %v5091 = vsel %vm4927, %v5075, 0.0
    %v5092 = vsel %vm4927, %v5076, 0.0
    %v5093 = vsel %vm4928, %v5073, 0.0
    %v5094 = vsel %vm4928, %v5074, 0.0
    %v5095 = vsel %vm4929, %v5071, 0.0
    %v5096 = vsel %vm4929, %v5072, 0.0
    %v5097 = vsel %vm4930, %v5069, 0.0
    %v5098 = vsel %vm4930, %v5070, 0.0
    %v5099 = vsel %vm4931, %v5067, 0.0
    %v5100 = vsel %vm4931, %v5068, 0.0
    %v5101 = vsel %vm4932, %v5065, 0.0
    %v5102 = vsel %vm4932, %v5066, 0.0
    %v5103 = vsel %vm4933, %v5063, 0.0
    %v5104 = vsel %vm4933, %v5064, 0.0
    %v5105 = vsel %vm4934, %v5061, 0.0
    %v5106 = vsel %vm4934, %v5062, 0.0
    %v5107 = vsel %vm4935, %v5059, 0.0
    %v5108 = vsel %vm4935, %v5060, 0.0
    %v5109 = vsel %vm4936, %v5057, 0.0
    %v5110 = vsel %vm4936, %v5058, 0.0
    %v5111 = vsel %vm4937, %v5055, 0.0
    %v5112 = vsel %vm4937, %v5056, 0.0
    %v5113 = vsel %vm4938, %v5053, 0.0
    %v5114 = vsel %vm4938, %v5054, 0.0
    %v5115 = vsel %vm4939, %v5051, 0.0
    %v5116 = vsel %vm4939, %v5052, 0.0
    %v5117 = vsel %vm4940, %v5049, 0.0
    %v5118 = vsel %vm4940, %v5050, 0.0
    %v5119 = vsel %vm4941, %v5047, 0.0
    %v5120 = vsel %vm4941, %v5048, 0.0
    %v5121 = vsel %vm4942, %v5045, 0.0
    %v5122 = vsel %vm4942, %v5046, 0.0
    %v5123 = vsel %vm4943, %v5043, 0.0
    %v5124 = vsel %vm4943, %v5044, 0.0
    %v5125 = vsel %vm4944, %v5041, 0.0
    %v5126 = vsel %vm4944, %v5042, 0.0
    %v5127 = vsel %vm4945, %v5039, 0.0
    %v5128 = vsel %vm4945, %v5040, 0.0
    %v5129 = vsel %vm4946, %v5037, 0.0
    %v5130 = vsel %vm4946, %v5038, 0.0
    %v5131 = vsel %vm4947, %v5035, 0.0
    %v5132 = vsel %vm4947, %v5036, 0.0
    %v5133 = vsel %vm4948, %v5033, 0.0
    %v5134 = vsel %vm4948, %v5034, 0.0
    %v5135 = vsel %vm4949, %v5031, 0.0
    %v5136 = vsel %vm4949, %v5032, 0.0
    %v5137 = vsel %vm4950, %v5029, 0.0
    %v5138 = vsel %vm4950, %v5030, 0.0
    %v5139 = vsel %vm4951, %v5027, 0.0
    %v5140 = vsel %vm4951, %v5028, 0.0
    %v5141 = vsel %vm4952, %v5025, 0.0
    %v5142 = vsel %vm4952, %v5026, 0.0
    %v5143 = vsel %vm4953, %v5023, 0.0
    %v5144 = vsel %vm4953, %v5024, 0.0
    %v5145 = vsel %vm4954, %v5021, 0.0
    %v5146 = vsel %vm4954, %v5022, 0.0
    %v5147 = vsel %vm4955, %v5083, 0.0
    %v5148 = vsel %vm4955, %v5084, 0.0
    %v5149 = vmax.f32 %v4572, %v5085
    %v5150 = vmax.f32 %v4573, %v5086
    %v5151 = vmax.f32 %v4574, %v5087
    %v5152 = vmax.f32 %v4575, %v5088
    %v5153 = vmax.f32 %v4576, %v5089
    %v5154 = vmax.f32 %v4577, %v5090
    %v5155 = vmax.f32 %v4578, %v5091
    %v5156 = vmax.f32 %v4579, %v5092
    %v5157 = vmax.f32 %v4580, %v5093
    %v5158 = vmax.f32 %v4581, %v5094
    %v5159 = vmax.f32 %v4582, %v5095
    %v5160 = vmax.f32 %v4583, %v5096
    %v5161 = vmax.f32 %v4584, %v5097
    %v5162 = vmax.f32 %v4585, %v5098
    %v5163 = vmax.f32 %v4586, %v5099
    %v5164 = vmax.f32 %v4587, %v5100
    %v5165 = vmax.f32 %v4588, %v5101
    %v5166 = vmax.f32 %v4589, %v5102
    %v5167 = vmax.f32 %v4590, %v5103
    %v5168 = vmax.f32 %v4591, %v5104
    %v5169 = vmax.f32 %v4592, %v5105
    %v5170 = vmax.f32 %v4593, %v5106
    %v5171 = vmax.f32 %v4594, %v5107
    %v5172 = vmax.f32 %v4595, %v5108
    %v5173 = vmax.f32 %v4596, %v5109
    %v5174 = vmax.f32 %v4597, %v5110
    %v5175 = vmax.f32 %v4598, %v5111
    %v5176 = vmax.f32 %v4599, %v5112
    %v5177 = vmax.f32 %v4600, %v5113
    %v5178 = vmax.f32 %v4601, %v5114
    %v5179 = vmax.f32 %v4602, %v5115
    %v5180 = vmax.f32 %v4603, %v5116
    %v5181 = vmax.f32 %v4604, %v5117
    %v5182 = vmax.f32 %v4605, %v5118
    %v5183 = vmax.f32 %v4606, %v5119
    %v5184 = vmax.f32 %v4607, %v5120
    %v5185 = vmax.f32 %v4608, %v5121
    %v5186 = vmax.f32 %v4609, %v5122
    %v5187 = vmax.f32 %v4610, %v5123
    %v5188 = vmax.f32 %v4611, %v5124
    %v5189 = vmax.f32 %v4612, %v5125
    %v5190 = vmax.f32 %v4613, %v5126
    %v5191 = vmax.f32 %v4614, %v5127
    %v5192 = vmax.f32 %v4615, %v5128
    %v5193 = vmax.f32 %v4616, %v5129
    %v5194 = vmax.f32 %v4617, %v5130
    %v5195 = vmax.f32 %v4618, %v5131
    %v5196 = vmax.f32 %v4619, %v5132
    %v5197 = vmax.f32 %v4620, %v5133
    %v5198 = vmax.f32 %v4621, %v5134
    %v5199 = vmax.f32 %v4622, %v5135
    %v5200 = vmax.f32 %v4623, %v5136
    %v5201 = vmax.f32 %v4624, %v5137
    %v5202 = vmax.f32 %v4625, %v5138
    %v5203 = vmax.f32 %v4626, %v5139
    %v5204 = vmax.f32 %v4627, %v5140
    %v5205 = vmax.f32 %v4628, %v5141
    %v5206 = vmax.f32 %v4629, %v5142
    %v5207 = vmax.f32 %v4630, %v5143
    %v5208 = vmax.f32 %v4631, %v5144
    %v5209 = vmax.f32 %v4632, %v5145
    %v5210 = vmax.f32 %v4633, %v5146
    %v5211 = vmax.f32 %v4634, %v5147
    %v5212 = vmax.f32 %v4635, %v5148
    %vm5213 = vcmp.ge.s32.totalorder %v3159, 5
    %vm5214 = vcmp.ge.s32.totalorder %v3160, 5
    %vm5215 = vcmp.ge.s32.totalorder %v3161, 5
    %vm5216 = vcmp.ge.s32.totalorder %v3162, 5
    %vm5217 = vcmp.ge.s32.totalorder %v3163, 5
    %vm5218 = vcmp.ge.s32.totalorder %v3164, 5
    %vm5219 = vcmp.ge.s32.totalorder %v3165, 5
    %vm5220 = vcmp.ge.s32.totalorder %v3166, 5
    %vm5221 = vcmp.ge.s32.totalorder %v3167, 5
    %vm5222 = vcmp.ge.s32.totalorder %v3168, 5
    %vm5223 = vcmp.ge.s32.totalorder %v3169, 5
    %vm5224 = vcmp.ge.s32.totalorder %v3170, 5
    %vm5225 = vcmp.ge.s32.totalorder %v3171, 5
    %vm5226 = vcmp.ge.s32.totalorder %v3172, 5
    %vm5227 = vcmp.ge.s32.totalorder %v3173, 5
    %vm5228 = vcmp.ge.s32.totalorder %v3174, 5
    %vm5229 = vcmp.ge.s32.totalorder %v3175, 5
    %vm5230 = vcmp.ge.s32.totalorder %v3176, 5
    %vm5231 = vcmp.ge.s32.totalorder %v3177, 5
    %vm5232 = vcmp.ge.s32.totalorder %v3178, 5
    %vm5233 = vcmp.ge.s32.totalorder %v3179, 5
    %vm5234 = vcmp.ge.s32.totalorder %v3180, 5
    %vm5235 = vcmp.ge.s32.totalorder %v3181, 5
    %vm5236 = vcmp.ge.s32.totalorder %v3182, 5
    %vm5237 = vcmp.ge.s32.totalorder %v3183, 5
    %vm5238 = vcmp.ge.s32.totalorder %v3184, 5
    %vm5239 = vcmp.ge.s32.totalorder %v3185, 5
    %vm5240 = vcmp.ge.s32.totalorder %v3186, 5
    %vm5241 = vcmp.ge.s32.totalorder %v3187, 5
    %vm5242 = vcmp.ge.s32.totalorder %v3188, 5
    %vm5243 = vcmp.ge.s32.totalorder %v3189, 5
    %vm5244 = vcmp.ge.s32.totalorder %v3190, 5
    %v5245 = vrot.slane %v4860, 3
    %v5246 = vrot.slane %v4861, 3
    %v5247 = vrot.slane %v4862, 3
    %v5248 = vrot.slane %v4863, 3
    %v5249 = vrot.slane %v4864, 3
    %v5250 = vrot.slane %v4865, 3
    %v5251 = vrot.slane %v4866, 3
    %v5252 = vrot.slane %v4867, 3
    %v5253 = vrot.slane %v4868, 3
    %v5254 = vrot.slane %v4869, 3
    %v5255 = vrot.slane %v4870, 3
    %v5256 = vrot.slane %v4871, 3
    %v5257 = vrot.slane %v4872, 3
    %v5258 = vrot.slane %v4873, 3
    %v5259 = vrot.slane %v4874, 3
    %v5260 = vrot.slane %v4875, 3
    %v5261 = vrot.slane %v4876, 3
    %v5262 = vrot.slane %v4877, 3
    %v5263 = vrot.slane %v4878, 3
    %v5264 = vrot.slane %v4879, 3
    %v5265 = vrot.slane %v4880, 3
    %v5266 = vrot.slane %v4881, 3
    %v5267 = vrot.slane %v4882, 3
    %v5268 = vrot.slane %v4883, 3
    %v5269 = vrot.slane %v4884, 3
    %v5270 = vrot.slane %v4885, 3
    %v5271 = vrot.slane %v4886, 3
    %v5272 = vrot.slane %v4887, 3
    %v5273 = vrot.slane %v4888, 3
    %v5274 = vrot.slane %v4889, 3
    %v5275 = vrot.slane %v4890, 3
    %v5276 = vrot.slane %v4891, 3
    %v5277 = vrot.slane %v4892, 3
    %v5278 = vrot.slane %v4893, 3
    %v5279 = vrot.slane %v4894, 3
    %v5280 = vrot.slane %v4895, 3
    %v5281 = vrot.slane %v4896, 3
    %v5282 = vrot.slane %v4897, 3
    %v5283 = vrot.slane %v4898, 3
    %v5284 = vrot.slane %v4899, 3
    %v5285 = vrot.slane %v4900, 3
    %v5286 = vrot.slane %v4901, 3
    %v5287 = vrot.slane %v4902, 3
    %v5288 = vrot.slane %v4903, 3
    %v5289 = vrot.slane %v4904, 3
    %v5290 = vrot.slane %v4905, 3
    %v5291 = vrot.slane %v4906, 3
    %v5292 = vrot.slane %v4907, 3
    %v5293 = vrot.slane %v4908, 3
    %v5294 = vrot.slane %v4909, 3
    %v5295 = vrot.slane %v4910, 3
    %v5296 = vrot.slane %v4911, 3
    %v5297 = vrot.slane %v4912, 3
    %v5298 = vrot.slane %v4913, 3
    %v5299 = vrot.slane %v4914, 3
    %v5300 = vrot.slane %v4915, 3
    %v5301 = vrot.slane %v4916, 3
    %v5302 = vrot.slane %v4917, 3
    %v5303 = vrot.slane %v4918, 3
    %v5304 = vrot.slane %v4919, 3
    %v5305 = vrot.slane %v4920, 3
    %v5306 = vrot.slane %v4921, 3
    %v5307 = vrot.slane %v4922, 3
    %v5308 = vrot.slane %v4923, 3
    %vm5309 = vcmp.lt.s32.totalorder %v3159, 5
    %v5310 = vsel %vm5309, %v5305, %v5307
    %v5311 = vsel %vm5309, %v5306, %v5308
    %v5312 = vsel %vm5309, %v5303, %v5305
    %v5313 = vsel %vm5309, %v5304, %v5306
    %v5314 = vsel %vm5309, %v5301, %v5303
    %v5315 = vsel %vm5309, %v5302, %v5304
    %v5316 = vsel %vm5309, %v5299, %v5301
    %v5317 = vsel %vm5309, %v5300, %v5302
    %v5318 = vsel %vm5309, %v5297, %v5299
    %v5319 = vsel %vm5309, %v5298, %v5300
    %v5320 = vsel %vm5309, %v5295, %v5297
    %v5321 = vsel %vm5309, %v5296, %v5298
    %v5322 = vsel %vm5309, %v5293, %v5295
    %v5323 = vsel %vm5309, %v5294, %v5296
    %v5324 = vsel %vm5309, %v5291, %v5293
    %v5325 = vsel %vm5309, %v5292, %v5294
    %v5326 = vsel %vm5309, %v5289, %v5291
    %v5327 = vsel %vm5309, %v5290, %v5292
    %v5328 = vsel %vm5309, %v5287, %v5289
    %v5329 = vsel %vm5309, %v5288, %v5290
    %v5330 = vsel %vm5309, %v5285, %v5287
    %v5331 = vsel %vm5309, %v5286, %v5288
    %v5332 = vsel %vm5309, %v5283, %v5285
    %v5333 = vsel %vm5309, %v5284, %v5286
    %v5334 = vsel %vm5309, %v5281, %v5283
    %v5335 = vsel %vm5309, %v5282, %v5284
    %v5336 = vsel %vm5309, %v5279, %v5281
    %v5337 = vsel %vm5309, %v5280, %v5282
    %v5338 = vsel %vm5309, %v5277, %v5279
    %v5339 = vsel %vm5309, %v5278, %v5280
    %v5340 = vsel %vm5309, %v5275, %v5277
    %v5341 = vsel %vm5309, %v5276, %v5278
    %v5342 = vsel %vm5309, %v5273, %v5275
    %v5343 = vsel %vm5309, %v5274, %v5276
    %v5344 = vsel %vm5309, %v5271, %v5273
    %v5345 = vsel %vm5309, %v5272, %v5274
    %v5346 = vsel %vm5309, %v5269, %v5271
    %v5347 = vsel %vm5309, %v5270, %v5272
    %v5348 = vsel %vm5309, %v5267, %v5269
    %v5349 = vsel %vm5309, %v5268, %v5270
    %v5350 = vsel %vm5309, %v5265, %v5267
    %v5351 = vsel %vm5309, %v5266, %v5268
    %v5352 = vsel %vm5309, %v5263, %v5265
    %v5353 = vsel %vm5309, %v5264, %v5266
    %v5354 = vsel %vm5309, %v5261, %v5263
    %v5355 = vsel %vm5309, %v5262, %v5264
    %v5356 = vsel %vm5309, %v5259, %v5261
    %v5357 = vsel %vm5309, %v5260, %v5262
    %v5358 = vsel %vm5309, %v5257, %v5259
    %v5359 = vsel %vm5309, %v5258, %v5260
    %v5360 = vsel %vm5309, %v5255, %v5257
    %v5361 = vsel %vm5309, %v5256, %v5258
    %v5362 = vsel %vm5309, %v5253, %v5255
    %v5363 = vsel %vm5309, %v5254, %v5256
    %v5364 = vsel %vm5309, %v5251, %v5253
    %v5365 = vsel %vm5309, %v5252, %v5254
    %v5366 = vsel %vm5309, %v5249, %v5251
    %v5367 = vsel %vm5309, %v5250, %v5252
    %v5368 = vsel %vm5309, %v5247, %v5249
    %v5369 = vsel %vm5309, %v5248, %v5250
    %v5370 = vsel %vm5309, %v5245, %v5247
    %v5371 = vsel %vm5309, %v5246, %v5248
    %v5372 = vsel %vm5309, %v5307, %v5245
    %v5373 = vsel %vm5309, %v5308, %v5246
    %v5374 = vsel %vm5213, %v5372, 0.0
    %v5375 = vsel %vm5213, %v5373, 0.0
    %v5376 = vsel %vm5214, %v5370, 0.0
    %v5377 = vsel %vm5214, %v5371, 0.0
    %v5378 = vsel %vm5215, %v5368, 0.0
    %v5379 = vsel %vm5215, %v5369, 0.0
    %v5380 = vsel %vm5216, %v5366, 0.0
    %v5381 = vsel %vm5216, %v5367, 0.0
    %v5382 = vsel %vm5217, %v5364, 0.0
    %v5383 = vsel %vm5217, %v5365, 0.0
    %v5384 = vsel %vm5218, %v5362, 0.0
    %v5385 = vsel %vm5218, %v5363, 0.0
    %v5386 = vsel %vm5219, %v5360, 0.0
    %v5387 = vsel %vm5219, %v5361, 0.0
    %v5388 = vsel %vm5220, %v5358, 0.0
    %v5389 = vsel %vm5220, %v5359, 0.0
    %v5390 = vsel %vm5221, %v5356, 0.0
    %v5391 = vsel %vm5221, %v5357, 0.0
    %v5392 = vsel %vm5222, %v5354, 0.0
    %v5393 = vsel %vm5222, %v5355, 0.0
    %v5394 = vsel %vm5223, %v5352, 0.0
    %v5395 = vsel %vm5223, %v5353, 0.0
    %v5396 = vsel %vm5224, %v5350, 0.0
    %v5397 = vsel %vm5224, %v5351, 0.0
    %v5398 = vsel %vm5225, %v5348, 0.0
    %v5399 = vsel %vm5225, %v5349, 0.0
    %v5400 = vsel %vm5226, %v5346, 0.0
    %v5401 = vsel %vm5226, %v5347, 0.0
    %v5402 = vsel %vm5227, %v5344, 0.0
    %v5403 = vsel %vm5227, %v5345, 0.0
    %v5404 = vsel %vm5228, %v5342, 0.0
    %v5405 = vsel %vm5228, %v5343, 0.0
    %v5406 = vsel %vm5229, %v5340, 0.0
    %v5407 = vsel %vm5229, %v5341, 0.0
    %v5408 = vsel %vm5230, %v5338, 0.0
    %v5409 = vsel %vm5230, %v5339, 0.0
    %v5410 = vsel %vm5231, %v5336, 0.0
    %v5411 = vsel %vm5231, %v5337, 0.0
    %v5412 = vsel %vm5232, %v5334, 0.0
    %v5413 = vsel %vm5232, %v5335, 0.0
    %v5414 = vsel %vm5233, %v5332, 0.0
    %v5415 = vsel %vm5233, %v5333, 0.0
    %v5416 = vsel %vm5234, %v5330, 0.0
    %v5417 = vsel %vm5234, %v5331, 0.0
    %v5418 = vsel %vm5235, %v5328, 0.0
    %v5419 = vsel %vm5235, %v5329, 0.0
    %v5420 = vsel %vm5236, %v5326, 0.0
    %v5421 = vsel %vm5236, %v5327, 0.0
    %v5422 = vsel %vm5237, %v5324, 0.0
    %v5423 = vsel %vm5237, %v5325, 0.0
    %v5424 = vsel %vm5238, %v5322, 0.0
    %v5425 = vsel %vm5238, %v5323, 0.0
    %v5426 = vsel %vm5239, %v5320, 0.0
    %v5427 = vsel %vm5239, %v5321, 0.0
    %v5428 = vsel %vm5240, %v5318, 0.0
    %v5429 = vsel %vm5240, %v5319, 0.0
    %v5430 = vsel %vm5241, %v5316, 0.0
    %v5431 = vsel %vm5241, %v5317, 0.0
    %v5432 = vsel %vm5242, %v5314, 0.0
    %v5433 = vsel %vm5242, %v5315, 0.0
    %v5434 = vsel %vm5243, %v5312, 0.0
    %v5435 = vsel %vm5243, %v5313, 0.0
    %v5436 = vsel %vm5244, %v5310, 0.0
    %v5437 = vsel %vm5244, %v5311, 0.0
    %v5438 = vmax.f32 %v4860, %v5374
    %v5439 = vmax.f32 %v4861, %v5375
    %v5440 = vmax.f32 %v4862, %v5376
    %v5441 = vmax.f32 %v4863, %v5377
    %v5442 = vmax.f32 %v4864, %v5378
    %v5443 = vmax.f32 %v4865, %v5379
    %v5444 = vmax.f32 %v4866, %v5380
    %v5445 = vmax.f32 %v4867, %v5381
    %v5446 = vmax.f32 %v4868, %v5382
    %v5447 = vmax.f32 %v4869, %v5383
    %v5448 = vmax.f32 %v4870, %v5384
    %v5449 = vmax.f32 %v4871, %v5385
    %v5450 = vmax.f32 %v4872, %v5386
    %v5451 = vmax.f32 %v4873, %v5387
    %v5452 = vmax.f32 %v4874, %v5388
    %v5453 = vmax.f32 %v4875, %v5389
    %v5454 = vmax.f32 %v4876, %v5390
    %v5455 = vmax.f32 %v4877, %v5391
    %v5456 = vmax.f32 %v4878, %v5392
    %v5457 = vmax.f32 %v4879, %v5393
    %v5458 = vmax.f32 %v4880, %v5394
    %v5459 = vmax.f32 %v4881, %v5395
    %v5460 = vmax.f32 %v4882, %v5396
    %v5461 = vmax.f32 %v4883, %v5397
    %v5462 = vmax.f32 %v4884, %v5398
    %v5463 = vmax.f32 %v4885, %v5399
    %v5464 = vmax.f32 %v4886, %v5400
    %v5465 = vmax.f32 %v4887, %v5401
    %v5466 = vmax.f32 %v4888, %v5402
    %v5467 = vmax.f32 %v4889, %v5403
    %v5468 = vmax.f32 %v4890, %v5404
    %v5469 = vmax.f32 %v4891, %v5405
    %v5470 = vmax.f32 %v4892, %v5406
    %v5471 = vmax.f32 %v4893, %v5407
    %v5472 = vmax.f32 %v4894, %v5408
    %v5473 = vmax.f32 %v4895, %v5409
    %v5474 = vmax.f32 %v4896, %v5410
    %v5475 = vmax.f32 %v4897, %v5411
    %v5476 = vmax.f32 %v4898, %v5412
    %v5477 = vmax.f32 %v4899, %v5413
    %v5478 = vmax.f32 %v4900, %v5414
    %v5479 = vmax.f32 %v4901, %v5415
    %v5480 = vmax.f32 %v4902, %v5416
    %v5481 = vmax.f32 %v4903, %v5417
    %v5482 = vmax.f32 %v4904, %v5418
    %v5483 = vmax.f32 %v4905, %v5419
    %v5484 = vmax.f32 %v4906, %v5420
    %v5485 = vmax.f32 %v4907, %v5421
    %v5486 = vmax.f32 %v4908, %v5422
    %v5487 = vmax.f32 %v4909, %v5423
    %v5488 = vmax.f32 %v4910, %v5424
    %v5489 = vmax.f32 %v4911, %v5425
    %v5490 = vmax.f32 %v4912, %v5426
    %v5491 = vmax.f32 %v4913, %v5427
    %v5492 = vmax.f32 %v4914, %v5428
    %v5493 = vmax.f32 %v4915, %v5429
    %v5494 = vmax.f32 %v4916, %v5430
    %v5495 = vmax.f32 %v4917, %v5431
    %v5496 = vmax.f32 %v4918, %v5432
    %v5497 = vmax.f32 %v4919, %v5433
    %v5498 = vmax.f32 %v4920, %v5434
    %v5499 = vmax.f32 %v4921, %v5435
    %v5500 = vmax.f32 %v4922, %v5436
    %v5501 = vmax.f32 %v4923, %v5437
    %v5502 = vmax.f32 %v5149, %v5438
    %v5503 = vmax.f32 %v5150, %v5439
    %v5504 = vmax.f32 %v5151, %v5440
    %v5505 = vmax.f32 %v5152, %v5441
    %v5506 = vmax.f32 %v5153, %v5442
    %v5507 = vmax.f32 %v5154, %v5443
    %v5508 = vmax.f32 %v5155, %v5444
    %v5509 = vmax.f32 %v5156, %v5445
    %v5510 = vmax.f32 %v5157, %v5446
    %v5511 = vmax.f32 %v5158, %v5447
    %v5512 = vmax.f32 %v5159, %v5448
    %v5513 = vmax.f32 %v5160, %v5449
    %v5514 = vmax.f32 %v5161, %v5450
    %v5515 = vmax.f32 %v5162, %v5451
    %v5516 = vmax.f32 %v5163, %v5452
    %v5517 = vmax.f32 %v5164, %v5453
    %v5518 = vmax.f32 %v5165, %v5454
    %v5519 = vmax.f32 %v5166, %v5455
    %v5520 = vmax.f32 %v5167, %v5456
    %v5521 = vmax.f32 %v5168, %v5457
    %v5522 = vmax.f32 %v5169, %v5458
    %v5523 = vmax.f32 %v5170, %v5459
    %v5524 = vmax.f32 %v5171, %v5460
    %v5525 = vmax.f32 %v5172, %v5461
    %v5526 = vmax.f32 %v5173, %v5462
    %v5527 = vmax.f32 %v5174, %v5463
    %v5528 = vmax.f32 %v5175, %v5464
    %v5529 = vmax.f32 %v5176, %v5465
    %v5530 = vmax.f32 %v5177, %v5466
    %v5531 = vmax.f32 %v5178, %v5467
    %v5532 = vmax.f32 %v5179, %v5468
    %v5533 = vmax.f32 %v5180, %v5469
    %v5534 = vmax.f32 %v5181, %v5470
    %v5535 = vmax.f32 %v5182, %v5471
    %v5536 = vmax.f32 %v5183, %v5472
    %v5537 = vmax.f32 %v5184, %v5473
    %v5538 = vmax.f32 %v5185, %v5474
    %v5539 = vmax.f32 %v5186, %v5475
    %v5540 = vmax.f32 %v5187, %v5476
    %v5541 = vmax.f32 %v5188, %v5477
    %v5542 = vmax.f32 %v5189, %v5478
    %v5543 = vmax.f32 %v5190, %v5479
    %v5544 = vmax.f32 %v5191, %v5480
    %v5545 = vmax.f32 %v5192, %v5481
    %v5546 = vmax.f32 %v5193, %v5482
    %v5547 = vmax.f32 %v5194, %v5483
    %v5548 = vmax.f32 %v5195, %v5484
    %v5549 = vmax.f32 %v5196, %v5485
    %v5550 = vmax.f32 %v5197, %v5486
    %v5551 = vmax.f32 %v5198, %v5487
    %v5552 = vmax.f32 %v5199, %v5488
    %v5553 = vmax.f32 %v5200, %v5489
    %v5554 = vmax.f32 %v5201, %v5490
    %v5555 = vmax.f32 %v5202, %v5491
    %v5556 = vmax.f32 %v5203, %v5492
    %v5557 = vmax.f32 %v5204, %v5493
    %v5558 = vmax.f32 %v5205, %v5494
    %v5559 = vmax.f32 %v5206, %v5495
    %v5560 = vmax.f32 %v5207, %v5496
    %v5561 = vmax.f32 %v5208, %v5497
    %v5562 = vmax.f32 %v5209, %v5498
    %v5563 = vmax.f32 %v5210, %v5499
    %v5564 = vmax.f32 %v5211, %v5500
    %v5565 = vmax.f32 %v5212, %v5501
    %v5566 = vpack.c.bf16 %v5504, %v5502
    %v5567 = vpack.c.bf16 %v5505, %v5503
    %v5568 = vpack.c.bf16 %v5508, %v5506
    %v5569 = vpack.c.bf16 %v5509, %v5507
    %v5570 = vpack.c.bf16 %v5512, %v5510
    %v5571 = vpack.c.bf16 %v5513, %v5511
    %v5572 = vpack.c.bf16 %v5516, %v5514
    %v5573 = vpack.c.bf16 %v5517, %v5515
    %v5574 = vpack.c.bf16 %v5520, %v5518
    %v5575 = vpack.c.bf16 %v5521, %v5519
    %v5576 = vpack.c.bf16 %v5524, %v5522
    %v5577 = vpack.c.bf16 %v5525, %v5523
    %v5578 = vpack.c.bf16 %v5528, %v5526
    %v5579 = vpack.c.bf16 %v5529, %v5527
    %v5580 = vpack.c.bf16 %v5532, %v5530
    %v5581 = vpack.c.bf16 %v5533, %v5531
    %v5582 = vpack.c.bf16 %v5536, %v5534
    %v5583 = vpack.c.bf16 %v5537, %v5535
    %v5584 = vpack.c.bf16 %v5540, %v5538
    %v5585 = vpack.c.bf16 %v5541, %v5539
    %v5586 = vpack.c.bf16 %v5544, %v5542
    %v5587 = vpack.c.bf16 %v5545, %v5543
    %v5588 = vpack.c.bf16 %v5548, %v5546
    %v5589 = vpack.c.bf16 %v5549, %v5547
    %v5590 = vpack.c.bf16 %v5552, %v5550
    %v5591 = vpack.c.bf16 %v5553, %v5551
    %v5592 = vpack.c.bf16 %v5556, %v5554
    %v5593 = vpack.c.bf16 %v5557, %v5555
    %v5594 = vpack.c.bf16 %v5560, %v5558
    %v5595 = vpack.c.bf16 %v5561, %v5559
    %v5596 = vpack.c.bf16 %v5564, %v5562
    %v5597 = vpack.c.bf16 %v5565, %v5563
    %v5598 = vld [vmem:[#allocation6] sm:$0xff]
    %v5599 = vld [vmem:[#allocation6 + $0x8] sm:$0xff]
    %v5600 = vld [vmem:[#allocation6 + $0x10] sm:$0xff]
    %v5601 = vld [vmem:[#allocation6 + $0x18] sm:$0xff]
    %v5602 = vld [vmem:[#allocation6 + $0x20] sm:$0xff]
    %v5603 = vld [vmem:[#allocation6 + $0x28] sm:$0xff]
    %v5604 = vld [vmem:[#allocation6 + $0x30] sm:$0xff]
    %v5605 = vld [vmem:[#allocation6 + $0x38] sm:$0xff]
    %v5606 = vld [vmem:[#allocation6 + $0x40] sm:$0xff]
    %v5607 = vld [vmem:[#allocation6 + $0x48] sm:$0xff]
    %v5608 = vld [vmem:[#allocation6 + $0x50] sm:$0xff]
    %v5609 = vld [vmem:[#allocation6 + $0x58] sm:$0xff]
    %v5610 = vld [vmem:[#allocation6 + $0x60] sm:$0xff]
    %v5611 = vld [vmem:[#allocation6 + $0x68] sm:$0xff]
    %v5612 = vld [vmem:[#allocation6 + $0x70] sm:$0xff]
    %v5613 = vld [vmem:[#allocation6 + $0x78] sm:$0xff]
    %v5614 = vld [vmem:[#allocation6 + $0x80] sm:$0xff]
    %v5615 = vld [vmem:[#allocation6 + $0x88] sm:$0xff]
    %v5616 = vld [vmem:[#allocation6 + $0x90] sm:$0xff]
    %v5617 = vld [vmem:[#allocation6 + $0x98] sm:$0xff]
    %v5618 = vld [vmem:[#allocation6 + $0xa0] sm:$0xff]
    %v5619 = vld [vmem:[#allocation6 + $0xa8] sm:$0xff]
    %v5620 = vld [vmem:[#allocation6 + $0xb0] sm:$0xff]
    %v5621 = vld [vmem:[#allocation6 + $0xb8] sm:$0xff]
    %v5622 = vld [vmem:[#allocation6 + $0xc0] sm:$0xff]
    %v5623 = vld [vmem:[#allocation6 + $0xc8] sm:$0xff]
    %v5624 = vld [vmem:[#allocation6 + $0xd0] sm:$0xff]
    %v5625 = vld [vmem:[#allocation6 + $0xd8] sm:$0xff]
    %v5626 = vld [vmem:[#allocation6 + $0xe0] sm:$0xff]
    %v5627 = vld [vmem:[#allocation6 + $0xe8] sm:$0xff]
    %v5628 = vld [vmem:[#allocation6 + $0xf0] sm:$0xff]
    %v5629 = vld [vmem:[#allocation6 + $0xf8] sm:$0xff]
    %v5662 = vunpack.c.l.b16 %v5598
    %v5663 = vunpack.c.h.b16 %v5598
    %v5664 = vunpack.c.l.b16 %v5599
    %v5665 = vunpack.c.h.b16 %v5599
    %v5666 = vunpack.c.l.b16 %v5600
    %v5667 = vunpack.c.h.b16 %v5600
    %v5668 = vunpack.c.l.b16 %v5601
    %v5669 = vunpack.c.h.b16 %v5601
    %v5670 = vunpack.c.l.b16 %v5602
    %v5671 = vunpack.c.h.b16 %v5602
    %v5672 = vunpack.c.l.b16 %v5603
    %v5673 = vunpack.c.h.b16 %v5603
    %v5674 = vunpack.c.l.b16 %v5604
    %v5675 = vunpack.c.h.b16 %v5604
    %v5676 = vunpack.c.l.b16 %v5605
    %v5677 = vunpack.c.h.b16 %v5605
    %v5678 = vunpack.c.l.b16 %v5606
    %v5679 = vunpack.c.h.b16 %v5606
    %v5680 = vunpack.c.l.b16 %v5607
    %v5681 = vunpack.c.h.b16 %v5607
    %v5682 = vunpack.c.l.b16 %v5608
    %v5683 = vunpack.c.h.b16 %v5608
    %v5684 = vunpack.c.l.b16 %v5609
    %v5685 = vunpack.c.h.b16 %v5609
    %v5686 = vunpack.c.l.b16 %v5610
    %v5687 = vunpack.c.h.b16 %v5610
    %v5688 = vunpack.c.l.b16 %v5611
    %v5689 = vunpack.c.h.b16 %v5611
    %v5690 = vunpack.c.l.b16 %v5612
    %v5691 = vunpack.c.h.b16 %v5612
    %v5692 = vunpack.c.l.b16 %v5613
    %v5693 = vunpack.c.h.b16 %v5613
    %v5694 = vunpack.c.l.b16 %v5614
    %v5695 = vunpack.c.h.b16 %v5614
    %v5696 = vunpack.c.l.b16 %v5615
    %v5697 = vunpack.c.h.b16 %v5615
    %v5698 = vunpack.c.l.b16 %v5616
    %v5699 = vunpack.c.h.b16 %v5616
    %v5700 = vunpack.c.l.b16 %v5617
    %v5701 = vunpack.c.h.b16 %v5617
    %v5702 = vunpack.c.l.b16 %v5618
    %v5703 = vunpack.c.h.b16 %v5618
    %v5704 = vunpack.c.l.b16 %v5619
    %v5705 = vunpack.c.h.b16 %v5619
    %v5706 = vunpack.c.l.b16 %v5620
    %v5707 = vunpack.c.h.b16 %v5620
    %v5708 = vunpack.c.l.b16 %v5621
    %v5709 = vunpack.c.h.b16 %v5621
    %v5710 = vunpack.c.l.b16 %v5622
    %v5711 = vunpack.c.h.b16 %v5622
    %v5712 = vunpack.c.l.b16 %v5623
    %v5713 = vunpack.c.h.b16 %v5623
    %v5714 = vunpack.c.l.b16 %v5624
    %v5715 = vunpack.c.h.b16 %v5624
    %v5716 = vunpack.c.l.b16 %v5625
    %v5717 = vunpack.c.h.b16 %v5625
    %v5718 = vunpack.c.l.b16 %v5626
    %v5719 = vunpack.c.h.b16 %v5626
    %v5720 = vunpack.c.l.b16 %v5627
    %v5721 = vunpack.c.h.b16 %v5627
    %v5722 = vunpack.c.l.b16 %v5628
    %v5723 = vunpack.c.h.b16 %v5628
    %v5724 = vunpack.c.l.b16 %v5629
    %v5725 = vunpack.c.h.b16 %v5629
    %v5726 = vpack.c.b16 %v5664, %v5662
    %v5727 = vpack.c.b16 %v5665, %v5663
    %v5728 = vpack.c.b16 %v5668, %v5666
    %v5729 = vpack.c.b16 %v5669, %v5667
    %v5730 = vpack.c.b16 %v5672, %v5670
    %v5731 = vpack.c.b16 %v5673, %v5671
    %v5732 = vpack.c.b16 %v5676, %v5674
    %v5733 = vpack.c.b16 %v5677, %v5675
    %v5734 = vpack.c.b16 %v5680, %v5678
    %v5735 = vpack.c.b16 %v5681, %v5679
    %v5736 = vpack.c.b16 %v5684, %v5682
    %v5737 = vpack.c.b16 %v5685, %v5683
    %v5738 = vpack.c.b16 %v5688, %v5686
    %v5739 = vpack.c.b16 %v5689, %v5687
    %v5740 = vpack.c.b16 %v5692, %v5690
    %v5741 = vpack.c.b16 %v5693, %v5691
    %v5742 = vpack.c.b16 %v5696, %v5694
    %v5743 = vpack.c.b16 %v5697, %v5695
    %v5744 = vpack.c.b16 %v5700, %v5698
    %v5745 = vpack.c.b16 %v5701, %v5699
    %v5746 = vpack.c.b16 %v5704, %v5702
    %v5747 = vpack.c.b16 %v5705, %v5703
    %v5748 = vpack.c.b16 %v5708, %v5706
    %v5749 = vpack.c.b16 %v5709, %v5707
    %v5750 = vpack.c.b16 %v5712, %v5710
    %v5751 = vpack.c.b16 %v5713, %v5711
    %v5752 = vpack.c.b16 %v5716, %v5714
    %v5753 = vpack.c.b16 %v5717, %v5715
    %v5754 = vpack.c.b16 %v5720, %v5718
    %v5755 = vpack.c.b16 %v5721, %v5719
    %v5756 = vpack.c.b16 %v5724, %v5722
    %v5757 = vpack.c.b16 %v5725, %v5723
    %5790 = vmatprep.subr.bf16.mxu0 %v5741
    %5791 = vmatpush1.bf16.msra.mxu0 %v5740
    %5792 = vmatprep.subr.bf16.mxu0 %v5739
    %5793 = vmatpush1.bf16.msra.mxu0 %v5738
    %5794 = vmatprep.subr.bf16.mxu0 %v5737
    %5795 = vmatpush1.bf16.msra.mxu0 %v5736
    %5796 = vmatprep.subr.bf16.mxu0 %v5735
    %5797 = vmatpush1.bf16.msra.mxu0 %v5734
    %5798 = vmatprep.subr.bf16.mxu0 %v5733
    %5799 = vmatpush1.bf16.msra.mxu0 %v5732
    %5800 = vmatprep.subr.bf16.mxu0 %v5731
    %5801 = vmatpush1.bf16.msra.mxu0 %v5730
    %5802 = vmatprep.subr.bf16.mxu0 %v5729
    %5803 = vmatpush1.bf16.msra.mxu0 %v5728
    %5804 = vmatprep.subr.bf16.mxu0 %v5727
    %5805 = vmatpush1.bf16.msra.mxu0 %v5726
    %5806 = vmatprep.subr.bf16.mxu0 %v5757
    %5807 = vmatpush2.bf16.msra.mxu0 %v5756
    %5808 = vmatprep.subr.bf16.mxu0 %v5755
    %5809 = vmatpush2.bf16.msra.mxu0 %v5754
    %5810 = vmatprep.subr.bf16.mxu0 %v5753
    %5811 = vmatpush2.bf16.msra.mxu0 %v5752
    %5812 = vmatprep.subr.bf16.mxu0 %v5751
    %5813 = vmatpush2.bf16.msra.mxu0 %v5750
    %5814 = vmatprep.subr.bf16.mxu0 %v5749
    %5815 = vmatpush2.bf16.msra.mxu0 %v5748
    %5816 = vmatprep.subr.bf16.mxu0 %v5747
    %5817 = vmatpush2.bf16.msra.mxu0 %v5746
    %5818 = vmatprep.subr.bf16.mxu0 %v5745
    %5819 = vmatpush2.bf16.msra.mxu0 %v5744
    %5820 = vmatprep.subr.bf16.mxu0 %v5743
    %5821 = vmatpush2.bf16.msra.mxu0 %v5742
    %5822 = vmatprep.mubr.bf16.mxu0 %v5567
    %5823 = vmatmul.mubr.bf16.gmra.mxu0 %v5566
    %v5824 = vpop.f32.mrf.mxu0
    %v5825 = vadd.f32 0.0, %v5824
    %v5826 = vpop.f32.mrf.mxu0
    %v5827 = vadd.f32 0.0, %v5826
    %v5828 = vpop.f32.mrf.mxu0
    %v5829 = vadd.f32 0.0, %v5828
    %v5830 = vpop.f32.mrf.mxu0
    %v5831 = vadd.f32 0.0, %v5830
    %5832 = vmatprep.mubr.bf16.mxu0 %v5569
    %5833 = vmatmul.mubr.bf16.gmra.mxu0 %v5568
    %v5834 = vpop.f32.mrf.mxu0
    %v5835 = vadd.f32 0.0, %v5834
    %v5836 = vpop.f32.mrf.mxu0
    %v5837 = vadd.f32 0.0, %v5836
    %v5838 = vpop.f32.mrf.mxu0
    %v5839 = vadd.f32 0.0, %v5838
    %v5840 = vpop.f32.mrf.mxu0
    %v5841 = vadd.f32 0.0, %v5840
    %5842 = vmatprep.mubr.bf16.mxu0 %v5571
    %5843 = vmatmul.mubr.bf16.gmra.mxu0 %v5570
    %v5844 = vpop.f32.mrf.mxu0
    %v5845 = vadd.f32 0.0, %v5844
    %v5846 = vpop.f32.mrf.mxu0
    %v5847 = vadd.f32 0.0, %v5846
    %v5848 = vpop.f32.mrf.mxu0
    %v5849 = vadd.f32 0.0, %v5848
    %v5850 = vpop.f32.mrf.mxu0
    %v5851 = vadd.f32 0.0, %v5850
    %5852 = vmatprep.mubr.bf16.mxu0 %v5573
    %5853 = vmatmul.mubr.bf16.gmra.mxu0 %v5572
    %v5854 = vpop.f32.mrf.mxu0
    %v5855 = vadd.f32 0.0, %v5854
    %v5856 = vpop.f32.mrf.mxu0
    %v5857 = vadd.f32 0.0, %v5856
    %v5858 = vpop.f32.mrf.mxu0
    %v5859 = vadd.f32 0.0, %v5858
    %v5860 = vpop.f32.mrf.mxu0
    %v5861 = vadd.f32 0.0, %v5860
    %5862 = vmatprep.mubr.bf16.mxu0 %v5575
    %5863 = vmatmul.mubr.bf16.gmra.mxu0 %v5574
    %v5864 = vpop.f32.mrf.mxu0
    %v5865 = vadd.f32 0.0, %v5864
    %v5866 = vpop.f32.mrf.mxu0
    %v5867 = vadd.f32 0.0, %v5866
    %v5868 = vpop.f32.mrf.mxu0
    %v5869 = vadd.f32 0.0, %v5868
    %v5870 = vpop.f32.mrf.mxu0
    %v5871 = vadd.f32 0.0, %v5870
    %5872 = vmatprep.mubr.bf16.mxu0 %v5577
    %5873 = vmatmul.mubr.bf16.gmra.mxu0 %v5576
    %v5874 = vpop.f32.mrf.mxu0
    %v5875 = vadd.f32 0.0, %v5874
    %v5876 = vpop.f32.mrf.mxu0
    %v5877 = vadd.f32 0.0, %v5876
    %v5878 = vpop.f32.mrf.mxu0
    %v5879 = vadd.f32 0.0, %v5878
    %v5880 = vpop.f32.mrf.mxu0
    %v5881 = vadd.f32 0.0, %v5880
    %5882 = vmatprep.mubr.bf16.mxu0 %v5579
    %5883 = vmatmul.mubr.bf16.gmra.mxu0 %v5578
    %v5884 = vpop.f32.mrf.mxu0
    %v5885 = vadd.f32 0.0, %v5884
    %v5886 = vpop.f32.mrf.mxu0
    %v5887 = vadd.f32 0.0, %v5886
    %v5888 = vpop.f32.mrf.mxu0
    %v5889 = vadd.f32 0.0, %v5888
    %v5890 = vpop.f32.mrf.mxu0
    %v5891 = vadd.f32 0.0, %v5890
    %5892 = vmatprep.mubr.bf16.mxu0 %v5581
    %5893 = vmatmul.mubr.bf16.gmra.mxu0 %v5580
    %v5894 = vpop.f32.mrf.mxu0
    %v5895 = vadd.f32 0.0, %v5894
    %v5896 = vpop.f32.mrf.mxu0
    %v5897 = vadd.f32 0.0, %v5896
    %v5898 = vpop.f32.mrf.mxu0
    %v5899 = vadd.f32 0.0, %v5898
    %v5900 = vpop.f32.mrf.mxu0
    %v5901 = vadd.f32 0.0, %v5900
    %5902 = vmatprep.mubr.bf16.mxu0 %v5583
    %5903 = vmatmul.mubr.bf16.gmra.mxu0 %v5582
    %v5904 = vpop.f32.mrf.mxu0
    %v5905 = vadd.f32 0.0, %v5904
    %v5906 = vpop.f32.mrf.mxu0
    %v5907 = vadd.f32 0.0, %v5906
    %v5908 = vpop.f32.mrf.mxu0
    %v5909 = vadd.f32 0.0, %v5908
    %v5910 = vpop.f32.mrf.mxu0
    %v5911 = vadd.f32 0.0, %v5910
    %5912 = vmatprep.mubr.bf16.mxu0 %v5585
    %5913 = vmatmul.mubr.bf16.gmra.mxu0 %v5584
    %v5914 = vpop.f32.mrf.mxu0
    %v5915 = vadd.f32 0.0, %v5914
    %v5916 = vpop.f32.mrf.mxu0
    %v5917 = vadd.f32 0.0, %v5916
    %v5918 = vpop.f32.mrf.mxu0
    %v5919 = vadd.f32 0.0, %v5918
    %v5920 = vpop.f32.mrf.mxu0
    %v5921 = vadd.f32 0.0, %v5920
    %5922 = vmatprep.mubr.bf16.mxu0 %v5587
    %5923 = vmatmul.mubr.bf16.gmra.mxu0 %v5586
    %v5924 = vpop.f32.mrf.mxu0
    %v5925 = vadd.f32 0.0, %v5924
    %v5926 = vpop.f32.mrf.mxu0
    %v5927 = vadd.f32 0.0, %v5926
    %v5928 = vpop.f32.mrf.mxu0
    %v5929 = vadd.f32 0.0, %v5928
    %v5930 = vpop.f32.mrf.mxu0
    %v5931 = vadd.f32 0.0, %v5930
    %5932 = vmatprep.mubr.bf16.mxu0 %v5589
    %5933 = vmatmul.mubr.bf16.gmra.mxu0 %v5588
    %v5934 = vpop.f32.mrf.mxu0
    %v5935 = vadd.f32 0.0, %v5934
    %v5936 = vpop.f32.mrf.mxu0
    %v5937 = vadd.f32 0.0, %v5936
    %v5938 = vpop.f32.mrf.mxu0
    %v5939 = vadd.f32 0.0, %v5938
    %v5940 = vpop.f32.mrf.mxu0
    %v5941 = vadd.f32 0.0, %v5940
    %5942 = vmatprep.mubr.bf16.mxu0 %v5591
    %5943 = vmatmul.mubr.bf16.gmra.mxu0 %v5590
    %v5944 = vpop.f32.mrf.mxu0
    %v5945 = vadd.f32 0.0, %v5944
    %v5946 = vpop.f32.mrf.mxu0
    %v5947 = vadd.f32 0.0, %v5946
    %v5948 = vpop.f32.mrf.mxu0
    %v5949 = vadd.f32 0.0, %v5948
    %v5950 = vpop.f32.mrf.mxu0
    %v5951 = vadd.f32 0.0, %v5950
    %5952 = vmatprep.mubr.bf16.mxu0 %v5593
    %5953 = vmatmul.mubr.bf16.gmra.mxu0 %v5592
    %v5954 = vpop.f32.mrf.mxu0
    %v5955 = vadd.f32 0.0, %v5954
    %v5956 = vpop.f32.mrf.mxu0
    %v5957 = vadd.f32 0.0, %v5956
    %v5958 = vpop.f32.mrf.mxu0
    %v5959 = vadd.f32 0.0, %v5958
    %v5960 = vpop.f32.mrf.mxu0
    %v5961 = vadd.f32 0.0, %v5960
    %5962 = vmatprep.mubr.bf16.mxu0 %v5595
    %5963 = vmatmul.mubr.bf16.gmra.mxu0 %v5594
    %v5964 = vpop.f32.mrf.mxu0
    %v5965 = vadd.f32 0.0, %v5964
    %v5966 = vpop.f32.mrf.mxu0
    %v5967 = vadd.f32 0.0, %v5966
    %v5968 = vpop.f32.mrf.mxu0
    %v5969 = vadd.f32 0.0, %v5968
    %v5970 = vpop.f32.mrf.mxu0
    %v5971 = vadd.f32 0.0, %v5970
    %5972 = vmatprep.mubr.bf16.mxu0 %v5597
    %5973 = vmatmul.mubr.bf16.gmra.mxu0 %v5596
    %v5974 = vpop.f32.mrf.mxu0
    %v5975 = vadd.f32 0.0, %v5974
    %v5976 = vpop.f32.mrf.mxu0
    %v5977 = vadd.f32 0.0, %v5976
    %v5978 = vpop.f32.mrf.mxu0
    %v5979 = vadd.f32 0.0, %v5978
    %v5980 = vpop.f32.mrf.mxu0
    %v5981 = vadd.f32 0.0, %v5980
    %5982 = vdwg.mxu0
    %v5983 = vld [vmem:[#allocation8] sm:$0xff]
    %v5984 = vld [vmem:[#allocation8 + $0x8] sm:$0xff]
    %v5985 = vld [vmem:[#allocation8 + $0x10] sm:$0xff]
    %v5986 = vld [vmem:[#allocation8 + $0x18] sm:$0xff]
    %v5987 = vld [vmem:[#allocation8 + $0x20] sm:$0xff]
    %v5988 = vld [vmem:[#allocation8 + $0x28] sm:$0xff]
    %v5989 = vld [vmem:[#allocation8 + $0x30] sm:$0xff]
    %v5990 = vld [vmem:[#allocation8 + $0x38] sm:$0xff]
    %v5991 = vld [vmem:[#allocation8 + $0x40] sm:$0xff]
    %v5992 = vld [vmem:[#allocation8 + $0x48] sm:$0xff]
    %v5993 = vld [vmem:[#allocation8 + $0x50] sm:$0xff]
    %v5994 = vld [vmem:[#allocation8 + $0x58] sm:$0xff]
    %v5995 = vld [vmem:[#allocation8 + $0x60] sm:$0xff]
    %v5996 = vld [vmem:[#allocation8 + $0x68] sm:$0xff]
    %v5997 = vld [vmem:[#allocation8 + $0x70] sm:$0xff]
    %v5998 = vld [vmem:[#allocation8 + $0x78] sm:$0xff]
    %v5999 = vld [vmem:[#allocation8 + $0x80] sm:$0xff]
    %v6000 = vld [vmem:[#allocation8 + $0x88] sm:$0xff]
    %v6001 = vld [vmem:[#allocation8 + $0x90] sm:$0xff]
    %v6002 = vld [vmem:[#allocation8 + $0x98] sm:$0xff]
    %v6003 = vld [vmem:[#allocation8 + $0xa0] sm:$0xff]
    %v6004 = vld [vmem:[#allocation8 + $0xa8] sm:$0xff]
    %v6005 = vld [vmem:[#allocation8 + $0xb0] sm:$0xff]
    %v6006 = vld [vmem:[#allocation8 + $0xb8] sm:$0xff]
    %v6007 = vld [vmem:[#allocation8 + $0xc0] sm:$0xff]
    %v6008 = vld [vmem:[#allocation8 + $0xc8] sm:$0xff]
    %v6009 = vld [vmem:[#allocation8 + $0xd0] sm:$0xff]
    %v6010 = vld [vmem:[#allocation8 + $0xd8] sm:$0xff]
    %v6011 = vld [vmem:[#allocation8 + $0xe0] sm:$0xff]
    %v6012 = vld [vmem:[#allocation8 + $0xe8] sm:$0xff]
    %v6013 = vld [vmem:[#allocation8 + $0xf0] sm:$0xff]
    %v6014 = vld [vmem:[#allocation8 + $0xf8] sm:$0xff]
    %v6015 = vpack.c.bf16 %v5829, %v5825
    %v6016 = vpack.c.bf16 %v5831, %v5827
    %v6017 = vpack.c.bf16 %v5839, %v5835
    %v6018 = vpack.c.bf16 %v5841, %v5837
    %v6019 = vpack.c.bf16 %v5849, %v5845
    %v6020 = vpack.c.bf16 %v5851, %v5847
    %v6021 = vpack.c.bf16 %v5859, %v5855
    %v6022 = vpack.c.bf16 %v5861, %v5857
    %v6023 = vpack.c.bf16 %v5869, %v5865
    %v6024 = vpack.c.bf16 %v5871, %v5867
    %v6025 = vpack.c.bf16 %v5879, %v5875
    %v6026 = vpack.c.bf16 %v5881, %v5877
    %v6027 = vpack.c.bf16 %v5889, %v5885
    %v6028 = vpack.c.bf16 %v5891, %v5887
    %v6029 = vpack.c.bf16 %v5899, %v5895
    %v6030 = vpack.c.bf16 %v5901, %v5897
    %v6031 = vpack.c.bf16 %v5909, %v5905
    %v6032 = vpack.c.bf16 %v5911, %v5907
    %v6033 = vpack.c.bf16 %v5919, %v5915
    %v6034 = vpack.c.bf16 %v5921, %v5917
    %v6035 = vpack.c.bf16 %v5929, %v5925
    %v6036 = vpack.c.bf16 %v5931, %v5927
    %v6037 = vpack.c.bf16 %v5939, %v5935
    %v6038 = vpack.c.bf16 %v5941, %v5937
    %v6039 = vpack.c.bf16 %v5949, %v5945
    %v6040 = vpack.c.bf16 %v5951, %v5947
    %v6041 = vpack.c.bf16 %v5959, %v5955
    %v6042 = vpack.c.bf16 %v5961, %v5957
    %v6043 = vpack.c.bf16 %v5969, %v5965
    %v6044 = vpack.c.bf16 %v5971, %v5967
    %v6045 = vpack.c.bf16 %v5979, %v5975
    %v6046 = vpack.c.bf16 %v5981, %v5977
    %v6079 = vunpack.c.l.b16 %v5983
    %v6080 = vunpack.c.h.b16 %v5983
    %v6081 = vunpack.c.l.b16 %v5984
    %v6082 = vunpack.c.h.b16 %v5984
    %v6083 = vunpack.c.l.b16 %v5985
    %v6084 = vunpack.c.h.b16 %v5985
    %v6085 = vunpack.c.l.b16 %v5986
    %v6086 = vunpack.c.h.b16 %v5986
    %v6087 = vunpack.c.l.b16 %v5987
    %v6088 = vunpack.c.h.b16 %v5987
    %v6089 = vunpack.c.l.b16 %v5988
    %v6090 = vunpack.c.h.b16 %v5988
    %v6091 = vunpack.c.l.b16 %v5989
    %v6092 = vunpack.c.h.b16 %v5989
    %v6093 = vunpack.c.l.b16 %v5990
    %v6094 = vunpack.c.h.b16 %v5990
    %v6095 = vunpack.c.l.b16 %v5991
    %v6096 = vunpack.c.h.b16 %v5991
    %v6097 = vunpack.c.l.b16 %v5992
    %v6098 = vunpack.c.h.b16 %v5992
    %v6099 = vunpack.c.l.b16 %v5993
    %v6100 = vunpack.c.h.b16 %v5993
    %v6101 = vunpack.c.l.b16 %v5994
    %v6102 = vunpack.c.h.b16 %v5994
    %v6103 = vunpack.c.l.b16 %v5995
    %v6104 = vunpack.c.h.b16 %v5995
    %v6105 = vunpack.c.l.b16 %v5996
    %v6106 = vunpack.c.h.b16 %v5996
    %v6107 = vunpack.c.l.b16 %v5997
    %v6108 = vunpack.c.h.b16 %v5997
    %v6109 = vunpack.c.l.b16 %v5998
    %v6110 = vunpack.c.h.b16 %v5998
    %v6111 = vunpack.c.l.b16 %v5999
    %v6112 = vunpack.c.h.b16 %v5999
    %v6113 = vunpack.c.l.b16 %v6000
    %v6114 = vunpack.c.h.b16 %v6000
    %v6115 = vunpack.c.l.b16 %v6001
    %v6116 = vunpack.c.h.b16 %v6001
    %v6117 = vunpack.c.l.b16 %v6002
    %v6118 = vunpack.c.h.b16 %v6002
    %v6119 = vunpack.c.l.b16 %v6003
    %v6120 = vunpack.c.h.b16 %v6003
    %v6121 = vunpack.c.l.b16 %v6004
    %v6122 = vunpack.c.h.b16 %v6004
    %v6123 = vunpack.c.l.b16 %v6005
    %v6124 = vunpack.c.h.b16 %v6005
    %v6125 = vunpack.c.l.b16 %v6006
    %v6126 = vunpack.c.h.b16 %v6006
    %v6127 = vunpack.c.l.b16 %v6007
    %v6128 = vunpack.c.h.b16 %v6007
    %v6129 = vunpack.c.l.b16 %v6008
    %v6130 = vunpack.c.h.b16 %v6008
    %v6131 = vunpack.c.l.b16 %v6009
    %v6132 = vunpack.c.h.b16 %v6009
    %v6133 = vunpack.c.l.b16 %v6010
    %v6134 = vunpack.c.h.b16 %v6010
    %v6135 = vunpack.c.l.b16 %v6011
    %v6136 = vunpack.c.h.b16 %v6011
    %v6137 = vunpack.c.l.b16 %v6012
    %v6138 = vunpack.c.h.b16 %v6012
    %v6139 = vunpack.c.l.b16 %v6013
    %v6140 = vunpack.c.h.b16 %v6013
    %v6141 = vunpack.c.l.b16 %v6014
    %v6142 = vunpack.c.h.b16 %v6014
    %v6143 = vpack.c.b16 %v6081, %v6079
    %v6144 = vpack.c.b16 %v6082, %v6080
    %v6145 = vpack.c.b16 %v6085, %v6083
    %v6146 = vpack.c.b16 %v6086, %v6084
    %v6147 = vpack.c.b16 %v6089, %v6087
    %v6148 = vpack.c.b16 %v6090, %v6088
    %v6149 = vpack.c.b16 %v6093, %v6091
    %v6150 = vpack.c.b16 %v6094, %v6092
    %v6151 = vpack.c.b16 %v6097, %v6095
    %v6152 = vpack.c.b16 %v6098, %v6096
    %v6153 = vpack.c.b16 %v6101, %v6099
    %v6154 = vpack.c.b16 %v6102, %v6100
    %v6155 = vpack.c.b16 %v6105, %v6103
    %v6156 = vpack.c.b16 %v6106, %v6104
    %v6157 = vpack.c.b16 %v6109, %v6107
    %v6158 = vpack.c.b16 %v6110, %v6108
    %v6159 = vpack.c.b16 %v6113, %v6111
    %v6160 = vpack.c.b16 %v6114, %v6112
    %v6161 = vpack.c.b16 %v6117, %v6115
    %v6162 = vpack.c.b16 %v6118, %v6116
    %v6163 = vpack.c.b16 %v6121, %v6119
    %v6164 = vpack.c.b16 %v6122, %v6120
    %v6165 = vpack.c.b16 %v6125, %v6123
    %v6166 = vpack.c.b16 %v6126, %v6124
    %v6167 = vpack.c.b16 %v6129, %v6127
    %v6168 = vpack.c.b16 %v6130, %v6128
    %v6169 = vpack.c.b16 %v6133, %v6131
    %v6170 = vpack.c.b16 %v6134, %v6132
    %v6171 = vpack.c.b16 %v6137, %v6135
    %v6172 = vpack.c.b16 %v6138, %v6136
    %v6173 = vpack.c.b16 %v6141, %v6139
    %v6174 = vpack.c.b16 %v6142, %v6140
    %6207 = vmatprep.subr.bf16.mxu0 %v6030
    %6208 = vmatpush1.bf16.msra.mxu0 %v6029
    %6209 = vmatprep.subr.bf16.mxu0 %v6028
    %6210 = vmatpush1.bf16.msra.mxu0 %v6027
    %6211 = vmatprep.subr.bf16.mxu0 %v6026
    %6212 = vmatpush1.bf16.msra.mxu0 %v6025
    %6213 = vmatprep.subr.bf16.mxu0 %v6024
    %6214 = vmatpush1.bf16.msra.mxu0 %v6023
    %6215 = vmatprep.subr.bf16.mxu0 %v6022
    %6216 = vmatpush1.bf16.msra.mxu0 %v6021
    %6217 = vmatprep.subr.bf16.mxu0 %v6020
    %6218 = vmatpush1.bf16.msra.mxu0 %v6019
    %6219 = vmatprep.subr.bf16.mxu0 %v6018
    %6220 = vmatpush1.bf16.msra.mxu0 %v6017
    %6221 = vmatprep.subr.bf16.mxu0 %v6016
    %6222 = vmatpush1.bf16.msra.mxu0 %v6015
    %6223 = vmatprep.subr.bf16.mxu0 %v6046
    %6224 = vmatpush2.bf16.msra.mxu0 %v6045
    %6225 = vmatprep.subr.bf16.mxu0 %v6044
    %6226 = vmatpush2.bf16.msra.mxu0 %v6043
    %6227 = vmatprep.subr.bf16.mxu0 %v6042
    %6228 = vmatpush2.bf16.msra.mxu0 %v6041
    %6229 = vmatprep.subr.bf16.mxu0 %v6040
    %6230 = vmatpush2.bf16.msra.mxu0 %v6039
    %6231 = vmatprep.subr.bf16.mxu0 %v6038
    %6232 = vmatpush2.bf16.msra.mxu0 %v6037
    %6233 = vmatprep.subr.bf16.mxu0 %v6036
    %6234 = vmatpush2.bf16.msra.mxu0 %v6035
    %6235 = vmatprep.subr.bf16.mxu0 %v6034
    %6236 = vmatpush2.bf16.msra.mxu0 %v6033
    %6237 = vmatprep.subr.bf16.mxu0 %v6032
    %6238 = vmatpush2.bf16.msra.mxu0 %v6031
    %6239 = vmatprep.mubr.bf16.mxu0 %v6144
    %6240 = vmatmul.mubr.bf16.gmra.mxu0 %v6143
    %v6241 = vpop.f32.mrf.mxu0
    %v6242 = vadd.f32 0.0, %v6241
    %v6243 = vpop.f32.mrf.mxu0
    %v6244 = vadd.f32 0.0, %v6243
    %v6245 = vpop.f32.mrf.mxu0
    %v6246 = vadd.f32 0.0, %v6245
    %v6247 = vpop.f32.mrf.mxu0
    %v6248 = vadd.f32 0.0, %v6247
    %6249 = vmatprep.mubr.bf16.mxu0 %v6146
    %6250 = vmatmul.mubr.bf16.gmra.mxu0 %v6145
    %v6251 = vpop.f32.mrf.mxu0
    %v6252 = vadd.f32 0.0, %v6251
    %v6253 = vpop.f32.mrf.mxu0
    %v6254 = vadd.f32 0.0, %v6253
    %v6255 = vpop.f32.mrf.mxu0
    %v6256 = vadd.f32 0.0, %v6255
    %v6257 = vpop.f32.mrf.mxu0
    %v6258 = vadd.f32 0.0, %v6257
    %6259 = vmatprep.mubr.bf16.mxu0 %v6148
    %6260 = vmatmul.mubr.bf16.gmra.mxu0 %v6147
    %v6261 = vpop.f32.mrf.mxu0
    %v6262 = vadd.f32 0.0, %v6261
    %v6263 = vpop.f32.mrf.mxu0
    %v6264 = vadd.f32 0.0, %v6263
    %v6265 = vpop.f32.mrf.mxu0
    %v6266 = vadd.f32 0.0, %v6265
    %v6267 = vpop.f32.mrf.mxu0
    %v6268 = vadd.f32 0.0, %v6267
    %6269 = vmatprep.mubr.bf16.mxu0 %v6150
    %6270 = vmatmul.mubr.bf16.gmra.mxu0 %v6149
    %v6271 = vpop.f32.mrf.mxu0
    %v6272 = vadd.f32 0.0, %v6271
    %v6273 = vpop.f32.mrf.mxu0
    %v6274 = vadd.f32 0.0, %v6273
    %v6275 = vpop.f32.mrf.mxu0
    %v6276 = vadd.f32 0.0, %v6275
    %v6277 = vpop.f32.mrf.mxu0
    %v6278 = vadd.f32 0.0, %v6277
    %6279 = vmatprep.mubr.bf16.mxu0 %v6152
    %6280 = vmatmul.mubr.bf16.gmra.mxu0 %v6151
    %v6281 = vpop.f32.mrf.mxu0
    %v6282 = vadd.f32 0.0, %v6281
    %v6283 = vpop.f32.mrf.mxu0
    %v6284 = vadd.f32 0.0, %v6283
    %v6285 = vpop.f32.mrf.mxu0
    %v6286 = vadd.f32 0.0, %v6285
    %v6287 = vpop.f32.mrf.mxu0
    %v6288 = vadd.f32 0.0, %v6287
    %6289 = vmatprep.mubr.bf16.mxu0 %v6154
    %6290 = vmatmul.mubr.bf16.gmra.mxu0 %v6153
    %v6291 = vpop.f32.mrf.mxu0
    %v6292 = vadd.f32 0.0, %v6291
    %v6293 = vpop.f32.mrf.mxu0
    %v6294 = vadd.f32 0.0, %v6293
    %v6295 = vpop.f32.mrf.mxu0
    %v6296 = vadd.f32 0.0, %v6295
    %v6297 = vpop.f32.mrf.mxu0
    %v6298 = vadd.f32 0.0, %v6297
    %6299 = vmatprep.mubr.bf16.mxu0 %v6156
    %6300 = vmatmul.mubr.bf16.gmra.mxu0 %v6155
    %v6301 = vpop.f32.mrf.mxu0
    %v6302 = vadd.f32 0.0, %v6301
    %v6303 = vpop.f32.mrf.mxu0
    %v6304 = vadd.f32 0.0, %v6303
    %v6305 = vpop.f32.mrf.mxu0
    %v6306 = vadd.f32 0.0, %v6305
    %v6307 = vpop.f32.mrf.mxu0
    %v6308 = vadd.f32 0.0, %v6307
    %6309 = vmatprep.mubr.bf16.mxu0 %v6158
    %6310 = vmatmul.mubr.bf16.gmra.mxu0 %v6157
    %v6311 = vpop.f32.mrf.mxu0
    %v6312 = vadd.f32 0.0, %v6311
    %v6313 = vpop.f32.mrf.mxu0
    %v6314 = vadd.f32 0.0, %v6313
    %v6315 = vpop.f32.mrf.mxu0
    %v6316 = vadd.f32 0.0, %v6315
    %v6317 = vpop.f32.mrf.mxu0
    %v6318 = vadd.f32 0.0, %v6317
    %6319 = vmatprep.mubr.bf16.mxu0 %v6160
    %6320 = vmatmul.mubr.bf16.gmra.mxu0 %v6159
    %v6321 = vpop.f32.mrf.mxu0
    %v6322 = vadd.f32 0.0, %v6321
    %v6323 = vpop.f32.mrf.mxu0
    %v6324 = vadd.f32 0.0, %v6323
    %v6325 = vpop.f32.mrf.mxu0
    %v6326 = vadd.f32 0.0, %v6325
    %v6327 = vpop.f32.mrf.mxu0
    %v6328 = vadd.f32 0.0, %v6327
    %6329 = vmatprep.mubr.bf16.mxu0 %v6162
    %6330 = vmatmul.mubr.bf16.gmra.mxu0 %v6161
    %v6331 = vpop.f32.mrf.mxu0
    %v6332 = vadd.f32 0.0, %v6331
    %v6333 = vpop.f32.mrf.mxu0
    %v6334 = vadd.f32 0.0, %v6333
    %v6335 = vpop.f32.mrf.mxu0
    %v6336 = vadd.f32 0.0, %v6335
    %v6337 = vpop.f32.mrf.mxu0
    %v6338 = vadd.f32 0.0, %v6337
    %6339 = vmatprep.mubr.bf16.mxu0 %v6164
    %6340 = vmatmul.mubr.bf16.gmra.mxu0 %v6163
    %v6341 = vpop.f32.mrf.mxu0
    %v6342 = vadd.f32 0.0, %v6341
    %v6343 = vpop.f32.mrf.mxu0
    %v6344 = vadd.f32 0.0, %v6343
    %v6345 = vpop.f32.mrf.mxu0
    %v6346 = vadd.f32 0.0, %v6345
    %v6347 = vpop.f32.mrf.mxu0
    %v6348 = vadd.f32 0.0, %v6347
    %6349 = vmatprep.mubr.bf16.mxu0 %v6166
    %6350 = vmatmul.mubr.bf16.gmra.mxu0 %v6165
    %v6351 = vpop.f32.mrf.mxu0
    %v6352 = vadd.f32 0.0, %v6351
    %v6353 = vpop.f32.mrf.mxu0
    %v6354 = vadd.f32 0.0, %v6353
    %v6355 = vpop.f32.mrf.mxu0
    %v6356 = vadd.f32 0.0, %v6355
    %v6357 = vpop.f32.mrf.mxu0
    %v6358 = vadd.f32 0.0, %v6357
    %6359 = vmatprep.mubr.bf16.mxu0 %v6168
    %6360 = vmatmul.mubr.bf16.gmra.mxu0 %v6167
    %v6361 = vpop.f32.mrf.mxu0
    %v6362 = vadd.f32 0.0, %v6361
    %v6363 = vpop.f32.mrf.mxu0
    %v6364 = vadd.f32 0.0, %v6363
    %v6365 = vpop.f32.mrf.mxu0
    %v6366 = vadd.f32 0.0, %v6365
    %v6367 = vpop.f32.mrf.mxu0
    %v6368 = vadd.f32 0.0, %v6367
    %6369 = vmatprep.mubr.bf16.mxu0 %v6170
    %6370 = vmatmul.mubr.bf16.gmra.mxu0 %v6169
    %v6371 = vpop.f32.mrf.mxu0
    %v6372 = vadd.f32 0.0, %v6371
    %v6373 = vpop.f32.mrf.mxu0
    %v6374 = vadd.f32 0.0, %v6373
    %v6375 = vpop.f32.mrf.mxu0
    %v6376 = vadd.f32 0.0, %v6375
    %v6377 = vpop.f32.mrf.mxu0
    %v6378 = vadd.f32 0.0, %v6377
    %6379 = vmatprep.mubr.bf16.mxu0 %v6172
    %6380 = vmatmul.mubr.bf16.gmra.mxu0 %v6171
    %v6381 = vpop.f32.mrf.mxu0
    %v6382 = vadd.f32 0.0, %v6381
    %v6383 = vpop.f32.mrf.mxu0
    %v6384 = vadd.f32 0.0, %v6383
    %v6385 = vpop.f32.mrf.mxu0
    %v6386 = vadd.f32 0.0, %v6385
    %v6387 = vpop.f32.mrf.mxu0
    %v6388 = vadd.f32 0.0, %v6387
    %6389 = vmatprep.mubr.bf16.mxu0 %v6174
    %6390 = vmatmul.mubr.bf16.gmra.mxu0 %v6173
    %v6391 = vpop.f32.mrf.mxu0
    %v6392 = vadd.f32 0.0, %v6391
    %v6393 = vpop.f32.mrf.mxu0
    %v6394 = vadd.f32 0.0, %v6393
    %v6395 = vpop.f32.mrf.mxu0
    %v6396 = vadd.f32 0.0, %v6395
    %v6397 = vpop.f32.mrf.mxu0
    %v6398 = vadd.f32 0.0, %v6397
    %6399 = vdwg.mxu0
    %6400 = vst [vmem:[#allocation9] sm:$0xff] %v6242
    %6401 = vst [vmem:[#allocation9 + $0x8] sm:$0xff] %v6244
    %6402 = vst [vmem:[#allocation9 + $0x10] sm:$0xff] %v6246
    %6403 = vst [vmem:[#allocation9 + $0x18] sm:$0xff] %v6248
    %6404 = vst [vmem:[#allocation9 + $0x20] sm:$0xff] %v6252
    %6405 = vst [vmem:[#allocation9 + $0x28] sm:$0xff] %v6254
    %6406 = vst [vmem:[#allocation9 + $0x30] sm:$0xff] %v6256
    %6407 = vst [vmem:[#allocation9 + $0x38] sm:$0xff] %v6258
    %6408 = vst [vmem:[#allocation9 + $0x40] sm:$0xff] %v6262
    %6409 = vst [vmem:[#allocation9 + $0x48] sm:$0xff] %v6264
    %6410 = vst [vmem:[#allocation9 + $0x50] sm:$0xff] %v6266
    %6411 = vst [vmem:[#allocation9 + $0x58] sm:$0xff] %v6268
    %6412 = vst [vmem:[#allocation9 + $0x60] sm:$0xff] %v6272
    %6413 = vst [vmem:[#allocation9 + $0x68] sm:$0xff] %v6274
    %6414 = vst [vmem:[#allocation9 + $0x70] sm:$0xff] %v6276
    %6415 = vst [vmem:[#allocation9 + $0x78] sm:$0xff] %v6278
    %6416 = vst [vmem:[#allocation9 + $0x80] sm:$0xff] %v6282
    %6417 = vst [vmem:[#allocation9 + $0x88] sm:$0xff] %v6284
    %6418 = vst [vmem:[#allocation9 + $0x90] sm:$0xff] %v6286
    %6419 = vst [vmem:[#allocation9 + $0x98] sm:$0xff] %v6288
    %6420 = vst [vmem:[#allocation9 + $0xa0] sm:$0xff] %v6292
    %6421 = vst [vmem:[#allocation9 + $0xa8] sm:$0xff] %v6294
    %6422 = vst [vmem:[#allocation9 + $0xb0] sm:$0xff] %v6296
    %6423 = vst [vmem:[#allocation9 + $0xb8] sm:$0xff] %v6298
    %6424 = vst [vmem:[#allocation9 + $0xc0] sm:$0xff] %v6302
    %6425 = vst [vmem:[#allocation9 + $0xc8] sm:$0xff] %v6304
    %6426 = vst [vmem:[#allocation9 + $0xd0] sm:$0xff] %v6306
    %6427 = vst [vmem:[#allocation9 + $0xd8] sm:$0xff] %v6308
    %6428 = vst [vmem:[#allocation9 + $0xe0] sm:$0xff] %v6312
    %6429 = vst [vmem:[#allocation9 + $0xe8] sm:$0xff] %v6314
    %6430 = vst [vmem:[#allocation9 + $0xf0] sm:$0xff] %v6316
    %6431 = vst [vmem:[#allocation9 + $0xf8] sm:$0xff] %v6318
    %6432 = vst [vmem:[#allocation9 + $0x100] sm:$0xff] %v6322
    %6433 = vst [vmem:[#allocation9 + $0x108] sm:$0xff] %v6324
    %6434 = vst [vmem:[#allocation9 + $0x110] sm:$0xff] %v6326
    %6435 = vst [vmem:[#allocation9 + $0x118] sm:$0xff] %v6328
    %6436 = vst [vmem:[#allocation9 + $0x120] sm:$0xff] %v6332
    %6437 = vst [vmem:[#allocation9 + $0x128] sm:$0xff] %v6334
    %6438 = vst [vmem:[#allocation9 + $0x130] sm:$0xff] %v6336
    %6439 = vst [vmem:[#allocation9 + $0x138] sm:$0xff] %v6338
    %6440 = vst [vmem:[#allocation9 + $0x140] sm:$0xff] %v6342
    %6441 = vst [vmem:[#allocation9 + $0x148] sm:$0xff] %v6344
    %6442 = vst [vmem:[#allocation9 + $0x150] sm:$0xff] %v6346
    %6443 = vst [vmem:[#allocation9 + $0x158] sm:$0xff] %v6348
    %6444 = vst [vmem:[#allocation9 + $0x160] sm:$0xff] %v6352
    %6445 = vst [vmem:[#allocation9 + $0x168] sm:$0xff] %v6354
    %6446 = vst [vmem:[#allocation9 + $0x170] sm:$0xff] %v6356
    %6447 = vst [vmem:[#allocation9 + $0x178] sm:$0xff] %v6358
    %6448 = vst [vmem:[#allocation9 + $0x180] sm:$0xff] %v6362
    %6449 = vst [vmem:[#allocation9 + $0x188] sm:$0xff] %v6364
    %6450 = vst [vmem:[#allocation9 + $0x190] sm:$0xff] %v6366
    %6451 = vst [vmem:[#allocation9 + $0x198] sm:$0xff] %v6368
    %6452 = vst [vmem:[#allocation9 + $0x1a0] sm:$0xff] %v6372
    %6453 = vst [vmem:[#allocation9 + $0x1a8] sm:$0xff] %v6374
    %6454 = vst [vmem:[#allocation9 + $0x1b0] sm:$0xff] %v6376
    %6455 = vst [vmem:[#allocation9 + $0x1b8] sm:$0xff] %v6378
    %6456 = vst [vmem:[#allocation9 + $0x1c0] sm:$0xff] %v6382
    %6457 = vst [vmem:[#allocation9 + $0x1c8] sm:$0xff] %v6384
    %6458 = vst [vmem:[#allocation9 + $0x1d0] sm:$0xff] %v6386
    %6459 = vst [vmem:[#allocation9 + $0x1d8] sm:$0xff] %v6388
    %6460 = vst [vmem:[#allocation9 + $0x1e0] sm:$0xff] %v6392
    %6461 = vst [vmem:[#allocation9 + $0x1e8] sm:$0xff] %v6394
    %6462 = vst [vmem:[#allocation9 + $0x1f0] sm:$0xff] %v6396
    %6463 = vst [vmem:[#allocation9 + $0x1f8] sm:$0xff] %v6398
    %v6464 = vmin.f32 %v6242, %v6252
    %v6465 = vmin.f32 %v6244, %v6254
    %v6466 = vmin.f32 %v6246, %v6256
    %v6467 = vmin.f32 %v6248, %v6258
    %v6468 = vmin.f32 %v6464, %v6262
    %v6469 = vmin.f32 %v6465, %v6264
    %v6470 = vmin.f32 %v6466, %v6266
    %v6471 = vmin.f32 %v6467, %v6268
    %v6472 = vmin.f32 %v6468, %v6272
    %v6473 = vmin.f32 %v6469, %v6274
    %v6474 = vmin.f32 %v6470, %v6276
    %v6475 = vmin.f32 %v6471, %v6278
    %v6476 = vmin.f32 %v6472, %v6282
    %v6477 = vmin.f32 %v6473, %v6284
    %v6478 = vmin.f32 %v6474, %v6286
    %v6479 = vmin.f32 %v6475, %v6288
    %v6480 = vmin.f32 %v6476, %v6292
    %v6481 = vmin.f32 %v6477, %v6294
    %v6482 = vmin.f32 %v6478, %v6296
    %v6483 = vmin.f32 %v6479, %v6298
    %v6484 = vmin.f32 %v6480, %v6302
    %v6485 = vmin.f32 %v6481, %v6304
    %v6486 = vmin.f32 %v6482, %v6306
    %v6487 = vmin.f32 %v6483, %v6308
    %v6488 = vmin.f32 %v6484, %v6312
    %v6489 = vmin.f32 %v6485, %v6314
    %v6490 = vmin.f32 %v6486, %v6316
    %v6491 = vmin.f32 %v6487, %v6318
    %v6492 = vmin.f32 %v6488, %v6322
    %v6493 = vmin.f32 %v6489, %v6324
    %v6494 = vmin.f32 %v6490, %v6326
    %v6495 = vmin.f32 %v6491, %v6328
    %v6496 = vmin.f32 %v6492, %v6332
    %v6497 = vmin.f32 %v6493, %v6334
    %v6498 = vmin.f32 %v6494, %v6336
    %v6499 = vmin.f32 %v6495, %v6338
    %v6500 = vmin.f32 %v6496, %v6342
    %v6501 = vmin.f32 %v6497, %v6344
    %v6502 = vmin.f32 %v6498, %v6346
    %v6503 = vmin.f32 %v6499, %v6348
    %v6504 = vmin.f32 %v6500, %v6352
    %v6505 = vmin.f32 %v6501, %v6354
    %v6506 = vmin.f32 %v6502, %v6356
    %v6507 = vmin.f32 %v6503, %v6358
    %v6508 = vmin.f32 %v6504, %v6362
    %v6509 = vmin.f32 %v6505, %v6364
    %v6510 = vmin.f32 %v6506, %v6366
    %v6511 = vmin.f32 %v6507, %v6368
    %v6512 = vmin.f32 %v6508, %v6372
    %v6513 = vmin.f32 %v6509, %v6374
    %v6514 = vmin.f32 %v6510, %v6376
    %v6515 = vmin.f32 %v6511, %v6378
    %v6516 = vmin.f32 %v6512, %v6382
    %v6517 = vmin.f32 %v6513, %v6384
    %v6518 = vmin.f32 %v6514, %v6386
    %v6519 = vmin.f32 %v6515, %v6388
    %v6520 = vmin.f32 %v6516, %v6392
    %v6521 = vmin.f32 %v6517, %v6394
    %v6522 = vmin.f32 %v6518, %v6396
    %v6523 = vmin.f32 %v6519, %v6398
    %v6524 = vmin.f32 %v6520, %v6521
    %v6525 = vmin.f32 %v6522, %v6523
    %v6526 = vmin.f32 %v6524, %v6525
    %6527 = vmin.xlane.f32.xlu0 %v6526
    %v6528 = vpop.xlane.xlu0 %6527
    %v6529 = vrot.slane %v6528, 4
    %v6530 = vmin.f32 %v6528, %v6529
    %v6531 = vrot.slane %v6530, 2
    %v6532 = vmin.f32 %v6530, %v6531
    %v6533 = vrot.slane %v6532, 1
    %v6534 = vmin.f32 %v6532, %v6533
    %s6535 = vtos %v6534
    %s6536 = scalar_lea.smem [#allocation10], 0
    %6537 = sst [smem:[%s6536]] %s6535
    %v6538 = vmax.f32 %v6242, %v6252
    %v6539 = vmax.f32 %v6244, %v6254
    %v6540 = vmax.f32 %v6246, %v6256
    %v6541 = vmax.f32 %v6248, %v6258
    %v6542 = vmax.f32 %v6538, %v6262
    %v6543 = vmax.f32 %v6539, %v6264
    %v6544 = vmax.f32 %v6540, %v6266
    %v6545 = vmax.f32 %v6541, %v6268
    %v6546 = vmax.f32 %v6542, %v6272
    %v6547 = vmax.f32 %v6543, %v6274
    %v6548 = vmax.f32 %v6544, %v6276
    %v6549 = vmax.f32 %v6545, %v6278
    %v6550 = vmax.f32 %v6546, %v6282
    %v6551 = vmax.f32 %v6547, %v6284
    %v6552 = vmax.f32 %v6548, %v6286
    %v6553 = vmax.f32 %v6549, %v6288
    %v6554 = vmax.f32 %v6550, %v6292
    %v6555 = vmax.f32 %v6551, %v6294
    %v6556 = vmax.f32 %v6552, %v6296
    %v6557 = vmax.f32 %v6553, %v6298
    %v6558 = vmax.f32 %v6554, %v6302
    %v6559 = vmax.f32 %v6555, %v6304
    %v6560 = vmax.f32 %v6556, %v6306
    %v6561 = vmax.f32 %v6557, %v6308
    %v6562 = vmax.f32 %v6558, %v6312
    %v6563 = vmax.f32 %v6559, %v6314
    %v6564 = vmax.f32 %v6560, %v6316
    %v6565 = vmax.f32 %v6561, %v6318
    %v6566 = vmax.f32 %v6562, %v6322
    %v6567 = vmax.f32 %v6563, %v6324
    %v6568 = vmax.f32 %v6564, %v6326
    %v6569 = vmax.f32 %v6565, %v6328
    %v6570 = vmax.f32 %v6566, %v6332
    %v6571 = vmax.f32 %v6567, %v6334
    %v6572 = vmax.f32 %v6568, %v6336
    %v6573 = vmax.f32 %v6569, %v6338
    %v6574 = vmax.f32 %v6570, %v6342
    %v6575 = vmax.f32 %v6571, %v6344
    %v6576 = vmax.f32 %v6572, %v6346
    %v6577 = vmax.f32 %v6573, %v6348
    %v6578 = vmax.f32 %v6574, %v6352
    %v6579 = vmax.f32 %v6575, %v6354
    %v6580 = vmax.f32 %v6576, %v6356
    %v6581 = vmax.f32 %v6577, %v6358
    %v6582 = vmax.f32 %v6578, %v6362
    %v6583 = vmax.f32 %v6579, %v6364
    %v6584 = vmax.f32 %v6580, %v6366
    %v6585 = vmax.f32 %v6581, %v6368
    %v6586 = vmax.f32 %v6582, %v6372
    %v6587 = vmax.f32 %v6583, %v6374
    %v6588 = vmax.f32 %v6584, %v6376
    %v6589 = vmax.f32 %v6585, %v6378
    %v6590 = vmax.f32 %v6586, %v6382
    %v6591 = vmax.f32 %v6587, %v6384
    %v6592 = vmax.f32 %v6588, %v6386
    %v6593 = vmax.f32 %v6589, %v6388
    %v6594 = vmax.f32 %v6590, %v6392
    %v6595 = vmax.f32 %v6591, %v6394
    %v6596 = vmax.f32 %v6592, %v6396
    %v6597 = vmax.f32 %v6593, %v6398
    %v6598 = vmax.f32 %v6594, %v6595
    %v6599 = vmax.f32 %v6596, %v6597
    %v6600 = vmax.f32 %v6598, %v6599
    %6601 = vmax.xlane.f32.xlu0 %v6600
    %v6602 = vpop.xlane.xlu0 %6601
    %v6603 = vrot.slane %v6602, 4
    %v6604 = vmax.f32 %v6602, %v6603
    %v6605 = vrot.slane %v6604, 2
    %v6606 = vmax.f32 %v6604, %v6605
    %v6607 = vrot.slane %v6606, 1
    %v6608 = vmax.f32 %v6606, %v6607
    %s6609 = vtos %v6608
    %s6610 = scalar_lea.smem [#allocation10], 1
    %6611 = sst [smem:[%s6610]] %s6609
    // Predicated region
    $region26: #{tpu_custom_call.1} parent=1 // pred_check
      _
    $region27: #{tpu_custom_call.1} parent=1 // pred_check_branch
      %6613 = sbr.rel (0) target = $region29
    $region28: #{tpu_custom_call.1} parent=1 // pred_region
      %s6615 = ssub.s32 8192, 8192
      %6616 = vsyncadd [#allocation4], %s6615
      %s6617 = sshll.u32 [#allocation9], 4
      %s6618 = int_to_ptr.vmem [resolvable:$true] %s6617
      %6623 = dma.vmem_to_hbm [thread:$0]  %s6618, 8192, %s3, [#allocation4], 256, 256, 16
    $region29: #{tpu_custom_call.1} parent=1 // pred_fallthru
      _
    // Predicated region
    $region30: #{tpu_custom_call.1} parent=1 // pred_check
      _
    $region31: #{tpu_custom_call.1} parent=1 // pred_check_branch
      %6625 = sbr.rel (0) target = $region33
    $region32: #{tpu_custom_call.1} parent=1 // pred_region
      %s6627 = ssub.s32 16, 16
      %6628 = vsyncadd [#allocation5], %s6627
      %6631 = dma.smem_to_hbm [#allocation10], 16, %s4, [#allocation5]
    $region33: #{tpu_custom_call.1} parent=1 // pred_fallthru
      _
    // Predicated region
    $region34: #{tpu_custom_call.1} parent=1 // pred_check
      _
    $region35: #{tpu_custom_call.1} parent=1 // pred_check_branch
      %6633 = sbr.rel (0) target = $region37
    $region36: #{tpu_custom_call.1} parent=1 // pred_region
      %6634 = dma.done [#allocation4], 8192
    $region37: #{tpu_custom_call.1} parent=1 // pred_fallthru
      _
    // Predicated region
    $region38: #{tpu_custom_call.1} parent=1 // pred_check
      _
    $region39: #{tpu_custom_call.1} parent=1 // pred_check_branch
      %6636 = sbr.rel (0) target = $region41
    $region40: #{tpu_custom_call.1} parent=1 // pred_region
      %6637 = dma.done [#allocation5], 16
    $region41: #{tpu_custom_call.1} parent=1 // pred_fallthru
      _
    %6638 = sfence
    %6639 = vsyncpa [#allocation3], 1
    %6640 = vsyncpa [#allocation7], 1
    %6641 = vsyncpa [#allocation4], 1
    %6642 = vsyncpa [#allocation5], 1

</llo_original>
